<compile_context>
chip_gen: v7x
topology: tpu7x:2x2x1
jax: 0.10.0
libtpu: 0.0.40
codegen_flags: <defaults>
</compile_context>

<pallas_src>
import functools
import math

import jax
import jax.numpy as jnp
from jax import lax
from jax.experimental import pallas as pl
from jax.experimental.pallas import tpu as pltpu


# ----------------------------------------------------------------------------
# shared math
# ----------------------------------------------------------------------------
def _gelu_tanh(x):
    # TODO(synk): torch F.gelu defaults to the exact erf form; tanh approx differs by ~1e-3
    # but keeps the transcendental on the EUP instead of a long VALU polynomial.
    k = 0.7978845608028654  # sqrt(2/pi)
    return 0.5 * x * (1.0 + jnp.tanh(k * (x + 0.044715 * x * x * x)))


def _round_up(v, m):
    return (v + m - 1) // m * m


# ----------------------------------------------------------------------------
# fused ResidualCNN kernel (block_b batch elements per grid step)
# ----------------------------------------------------------------------------
def _residual_cnn_kernel(x_ref, g1_ref, be1_ref, w1_ref, cb1_ref,
                         g2_ref, be2_ref, w2_ref, cb2_ref,
                         o_ref, hp_ref, *, Bb, L, F, FP, C, eps):
    """
    x_ref   : (Bb, L, F, C)      input activation, channels-last (F = LayerNorm axis), f32
    g*/be*  : (F, 1)             LayerNorm affine (broadcast over L and C in-kernel), f32
    w*      : (C, 9*C)           conv weights packed as [ci, (3*a + d)*C + co], a=feature tap,
                                 d=length tap, bf16
    cb*     : (1, C)             conv bias, f32
    o_ref   : (Bb, L, F, C)      output, f32
    hp_ref  : (Bb, L+2, FP, C)   padded-input scratch (bf16); FP = round_up(F+2, 16)
    """
    x = x_ref[...].astype(jnp.float32)                       # (Bb, L, F, C)
    inv_f = 1.0 / F

    # Zero only the *consumed* border of the padded-input scratch (rows 0 / L+1, cols 0 / F+1),
    # once per grid step.  The interior is fully overwritten by each conv; columns >= F+2 are
    # never read back (matmul rows are independent), so they need no initialization.
    zrow = jnp.zeros((Bb, 1, FP, C), jnp.bfloat16)
    hp_ref[:, 0:1, :, :] = zrow
    hp_ref[:, L + 1:L + 2, :, :] = zrow
    zcol = jnp.zeros((Bb, L + 2, 1, C), jnp.bfloat16)
    hp_ref[:, :, 0:1, :] = zcol
    hp_ref[:, :, F + 1:F + 2, :] = zcol

    def ln_gelu(v, g_ref, b_ref):
        # Single-pass LayerNorm stats over the feature axis (axis=2) + tanh-GELU, returning bf16
        # so the conv's MXU feed needs no separate full-tile cast pass.
        s1 = jnp.sum(v, axis=2, keepdims=True)
        s2 = jnp.sum(v * v, axis=2, keepdims=True)
        mu = s1 * inv_f
        var = s2 * inv_f - mu * mu
        y = (v - mu) * lax.rsqrt(var + eps) * g_ref[...] + b_ref[...]
        return _gelu_tanh(y).astype(jnp.bfloat16)

    def conv3x3(h, w_ref, cb_ref):
        # One fused MXU matmul per conv over the padded input, then the 9 tap contributions are
        # accumulated from statically shifted READ slices of the result (no RMW scatter stores).
        hp_ref[:, 1:L + 1, 1:F + 1, :] = h                   # interior; border stays zero
        hmat = hp_ref[...].reshape(Bb * (L + 2) * FP, C)     # layout-preserving (FP % 16 == 0)
        p = jnp.dot(hmat, w_ref[...], preferred_element_type=jnp.float32)   # (M, 9*C)
        p4 = p.reshape(Bb, L + 2, FP, 9 * C)                 # layout-preserving split
        acc = None
        for a in range(3):                                   # kernel tap along the feature axis
            for d in range(3):                               # kernel tap along the length axis
                t = 3 * a + d
                sl = p4[:, d:d + L, a:a + F, t * C:(t + 1) * C]
                acc = sl if acc is None else acc + sl
        return acc + cb_ref[...]

    h = ln_gelu(x, g1_ref, be1_ref)             # layer_norm1 + gelu   (dropout1 = identity)
    y = conv3x3(h, w1_ref, cb1_ref)             # cnn1
    h = ln_gelu(y, g2_ref, be2_ref)             # layer_norm2 + gelu   (dropout2 = identity)
    y = conv3x3(h, w2_ref, cb2_ref)             # cnn2
    o_ref[...] = (y + x).astype(o_ref.dtype)    # += residual


# ----------------------------------------------------------------------------
# wrapper
# ----------------------------------------------------------------------------
def _phys_vmem_bytes(shape, dtype):
    """Approximate physical VMEM footprint including (sublane, 128)-lane tiling inflation."""
    sub = 16 if dtype == jnp.bfloat16 else 8
    item = 2 if dtype == jnp.bfloat16 else 4
    *lead, s, l = shape
    n = 1
    for d in lead:
        n *= d
    return n * _round_up(max(s, 1), sub) * _round_up(max(l, 1), 128) * item


def residual_cnn_forward(x, params, eps=1e-5, block_b=None):
    """ResidualCNN forward. x: (B, C, F, L) float32 (same layout as the PyTorch module)."""
    B, C, F, L = x.shape
    w1, b1 = params['conv1_w'], params['conv1_b']
    w2, b2 = params['conv2_w'], params['conv2_b']
    Cout = w1.shape[0]
    assert w1.shape == (Cout, C, 3, 3) and w2.shape == (Cout, Cout, 3, 3)
    assert Cout == C, "residual add requires in_channels == out_channels"
    assert F % 8 == 0, "feature dim must be a multiple of 8 for layout-preserving reshapes"

    FP = _round_up(F + 2, 16)        # padded feature extent, bf16 sublane-tile aligned

    def step_vmem(bb):
        act = _phys_vmem_bytes((bb, L, F, C), jnp.float32)
        pad = _phys_vmem_bytes((bb, L + 2, FP, C), jnp.bfloat16)
        taps = _phys_vmem_bytes((bb * (L + 2) * FP, 9 * C), jnp.float32)   # fused-matmul result
        wts = 2 * _phys_vmem_bytes((C, 9 * C), jnp.bfloat16)
        return 2 * act + 2 * act + pad + taps + wts          # in/out double-buffered + scratch

    budget = 40 << 20                                        # safe on v5e/v6e/v7x
    if block_b is None:
        block_b = 1
        for d in range(1, B + 1):                            # largest divisor keeping grid >= 2
            if B % d == 0 and (B // d >= 2 or B == 1) and step_vmem(d) <= budget:
                block_b = d
    assert B % block_b == 0
    vmem_limit = int(min(max(step_vmem(block_b) + (16 << 20), 32 << 20), 100 << 20))

    # Single relayout in / out of the whole fused block (kept channels-last in between).
    xw = jnp.transpose(x, (0, 3, 2, 1))                      # (B, L, F, C)

    def pack_w(w):
        # (Co, Ci, 3, 3) -> (Ci, 9*Co), columns grouped tap-major (t = 3*a + d), bf16 MXU feed.
        return jnp.transpose(w, (1, 2, 3, 0)).reshape(C, 9 * Cout).astype(jnp.bfloat16)

    def ln_param(p):
        return p.astype(jnp.float32).reshape(F, 1)           # broadcast over L, C in-kernel

    def full_spec(shape):
        n = len(shape)
        return pl.BlockSpec(shape, lambda b, n=n: (0,) * n)

    kernel = functools.partial(_residual_cnn_kernel,
                               Bb=block_b, L=L, F=F, FP=FP, C=C, eps=eps)

    out = pl.pallas_call(
        kernel,
        out_shape=jax.ShapeDtypeStruct((B, L, F, C), jnp.float32),
        grid=(B // block_b,),
        in_specs=[
            pl.BlockSpec((block_b, L, F, C), lambda b: (b, 0, 0, 0)),   # activation block
            full_spec((F, 1)), full_spec((F, 1)),                       # ln1 gamma / beta
            full_spec((C, 9 * Cout)), full_spec((1, Cout)),             # conv1 weight / bias
            full_spec((F, 1)), full_spec((F, 1)),                       # ln2 gamma / beta
            full_spec((C, 9 * Cout)), full_spec((1, Cout)),             # conv2 weight / bias
        ],
        out_specs=pl.BlockSpec((block_b, L, F, C), lambda b: (b, 0, 0, 0)),
        scratch_shapes=[pltpu.VMEM((block_b, L + 2, FP, C), jnp.bfloat16)],
        compiler_params=pltpu.CompilerParams(
            dimension_semantics=("parallel",),               # megacore split on v7x when grid >= 2
            vmem_limit_bytes=vmem_limit),
    )(xw,
      ln_param(params['ln1_g']), ln_param(params['ln1_b']),
      pack_w(w1), b1.astype(jnp.float32).reshape(1, Cout),
      ln_param(params['ln2_g']), ln_param(params['ln2_b']),
      pack_w(w2), b2.astype(jnp.float32).reshape(1, Cout))

    return jnp.transpose(out, (0, 3, 2, 1))                  # back to (B, C, F, L)


# ----------------------------------------------------------------------------
# pure-XLA reference (same tanh-GELU variant, f32 throughout) for correctness
# ----------------------------------------------------------------------------
def reference_forward(x, params, eps=1e-5):
    def cnn_layernorm(v, g, b):
        mu = jnp.mean(v, axis=2, keepdims=True)
        var = jnp.mean((v - mu) ** 2, axis=2, keepdims=True)
        return (v - mu) * lax.rsqrt(var + eps) * g[None, None, :, None] + b[None, None, :, None]

    def conv(v, w, b):
        y = lax.conv_general_dilated(
            v, w, window_strides=(1, 1), padding=((1, 1), (1, 1)),
            dimension_numbers=('NCHW', 'OIHW', 'NCHW'),
            precision=lax.Precision.HIGHEST)
        return y + b[None, :, None, None]

    h = conv(_gelu_tanh(cnn_layernorm(x, params['ln1_g'], params['ln1_b'])),
             params['conv1_w'], params['conv1_b'])
    h = conv(_gelu_tanh(cnn_layernorm(h, params['ln2_g'], params['ln2_b'])),
             params['conv2_w'], params['conv2_b'])
    return h + x


# ----------------------------------------------------------------------------
def init_params(key, channels, n_feats):
    k = jax.random.split(key, 8)
    return {
        'ln1_g': 1.0 + 0.1 * jax.random.normal(k[0], (n_feats,), jnp.float32),
        'ln1_b': 0.01 * jax.random.normal(k[1], (n_feats,), jnp.float32),
        'ln2_g': 1.0 + 0.1 * jax.random.normal(k[2], (n_feats,), jnp.float32),
        'ln2_b': 0.01 * jax.random.normal(k[3], (n_feats,), jnp.float32),
        'conv1_w': 0.05 * jax.random.normal(k[4], (channels, channels, 3, 3), jnp.float32),
        'conv1_b': 0.01 * jax.random.normal(k[5], (channels,), jnp.float32),
        'conv2_w': 0.05 * jax.random.normal(k[6], (channels, channels, 3, 3), jnp.float32),
        'conv2_b': 0.01 * jax.random.normal(k[7], (channels,), jnp.float32),
    }


if __name__ == "__main__":
    key = jax.random.PRNGKey(0)
    kx, kp = jax.random.split(key)

    # ResidualCNN(in_channels=32, out_channels=32, kernel=3, stride=1, dropout, n_feats=16)
    B, C, F, L = 2, 32, 16, 16
    params = init_params(kp, channels=C, n_feats=F)
    x = jax.random.normal(kx, (B, C, F, L), jnp.float32)     # (batch, channel, feature, length)

    out = jax.jit(residual_cnn_forward)(x, params)
    jax.block_until_ready(out)

    assert out.shape == (B, C, F, L), out.shape
    assert bool(jnp.all(jnp.isfinite(out)))

    ref = reference_forward(x, params)
    err = float(jnp.max(jnp.abs(out - ref)))
    # bf16 activations + bf16 weights with f32 accumulation across two K=288 convs gives a
    # worst-case element error of ~1e-2; 3e-2 keeps margin while still catching any tap-offset
    # or weight-packing bug (those would produce errors ~0.2+).
    assert err < 3e-2, f"max abs diff vs reference: {err}"

    print("KERNEL_OK")
</pallas_src>

<mosaic_0001>
module attributes {stable_mosaic.version = 11 : i64} {
  func.func @_residual_cnn_kernel(%arg0: i32, %arg1: memref<1x16x16x32xf32, #tpu.memory_space<vmem>>, %arg2: memref<16x1xf32, #tpu.memory_space<vmem>>, %arg3: memref<16x1xf32, #tpu.memory_space<vmem>>, %arg4: memref<32x288xbf16, #tpu.memory_space<vmem>>, %arg5: memref<1x32xf32, #tpu.memory_space<vmem>>, %arg6: memref<16x1xf32, #tpu.memory_space<vmem>>, %arg7: memref<16x1xf32, #tpu.memory_space<vmem>>, %arg8: memref<32x288xbf16, #tpu.memory_space<vmem>>, %arg9: memref<1x32xf32, #tpu.memory_space<vmem>>, %arg10: memref<1x16x16x32xf32, #tpu.memory_space<vmem>>, %arg11: memref<1x18x32x32xbf16, #tpu.memory_space<vmem>>) attributes {dimension_semantics = [#tpu.dimension_semantics<parallel>], iteration_bounds = array<i64: 2>, scalar_prefetch = 0 : i64, scratch_operands = 1 : i64, tpu.core_type = #tpu.core_type<tc>, window_params = [{transform_indices = @transform_0, window_bounds = array<i64: 1, 16, 16, 32>}, {pipeline_mode = #tpu.pipeline_mode<synchronous>, transform_indices = @transform_1, window_bounds = array<i64: 16, 1>}, {pipeline_mode = #tpu.pipeline_mode<synchronous>, transform_indices = @transform_2, window_bounds = array<i64: 16, 1>}, {pipeline_mode = #tpu.pipeline_mode<synchronous>, transform_indices = @transform_3, window_bounds = array<i64: 32, 288>}, {pipeline_mode = #tpu.pipeline_mode<synchronous>, transform_indices = @transform_4, window_bounds = array<i64: 1, 32>}, {pipeline_mode = #tpu.pipeline_mode<synchronous>, transform_indices = @transform_5, window_bounds = array<i64: 16, 1>}, {pipeline_mode = #tpu.pipeline_mode<synchronous>, transform_indices = @transform_6, window_bounds = array<i64: 16, 1>}, {pipeline_mode = #tpu.pipeline_mode<synchronous>, transform_indices = @transform_7, window_bounds = array<i64: 32, 288>}, {pipeline_mode = #tpu.pipeline_mode<synchronous>, transform_indices = @transform_8, window_bounds = array<i64: 1, 32>}, {transform_indices = @transform_9, window_bounds = array<i64: 1, 16, 16, 32>}]} {
    %c0 = arith.constant 0 : index
    %c0_0 = arith.constant 0 : index
    %c0_1 = arith.constant 0 : index
    %c0_2 = arith.constant 0 : index
    %0 = vector.load %arg1[%c0, %c0_0, %c0_1, %c0_2] : memref<1x16x16x32xf32, #tpu.memory_space<vmem>>, vector<1x16x16x32xf32>
    %cst = arith.constant 0.000000e+00 : bf16
    %1 = vector.broadcast %cst : bf16 to vector<1x1x32x32xbf16>
    %c0_3 = arith.constant 0 : index
    %c0_4 = arith.constant 0 : index
    %c0_5 = arith.constant 0 : index
    %c0_6 = arith.constant 0 : index
    %2 = vector.load %arg11[%c0_3, %c0_4, %c0_5, %c0_6] : memref<1x18x32x32xbf16, #tpu.memory_space<vmem>>, vector<1x1x32x32xbf16>
    tpu.vector_store %arg11[%c0_3, %c0_4, %c0_5, %c0_6], %1 {strides = array<i32>} : memref<1x18x32x32xbf16, #tpu.memory_space<vmem>>, vector<1x1x32x32xbf16>,
    %c0_7 = arith.constant 0 : index
    %c17 = arith.constant 17 : index
    %c0_8 = arith.constant 0 : index
    %c0_9 = arith.constant 0 : index
    %3 = vector.load %arg11[%c0_7, %c17, %c0_8, %c0_9] : memref<1x18x32x32xbf16, #tpu.memory_space<vmem>>, vector<1x1x32x32xbf16>
    tpu.vector_store %arg11[%c0_7, %c17, %c0_8, %c0_9], %1 {strides = array<i32>} : memref<1x18x32x32xbf16, #tpu.memory_space<vmem>>, vector<1x1x32x32xbf16>,
    %cst_10 = arith.constant 0.000000e+00 : bf16
    %4 = vector.broadcast %cst_10 : bf16 to vector<1x18x1x32xbf16>
    %c0_11 = arith.constant 0 : index
    %c0_12 = arith.constant 0 : index
    %c0_13 = arith.constant 0 : index
    %c0_14 = arith.constant 0 : index
    %5 = vector.load %arg11[%c0_11, %c0_12, %c0_13, %c0_14] : memref<1x18x32x32xbf16, #tpu.memory_space<vmem>>, vector<1x18x1x32xbf16>
    tpu.vector_store %arg11[%c0_11, %c0_12, %c0_13, %c0_14], %4 {strides = array<i32>} : memref<1x18x32x32xbf16, #tpu.memory_space<vmem>>, vector<1x18x1x32xbf16>,
    %c0_15 = arith.constant 0 : index
    %c0_16 = arith.constant 0 : index
    %c17_17 = arith.constant 17 : index
    %c0_18 = arith.constant 0 : index
    %6 = vector.load %arg11[%c0_15, %c0_16, %c17_17, %c0_18] : memref<1x18x32x32xbf16, #tpu.memory_space<vmem>>, vector<1x18x1x32xbf16>
    tpu.vector_store %arg11[%c0_15, %c0_16, %c17_17, %c0_18], %4 {strides = array<i32>} : memref<1x18x32x32xbf16, #tpu.memory_space<vmem>>, vector<1x18x1x32xbf16>,
    %cst_19 = arith.constant dense<0.000000e+00> : vector<1x16x32xf32>
    %7 = vector.multi_reduction <add>, %0, %cst_19 [2] : vector<1x16x16x32xf32> to vector<1x16x32xf32>
    %8 = vector.shape_cast %7 : vector<1x16x32xf32> to vector<1x16x1x32xf32>
    %9 = arith.mulf %0, %0 : vector<1x16x16x32xf32>
    %cst_20 = arith.constant dense<0.000000e+00> : vector<1x16x32xf32>
    %10 = vector.multi_reduction <add>, %9, %cst_20 [2] : vector<1x16x16x32xf32> to vector<1x16x32xf32>
    %11 = vector.shape_cast %10 : vector<1x16x32xf32> to vector<1x16x1x32xf32>
    %cst_21 = arith.constant 6.250000e-02 : f32
    %12 = vector.broadcast %cst_21 : f32 to vector<1x16x1x32xf32>
    %13 = arith.mulf %8, %12 : vector<1x16x1x32xf32>
    %cst_22 = arith.constant 6.250000e-02 : f32
    %14 = vector.broadcast %cst_22 : f32 to vector<1x16x1x32xf32>
    %15 = arith.mulf %11, %14 : vector<1x16x1x32xf32>
    %16 = arith.mulf %13, %13 : vector<1x16x1x32xf32>
    %17 = arith.subf %15, %16 : vector<1x16x1x32xf32>
    %18 = vector.broadcast %13 : vector<1x16x1x32xf32> to vector<1x16x16x32xf32>
    %19 = arith.subf %0, %18 : vector<1x16x16x32xf32>
    %cst_23 = arith.constant 9.99999974E-6 : f32
    %20 = vector.broadcast %cst_23 : f32 to vector<1x16x1x32xf32>
    %21 = arith.addf %17, %20 : vector<1x16x1x32xf32>
    %22 = math.rsqrt %21 : vector<1x16x1x32xf32>
    %23 = vector.broadcast %22 : vector<1x16x1x32xf32> to vector<1x16x16x32xf32>
    %24 = arith.mulf %19, %23 : vector<1x16x16x32xf32>
    %c0_24 = arith.constant 0 : index
    %c0_25 = arith.constant 0 : index
    %25 = vector.load %arg2[%c0_24, %c0_25] : memref<16x1xf32, #tpu.memory_space<vmem>>, vector<16x1xf32>
    %26 = vector.shape_cast %25 : vector<16x1xf32> to vector<1x1x16x1xf32>
    %27 = vector.broadcast %26 : vector<1x1x16x1xf32> to vector<1x16x16x32xf32>
    %28 = arith.mulf %24, %27 : vector<1x16x16x32xf32>
    %c0_26 = arith.constant 0 : index
    %c0_27 = arith.constant 0 : index
    %29 = vector.load %arg3[%c0_26, %c0_27] : memref<16x1xf32, #tpu.memory_space<vmem>>, vector<16x1xf32>
    %30 = vector.shape_cast %29 : vector<16x1xf32> to vector<1x1x16x1xf32>
    %31 = vector.broadcast %30 : vector<1x1x16x1xf32> to vector<1x16x16x32xf32>
    %32 = arith.addf %28, %31 : vector<1x16x16x32xf32>
    %cst_28 = arith.constant 5.000000e-01 : f32
    %33 = vector.broadcast %cst_28 : f32 to vector<1x16x16x32xf32>
    %34 = arith.mulf %33, %32 : vector<1x16x16x32xf32>
    %cst_29 = arith.constant 4.471500e-02 : f32
    %35 = vector.broadcast %cst_29 : f32 to vector<1x16x16x32xf32>
    %36 = arith.mulf %35, %32 : vector<1x16x16x32xf32>
    %37 = arith.mulf %36, %32 : vector<1x16x16x32xf32>
    %38 = arith.mulf %37, %32 : vector<1x16x16x32xf32>
    %39 = arith.addf %32, %38 : vector<1x16x16x32xf32>
    %cst_30 = arith.constant 0.797884583 : f32
    %40 = vector.broadcast %cst_30 : f32 to vector<1x16x16x32xf32>
    %41 = arith.mulf %40, %39 : vector<1x16x16x32xf32>
    %42 = math.tanh %41 : vector<1x16x16x32xf32>
    %cst_31 = arith.constant 1.000000e+00 : f32
    %43 = vector.broadcast %cst_31 : f32 to vector<1x16x16x32xf32>
    %44 = arith.addf %43, %42 : vector<1x16x16x32xf32>
    %45 = arith.mulf %34, %44 : vector<1x16x16x32xf32>
    %46 = arith.truncf %45 : vector<1x16x16x32xf32> to vector<1x16x16x32xbf16>
    %c0_32 = arith.constant 0 : index
    %c1 = arith.constant 1 : index
    %c1_33 = arith.constant 1 : index
    %c0_34 = arith.constant 0 : index
    %47 = vector.load %arg11[%c0_32, %c1, %c1_33, %c0_34] : memref<1x18x32x32xbf16, #tpu.memory_space<vmem>>, vector<1x16x16x32xbf16>
    tpu.vector_store %arg11[%c0_32, %c1, %c1_33, %c0_34], %46 {strides = array<i32>} : memref<1x18x32x32xbf16, #tpu.memory_space<vmem>>, vector<1x16x16x32xbf16>,
    %c0_35 = arith.constant 0 : index
    %c0_36 = arith.constant 0 : index
    %c0_37 = arith.constant 0 : index
    %c0_38 = arith.constant 0 : index
    %48 = vector.load %arg11[%c0_35, %c0_36, %c0_37, %c0_38] : memref<1x18x32x32xbf16, #tpu.memory_space<vmem>>, vector<1x18x32x32xbf16>
    %49 = vector.shape_cast %48 : vector<1x18x32x32xbf16> to vector<576x32xbf16>
    %c0_39 = arith.constant 0 : index
    %c0_40 = arith.constant 0 : index
    %50 = vector.load %arg4[%c0_39, %c0_40] : memref<32x288xbf16, #tpu.memory_space<vmem>>, vector<32x288xbf16>
    %cst_41 = arith.constant dense<0.000000e+00> : vector<576x288xf32>
    %51 = tpu.matmul %49, %50, %cst_41 {dimension_numbers = #tpu.dot_dimension_numbers<[1], [0], [0], [1], [0, 0, 1, 1], [], []>} : vector<576x32xbf16>, vector<32x288xbf16>, vector<576x288xf32> -> vector<576x288xf32>
    %52 = vector.shape_cast %51 : vector<576x288xf32> to vector<1x18x32x288xf32>
    %53 = vector.extract_strided_slice %52 {offsets = [0, 0, 0, 0], sizes = [1, 16, 16, 32], strides = [1, 1, 1, 1]} : vector<1x18x32x288xf32> to vector<1x16x16x32xf32>
    %54 = vector.extract_strided_slice %52 {offsets = [0, 1, 0, 32], sizes = [1, 16, 16, 32], strides = [1, 1, 1, 1]} : vector<1x18x32x288xf32> to vector<1x16x16x32xf32>
    %55 = arith.addf %53, %54 : vector<1x16x16x32xf32>
    %56 = vector.extract_strided_slice %52 {offsets = [0, 2, 0, 64], sizes = [1, 16, 16, 32], strides = [1, 1, 1, 1]} : vector<1x18x32x288xf32> to vector<1x16x16x32xf32>
    %57 = arith.addf %55, %56 : vector<1x16x16x32xf32>
    %58 = vector.extract_strided_slice %52 {offsets = [0, 0, 1, 96], sizes = [1, 16, 16, 32], strides = [1, 1, 1, 1]} : vector<1x18x32x288xf32> to vector<1x16x16x32xf32>
    %59 = arith.addf %57, %58 : vector<1x16x16x32xf32>
    %60 = vector.extract_strided_slice %52 {offsets = [0, 1, 1, 128], sizes = [1, 16, 16, 32], strides = [1, 1, 1, 1]} : vector<1x18x32x288xf32> to vector<1x16x16x32xf32>
    %61 = arith.addf %59, %60 : vector<1x16x16x32xf32>
    %62 = vector.extract_strided_slice %52 {offsets = [0, 2, 1, 160], sizes = [1, 16, 16, 32], strides = [1, 1, 1, 1]} : vector<1x18x32x288xf32> to vector<1x16x16x32xf32>
    %63 = arith.addf %61, %62 : vector<1x16x16x32xf32>
    %64 = vector.extract_strided_slice %52 {offsets = [0, 0, 2, 192], sizes = [1, 16, 16, 32], strides = [1, 1, 1, 1]} : vector<1x18x32x288xf32> to vector<1x16x16x32xf32>
    %65 = arith.addf %63, %64 : vector<1x16x16x32xf32>
    %66 = vector.extract_strided_slice %52 {offsets = [0, 1, 2, 224], sizes = [1, 16, 16, 32], strides = [1, 1, 1, 1]} : vector<1x18x32x288xf32> to vector<1x16x16x32xf32>
    %67 = arith.addf %65, %66 : vector<1x16x16x32xf32>
    %68 = vector.extract_strided_slice %52 {offsets = [0, 2, 2, 256], sizes = [1, 16, 16, 32], strides = [1, 1, 1, 1]} : vector<1x18x32x288xf32> to vector<1x16x16x32xf32>
    %69 = arith.addf %67, %68 : vector<1x16x16x32xf32>
    %c0_42 = arith.constant 0 : index
    %c0_43 = arith.constant 0 : index
    %70 = vector.load %arg5[%c0_42, %c0_43] : memref<1x32xf32, #tpu.memory_space<vmem>>, vector<1x32xf32>
    %71 = vector.shape_cast %70 : vector<1x32xf32> to vector<1x1x1x32xf32>
    %72 = vector.broadcast %71 : vector<1x1x1x32xf32> to vector<1x16x16x32xf32>
    %73 = arith.addf %69, %72 : vector<1x16x16x32xf32>
    %cst_44 = arith.constant dense<0.000000e+00> : vector<1x16x32xf32>
    %74 = vector.multi_reduction <add>, %73, %cst_44 [2] : vector<1x16x16x32xf32> to vector<1x16x32xf32>
    %75 = vector.shape_cast %74 : vector<1x16x32xf32> to vector<1x16x1x32xf32>
    %76 = arith.mulf %73, %73 : vector<1x16x16x32xf32>
    %cst_45 = arith.constant dense<0.000000e+00> : vector<1x16x32xf32>
    %77 = vector.multi_reduction <add>, %76, %cst_45 [2] : vector<1x16x16x32xf32> to vector<1x16x32xf32>
    %78 = vector.shape_cast %77 : vector<1x16x32xf32> to vector<1x16x1x32xf32>
    %cst_46 = arith.constant 6.250000e-02 : f32
    %79 = vector.broadcast %cst_46 : f32 to vector<1x16x1x32xf32>
    %80 = arith.mulf %75, %79 : vector<1x16x1x32xf32>
    %cst_47 = arith.constant 6.250000e-02 : f32
    %81 = vector.broadcast %cst_47 : f32 to vector<1x16x1x32xf32>
    %82 = arith.mulf %78, %81 : vector<1x16x1x32xf32>
    %83 = arith.mulf %80, %80 : vector<1x16x1x32xf32>
    %84 = arith.subf %82, %83 : vector<1x16x1x32xf32>
    %85 = vector.broadcast %80 : vector<1x16x1x32xf32> to vector<1x16x16x32xf32>
    %86 = arith.subf %73, %85 : vector<1x16x16x32xf32>
    %cst_48 = arith.constant 9.99999974E-6 : f32
    %87 = vector.broadcast %cst_48 : f32 to vector<1x16x1x32xf32>
    %88 = arith.addf %84, %87 : vector<1x16x1x32xf32>
    %89 = math.rsqrt %88 : vector<1x16x1x32xf32>
    %90 = vector.broadcast %89 : vector<1x16x1x32xf32> to vector<1x16x16x32xf32>
    %91 = arith.mulf %86, %90 : vector<1x16x16x32xf32>
    %c0_49 = arith.constant 0 : index
    %c0_50 = arith.constant 0 : index
    %92 = vector.load %arg6[%c0_49, %c0_50] : memref<16x1xf32, #tpu.memory_space<vmem>>, vector<16x1xf32>
    %93 = vector.shape_cast %92 : vector<16x1xf32> to vector<1x1x16x1xf32>
    %94 = vector.broadcast %93 : vector<1x1x16x1xf32> to vector<1x16x16x32xf32>
    %95 = arith.mulf %91, %94 : vector<1x16x16x32xf32>
    %c0_51 = arith.constant 0 : index
    %c0_52 = arith.constant 0 : index
    %96 = vector.load %arg7[%c0_51, %c0_52] : memref<16x1xf32, #tpu.memory_space<vmem>>, vector<16x1xf32>
    %97 = vector.shape_cast %96 : vector<16x1xf32> to vector<1x1x16x1xf32>
    %98 = vector.broadcast %97 : vector<1x1x16x1xf32> to vector<1x16x16x32xf32>
    %99 = arith.addf %95, %98 : vector<1x16x16x32xf32>
    %cst_53 = arith.constant 5.000000e-01 : f32
    %100 = vector.broadcast %cst_53 : f32 to vector<1x16x16x32xf32>
    %101 = arith.mulf %100, %99 : vector<1x16x16x32xf32>
    %cst_54 = arith.constant 4.471500e-02 : f32
    %102 = vector.broadcast %cst_54 : f32 to vector<1x16x16x32xf32>
    %103 = arith.mulf %102, %99 : vector<1x16x16x32xf32>
    %104 = arith.mulf %103, %99 : vector<1x16x16x32xf32>
    %105 = arith.mulf %104, %99 : vector<1x16x16x32xf32>
    %106 = arith.addf %99, %105 : vector<1x16x16x32xf32>
    %cst_55 = arith.constant 0.797884583 : f32
    %107 = vector.broadcast %cst_55 : f32 to vector<1x16x16x32xf32>
    %108 = arith.mulf %107, %106 : vector<1x16x16x32xf32>
    %109 = math.tanh %108 : vector<1x16x16x32xf32>
    %cst_56 = arith.constant 1.000000e+00 : f32
    %110 = vector.broadcast %cst_56 : f32 to vector<1x16x16x32xf32>
    %111 = arith.addf %110, %109 : vector<1x16x16x32xf32>
    %112 = arith.mulf %101, %111 : vector<1x16x16x32xf32>
    %113 = arith.truncf %112 : vector<1x16x16x32xf32> to vector<1x16x16x32xbf16>
    %c0_57 = arith.constant 0 : index
    %c1_58 = arith.constant 1 : index
    %c1_59 = arith.constant 1 : index
    %c0_60 = arith.constant 0 : index
    %114 = vector.load %arg11[%c0_57, %c1_58, %c1_59, %c0_60] : memref<1x18x32x32xbf16, #tpu.memory_space<vmem>>, vector<1x16x16x32xbf16>
    tpu.vector_store %arg11[%c0_57, %c1_58, %c1_59, %c0_60], %113 {strides = array<i32>} : memref<1x18x32x32xbf16, #tpu.memory_space<vmem>>, vector<1x16x16x32xbf16>,
    %c0_61 = arith.constant 0 : index
    %c0_62 = arith.constant 0 : index
    %c0_63 = arith.constant 0 : index
    %c0_64 = arith.constant 0 : index
    %115 = vector.load %arg11[%c0_61, %c0_62, %c0_63, %c0_64] : memref<1x18x32x32xbf16, #tpu.memory_space<vmem>>, vector<1x18x32x32xbf16>
    %116 = vector.shape_cast %115 : vector<1x18x32x32xbf16> to vector<576x32xbf16>
    %c0_65 = arith.constant 0 : index
    %c0_66 = arith.constant 0 : index
    %117 = vector.load %arg8[%c0_65, %c0_66] : memref<32x288xbf16, #tpu.memory_space<vmem>>, vector<32x288xbf16>
    %cst_67 = arith.constant dense<0.000000e+00> : vector<576x288xf32>
    %118 = tpu.matmul %116, %117, %cst_67 {dimension_numbers = #tpu.dot_dimension_numbers<[1], [0], [0], [1], [0, 0, 1, 1], [], []>} : vector<576x32xbf16>, vector<32x288xbf16>, vector<576x288xf32> -> vector<576x288xf32>
    %119 = vector.shape_cast %118 : vector<576x288xf32> to vector<1x18x32x288xf32>
    %120 = vector.extract_strided_slice %119 {offsets = [0, 0, 0, 0], sizes = [1, 16, 16, 32], strides = [1, 1, 1, 1]} : vector<1x18x32x288xf32> to vector<1x16x16x32xf32>
    %121 = vector.extract_strided_slice %119 {offsets = [0, 1, 0, 32], sizes = [1, 16, 16, 32], strides = [1, 1, 1, 1]} : vector<1x18x32x288xf32> to vector<1x16x16x32xf32>
    %122 = arith.addf %120, %121 : vector<1x16x16x32xf32>
    %123 = vector.extract_strided_slice %119 {offsets = [0, 2, 0, 64], sizes = [1, 16, 16, 32], strides = [1, 1, 1, 1]} : vector<1x18x32x288xf32> to vector<1x16x16x32xf32>
    %124 = arith.addf %122, %123 : vector<1x16x16x32xf32>
    %125 = vector.extract_strided_slice %119 {offsets = [0, 0, 1, 96], sizes = [1, 16, 16, 32], strides = [1, 1, 1, 1]} : vector<1x18x32x288xf32> to vector<1x16x16x32xf32>
    %126 = arith.addf %124, %125 : vector<1x16x16x32xf32>
    %127 = vector.extract_strided_slice %119 {offsets = [0, 1, 1, 128], sizes = [1, 16, 16, 32], strides = [1, 1, 1, 1]} : vector<1x18x32x288xf32> to vector<1x16x16x32xf32>
    %128 = arith.addf %126, %127 : vector<1x16x16x32xf32>
    %129 = vector.extract_strided_slice %119 {offsets = [0, 2, 1, 160], sizes = [1, 16, 16, 32], strides = [1, 1, 1, 1]} : vector<1x18x32x288xf32> to vector<1x16x16x32xf32>
    %130 = arith.addf %128, %129 : vector<1x16x16x32xf32>
    %131 = vector.extract_strided_slice %119 {offsets = [0, 0, 2, 192], sizes = [1, 16, 16, 32], strides = [1, 1, 1, 1]} : vector<1x18x32x288xf32> to vector<1x16x16x32xf32>
    %132 = arith.addf %130, %131 : vector<1x16x16x32xf32>
    %133 = vector.extract_strided_slice %119 {offsets = [0, 1, 2, 224], sizes = [1, 16, 16, 32], strides = [1, 1, 1, 1]} : vector<1x18x32x288xf32> to vector<1x16x16x32xf32>
    %134 = arith.addf %132, %133 : vector<1x16x16x32xf32>
    %135 = vector.extract_strided_slice %119 {offsets = [0, 2, 2, 256], sizes = [1, 16, 16, 32], strides = [1, 1, 1, 1]} : vector<1x18x32x288xf32> to vector<1x16x16x32xf32>
    %136 = arith.addf %134, %135 : vector<1x16x16x32xf32>
    %c0_68 = arith.constant 0 : index
    %c0_69 = arith.constant 0 : index
    %137 = vector.load %arg9[%c0_68, %c0_69] : memref<1x32xf32, #tpu.memory_space<vmem>>, vector<1x32xf32>
    %138 = vector.shape_cast %137 : vector<1x32xf32> to vector<1x1x1x32xf32>
    %139 = vector.broadcast %138 : vector<1x1x1x32xf32> to vector<1x16x16x32xf32>
    %140 = arith.addf %136, %139 : vector<1x16x16x32xf32>
    %141 = arith.addf %140, %0 : vector<1x16x16x32xf32>
    %c0_70 = arith.constant 0 : index
    %c0_71 = arith.constant 0 : index
    %c0_72 = arith.constant 0 : index
    %c0_73 = arith.constant 0 : index
    %142 = vector.load %arg10[%c0_70, %c0_71, %c0_72, %c0_73] : memref<1x16x16x32xf32, #tpu.memory_space<vmem>>, vector<1x16x16x32xf32>
    tpu.vector_store %arg10[%c0_70, %c0_71, %c0_72, %c0_73], %141 {strides = array<i32>} : memref<1x16x16x32xf32, #tpu.memory_space<vmem>>, vector<1x16x16x32xf32>,
    return
  }
  func.func @transform_0(%arg0: i32) -> (i32, i32, i32, i32) {
    %c0_i32 = arith.constant 0 : i32
    %c0_i32_0 = arith.constant 0 : i32
    %c0_i32_1 = arith.constant 0 : i32
    %c0_i32_2 = arith.constant 0 : i32
    return %arg0, %c0_i32, %c0_i32_0, %c0_i32_1 : i32, i32, i32, i32
  }
  func.func @transform_1(%arg0: i32) -> (i32, i32) {
    %c0_i32 = arith.constant 0 : i32
    %c0_i32_0 = arith.constant 0 : i32
    %c0_i32_1 = arith.constant 0 : i32
    return %c0_i32, %c0_i32_0 : i32, i32
  }
  func.func @transform_2(%arg0: i32) -> (i32, i32) {
    %c0_i32 = arith.constant 0 : i32
    %c0_i32_0 = arith.constant 0 : i32
    %c0_i32_1 = arith.constant 0 : i32
    return %c0_i32, %c0_i32_0 : i32, i32
  }
  func.func @transform_3(%arg0: i32) -> (i32, i32) {
    %c0_i32 = arith.constant 0 : i32
    %c0_i32_0 = arith.constant 0 : i32
    %c0_i32_1 = arith.constant 0 : i32
    return %c0_i32, %c0_i32_0 : i32, i32
  }
  func.func @transform_4(%arg0: i32) -> (i32, i32) {
    %c0_i32 = arith.constant 0 : i32
    %c0_i32_0 = arith.constant 0 : i32
    %c0_i32_1 = arith.constant 0 : i32
    return %c0_i32, %c0_i32_0 : i32, i32
  }
  func.func @transform_5(%arg0: i32) -> (i32, i32) {
    %c0_i32 = arith.constant 0 : i32
    %c0_i32_0 = arith.constant 0 : i32
    %c0_i32_1 = arith.constant 0 : i32
    return %c0_i32, %c0_i32_0 : i32, i32
  }
  func.func @transform_6(%arg0: i32) -> (i32, i32) {
    %c0_i32 = arith.constant 0 : i32
    %c0_i32_0 = arith.constant 0 : i32
    %c0_i32_1 = arith.constant 0 : i32
    return %c0_i32, %c0_i32_0 : i32, i32
  }
  func.func @transform_7(%arg0: i32) -> (i32, i32) {
    %c0_i32 = arith.constant 0 : i32
    %c0_i32_0 = arith.constant 0 : i32
    %c0_i32_1 = arith.constant 0 : i32
    return %c0_i32, %c0_i32_0 : i32, i32
  }
  func.func @transform_8(%arg0: i32) -> (i32, i32) {
    %c0_i32 = arith.constant 0 : i32
    %c0_i32_0 = arith.constant 0 : i32
    %c0_i32_1 = arith.constant 0 : i32
    return %c0_i32, %c0_i32_0 : i32, i32
  }
  func.func @transform_9(%arg0: i32) -> (i32, i32, i32, i32) {
    %c0_i32 = arith.constant 0 : i32
    %c0_i32_0 = arith.constant 0 : i32
    %c0_i32_1 = arith.constant 0 : i32
    %c0_i32_2 = arith.constant 0 : i32
    return %arg0, %c0_i32, %c0_i32_0, %c0_i32_1 : i32, i32, i32, i32
  }
}

</mosaic_0001>

<llo_original>
// kernel: residual_cnn_forward.1
$region0: #{residual_cnn_forward.1}
  #allocation0 [shape = 'u32[]', space=smem, size = 0x4, offset = 0x4, fixed_abs, tag = 'smem constant byte address 0x4 - core index']
  #allocation1 [shape = 'u32[144,128]{1,0:T(1,128)}', space=vmem, size = 0x12000, scoped, tag = 'internal scratch']
  #allocation2 [shape = 'bf16[1,18,32,32]{3,2,1,0:T(16,128)(2,1)}', space=vmem, size = 0x24000, scoped, tag = 'scratch operand']
  %s0 = inlined_call_operand.vmem [shape: f32[2,16,16,32], index: 0, kind: input, shape index: {}]
  %s1 = inlined_call_operand.vmem [shape: f32[16,1], index: 1, kind: input, shape index: {}]
  %s2 = inlined_call_operand.vmem [shape: f32[16,1], index: 2, kind: input, shape index: {}]
  %s3 = inlined_call_operand.vmem [shape: bf16[32,288], index: 3, kind: input, shape index: {}]
  %s4 = inlined_call_operand.vmem [shape: f32[1,32], index: 4, kind: input, shape index: {}]
  %s5 = inlined_call_operand.vmem [shape: f32[16,1], index: 5, kind: input, shape index: {}]
  %s6 = inlined_call_operand.vmem [shape: f32[16,1], index: 6, kind: input, shape index: {}]
  %s7 = inlined_call_operand.vmem [shape: bf16[32,288], index: 7, kind: input, shape index: {}]
  %s8 = inlined_call_operand.vmem [shape: f32[1,32], index: 8, kind: input, shape index: {}]
  %s9 = inlined_call_operand.vmem [shape: f32[2,16,16,32], index: 9, kind: output, shape index: {}]
  %s10 = sld [smem:[#allocation0]]
  $region69: #{residual_cnn_forward.1} parent=0
    _
  %s12 = ssub.s32 1, %s10
  %s13 = scalar_select 0, %s12, %s10
  loop: start=0, step=1, limit=4
  $region2: #{residual_cnn_forward.1} parent=0 // loop_pre_header
    _
  $region3: #{residual_cnn_forward.1} parent=0 // loop_header
    %s15 = sphi 0, %s19
    %p16 = scmp.ge.s32.totalorder %s15, 4
    %s25 = sphi 0, %s27
    %s28 = sphi 0, %s25
    %s29 = sphi 0, %s28
    %s45 = sphi 0, %s29
    %s49 = sphi 0, %s49
    %s51 = sphi 0, %s49
    %s52 = sphi 0, %s51
    %s66 = sphi 0, %s52
    %s70 = sphi 0, %s70
    %s72 = sphi 0, %s70
    %s73 = sphi 0, %s72
    %s87 = sphi 0, %s73
    %s91 = sphi 0, %s91
    %s93 = sphi 0, %s91
    %s94 = sphi 0, %s93
    %s108 = sphi 0, %s94
    %s112 = sphi 0, %s112
    %s114 = sphi 0, %s112
    %s115 = sphi 0, %s114
    %s129 = sphi 0, %s115
    %s133 = sphi 0, %s133
    %s135 = sphi 0, %s133
    %s136 = sphi 0, %s135
    %s150 = sphi 0, %s136
    %s154 = sphi 0, %s154
    %s156 = sphi 0, %s154
    %s157 = sphi 0, %s156
    %s171 = sphi 0, %s157
    %s175 = sphi 0, %s175
    %s177 = sphi 0, %s175
    %s178 = sphi 0, %s177
    %s192 = sphi 0, %s178
    %s196 = sphi 0, %s196
    %s198 = sphi 0, %s196
    %s199 = sphi 0, %s198
    %s213 = sphi 0, %s199
    %s219 = sphi 0, %s221
    %s222 = sphi 0, %s219
    %s223 = sphi 0, %s222
    %s239 = sphi 0, %s223
  $region4: #{residual_cnn_forward.1} parent=0 // loop_header_branch
    %18 = sbr.rel (%p16) target = $region8
  $region5: #{residual_cnn_forward.1} parent=0 // loop_body
    %s20 = ssub.s32 %s15, 1
    %s21 = ssub.s32 %s15, 2
    %s22 = sadd.s32 %s15, 1
    %s23 = ssub.s32 %s15, %s22
    %p24 = scmp.eq.s32.totalorder %s23, 0
    %s26 = sadd.s32 %s25, 1
    %s27 = scalar_select %p24, %s25, %s26
    %p30 = pneg %p24
    %p31 = scmp.eq.s32.totalorder %s15, 1
    %p32 = por %p30, %p31
    %p33 = scmp.ne.s32.totalorder %s25, %s28
    %p34 = scmp.eq.s32.totalorder %s15, 0
    %p35 = por %p33, %p34
    %p36 = scmp.ne.s32.totalorder %s25, %s28
    %p37 = scmp.eq.s32.totalorder %s20, 1
    %p38 = por %p36, %p37
    %p39 = scmp.ne.s32.totalorder %s28, %s29
    %p40 = scmp.eq.s32.totalorder %s20, 0
    %p41 = por %p39, %p40
    %p42 = scmp.ne.s32.totalorder %s28, %s29
    %p43 = scmp.eq.s32.totalorder %s21, 1
    %p44 = por %p42, %p43
    %p46 = scmp.ne.s32.totalorder %s29, %s45
    %p47 = scmp.eq.s32.totalorder %s21, 0
    %p48 = por %p46, %p47
    %s50 = sadd.s32 %s49, 1
    %p53 = scmp.eq.s32.totalorder %s15, 1
    %p54 = scmp.ne.s32.totalorder %s49, %s51
    %p55 = scmp.eq.s32.totalorder %s15, 0
    %p56 = por %p54, %p55
    %p57 = scmp.ne.s32.totalorder %s49, %s51
    %p58 = scmp.eq.s32.totalorder %s20, 1
    %p59 = por %p57, %p58
    %p60 = scmp.ne.s32.totalorder %s51, %s52
    %p61 = scmp.eq.s32.totalorder %s20, 0
    %p62 = por %p60, %p61
    %p63 = scmp.ne.s32.totalorder %s51, %s52
    %p64 = scmp.eq.s32.totalorder %s21, 1
    %p65 = por %p63, %p64
    %p67 = scmp.ne.s32.totalorder %s52, %s66
    %p68 = scmp.eq.s32.totalorder %s21, 0
    %p69 = por %p67, %p68
    %s71 = sadd.s32 %s70, 1
    %p74 = scmp.eq.s32.totalorder %s15, 1
    %p75 = scmp.ne.s32.totalorder %s70, %s72
    %p76 = scmp.eq.s32.totalorder %s15, 0
    %p77 = por %p75, %p76
    %p78 = scmp.ne.s32.totalorder %s70, %s72
    %p79 = scmp.eq.s32.totalorder %s20, 1
    %p80 = por %p78, %p79
    %p81 = scmp.ne.s32.totalorder %s72, %s73
    %p82 = scmp.eq.s32.totalorder %s20, 0
    %p83 = por %p81, %p82
    %p84 = scmp.ne.s32.totalorder %s72, %s73
    %p85 = scmp.eq.s32.totalorder %s21, 1
    %p86 = por %p84, %p85
    %p88 = scmp.ne.s32.totalorder %s73, %s87
    %p89 = scmp.eq.s32.totalorder %s21, 0
    %p90 = por %p88, %p89
    %s92 = sadd.s32 %s91, 1
    %p95 = scmp.eq.s32.totalorder %s15, 1
    %p96 = scmp.ne.s32.totalorder %s91, %s93
    %p97 = scmp.eq.s32.totalorder %s15, 0
    %p98 = por %p96, %p97
    %p99 = scmp.ne.s32.totalorder %s91, %s93
    %p100 = scmp.eq.s32.totalorder %s20, 1
    %p101 = por %p99, %p100
    %p102 = scmp.ne.s32.totalorder %s93, %s94
    %p103 = scmp.eq.s32.totalorder %s20, 0
    %p104 = por %p102, %p103
    %p105 = scmp.ne.s32.totalorder %s93, %s94
    %p106 = scmp.eq.s32.totalorder %s21, 1
    %p107 = por %p105, %p106
    %p109 = scmp.ne.s32.totalorder %s94, %s108
    %p110 = scmp.eq.s32.totalorder %s21, 0
    %p111 = por %p109, %p110
    %s113 = sadd.s32 %s112, 1
    %p116 = scmp.eq.s32.totalorder %s15, 1
    %p117 = scmp.ne.s32.totalorder %s112, %s114
    %p118 = scmp.eq.s32.totalorder %s15, 0
    %p119 = por %p117, %p118
    %p120 = scmp.ne.s32.totalorder %s112, %s114
    %p121 = scmp.eq.s32.totalorder %s20, 1
    %p122 = por %p120, %p121
    %p123 = scmp.ne.s32.totalorder %s114, %s115
    %p124 = scmp.eq.s32.totalorder %s20, 0
    %p125 = por %p123, %p124
    %p126 = scmp.ne.s32.totalorder %s114, %s115
    %p127 = scmp.eq.s32.totalorder %s21, 1
    %p128 = por %p126, %p127
    %p130 = scmp.ne.s32.totalorder %s115, %s129
    %p131 = scmp.eq.s32.totalorder %s21, 0
    %p132 = por %p130, %p131
    %s134 = sadd.s32 %s133, 1
    %p137 = scmp.eq.s32.totalorder %s15, 1
    %p138 = scmp.ne.s32.totalorder %s133, %s135
    %p139 = scmp.eq.s32.totalorder %s15, 0
    %p140 = por %p138, %p139
    %p141 = scmp.ne.s32.totalorder %s133, %s135
    %p142 = scmp.eq.s32.totalorder %s20, 1
    %p143 = por %p141, %p142
    %p144 = scmp.ne.s32.totalorder %s135, %s136
    %p145 = scmp.eq.s32.totalorder %s20, 0
    %p146 = por %p144, %p145
    %p147 = scmp.ne.s32.totalorder %s135, %s136
    %p148 = scmp.eq.s32.totalorder %s21, 1
    %p149 = por %p147, %p148
    %p151 = scmp.ne.s32.totalorder %s136, %s150
    %p152 = scmp.eq.s32.totalorder %s21, 0
    %p153 = por %p151, %p152
    %s155 = sadd.s32 %s154, 1
    %p158 = scmp.eq.s32.totalorder %s15, 1
    %p159 = scmp.ne.s32.totalorder %s154, %s156
    %p160 = scmp.eq.s32.totalorder %s15, 0
    %p161 = por %p159, %p160
    %p162 = scmp.ne.s32.totalorder %s154, %s156
    %p163 = scmp.eq.s32.totalorder %s20, 1
    %p164 = por %p162, %p163
    %p165 = scmp.ne.s32.totalorder %s156, %s157
    %p166 = scmp.eq.s32.totalorder %s20, 0
    %p167 = por %p165, %p166
    %p168 = scmp.ne.s32.totalorder %s156, %s157
    %p169 = scmp.eq.s32.totalorder %s21, 1
    %p170 = por %p168, %p169
    %p172 = scmp.ne.s32.totalorder %s157, %s171
    %p173 = scmp.eq.s32.totalorder %s21, 0
    %p174 = por %p172, %p173
    %s176 = sadd.s32 %s175, 1
    %p179 = scmp.eq.s32.totalorder %s15, 1
    %p180 = scmp.ne.s32.totalorder %s175, %s177
    %p181 = scmp.eq.s32.totalorder %s15, 0
    %p182 = por %p180, %p181
    %p183 = scmp.ne.s32.totalorder %s175, %s177
    %p184 = scmp.eq.s32.totalorder %s20, 1
    %p185 = por %p183, %p184
    %p186 = scmp.ne.s32.totalorder %s177, %s178
    %p187 = scmp.eq.s32.totalorder %s20, 0
    %p188 = por %p186, %p187
    %p189 = scmp.ne.s32.totalorder %s177, %s178
    %p190 = scmp.eq.s32.totalorder %s21, 1
    %p191 = por %p189, %p190
    %p193 = scmp.ne.s32.totalorder %s178, %s192
    %p194 = scmp.eq.s32.totalorder %s21, 0
    %p195 = por %p193, %p194
    %s197 = sadd.s32 %s196, 1
    %p200 = scmp.eq.s32.totalorder %s15, 1
    %p201 = scmp.ne.s32.totalorder %s196, %s198
    %p202 = scmp.eq.s32.totalorder %s15, 0
    %p203 = por %p201, %p202
    %p204 = scmp.ne.s32.totalorder %s196, %s198
    %p205 = scmp.eq.s32.totalorder %s20, 1
    %p206 = por %p204, %p205
    %p207 = scmp.ne.s32.totalorder %s198, %s199
    %p208 = scmp.eq.s32.totalorder %s20, 0
    %p209 = por %p207, %p208
    %p210 = scmp.ne.s32.totalorder %s198, %s199
    %p211 = scmp.eq.s32.totalorder %s21, 1
    %p212 = por %p210, %p211
    %p214 = scmp.ne.s32.totalorder %s199, %s213
    %p215 = scmp.eq.s32.totalorder %s21, 0
    %p216 = por %p214, %p215
    %s217 = ssub.s32 %s15, %s22
    %p218 = scmp.eq.s32.totalorder %s217, 0
    %s220 = sadd.s32 %s219, 1
    %s221 = scalar_select %p218, %s219, %s220
    %p224 = pneg %p218
    %p225 = scmp.eq.s32.totalorder %s15, 1
    %p226 = por %p224, %p225
    %p227 = scmp.ne.s32.totalorder %s219, %s222
    %p228 = scmp.eq.s32.totalorder %s15, 0
    %p229 = por %p227, %p228
    %p230 = scmp.ne.s32.totalorder %s219, %s222
    %p231 = scmp.eq.s32.totalorder %s20, 1
    %p232 = por %p230, %p231
    %p233 = scmp.ne.s32.totalorder %s222, %s223
    %p234 = scmp.eq.s32.totalorder %s20, 0
    %p235 = por %p233, %p234
    %p236 = scmp.ne.s32.totalorder %s222, %s223
    %p237 = scmp.eq.s32.totalorder %s21, 1
    %p238 = por %p236, %p237
    %p240 = scmp.ne.s32.totalorder %s223, %s239
    %p241 = scmp.eq.s32.totalorder %s21, 0
    %p242 = por %p240, %p241
    %p243 = scmp.le.s32.totalorder 1, %s15
    %p244 = scmp.lt.s32.totalorder %s15, 3
    %p245 = pnand %p243, %p244
    %p246 = pneg %p245
    // Predicated region
    $region9: #{residual_cnn_forward.1} parent=5 // pred_check
      _
    $region10: #{residual_cnn_forward.1} parent=5 // pred_check_branch
      %248 = sbr.rel (%p245) target = $region12
    $region11: #{residual_cnn_forward.1} parent=5 // pred_region
      %s249 = ssub.s32 %s15, 1
      // Predicated region
      $region13: #{residual_cnn_forward.1} parent=11 // pred_check
        %p250 = pneg %p62
      $region14: #{residual_cnn_forward.1} parent=11 // pred_check_branch
        %252 = sbr.rel (%p250) target = $region16
      $region15: #{residual_cnn_forward.1} parent=11 // pred_region
        _
      $region16: #{residual_cnn_forward.1} parent=11 // pred_fallthru
        _
      // Predicated region
      $region17: #{residual_cnn_forward.1} parent=11 // pred_check
        %p253 = pneg %p83
      $region18: #{residual_cnn_forward.1} parent=11 // pred_check_branch
        %255 = sbr.rel (%p253) target = $region20
      $region19: #{residual_cnn_forward.1} parent=11 // pred_region
        _
      $region20: #{residual_cnn_forward.1} parent=11 // pred_fallthru
        _
      // Predicated region
      $region21: #{residual_cnn_forward.1} parent=11 // pred_check
        %p256 = pneg %p104
      $region22: #{residual_cnn_forward.1} parent=11 // pred_check_branch
        %258 = sbr.rel (%p256) target = $region24
      $region23: #{residual_cnn_forward.1} parent=11 // pred_region
        _
      $region24: #{residual_cnn_forward.1} parent=11 // pred_fallthru
        _
      // Predicated region
      $region25: #{residual_cnn_forward.1} parent=11 // pred_check
        %p259 = pneg %p125
      $region26: #{residual_cnn_forward.1} parent=11 // pred_check_branch
        %261 = sbr.rel (%p259) target = $region28
      $region27: #{residual_cnn_forward.1} parent=11 // pred_region
        _
      $region28: #{residual_cnn_forward.1} parent=11 // pred_fallthru
        _
      // Predicated region
      $region29: #{residual_cnn_forward.1} parent=11 // pred_check
        %p262 = pneg %p146
      $region30: #{residual_cnn_forward.1} parent=11 // pred_check_branch
        %264 = sbr.rel (%p262) target = $region32
      $region31: #{residual_cnn_forward.1} parent=11 // pred_region
        _
      $region32: #{residual_cnn_forward.1} parent=11 // pred_fallthru
        _
      // Predicated region
      $region33: #{residual_cnn_forward.1} parent=11 // pred_check
        %p265 = pneg %p167
      $region34: #{residual_cnn_forward.1} parent=11 // pred_check_branch
        %267 = sbr.rel (%p265) target = $region36
      $region35: #{residual_cnn_forward.1} parent=11 // pred_region
        _
      $region36: #{residual_cnn_forward.1} parent=11 // pred_fallthru
        _
      // Predicated region
      $region37: #{residual_cnn_forward.1} parent=11 // pred_check
        %p268 = pneg %p188
      $region38: #{residual_cnn_forward.1} parent=11 // pred_check_branch
        %270 = sbr.rel (%p268) target = $region40
      $region39: #{residual_cnn_forward.1} parent=11 // pred_region
        _
      $region40: #{residual_cnn_forward.1} parent=11 // pred_fallthru
        _
      // Predicated region
      $region41: #{residual_cnn_forward.1} parent=11 // pred_check
        %p271 = pneg %p209
      $region42: #{residual_cnn_forward.1} parent=11 // pred_check_branch
        %273 = sbr.rel (%p271) target = $region44
      $region43: #{residual_cnn_forward.1} parent=11 // pred_region
        _
      $region44: #{residual_cnn_forward.1} parent=11 // pred_fallthru
        _
    $region12: #{residual_cnn_forward.1} parent=5 // pred_fallthru
      _
    %p274 = scmp.lt.s32.totalorder %s15, 2
    // Predicated region
    $region45: #{residual_cnn_forward.1} parent=5 // pred_check
      %p275 = pneg %p274
    $region46: #{residual_cnn_forward.1} parent=5 // pred_check_branch
      %277 = sbr.rel (%p275) target = $region48
    $region47: #{residual_cnn_forward.1} parent=5 // pred_region
      // Predicated region
      $region49: #{residual_cnn_forward.1} parent=47 // pred_check
        %p278 = pneg %p35
      $region50: #{residual_cnn_forward.1} parent=47 // pred_check_branch
        %280 = sbr.rel (%p278) target = $region52
      $region51: #{residual_cnn_forward.1} parent=47 // pred_region
        %p281 = scmp.lt.s32.totalorder %s15, 1
        %s282 = scalar_select %p281, %s15, 1
        %s283 = smul.addr %s282, 32
        %s284 = smul.addr %s283, 8
        %s285 = scalar_lea.vmem %s0, %s284
      $region52: #{residual_cnn_forward.1} parent=47 // pred_fallthru
        _
    $region48: #{residual_cnn_forward.1} parent=5 // pred_fallthru
      _
    %p286 = scmp.le.s32.totalorder 1, %s15
    %p287 = scmp.lt.s32.totalorder %s15, 3
    %p288 = pnand %p286, %p287
    %p289 = pneg %p288
    // Predicated region
    $region53: #{residual_cnn_forward.1} parent=5 // pred_check
      _
    $region54: #{residual_cnn_forward.1} parent=5 // pred_check_branch
      %291 = sbr.rel (%p288) target = $region56
    $region55: #{residual_cnn_forward.1} parent=5 // pred_region
      %s292 = ssub.s32 %s15, 1
      %p293 = scmp.lt.s32.totalorder %s20, 1
      %s294 = scalar_select %p293, %s20, 1
      %s295 = smul.addr %s294, 32
      %s296 = smul.addr %s295, 8
      %s297 = scalar_lea.vmem %s0, %s296
      %p298 = pneg %p41
      %p299 = pneg %p38
      %p300 = pneg %p62
      %p301 = pneg %p59
      %p302 = pneg %p83
      %p303 = pneg %p80
      %p304 = pneg %p104
      %p305 = pneg %p101
      %p306 = pneg %p125
      %p307 = pneg %p122
      %p308 = pneg %p146
      %p309 = pneg %p143
      %p310 = pneg %p167
      %p311 = pneg %p164
      %p312 = pneg %p188
      %p313 = pneg %p185
      %p314 = pneg %p209
      %p315 = pneg %p206
      %p316 = pneg %p235
      %p317 = pneg %p232
      %p318 = scmp.lt.s32.totalorder %s20, 1
      %s319 = scalar_select %p318, %s20, 1
      %s320 = smul.addr %s319, 32
      %s321 = smul.addr %s320, 8
      %s322 = scalar_lea.vmem %s9, %s321
      %p323 = scmp.lt.s32.totalorder %s20, 1
      %s324 = scalar_select %p323, %s20, 1
      %s325 = smul.addr %s324, 32
      %s326 = smul.addr %s325, 8
      %s327 = scalar_lea.vmem %s0, %s326
      %p328 = scmp.lt.s32.totalorder %s20, 1
      %s329 = scalar_select %p328, %s20, 1
      %s330 = smul.addr %s329, 32
      %s331 = smul.addr %s330, 8
      %s332 = scalar_lea.vmem %s9, %s331
      %v334 = vld [vmem:[%s327] sm:$0xff]
      %v335 = vld [vmem:[%s327 + $0x8] sm:$0xff]
      %v336 = vld [vmem:[%s327 + $0x10] sm:$0xff]
      %v337 = vld [vmem:[%s327 + $0x18] sm:$0xff]
      %v338 = vld [vmem:[%s327 + $0x20] sm:$0xff]
      %v339 = vld [vmem:[%s327 + $0x28] sm:$0xff]
      %v340 = vld [vmem:[%s327 + $0x30] sm:$0xff]
      %v341 = vld [vmem:[%s327 + $0x38] sm:$0xff]
      %v342 = vld [vmem:[%s327 + $0x40] sm:$0xff]
      %v343 = vld [vmem:[%s327 + $0x48] sm:$0xff]
      %v344 = vld [vmem:[%s327 + $0x50] sm:$0xff]
      %v345 = vld [vmem:[%s327 + $0x58] sm:$0xff]
      %v346 = vld [vmem:[%s327 + $0x60] sm:$0xff]
      %v347 = vld [vmem:[%s327 + $0x68] sm:$0xff]
      %v348 = vld [vmem:[%s327 + $0x70] sm:$0xff]
      %v349 = vld [vmem:[%s327 + $0x78] sm:$0xff]
      %v350 = vld [vmem:[%s327 + $0x80] sm:$0xff]
      %v351 = vld [vmem:[%s327 + $0x88] sm:$0xff]
      %v352 = vld [vmem:[%s327 + $0x90] sm:$0xff]
      %v353 = vld [vmem:[%s327 + $0x98] sm:$0xff]
      %v354 = vld [vmem:[%s327 + $0xa0] sm:$0xff]
      %v355 = vld [vmem:[%s327 + $0xa8] sm:$0xff]
      %v356 = vld [vmem:[%s327 + $0xb0] sm:$0xff]
      %v357 = vld [vmem:[%s327 + $0xb8] sm:$0xff]
      %v358 = vld [vmem:[%s327 + $0xc0] sm:$0xff]
      %v359 = vld [vmem:[%s327 + $0xc8] sm:$0xff]
      %v360 = vld [vmem:[%s327 + $0xd0] sm:$0xff]
      %v361 = vld [vmem:[%s327 + $0xd8] sm:$0xff]
      %v362 = vld [vmem:[%s327 + $0xe0] sm:$0xff]
      %v363 = vld [vmem:[%s327 + $0xe8] sm:$0xff]
      %v364 = vld [vmem:[%s327 + $0xf0] sm:$0xff]
      %v365 = vld [vmem:[%s327 + $0xf8] sm:$0xff]
      %vm366 = vcmask 261120
      %367 = vst.msk [vmem:[#allocation2] sm:$0xff] %vm366, 0
      %368 = vst.msk [vmem:[#allocation2 + $0x8] sm:$0xff] %vm366, 0
      %s369 = scalar_lea.vmem [#allocation2], 272
      %370 = vst.msk [vmem:[%s369] sm:$0xff] %vm366, 0
      %371 = vst.msk [vmem:[%s369 + $0x8] sm:$0xff] %vm366, 0
      %vm372 = vcmask 253952
      %vm373 = vsmask.f32 256
      %vm374 = vmand %vm372, %vm373
      %v375 = vld [vmem:[#allocation2] sm:$0x1]
      %v376 = vsel %vm374, 0, %v375
      %377 = vst [vmem:[#allocation2] sm:$0x1] %v376
      %v378 = vld [vmem:[#allocation2 + $0x10] sm:$0x1]
      %v379 = vsel %vm374, 0, %v378
      %380 = vst [vmem:[#allocation2 + $0x10] sm:$0x1] %v379
      %v381 = vld [vmem:[#allocation2 + $0x20] sm:$0x1]
      %v382 = vsel %vm374, 0, %v381
      %383 = vst [vmem:[#allocation2 + $0x20] sm:$0x1] %v382
      %v384 = vld [vmem:[#allocation2 + $0x30] sm:$0x1]
      %v385 = vsel %vm374, 0, %v384
      %386 = vst [vmem:[#allocation2 + $0x30] sm:$0x1] %v385
      %v387 = vld [vmem:[#allocation2 + $0x40] sm:$0x1]
      %v388 = vsel %vm374, 0, %v387
      %389 = vst [vmem:[#allocation2 + $0x40] sm:$0x1] %v388
      %v390 = vld [vmem:[#allocation2 + $0x50] sm:$0x1]
      %v391 = vsel %vm374, 0, %v390
      %392 = vst [vmem:[#allocation2 + $0x50] sm:$0x1] %v391
      %v393 = vld [vmem:[#allocation2 + $0x60] sm:$0x1]
      %v394 = vsel %vm374, 0, %v393
      %395 = vst [vmem:[#allocation2 + $0x60] sm:$0x1] %v394
      %v396 = vld [vmem:[#allocation2 + $0x70] sm:$0x1]
      %v397 = vsel %vm374, 0, %v396
      %398 = vst [vmem:[#allocation2 + $0x70] sm:$0x1] %v397
      %v399 = vld [vmem:[#allocation2 + $0x80] sm:$0x1]
      %v400 = vsel %vm374, 0, %v399
      %401 = vst [vmem:[#allocation2 + $0x80] sm:$0x1] %v400
      %v402 = vld [vmem:[#allocation2 + $0x90] sm:$0x1]
      %v403 = vsel %vm374, 0, %v402
      %404 = vst [vmem:[#allocation2 + $0x90] sm:$0x1] %v403
      %v405 = vld [vmem:[#allocation2 + $0xa0] sm:$0x1]
      %v406 = vsel %vm374, 0, %v405
      %407 = vst [vmem:[#allocation2 + $0xa0] sm:$0x1] %v406
      %v408 = vld [vmem:[#allocation2 + $0xb0] sm:$0x1]
      %v409 = vsel %vm374, 0, %v408
      %410 = vst [vmem:[#allocation2 + $0xb0] sm:$0x1] %v409
      %v411 = vld [vmem:[#allocation2 + $0xc0] sm:$0x1]
      %v412 = vsel %vm374, 0, %v411
      %413 = vst [vmem:[#allocation2 + $0xc0] sm:$0x1] %v412
      %v414 = vld [vmem:[#allocation2 + $0xd0] sm:$0x1]
      %v415 = vsel %vm374, 0, %v414
      %416 = vst [vmem:[#allocation2 + $0xd0] sm:$0x1] %v415
      %v417 = vld [vmem:[#allocation2 + $0xe0] sm:$0x1]
      %v418 = vsel %vm374, 0, %v417
      %419 = vst [vmem:[#allocation2 + $0xe0] sm:$0x1] %v418
      %v420 = vld [vmem:[#allocation2 + $0xf0] sm:$0x1]
      %v421 = vsel %vm374, 0, %v420
      %422 = vst [vmem:[#allocation2 + $0xf0] sm:$0x1] %v421
      %v423 = vld [vmem:[#allocation2 + $0x100] sm:$0x1]
      %v424 = vsel %vm374, 0, %v423
      %425 = vst [vmem:[#allocation2 + $0x100] sm:$0x1] %v424
      %v426 = vld [vmem:[#allocation2 + $0x110] sm:$0x1]
      %v427 = vsel %vm374, 0, %v426
      %428 = vst [vmem:[#allocation2 + $0x110] sm:$0x1] %v427
      %vm429 = vsmask.f32 7938
      %vm430 = vmand %vm372, %vm429
      %v431 = vld [vmem:[#allocation2 + $0x8] sm:$0x1]
      %v432 = vsel %vm430, 0, %v431
      %433 = vst [vmem:[#allocation2 + $0x8] sm:$0x1] %v432
      %v434 = vld [vmem:[#allocation2 + $0x18] sm:$0x1]
      %v435 = vsel %vm430, 0, %v434
      %436 = vst [vmem:[#allocation2 + $0x18] sm:$0x1] %v435
      %v437 = vld [vmem:[#allocation2 + $0x28] sm:$0x1]
      %v438 = vsel %vm430, 0, %v437
      %439 = vst [vmem:[#allocation2 + $0x28] sm:$0x1] %v438
      %v440 = vld [vmem:[#allocation2 + $0x38] sm:$0x1]
      %v441 = vsel %vm430, 0, %v440
      %442 = vst [vmem:[#allocation2 + $0x38] sm:$0x1] %v441
      %v443 = vld [vmem:[#allocation2 + $0x48] sm:$0x1]
      %v444 = vsel %vm430, 0, %v443
      %445 = vst [vmem:[#allocation2 + $0x48] sm:$0x1] %v444
      %v446 = vld [vmem:[#allocation2 + $0x58] sm:$0x1]
      %v447 = vsel %vm430, 0, %v446
      %448 = vst [vmem:[#allocation2 + $0x58] sm:$0x1] %v447
      %v449 = vld [vmem:[#allocation2 + $0x68] sm:$0x1]
      %v450 = vsel %vm430, 0, %v449
      %451 = vst [vmem:[#allocation2 + $0x68] sm:$0x1] %v450
      %v452 = vld [vmem:[#allocation2 + $0x78] sm:$0x1]
      %v453 = vsel %vm430, 0, %v452
      %454 = vst [vmem:[#allocation2 + $0x78] sm:$0x1] %v453
      %v455 = vld [vmem:[#allocation2 + $0x88] sm:$0x1]
      %v456 = vsel %vm430, 0, %v455
      %457 = vst [vmem:[#allocation2 + $0x88] sm:$0x1] %v456
      %v458 = vld [vmem:[#allocation2 + $0x98] sm:$0x1]
      %v459 = vsel %vm430, 0, %v458
      %460 = vst [vmem:[#allocation2 + $0x98] sm:$0x1] %v459
      %v461 = vld [vmem:[#allocation2 + $0xa8] sm:$0x1]
      %v462 = vsel %vm430, 0, %v461
      %463 = vst [vmem:[#allocation2 + $0xa8] sm:$0x1] %v462
      %v464 = vld [vmem:[#allocation2 + $0xb8] sm:$0x1]
      %v465 = vsel %vm430, 0, %v464
      %466 = vst [vmem:[#allocation2 + $0xb8] sm:$0x1] %v465
      %v467 = vld [vmem:[#allocation2 + $0xc8] sm:$0x1]
      %v468 = vsel %vm430, 0, %v467
      %469 = vst [vmem:[#allocation2 + $0xc8] sm:$0x1] %v468
      %v470 = vld [vmem:[#allocation2 + $0xd8] sm:$0x1]
      %v471 = vsel %vm430, 0, %v470
      %472 = vst [vmem:[#allocation2 + $0xd8] sm:$0x1] %v471
      %v473 = vld [vmem:[#allocation2 + $0xe8] sm:$0x1]
      %v474 = vsel %vm430, 0, %v473
      %475 = vst [vmem:[#allocation2 + $0xe8] sm:$0x1] %v474
      %v476 = vld [vmem:[#allocation2 + $0xf8] sm:$0x1]
      %v477 = vsel %vm430, 0, %v476
      %478 = vst [vmem:[#allocation2 + $0xf8] sm:$0x1] %v477
      %v479 = vld [vmem:[#allocation2 + $0x108] sm:$0x1]
      %v480 = vsel %vm430, 0, %v479
      %481 = vst [vmem:[#allocation2 + $0x108] sm:$0x1] %v480
      %v482 = vld [vmem:[#allocation2 + $0x118] sm:$0x1]
      %v483 = vsel %vm430, 0, %v482
      %484 = vst [vmem:[#allocation2 + $0x118] sm:$0x1] %v483
      %v485 = vsel %vm366, %v334, 0.0
      %v486 = vsel %vm366, %v335, 0.0
      %v487 = vadd.f32 %v485, %v486
      %v488 = vrot.slane %v487, 4
      %v489 = vadd.f32 %v487, %v488
      %v490 = vrot.slane %v489, 2
      %v491 = vadd.f32 %v489, %v490
      %v492 = vrot.slane %v491, 1
      %v493 = vadd.f32 %v491, %v492
      %v494 = vsel %vm366, %v336, 0.0
      %v495 = vsel %vm366, %v337, 0.0
      %v496 = vadd.f32 %v494, %v495
      %v497 = vrot.slane %v496, 4
      %v498 = vadd.f32 %v496, %v497
      %v499 = vrot.slane %v498, 2
      %v500 = vadd.f32 %v498, %v499
      %v501 = vrot.slane %v500, 1
      %v502 = vadd.f32 %v500, %v501
      %v503 = vsel %vm366, %v338, 0.0
      %v504 = vsel %vm366, %v339, 0.0
      %v505 = vadd.f32 %v503, %v504
      %v506 = vrot.slane %v505, 4
      %v507 = vadd.f32 %v505, %v506
      %v508 = vrot.slane %v507, 2
      %v509 = vadd.f32 %v507, %v508
      %v510 = vrot.slane %v509, 1
      %v511 = vadd.f32 %v509, %v510
      %v512 = vsel %vm366, %v340, 0.0
      %v513 = vsel %vm366, %v341, 0.0
      %v514 = vadd.f32 %v512, %v513
      %v515 = vrot.slane %v514, 4
      %v516 = vadd.f32 %v514, %v515
      %v517 = vrot.slane %v516, 2
      %v518 = vadd.f32 %v516, %v517
      %v519 = vrot.slane %v518, 1
      %v520 = vadd.f32 %v518, %v519
      %v521 = vsel %vm366, %v342, 0.0
      %v522 = vsel %vm366, %v343, 0.0
      %v523 = vadd.f32 %v521, %v522
      %v524 = vrot.slane %v523, 4
      %v525 = vadd.f32 %v523, %v524
      %v526 = vrot.slane %v525, 2
      %v527 = vadd.f32 %v525, %v526
      %v528 = vrot.slane %v527, 1
      %v529 = vadd.f32 %v527, %v528
      %v530 = vsel %vm366, %v344, 0.0
      %v531 = vsel %vm366, %v345, 0.0
      %v532 = vadd.f32 %v530, %v531
      %v533 = vrot.slane %v532, 4
      %v534 = vadd.f32 %v532, %v533
      %v535 = vrot.slane %v534, 2
      %v536 = vadd.f32 %v534, %v535
      %v537 = vrot.slane %v536, 1
      %v538 = vadd.f32 %v536, %v537
      %v539 = vsel %vm366, %v346, 0.0
      %v540 = vsel %vm366, %v347, 0.0
      %v541 = vadd.f32 %v539, %v540
      %v542 = vrot.slane %v541, 4
      %v543 = vadd.f32 %v541, %v542
      %v544 = vrot.slane %v543, 2
      %v545 = vadd.f32 %v543, %v544
      %v546 = vrot.slane %v545, 1
      %v547 = vadd.f32 %v545, %v546
      %v548 = vsel %vm366, %v348, 0.0
      %v549 = vsel %vm366, %v349, 0.0
      %v550 = vadd.f32 %v548, %v549
      %v551 = vrot.slane %v550, 4
      %v552 = vadd.f32 %v550, %v551
      %v553 = vrot.slane %v552, 2
      %v554 = vadd.f32 %v552, %v553
      %v555 = vrot.slane %v554, 1
      %v556 = vadd.f32 %v554, %v555
      %v557 = vsel %vm366, %v350, 0.0
      %v558 = vsel %vm366, %v351, 0.0
      %v559 = vadd.f32 %v557, %v558
      %v560 = vrot.slane %v559, 4
      %v561 = vadd.f32 %v559, %v560
      %v562 = vrot.slane %v561, 2
      %v563 = vadd.f32 %v561, %v562
      %v564 = vrot.slane %v563, 1
      %v565 = vadd.f32 %v563, %v564
      %v566 = vsel %vm366, %v352, 0.0
      %v567 = vsel %vm366, %v353, 0.0
      %v568 = vadd.f32 %v566, %v567
      %v569 = vrot.slane %v568, 4
      %v570 = vadd.f32 %v568, %v569
      %v571 = vrot.slane %v570, 2
      %v572 = vadd.f32 %v570, %v571
      %v573 = vrot.slane %v572, 1
      %v574 = vadd.f32 %v572, %v573
      %v575 = vsel %vm366, %v354, 0.0
      %v576 = vsel %vm366, %v355, 0.0
      %v577 = vadd.f32 %v575, %v576
      %v578 = vrot.slane %v577, 4
      %v579 = vadd.f32 %v577, %v578
      %v580 = vrot.slane %v579, 2
      %v581 = vadd.f32 %v579, %v580
      %v582 = vrot.slane %v581, 1
      %v583 = vadd.f32 %v581, %v582
      %v584 = vsel %vm366, %v356, 0.0
      %v585 = vsel %vm366, %v357, 0.0
      %v586 = vadd.f32 %v584, %v585
      %v587 = vrot.slane %v586, 4
      %v588 = vadd.f32 %v586, %v587
      %v589 = vrot.slane %v588, 2
      %v590 = vadd.f32 %v588, %v589
      %v591 = vrot.slane %v590, 1
      %v592 = vadd.f32 %v590, %v591
      %v593 = vsel %vm366, %v358, 0.0
      %v594 = vsel %vm366, %v359, 0.0
      %v595 = vadd.f32 %v593, %v594
      %v596 = vrot.slane %v595, 4
      %v597 = vadd.f32 %v595, %v596
      %v598 = vrot.slane %v597, 2
      %v599 = vadd.f32 %v597, %v598
      %v600 = vrot.slane %v599, 1
      %v601 = vadd.f32 %v599, %v600
      %v602 = vsel %vm366, %v360, 0.0
      %v603 = vsel %vm366, %v361, 0.0
      %v604 = vadd.f32 %v602, %v603
      %v605 = vrot.slane %v604, 4
      %v606 = vadd.f32 %v604, %v605
      %v607 = vrot.slane %v606, 2
      %v608 = vadd.f32 %v606, %v607
      %v609 = vrot.slane %v608, 1
      %v610 = vadd.f32 %v608, %v609
      %v611 = vsel %vm366, %v362, 0.0
      %v612 = vsel %vm366, %v363, 0.0
      %v613 = vadd.f32 %v611, %v612
      %v614 = vrot.slane %v613, 4
      %v615 = vadd.f32 %v613, %v614
      %v616 = vrot.slane %v615, 2
      %v617 = vadd.f32 %v615, %v616
      %v618 = vrot.slane %v617, 1
      %v619 = vadd.f32 %v617, %v618
      %v620 = vsel %vm366, %v364, 0.0
      %v621 = vsel %vm366, %v365, 0.0
      %v622 = vadd.f32 %v620, %v621
      %v623 = vrot.slane %v622, 4
      %v624 = vadd.f32 %v622, %v623
      %v625 = vrot.slane %v624, 2
      %v626 = vadd.f32 %v624, %v625
      %v627 = vrot.slane %v626, 1
      %v628 = vadd.f32 %v626, %v627
      %v629 = vmul.f32 %v334, %v334
      %v630 = vmul.f32 %v335, %v335
      %v631 = vmul.f32 %v336, %v336
      %v632 = vmul.f32 %v337, %v337
      %v633 = vmul.f32 %v338, %v338
      %v634 = vmul.f32 %v339, %v339
      %v635 = vmul.f32 %v340, %v340
      %v636 = vmul.f32 %v341, %v341
      %v637 = vmul.f32 %v342, %v342
      %v638 = vmul.f32 %v343, %v343
      %v639 = vmul.f32 %v344, %v344
      %v640 = vmul.f32 %v345, %v345
      %v641 = vmul.f32 %v346, %v346
      %v642 = vmul.f32 %v347, %v347
      %v643 = vmul.f32 %v348, %v348
      %v644 = vmul.f32 %v349, %v349
      %v645 = vmul.f32 %v350, %v350
      %v646 = vmul.f32 %v351, %v351
      %v647 = vmul.f32 %v352, %v352
      %v648 = vmul.f32 %v353, %v353
      %v649 = vmul.f32 %v354, %v354
      %v650 = vmul.f32 %v355, %v355
      %v651 = vmul.f32 %v356, %v356
      %v652 = vmul.f32 %v357, %v357
      %v653 = vmul.f32 %v358, %v358
      %v654 = vmul.f32 %v359, %v359
      %v655 = vmul.f32 %v360, %v360
      %v656 = vmul.f32 %v361, %v361
      %v657 = vmul.f32 %v362, %v362
      %v658 = vmul.f32 %v363, %v363
      %v659 = vmul.f32 %v364, %v364
      %v660 = vmul.f32 %v365, %v365
      %v661 = vsel %vm366, %v629, 0.0
      %v662 = vsel %vm366, %v630, 0.0
      %v663 = vadd.f32 %v661, %v662
      %v664 = vrot.slane %v663, 4
      %v665 = vadd.f32 %v663, %v664
      %v666 = vrot.slane %v665, 2
      %v667 = vadd.f32 %v665, %v666
      %v668 = vrot.slane %v667, 1
      %v669 = vadd.f32 %v667, %v668
      %v670 = vsel %vm366, %v631, 0.0
      %v671 = vsel %vm366, %v632, 0.0
      %v672 = vadd.f32 %v670, %v671
      %v673 = vrot.slane %v672, 4
      %v674 = vadd.f32 %v672, %v673
      %v675 = vrot.slane %v674, 2
      %v676 = vadd.f32 %v674, %v675
      %v677 = vrot.slane %v676, 1
      %v678 = vadd.f32 %v676, %v677
      %v679 = vsel %vm366, %v633, 0.0
      %v680 = vsel %vm366, %v634, 0.0
      %v681 = vadd.f32 %v679, %v680
      %v682 = vrot.slane %v681, 4
      %v683 = vadd.f32 %v681, %v682
      %v684 = vrot.slane %v683, 2
      %v685 = vadd.f32 %v683, %v684
      %v686 = vrot.slane %v685, 1
      %v687 = vadd.f32 %v685, %v686
      %v688 = vsel %vm366, %v635, 0.0
      %v689 = vsel %vm366, %v636, 0.0
      %v690 = vadd.f32 %v688, %v689
      %v691 = vrot.slane %v690, 4
      %v692 = vadd.f32 %v690, %v691
      %v693 = vrot.slane %v692, 2
      %v694 = vadd.f32 %v692, %v693
      %v695 = vrot.slane %v694, 1
      %v696 = vadd.f32 %v694, %v695
      %v697 = vsel %vm366, %v637, 0.0
      %v698 = vsel %vm366, %v638, 0.0
      %v699 = vadd.f32 %v697, %v698
      %v700 = vrot.slane %v699, 4
      %v701 = vadd.f32 %v699, %v700
      %v702 = vrot.slane %v701, 2
      %v703 = vadd.f32 %v701, %v702
      %v704 = vrot.slane %v703, 1
      %v705 = vadd.f32 %v703, %v704
      %v706 = vsel %vm366, %v639, 0.0
      %v707 = vsel %vm366, %v640, 0.0
      %v708 = vadd.f32 %v706, %v707
      %v709 = vrot.slane %v708, 4
      %v710 = vadd.f32 %v708, %v709
      %v711 = vrot.slane %v710, 2
      %v712 = vadd.f32 %v710, %v711
      %v713 = vrot.slane %v712, 1
      %v714 = vadd.f32 %v712, %v713
      %v715 = vsel %vm366, %v641, 0.0
      %v716 = vsel %vm366, %v642, 0.0
      %v717 = vadd.f32 %v715, %v716
      %v718 = vrot.slane %v717, 4
      %v719 = vadd.f32 %v717, %v718
      %v720 = vrot.slane %v719, 2
      %v721 = vadd.f32 %v719, %v720
      %v722 = vrot.slane %v721, 1
      %v723 = vadd.f32 %v721, %v722
      %v724 = vsel %vm366, %v643, 0.0
      %v725 = vsel %vm366, %v644, 0.0
      %v726 = vadd.f32 %v724, %v725
      %v727 = vrot.slane %v726, 4
      %v728 = vadd.f32 %v726, %v727
      %v729 = vrot.slane %v728, 2
      %v730 = vadd.f32 %v728, %v729
      %v731 = vrot.slane %v730, 1
      %v732 = vadd.f32 %v730, %v731
      %v733 = vsel %vm366, %v645, 0.0
      %v734 = vsel %vm366, %v646, 0.0
      %v735 = vadd.f32 %v733, %v734
      %v736 = vrot.slane %v735, 4
      %v737 = vadd.f32 %v735, %v736
      %v738 = vrot.slane %v737, 2
      %v739 = vadd.f32 %v737, %v738
      %v740 = vrot.slane %v739, 1
      %v741 = vadd.f32 %v739, %v740
      %v742 = vsel %vm366, %v647, 0.0
      %v743 = vsel %vm366, %v648, 0.0
      %v744 = vadd.f32 %v742, %v743
      %v745 = vrot.slane %v744, 4
      %v746 = vadd.f32 %v744, %v745
      %v747 = vrot.slane %v746, 2
      %v748 = vadd.f32 %v746, %v747
      %v749 = vrot.slane %v748, 1
      %v750 = vadd.f32 %v748, %v749
      %v751 = vsel %vm366, %v649, 0.0
      %v752 = vsel %vm366, %v650, 0.0
      %v753 = vadd.f32 %v751, %v752
      %v754 = vrot.slane %v753, 4
      %v755 = vadd.f32 %v753, %v754
      %v756 = vrot.slane %v755, 2
      %v757 = vadd.f32 %v755, %v756
      %v758 = vrot.slane %v757, 1
      %v759 = vadd.f32 %v757, %v758
      %v760 = vsel %vm366, %v651, 0.0
      %v761 = vsel %vm366, %v652, 0.0
      %v762 = vadd.f32 %v760, %v761
      %v763 = vrot.slane %v762, 4
      %v764 = vadd.f32 %v762, %v763
      %v765 = vrot.slane %v764, 2
      %v766 = vadd.f32 %v764, %v765
      %v767 = vrot.slane %v766, 1
      %v768 = vadd.f32 %v766, %v767
      %v769 = vsel %vm366, %v653, 0.0
      %v770 = vsel %vm366, %v654, 0.0
      %v771 = vadd.f32 %v769, %v770
      %v772 = vrot.slane %v771, 4
      %v773 = vadd.f32 %v771, %v772
      %v774 = vrot.slane %v773, 2
      %v775 = vadd.f32 %v773, %v774
      %v776 = vrot.slane %v775, 1
      %v777 = vadd.f32 %v775, %v776
      %v778 = vsel %vm366, %v655, 0.0
      %v779 = vsel %vm366, %v656, 0.0
      %v780 = vadd.f32 %v778, %v779
      %v781 = vrot.slane %v780, 4
      %v782 = vadd.f32 %v780, %v781
      %v783 = vrot.slane %v782, 2
      %v784 = vadd.f32 %v782, %v783
      %v785 = vrot.slane %v784, 1
      %v786 = vadd.f32 %v784, %v785
      %v787 = vsel %vm366, %v657, 0.0
      %v788 = vsel %vm366, %v658, 0.0
      %v789 = vadd.f32 %v787, %v788
      %v790 = vrot.slane %v789, 4
      %v791 = vadd.f32 %v789, %v790
      %v792 = vrot.slane %v791, 2
      %v793 = vadd.f32 %v791, %v792
      %v794 = vrot.slane %v793, 1
      %v795 = vadd.f32 %v793, %v794
      %v796 = vsel %vm366, %v659, 0.0
      %v797 = vsel %vm366, %v660, 0.0
      %v798 = vadd.f32 %v796, %v797
      %v799 = vrot.slane %v798, 4
      %v800 = vadd.f32 %v798, %v799
      %v801 = vrot.slane %v800, 2
      %v802 = vadd.f32 %v800, %v801
      %v803 = vrot.slane %v802, 1
      %v804 = vadd.f32 %v802, %v803
      %v805 = vmul.f32 %v493, 0.0625
      %v806 = vmul.f32 %v502, 0.0625
      %v807 = vmul.f32 %v511, 0.0625
      %v808 = vmul.f32 %v520, 0.0625
      %v809 = vmul.f32 %v529, 0.0625
      %v810 = vmul.f32 %v538, 0.0625
      %v811 = vmul.f32 %v547, 0.0625
      %v812 = vmul.f32 %v556, 0.0625
      %v813 = vmul.f32 %v565, 0.0625
      %v814 = vmul.f32 %v574, 0.0625
      %v815 = vmul.f32 %v583, 0.0625
      %v816 = vmul.f32 %v592, 0.0625
      %v817 = vmul.f32 %v601, 0.0625
      %v818 = vmul.f32 %v610, 0.0625
      %v819 = vmul.f32 %v619, 0.0625
      %v820 = vmul.f32 %v628, 0.0625
      %v821 = vmul.f32 %v669, 0.0625
      %v822 = vmul.f32 %v678, 0.0625
      %v823 = vmul.f32 %v687, 0.0625
      %v824 = vmul.f32 %v696, 0.0625
      %v825 = vmul.f32 %v705, 0.0625
      %v826 = vmul.f32 %v714, 0.0625
      %v827 = vmul.f32 %v723, 0.0625
      %v828 = vmul.f32 %v732, 0.0625
      %v829 = vmul.f32 %v741, 0.0625
      %v830 = vmul.f32 %v750, 0.0625
      %v831 = vmul.f32 %v759, 0.0625
      %v832 = vmul.f32 %v768, 0.0625
      %v833 = vmul.f32 %v777, 0.0625
      %v834 = vmul.f32 %v786, 0.0625
      %v835 = vmul.f32 %v795, 0.0625
      %v836 = vmul.f32 %v804, 0.0625
      %v837 = vmul.f32 %v805, %v805
      %v838 = vmul.f32 %v806, %v806
      %v839 = vmul.f32 %v807, %v807
      %v840 = vmul.f32 %v808, %v808
      %v841 = vmul.f32 %v809, %v809
      %v842 = vmul.f32 %v810, %v810
      %v843 = vmul.f32 %v811, %v811
      %v844 = vmul.f32 %v812, %v812
      %v845 = vmul.f32 %v813, %v813
      %v846 = vmul.f32 %v814, %v814
      %v847 = vmul.f32 %v815, %v815
      %v848 = vmul.f32 %v816, %v816
      %v849 = vmul.f32 %v817, %v817
      %v850 = vmul.f32 %v818, %v818
      %v851 = vmul.f32 %v819, %v819
      %v852 = vmul.f32 %v820, %v820
      %v853 = vsub.f32 %v821, %v837
      %v854 = vsub.f32 %v822, %v838
      %v855 = vsub.f32 %v823, %v839
      %v856 = vsub.f32 %v824, %v840
      %v857 = vsub.f32 %v825, %v841
      %v858 = vsub.f32 %v826, %v842
      %v859 = vsub.f32 %v827, %v843
      %v860 = vsub.f32 %v828, %v844
      %v861 = vsub.f32 %v829, %v845
      %v862 = vsub.f32 %v830, %v846
      %v863 = vsub.f32 %v831, %v847
      %v864 = vsub.f32 %v832, %v848
      %v865 = vsub.f32 %v833, %v849
      %v866 = vsub.f32 %v834, %v850
      %v867 = vsub.f32 %v835, %v851
      %v868 = vsub.f32 %v836, %v852
      %v869 = vsub.f32 %v334, %v805
      %v870 = vsub.f32 %v335, %v805
      %v871 = vsub.f32 %v336, %v806
      %v872 = vsub.f32 %v337, %v806
      %v873 = vsub.f32 %v338, %v807
      %v874 = vsub.f32 %v339, %v807
      %v875 = vsub.f32 %v340, %v808
      %v876 = vsub.f32 %v341, %v808
      %v877 = vsub.f32 %v342, %v809
      %v878 = vsub.f32 %v343, %v809
      %v879 = vsub.f32 %v344, %v810
      %v880 = vsub.f32 %v345, %v810
      %v881 = vsub.f32 %v346, %v811
      %v882 = vsub.f32 %v347, %v811
      %v883 = vsub.f32 %v348, %v812
      %v884 = vsub.f32 %v349, %v812
      %v885 = vsub.f32 %v350, %v813
      %v886 = vsub.f32 %v351, %v813
      %v887 = vsub.f32 %v352, %v814
      %v888 = vsub.f32 %v353, %v814
      %v889 = vsub.f32 %v354, %v815
      %v890 = vsub.f32 %v355, %v815
      %v891 = vsub.f32 %v356, %v816
      %v892 = vsub.f32 %v357, %v816
      %v893 = vsub.f32 %v358, %v817
      %v894 = vsub.f32 %v359, %v817
      %v895 = vsub.f32 %v360, %v818
      %v896 = vsub.f32 %v361, %v818
      %v897 = vsub.f32 %v362, %v819
      %v898 = vsub.f32 %v363, %v819
      %v899 = vsub.f32 %v364, %v820
      %v900 = vsub.f32 %v365, %v820
      %v901 = vadd.f32 %v853, 1e-05
      %v902 = vadd.f32 %v854, 1e-05
      %v903 = vadd.f32 %v855, 1e-05
      %v904 = vadd.f32 %v856, 1e-05
      %v905 = vadd.f32 %v857, 1e-05
      %v906 = vadd.f32 %v858, 1e-05
      %v907 = vadd.f32 %v859, 1e-05
      %v908 = vadd.f32 %v860, 1e-05
      %v909 = vadd.f32 %v861, 1e-05
      %v910 = vadd.f32 %v862, 1e-05
      %v911 = vadd.f32 %v863, 1e-05
      %v912 = vadd.f32 %v864, 1e-05
      %v913 = vadd.f32 %v865, 1e-05
      %v914 = vadd.f32 %v866, 1e-05
      %v915 = vadd.f32 %v867, 1e-05
      %v916 = vadd.f32 %v868, 1e-05
      %v917 = vrsqrt.pop %v901
      %v918 = vrsqrt.pop %v902
      %v919 = vrsqrt.pop %v903
      %v920 = vrsqrt.pop %v904
      %v921 = vrsqrt.pop %v905
      %v922 = vrsqrt.pop %v906
      %v923 = vrsqrt.pop %v907
      %v924 = vrsqrt.pop %v908
      %v925 = vrsqrt.pop %v909
      %v926 = vrsqrt.pop %v910
      %v927 = vrsqrt.pop %v911
      %v928 = vrsqrt.pop %v912
      %v929 = vrsqrt.pop %v913
      %v930 = vrsqrt.pop %v914
      %v931 = vrsqrt.pop %v915
      %v932 = vrsqrt.pop %v916
      %v933 = vmul.f32 %v869, %v917
      %v934 = vmul.f32 %v870, %v917
      %v935 = vmul.f32 %v871, %v918
      %v936 = vmul.f32 %v872, %v918
      %v937 = vmul.f32 %v873, %v919
      %v938 = vmul.f32 %v874, %v919
      %v939 = vmul.f32 %v875, %v920
      %v940 = vmul.f32 %v876, %v920
      %v941 = vmul.f32 %v877, %v921
      %v942 = vmul.f32 %v878, %v921
      %v943 = vmul.f32 %v879, %v922
      %v944 = vmul.f32 %v880, %v922
      %v945 = vmul.f32 %v881, %v923
      %v946 = vmul.f32 %v882, %v923
      %v947 = vmul.f32 %v883, %v924
      %v948 = vmul.f32 %v884, %v924
      %v949 = vmul.f32 %v885, %v925
      %v950 = vmul.f32 %v886, %v925
      %v951 = vmul.f32 %v887, %v926
      %v952 = vmul.f32 %v888, %v926
      %v953 = vmul.f32 %v889, %v927
      %v954 = vmul.f32 %v890, %v927
      %v955 = vmul.f32 %v891, %v928
      %v956 = vmul.f32 %v892, %v928
      %v957 = vmul.f32 %v893, %v929
      %v958 = vmul.f32 %v894, %v929
      %v959 = vmul.f32 %v895, %v930
      %v960 = vmul.f32 %v896, %v930
      %v961 = vmul.f32 %v897, %v931
      %v962 = vmul.f32 %v898, %v931
      %v963 = vmul.f32 %v899, %v932
      %v964 = vmul.f32 %v900, %v932
      %v965 = vld [vmem:[%s1] sm:$0xff]
      %v966 = vld [vmem:[%s1 + $0x8] sm:$0xff]
      %968 = vset.pattern.permute.xlu0 0
      %969 = vperm.xlu0 %968, %v965
      %v970 = vpop.permute.xlu0 %969
      %973 = vset.pattern.permute.xlu0 0
      %974 = vperm.xlu0 %973, %v966
      %v975 = vpop.permute.xlu0 %974
      %v977 = vmul.f32 %v933, %v970
      %v978 = vmul.f32 %v934, %v975
      %v979 = vmul.f32 %v935, %v970
      %v980 = vmul.f32 %v936, %v975
      %v981 = vmul.f32 %v937, %v970
      %v982 = vmul.f32 %v938, %v975
      %v983 = vmul.f32 %v939, %v970
      %v984 = vmul.f32 %v940, %v975
      %v985 = vmul.f32 %v941, %v970
      %v986 = vmul.f32 %v942, %v975
      %v987 = vmul.f32 %v943, %v970
      %v988 = vmul.f32 %v944, %v975
      %v989 = vmul.f32 %v945, %v970
      %v990 = vmul.f32 %v946, %v975
      %v991 = vmul.f32 %v947, %v970
      %v992 = vmul.f32 %v948, %v975
      %v993 = vmul.f32 %v949, %v970
      %v994 = vmul.f32 %v950, %v975
      %v995 = vmul.f32 %v951, %v970
      %v996 = vmul.f32 %v952, %v975
      %v997 = vmul.f32 %v953, %v970
      %v998 = vmul.f32 %v954, %v975
      %v999 = vmul.f32 %v955, %v970
      %v1000 = vmul.f32 %v956, %v975
      %v1001 = vmul.f32 %v957, %v970
      %v1002 = vmul.f32 %v958, %v975
      %v1003 = vmul.f32 %v959, %v970
      %v1004 = vmul.f32 %v960, %v975
      %v1005 = vmul.f32 %v961, %v970
      %v1006 = vmul.f32 %v962, %v975
      %v1007 = vmul.f32 %v963, %v970
      %v1008 = vmul.f32 %v964, %v975
      %v1009 = vld [vmem:[%s2] sm:$0xff]
      %v1010 = vld [vmem:[%s2 + $0x8] sm:$0xff]
      %1012 = vset.pattern.permute.xlu0 0
      %1013 = vperm.xlu0 %1012, %v1009
      %v1014 = vpop.permute.xlu0 %1013
      %1017 = vset.pattern.permute.xlu0 0
      %1018 = vperm.xlu0 %1017, %v1010
      %v1019 = vpop.permute.xlu0 %1018
      %v1021 = vadd.f32 %v977, %v1014
      %v1022 = vadd.f32 %v978, %v1019
      %v1023 = vadd.f32 %v979, %v1014
      %v1024 = vadd.f32 %v980, %v1019
      %v1025 = vadd.f32 %v981, %v1014
      %v1026 = vadd.f32 %v982, %v1019
      %v1027 = vadd.f32 %v983, %v1014
      %v1028 = vadd.f32 %v984, %v1019
      %v1029 = vadd.f32 %v985, %v1014
      %v1030 = vadd.f32 %v986, %v1019
      %v1031 = vadd.f32 %v987, %v1014
      %v1032 = vadd.f32 %v988, %v1019
      %v1033 = vadd.f32 %v989, %v1014
      %v1034 = vadd.f32 %v990, %v1019
      %v1035 = vadd.f32 %v991, %v1014
      %v1036 = vadd.f32 %v992, %v1019
      %v1037 = vadd.f32 %v993, %v1014
      %v1038 = vadd.f32 %v994, %v1019
      %v1039 = vadd.f32 %v995, %v1014
      %v1040 = vadd.f32 %v996, %v1019
      %v1041 = vadd.f32 %v997, %v1014
      %v1042 = vadd.f32 %v998, %v1019
      %v1043 = vadd.f32 %v999, %v1014
      %v1044 = vadd.f32 %v1000, %v1019
      %v1045 = vadd.f32 %v1001, %v1014
      %v1046 = vadd.f32 %v1002, %v1019
      %v1047 = vadd.f32 %v1003, %v1014
      %v1048 = vadd.f32 %v1004, %v1019
      %v1049 = vadd.f32 %v1005, %v1014
      %v1050 = vadd.f32 %v1006, %v1019
      %v1051 = vadd.f32 %v1007, %v1014
      %v1052 = vadd.f32 %v1008, %v1019
      %v1053 = vmul.f32 %v1021, 0.5
      %v1054 = vmul.f32 %v1022, 0.5
      %v1055 = vmul.f32 %v1023, 0.5
      %v1056 = vmul.f32 %v1024, 0.5
      %v1057 = vmul.f32 %v1025, 0.5
      %v1058 = vmul.f32 %v1026, 0.5
      %v1059 = vmul.f32 %v1027, 0.5
      %v1060 = vmul.f32 %v1028, 0.5
      %v1061 = vmul.f32 %v1029, 0.5
      %v1062 = vmul.f32 %v1030, 0.5
      %v1063 = vmul.f32 %v1031, 0.5
      %v1064 = vmul.f32 %v1032, 0.5
      %v1065 = vmul.f32 %v1033, 0.5
      %v1066 = vmul.f32 %v1034, 0.5
      %v1067 = vmul.f32 %v1035, 0.5
      %v1068 = vmul.f32 %v1036, 0.5
      %v1069 = vmul.f32 %v1037, 0.5
      %v1070 = vmul.f32 %v1038, 0.5
      %v1071 = vmul.f32 %v1039, 0.5
      %v1072 = vmul.f32 %v1040, 0.5
      %v1073 = vmul.f32 %v1041, 0.5
      %v1074 = vmul.f32 %v1042, 0.5
      %v1075 = vmul.f32 %v1043, 0.5
      %v1076 = vmul.f32 %v1044, 0.5
      %v1077 = vmul.f32 %v1045, 0.5
      %v1078 = vmul.f32 %v1046, 0.5
      %v1079 = vmul.f32 %v1047, 0.5
      %v1080 = vmul.f32 %v1048, 0.5
      %v1081 = vmul.f32 %v1049, 0.5
      %v1082 = vmul.f32 %v1050, 0.5
      %v1083 = vmul.f32 %v1051, 0.5
      %v1084 = vmul.f32 %v1052, 0.5
      %v1085 = vmul.f32 %v1021, 0.044715
      %v1086 = vmul.f32 %v1022, 0.044715
      %v1087 = vmul.f32 %v1023, 0.044715
      %v1088 = vmul.f32 %v1024, 0.044715
      %v1089 = vmul.f32 %v1025, 0.044715
      %v1090 = vmul.f32 %v1026, 0.044715
      %v1091 = vmul.f32 %v1027, 0.044715
      %v1092 = vmul.f32 %v1028, 0.044715
      %v1093 = vmul.f32 %v1029, 0.044715
      %v1094 = vmul.f32 %v1030, 0.044715
      %v1095 = vmul.f32 %v1031, 0.044715
      %v1096 = vmul.f32 %v1032, 0.044715
      %v1097 = vmul.f32 %v1033, 0.044715
      %v1098 = vmul.f32 %v1034, 0.044715
      %v1099 = vmul.f32 %v1035, 0.044715
      %v1100 = vmul.f32 %v1036, 0.044715
      %v1101 = vmul.f32 %v1037, 0.044715
      %v1102 = vmul.f32 %v1038, 0.044715
      %v1103 = vmul.f32 %v1039, 0.044715
      %v1104 = vmul.f32 %v1040, 0.044715
      %v1105 = vmul.f32 %v1041, 0.044715
      %v1106 = vmul.f32 %v1042, 0.044715
      %v1107 = vmul.f32 %v1043, 0.044715
      %v1108 = vmul.f32 %v1044, 0.044715
      %v1109 = vmul.f32 %v1045, 0.044715
      %v1110 = vmul.f32 %v1046, 0.044715
      %v1111 = vmul.f32 %v1047, 0.044715
      %v1112 = vmul.f32 %v1048, 0.044715
      %v1113 = vmul.f32 %v1049, 0.044715
      %v1114 = vmul.f32 %v1050, 0.044715
      %v1115 = vmul.f32 %v1051, 0.044715
      %v1116 = vmul.f32 %v1052, 0.044715
      %v1117 = vmul.f32 %v1085, %v1021
      %v1118 = vmul.f32 %v1086, %v1022
      %v1119 = vmul.f32 %v1087, %v1023
      %v1120 = vmul.f32 %v1088, %v1024
      %v1121 = vmul.f32 %v1089, %v1025
      %v1122 = vmul.f32 %v1090, %v1026
      %v1123 = vmul.f32 %v1091, %v1027
      %v1124 = vmul.f32 %v1092, %v1028
      %v1125 = vmul.f32 %v1093, %v1029
      %v1126 = vmul.f32 %v1094, %v1030
      %v1127 = vmul.f32 %v1095, %v1031
      %v1128 = vmul.f32 %v1096, %v1032
      %v1129 = vmul.f32 %v1097, %v1033
      %v1130 = vmul.f32 %v1098, %v1034
      %v1131 = vmul.f32 %v1099, %v1035
      %v1132 = vmul.f32 %v1100, %v1036
      %v1133 = vmul.f32 %v1101, %v1037
      %v1134 = vmul.f32 %v1102, %v1038
      %v1135 = vmul.f32 %v1103, %v1039
      %v1136 = vmul.f32 %v1104, %v1040
      %v1137 = vmul.f32 %v1105, %v1041
      %v1138 = vmul.f32 %v1106, %v1042
      %v1139 = vmul.f32 %v1107, %v1043
      %v1140 = vmul.f32 %v1108, %v1044
      %v1141 = vmul.f32 %v1109, %v1045
      %v1142 = vmul.f32 %v1110, %v1046
      %v1143 = vmul.f32 %v1111, %v1047
      %v1144 = vmul.f32 %v1112, %v1048
      %v1145 = vmul.f32 %v1113, %v1049
      %v1146 = vmul.f32 %v1114, %v1050
      %v1147 = vmul.f32 %v1115, %v1051
      %v1148 = vmul.f32 %v1116, %v1052
      %v1149 = vmul.f32 %v1117, %v1021
      %v1150 = vmul.f32 %v1118, %v1022
      %v1151 = vmul.f32 %v1119, %v1023
      %v1152 = vmul.f32 %v1120, %v1024
      %v1153 = vmul.f32 %v1121, %v1025
      %v1154 = vmul.f32 %v1122, %v1026
      %v1155 = vmul.f32 %v1123, %v1027
      %v1156 = vmul.f32 %v1124, %v1028
      %v1157 = vmul.f32 %v1125, %v1029
      %v1158 = vmul.f32 %v1126, %v1030
      %v1159 = vmul.f32 %v1127, %v1031
      %v1160 = vmul.f32 %v1128, %v1032
      %v1161 = vmul.f32 %v1129, %v1033
      %v1162 = vmul.f32 %v1130, %v1034
      %v1163 = vmul.f32 %v1131, %v1035
      %v1164 = vmul.f32 %v1132, %v1036
      %v1165 = vmul.f32 %v1133, %v1037
      %v1166 = vmul.f32 %v1134, %v1038
      %v1167 = vmul.f32 %v1135, %v1039
      %v1168 = vmul.f32 %v1136, %v1040
      %v1169 = vmul.f32 %v1137, %v1041
      %v1170 = vmul.f32 %v1138, %v1042
      %v1171 = vmul.f32 %v1139, %v1043
      %v1172 = vmul.f32 %v1140, %v1044
      %v1173 = vmul.f32 %v1141, %v1045
      %v1174 = vmul.f32 %v1142, %v1046
      %v1175 = vmul.f32 %v1143, %v1047
      %v1176 = vmul.f32 %v1144, %v1048
      %v1177 = vmul.f32 %v1145, %v1049
      %v1178 = vmul.f32 %v1146, %v1050
      %v1179 = vmul.f32 %v1147, %v1051
      %v1180 = vmul.f32 %v1148, %v1052
      %v1181 = vadd.f32 %v1021, %v1149
      %v1182 = vadd.f32 %v1022, %v1150
      %v1183 = vadd.f32 %v1023, %v1151
      %v1184 = vadd.f32 %v1024, %v1152
      %v1185 = vadd.f32 %v1025, %v1153
      %v1186 = vadd.f32 %v1026, %v1154
      %v1187 = vadd.f32 %v1027, %v1155
      %v1188 = vadd.f32 %v1028, %v1156
      %v1189 = vadd.f32 %v1029, %v1157
      %v1190 = vadd.f32 %v1030, %v1158
      %v1191 = vadd.f32 %v1031, %v1159
      %v1192 = vadd.f32 %v1032, %v1160
      %v1193 = vadd.f32 %v1033, %v1161
      %v1194 = vadd.f32 %v1034, %v1162
      %v1195 = vadd.f32 %v1035, %v1163
      %v1196 = vadd.f32 %v1036, %v1164
      %v1197 = vadd.f32 %v1037, %v1165
      %v1198 = vadd.f32 %v1038, %v1166
      %v1199 = vadd.f32 %v1039, %v1167
      %v1200 = vadd.f32 %v1040, %v1168
      %v1201 = vadd.f32 %v1041, %v1169
      %v1202 = vadd.f32 %v1042, %v1170
      %v1203 = vadd.f32 %v1043, %v1171
      %v1204 = vadd.f32 %v1044, %v1172
      %v1205 = vadd.f32 %v1045, %v1173
      %v1206 = vadd.f32 %v1046, %v1174
      %v1207 = vadd.f32 %v1047, %v1175
      %v1208 = vadd.f32 %v1048, %v1176
      %v1209 = vadd.f32 %v1049, %v1177
      %v1210 = vadd.f32 %v1050, %v1178
      %v1211 = vadd.f32 %v1051, %v1179
      %v1212 = vadd.f32 %v1052, %v1180
      %v1213 = vmul.f32 %v1181, 0.7978846
      %v1214 = vmul.f32 %v1182, 0.7978846
      %v1215 = vmul.f32 %v1183, 0.7978846
      %v1216 = vmul.f32 %v1184, 0.7978846
      %v1217 = vmul.f32 %v1185, 0.7978846
      %v1218 = vmul.f32 %v1186, 0.7978846
      %v1219 = vmul.f32 %v1187, 0.7978846
      %v1220 = vmul.f32 %v1188, 0.7978846
      %v1221 = vmul.f32 %v1189, 0.7978846
      %v1222 = vmul.f32 %v1190, 0.7978846
      %v1223 = vmul.f32 %v1191, 0.7978846
      %v1224 = vmul.f32 %v1192, 0.7978846
      %v1225 = vmul.f32 %v1193, 0.7978846
      %v1226 = vmul.f32 %v1194, 0.7978846
      %v1227 = vmul.f32 %v1195, 0.7978846
      %v1228 = vmul.f32 %v1196, 0.7978846
      %v1229 = vmul.f32 %v1197, 0.7978846
      %v1230 = vmul.f32 %v1198, 0.7978846
      %v1231 = vmul.f32 %v1199, 0.7978846
      %v1232 = vmul.f32 %v1200, 0.7978846
      %v1233 = vmul.f32 %v1201, 0.7978846
      %v1234 = vmul.f32 %v1202, 0.7978846
      %v1235 = vmul.f32 %v1203, 0.7978846
      %v1236 = vmul.f32 %v1204, 0.7978846
      %v1237 = vmul.f32 %v1205, 0.7978846
      %v1238 = vmul.f32 %v1206, 0.7978846
      %v1239 = vmul.f32 %v1207, 0.7978846
      %v1240 = vmul.f32 %v1208, 0.7978846
      %v1241 = vmul.f32 %v1209, 0.7978846
      %v1242 = vmul.f32 %v1210, 0.7978846
      %v1243 = vmul.f32 %v1211, 0.7978846
      %v1244 = vmul.f32 %v1212, 0.7978846
      %v1245 = vtanh.pop %v1213
      %v1246 = vtanh.pop %v1214
      %v1247 = vtanh.pop %v1215
      %v1248 = vtanh.pop %v1216
      %v1249 = vtanh.pop %v1217
      %v1250 = vtanh.pop %v1218
      %v1251 = vtanh.pop %v1219
      %v1252 = vtanh.pop %v1220
      %v1253 = vtanh.pop %v1221
      %v1254 = vtanh.pop %v1222
      %v1255 = vtanh.pop %v1223
      %v1256 = vtanh.pop %v1224
      %v1257 = vtanh.pop %v1225
      %v1258 = vtanh.pop %v1226
      %v1259 = vtanh.pop %v1227
      %v1260 = vtanh.pop %v1228
      %v1261 = vtanh.pop %v1229
      %v1262 = vtanh.pop %v1230
      %v1263 = vtanh.pop %v1231
      %v1264 = vtanh.pop %v1232
      %v1265 = vtanh.pop %v1233
      %v1266 = vtanh.pop %v1234
      %v1267 = vtanh.pop %v1235
      %v1268 = vtanh.pop %v1236
      %v1269 = vtanh.pop %v1237
      %v1270 = vtanh.pop %v1238
      %v1271 = vtanh.pop %v1239
      %v1272 = vtanh.pop %v1240
      %v1273 = vtanh.pop %v1241
      %v1274 = vtanh.pop %v1242
      %v1275 = vtanh.pop %v1243
      %v1276 = vtanh.pop %v1244
      %v1277 = vadd.f32 %v1245, 1.0
      %v1278 = vadd.f32 %v1246, 1.0
      %v1279 = vadd.f32 %v1247, 1.0
      %v1280 = vadd.f32 %v1248, 1.0
      %v1281 = vadd.f32 %v1249, 1.0
      %v1282 = vadd.f32 %v1250, 1.0
      %v1283 = vadd.f32 %v1251, 1.0
      %v1284 = vadd.f32 %v1252, 1.0
      %v1285 = vadd.f32 %v1253, 1.0
      %v1286 = vadd.f32 %v1254, 1.0
      %v1287 = vadd.f32 %v1255, 1.0
      %v1288 = vadd.f32 %v1256, 1.0
      %v1289 = vadd.f32 %v1257, 1.0
      %v1290 = vadd.f32 %v1258, 1.0
      %v1291 = vadd.f32 %v1259, 1.0
      %v1292 = vadd.f32 %v1260, 1.0
      %v1293 = vadd.f32 %v1261, 1.0
      %v1294 = vadd.f32 %v1262, 1.0
      %v1295 = vadd.f32 %v1263, 1.0
      %v1296 = vadd.f32 %v1264, 1.0
      %v1297 = vadd.f32 %v1265, 1.0
      %v1298 = vadd.f32 %v1266, 1.0
      %v1299 = vadd.f32 %v1267, 1.0
      %v1300 = vadd.f32 %v1268, 1.0
      %v1301 = vadd.f32 %v1269, 1.0
      %v1302 = vadd.f32 %v1270, 1.0
      %v1303 = vadd.f32 %v1271, 1.0
      %v1304 = vadd.f32 %v1272, 1.0
      %v1305 = vadd.f32 %v1273, 1.0
      %v1306 = vadd.f32 %v1274, 1.0
      %v1307 = vadd.f32 %v1275, 1.0
      %v1308 = vadd.f32 %v1276, 1.0
      %v1309 = vmul.f32 %v1053, %v1277
      %v1310 = vmul.f32 %v1054, %v1278
      %v1311 = vmul.f32 %v1055, %v1279
      %v1312 = vmul.f32 %v1056, %v1280
      %v1313 = vmul.f32 %v1057, %v1281
      %v1314 = vmul.f32 %v1058, %v1282
      %v1315 = vmul.f32 %v1059, %v1283
      %v1316 = vmul.f32 %v1060, %v1284
      %v1317 = vmul.f32 %v1061, %v1285
      %v1318 = vmul.f32 %v1062, %v1286
      %v1319 = vmul.f32 %v1063, %v1287
      %v1320 = vmul.f32 %v1064, %v1288
      %v1321 = vmul.f32 %v1065, %v1289
      %v1322 = vmul.f32 %v1066, %v1290
      %v1323 = vmul.f32 %v1067, %v1291
      %v1324 = vmul.f32 %v1068, %v1292
      %v1325 = vmul.f32 %v1069, %v1293
      %v1326 = vmul.f32 %v1070, %v1294
      %v1327 = vmul.f32 %v1071, %v1295
      %v1328 = vmul.f32 %v1072, %v1296
      %v1329 = vmul.f32 %v1073, %v1297
      %v1330 = vmul.f32 %v1074, %v1298
      %v1331 = vmul.f32 %v1075, %v1299
      %v1332 = vmul.f32 %v1076, %v1300
      %v1333 = vmul.f32 %v1077, %v1301
      %v1334 = vmul.f32 %v1078, %v1302
      %v1335 = vmul.f32 %v1079, %v1303
      %v1336 = vmul.f32 %v1080, %v1304
      %v1337 = vmul.f32 %v1081, %v1305
      %v1338 = vmul.f32 %v1082, %v1306
      %v1339 = vmul.f32 %v1083, %v1307
      %v1340 = vmul.f32 %v1084, %v1308
      %v1341 = vpack.c.bf16 %v1310, %v1309
      %v1342 = vpack.c.bf16 %v1312, %v1311
      %v1343 = vpack.c.bf16 %v1314, %v1313
      %v1344 = vpack.c.bf16 %v1316, %v1315
      %v1345 = vpack.c.bf16 %v1318, %v1317
      %v1346 = vpack.c.bf16 %v1320, %v1319
      %v1347 = vpack.c.bf16 %v1322, %v1321
      %v1348 = vpack.c.bf16 %v1324, %v1323
      %v1349 = vpack.c.bf16 %v1326, %v1325
      %v1350 = vpack.c.bf16 %v1328, %v1327
      %v1351 = vpack.c.bf16 %v1330, %v1329
      %v1352 = vpack.c.bf16 %v1332, %v1331
      %v1353 = vpack.c.bf16 %v1334, %v1333
      %v1354 = vpack.c.bf16 %v1336, %v1335
      %v1355 = vpack.c.bf16 %v1338, %v1337
      %v1356 = vpack.c.bf16 %v1340, %v1339
      %v1358 = vshrl.u32 %v1341, 16
      %v1360 = vrot.slane %v1358, 7
      %v1361 = vshll.u32 %v1341, 16
      %v1363 = vor.u32 %v1360, %v1361
      %v1365 = vshrl.u32 %v1342, 16
      %v1367 = vrot.slane %v1365, 7
      %v1368 = vshll.u32 %v1342, 16
      %v1370 = vor.u32 %v1367, %v1368
      %v1372 = vshrl.u32 %v1343, 16
      %v1374 = vrot.slane %v1372, 7
      %v1375 = vshll.u32 %v1343, 16
      %v1377 = vor.u32 %v1374, %v1375
      %v1379 = vshrl.u32 %v1344, 16
      %v1381 = vrot.slane %v1379, 7
      %v1382 = vshll.u32 %v1344, 16
      %v1384 = vor.u32 %v1381, %v1382
      %v1386 = vshrl.u32 %v1345, 16
      %v1388 = vrot.slane %v1386, 7
      %v1389 = vshll.u32 %v1345, 16
      %v1391 = vor.u32 %v1388, %v1389
      %v1393 = vshrl.u32 %v1346, 16
      %v1395 = vrot.slane %v1393, 7
      %v1396 = vshll.u32 %v1346, 16
      %v1398 = vor.u32 %v1395, %v1396
      %v1400 = vshrl.u32 %v1347, 16
      %v1402 = vrot.slane %v1400, 7
      %v1403 = vshll.u32 %v1347, 16
      %v1405 = vor.u32 %v1402, %v1403
      %v1407 = vshrl.u32 %v1348, 16
      %v1409 = vrot.slane %v1407, 7
      %v1410 = vshll.u32 %v1348, 16
      %v1412 = vor.u32 %v1409, %v1410
      %v1414 = vshrl.u32 %v1349, 16
      %v1416 = vrot.slane %v1414, 7
      %v1417 = vshll.u32 %v1349, 16
      %v1419 = vor.u32 %v1416, %v1417
      %v1421 = vshrl.u32 %v1350, 16
      %v1423 = vrot.slane %v1421, 7
      %v1424 = vshll.u32 %v1350, 16
      %v1426 = vor.u32 %v1423, %v1424
      %v1428 = vshrl.u32 %v1351, 16
      %v1430 = vrot.slane %v1428, 7
      %v1431 = vshll.u32 %v1351, 16
      %v1433 = vor.u32 %v1430, %v1431
      %v1435 = vshrl.u32 %v1352, 16
      %v1437 = vrot.slane %v1435, 7
      %v1438 = vshll.u32 %v1352, 16
      %v1440 = vor.u32 %v1437, %v1438
      %v1442 = vshrl.u32 %v1353, 16
      %v1444 = vrot.slane %v1442, 7
      %v1445 = vshll.u32 %v1353, 16
      %v1447 = vor.u32 %v1444, %v1445
      %v1449 = vshrl.u32 %v1354, 16
      %v1451 = vrot.slane %v1449, 7
      %v1452 = vshll.u32 %v1354, 16
      %v1454 = vor.u32 %v1451, %v1452
      %v1456 = vshrl.u32 %v1355, 16
      %v1458 = vrot.slane %v1456, 7
      %v1459 = vshll.u32 %v1355, 16
      %v1461 = vor.u32 %v1458, %v1459
      %v1463 = vshrl.u32 %v1356, 16
      %v1465 = vrot.slane %v1463, 7
      %v1466 = vshll.u32 %v1356, 16
      %v1468 = vor.u32 %v1465, %v1466
      %s1501 = scalar_lea.vmem [#allocation2], 16
      %vm1502 = vcmask 261120
      %vm1503 = vmand %vm1502, %vm429
      %v1504 = vld [vmem:[%s1501] sm:$0xff]
      %v1505 = vsel %vm1503, %v1363, %v1504
      %1506 = vst [vmem:[%s1501] sm:$0xff] %v1505
      %v1507 = vld [vmem:[%s1501 + $0x8] sm:$0x1]
      %v1508 = vsel %vm374, %v1360, %v1507
      %1509 = vst [vmem:[%s1501 + $0x8] sm:$0x1] %v1508
      %v1510 = vld [vmem:[%s1501 + $0x10] sm:$0xff]
      %v1511 = vsel %vm1503, %v1370, %v1510
      %1512 = vst [vmem:[%s1501 + $0x10] sm:$0xff] %v1511
      %v1513 = vld [vmem:[%s1501 + $0x18] sm:$0x1]
      %v1514 = vsel %vm374, %v1367, %v1513
      %1515 = vst [vmem:[%s1501 + $0x18] sm:$0x1] %v1514
      %v1516 = vld [vmem:[%s1501 + $0x20] sm:$0xff]
      %v1517 = vsel %vm1503, %v1377, %v1516
      %1518 = vst [vmem:[%s1501 + $0x20] sm:$0xff] %v1517
      %v1519 = vld [vmem:[%s1501 + $0x28] sm:$0x1]
      %v1520 = vsel %vm374, %v1374, %v1519
      %1521 = vst [vmem:[%s1501 + $0x28] sm:$0x1] %v1520
      %v1522 = vld [vmem:[%s1501 + $0x30] sm:$0xff]
      %v1523 = vsel %vm1503, %v1384, %v1522
      %1524 = vst [vmem:[%s1501 + $0x30] sm:$0xff] %v1523
      %v1525 = vld [vmem:[%s1501 + $0x38] sm:$0x1]
      %v1526 = vsel %vm374, %v1381, %v1525
      %1527 = vst [vmem:[%s1501 + $0x38] sm:$0x1] %v1526
      %v1528 = vld [vmem:[%s1501 + $0x40] sm:$0xff]
      %v1529 = vsel %vm1503, %v1391, %v1528
      %1530 = vst [vmem:[%s1501 + $0x40] sm:$0xff] %v1529
      %v1531 = vld [vmem:[%s1501 + $0x48] sm:$0x1]
      %v1532 = vsel %vm374, %v1388, %v1531
      %1533 = vst [vmem:[%s1501 + $0x48] sm:$0x1] %v1532
      %v1534 = vld [vmem:[%s1501 + $0x50] sm:$0xff]
      %v1535 = vsel %vm1503, %v1398, %v1534
      %1536 = vst [vmem:[%s1501 + $0x50] sm:$0xff] %v1535
      %v1537 = vld [vmem:[%s1501 + $0x58] sm:$0x1]
      %v1538 = vsel %vm374, %v1395, %v1537
      %1539 = vst [vmem:[%s1501 + $0x58] sm:$0x1] %v1538
      %v1540 = vld [vmem:[%s1501 + $0x60] sm:$0xff]
      %v1541 = vsel %vm1503, %v1405, %v1540
      %1542 = vst [vmem:[%s1501 + $0x60] sm:$0xff] %v1541
      %v1543 = vld [vmem:[%s1501 + $0x68] sm:$0x1]
      %v1544 = vsel %vm374, %v1402, %v1543
      %1545 = vst [vmem:[%s1501 + $0x68] sm:$0x1] %v1544
      %v1546 = vld [vmem:[%s1501 + $0x70] sm:$0xff]
      %v1547 = vsel %vm1503, %v1412, %v1546
      %1548 = vst [vmem:[%s1501 + $0x70] sm:$0xff] %v1547
      %v1549 = vld [vmem:[%s1501 + $0x78] sm:$0x1]
      %v1550 = vsel %vm374, %v1409, %v1549
      %1551 = vst [vmem:[%s1501 + $0x78] sm:$0x1] %v1550
      %v1552 = vld [vmem:[%s1501 + $0x80] sm:$0xff]
      %v1553 = vsel %vm1503, %v1419, %v1552
      %1554 = vst [vmem:[%s1501 + $0x80] sm:$0xff] %v1553
      %v1555 = vld [vmem:[%s1501 + $0x88] sm:$0x1]
      %v1556 = vsel %vm374, %v1416, %v1555
      %1557 = vst [vmem:[%s1501 + $0x88] sm:$0x1] %v1556
      %v1558 = vld [vmem:[%s1501 + $0x90] sm:$0xff]
      %v1559 = vsel %vm1503, %v1426, %v1558
      %1560 = vst [vmem:[%s1501 + $0x90] sm:$0xff] %v1559
      %v1561 = vld [vmem:[%s1501 + $0x98] sm:$0x1]
      %v1562 = vsel %vm374, %v1423, %v1561
      %1563 = vst [vmem:[%s1501 + $0x98] sm:$0x1] %v1562
      %v1564 = vld [vmem:[%s1501 + $0xa0] sm:$0xff]
      %v1565 = vsel %vm1503, %v1433, %v1564
      %1566 = vst [vmem:[%s1501 + $0xa0] sm:$0xff] %v1565
      %v1567 = vld [vmem:[%s1501 + $0xa8] sm:$0x1]
      %v1568 = vsel %vm374, %v1430, %v1567
      %1569 = vst [vmem:[%s1501 + $0xa8] sm:$0x1] %v1568
      %v1570 = vld [vmem:[%s1501 + $0xb0] sm:$0xff]
      %v1571 = vsel %vm1503, %v1440, %v1570
      %1572 = vst [vmem:[%s1501 + $0xb0] sm:$0xff] %v1571
      %v1573 = vld [vmem:[%s1501 + $0xb8] sm:$0x1]
      %v1574 = vsel %vm374, %v1437, %v1573
      %1575 = vst [vmem:[%s1501 + $0xb8] sm:$0x1] %v1574
      %v1576 = vld [vmem:[%s1501 + $0xc0] sm:$0xff]
      %v1577 = vsel %vm1503, %v1447, %v1576
      %1578 = vst [vmem:[%s1501 + $0xc0] sm:$0xff] %v1577
      %v1579 = vld [vmem:[%s1501 + $0xc8] sm:$0x1]
      %v1580 = vsel %vm374, %v1444, %v1579
      %1581 = vst [vmem:[%s1501 + $0xc8] sm:$0x1] %v1580
      %v1582 = vld [vmem:[%s1501 + $0xd0] sm:$0xff]
      %v1583 = vsel %vm1503, %v1454, %v1582
      %1584 = vst [vmem:[%s1501 + $0xd0] sm:$0xff] %v1583
      %v1585 = vld [vmem:[%s1501 + $0xd8] sm:$0x1]
      %v1586 = vsel %vm374, %v1451, %v1585
      %1587 = vst [vmem:[%s1501 + $0xd8] sm:$0x1] %v1586
      %v1588 = vld [vmem:[%s1501 + $0xe0] sm:$0xff]
      %v1589 = vsel %vm1503, %v1461, %v1588
      %1590 = vst [vmem:[%s1501 + $0xe0] sm:$0xff] %v1589
      %v1591 = vld [vmem:[%s1501 + $0xe8] sm:$0x1]
      %v1592 = vsel %vm374, %v1458, %v1591
      %1593 = vst [vmem:[%s1501 + $0xe8] sm:$0x1] %v1592
      %v1594 = vld [vmem:[%s1501 + $0xf0] sm:$0xff]
      %v1595 = vsel %vm1503, %v1468, %v1594
      %1596 = vst [vmem:[%s1501 + $0xf0] sm:$0xff] %v1595
      %v1597 = vld [vmem:[%s1501 + $0xf8] sm:$0x1]
      %v1598 = vsel %vm374, %v1465, %v1597
      %1599 = vst [vmem:[%s1501 + $0xf8] sm:$0x1] %v1598
      %v1600 = vld [vmem:[#allocation2] sm:$0xff]
      %v1601 = vld [vmem:[#allocation2 + $0x8] sm:$0xff]
      %v1602 = vld [vmem:[#allocation2 + $0x10] sm:$0xff]
      %v1603 = vld [vmem:[#allocation2 + $0x18] sm:$0xff]
      %v1604 = vld [vmem:[#allocation2 + $0x20] sm:$0xff]
      %v1605 = vld [vmem:[#allocation2 + $0x28] sm:$0xff]
      %v1606 = vld [vmem:[#allocation2 + $0x30] sm:$0xff]
      %v1607 = vld [vmem:[#allocation2 + $0x38] sm:$0xff]
      %v1608 = vld [vmem:[#allocation2 + $0x40] sm:$0xff]
      %v1609 = vld [vmem:[#allocation2 + $0x48] sm:$0xff]
      %v1610 = vld [vmem:[#allocation2 + $0x50] sm:$0xff]
      %v1611 = vld [vmem:[#allocation2 + $0x58] sm:$0xff]
      %v1612 = vld [vmem:[#allocation2 + $0x60] sm:$0xff]
      %v1613 = vld [vmem:[#allocation2 + $0x68] sm:$0xff]
      %v1614 = vld [vmem:[#allocation2 + $0x70] sm:$0xff]
      %v1615 = vld [vmem:[#allocation2 + $0x78] sm:$0xff]
      %v1616 = vld [vmem:[#allocation2 + $0x80] sm:$0xff]
      %v1617 = vld [vmem:[#allocation2 + $0x88] sm:$0xff]
      %v1618 = vld [vmem:[#allocation2 + $0x90] sm:$0xff]
      %v1619 = vld [vmem:[#allocation2 + $0x98] sm:$0xff]
      %v1620 = vld [vmem:[#allocation2 + $0xa0] sm:$0xff]
      %v1621 = vld [vmem:[#allocation2 + $0xa8] sm:$0xff]
      %v1622 = vld [vmem:[#allocation2 + $0xb0] sm:$0xff]
      %v1623 = vld [vmem:[#allocation2 + $0xb8] sm:$0xff]
      %v1624 = vld [vmem:[#allocation2 + $0xc0] sm:$0xff]
      %v1625 = vld [vmem:[#allocation2 + $0xc8] sm:$0xff]
      %v1626 = vld [vmem:[#allocation2 + $0xd0] sm:$0xff]
      %v1627 = vld [vmem:[#allocation2 + $0xd8] sm:$0xff]
      %v1628 = vld [vmem:[#allocation2 + $0xe0] sm:$0xff]
      %v1629 = vld [vmem:[#allocation2 + $0xe8] sm:$0xff]
      %v1630 = vld [vmem:[#allocation2 + $0xf0] sm:$0xff]
      %v1631 = vld [vmem:[#allocation2 + $0xf8] sm:$0xff]
      %v1632 = vld [vmem:[#allocation2 + $0x100] sm:$0xff]
      %v1633 = vld [vmem:[#allocation2 + $0x108] sm:$0xff]
      %v1634 = vld [vmem:[#allocation2 + $0x110] sm:$0xff]
      %v1635 = vld [vmem:[#allocation2 + $0x118] sm:$0xff]
      %v1636 = vld [vmem:[%s3] sm:$0xff]
      %v1637 = vld [vmem:[%s3 + $0x8] sm:$0xf]
      %v1638 = vld [vmem:[%s3 + $0xc] sm:$0xff]
      %v1639 = vld [vmem:[%s3 + $0x14] sm:$0xf]
      %v1640 = vld [vmem:[%s3 + $0x18] sm:$0xff]
      %v1641 = vld [vmem:[%s3 + $0x20] sm:$0xf]
      %v1642 = vld [vmem:[%s3 + $0x24] sm:$0xff]
      %v1643 = vld [vmem:[%s3 + $0x2c] sm:$0xf]
      %v1652 = vunpack.c.l.b16 %v1636
      %v1653 = vunpack.c.h.b16 %v1636
      %v1654 = vunpack.c.l.b16 %v1637
      %v1655 = vunpack.c.l.b16 %v1638
      %v1656 = vunpack.c.h.b16 %v1638
      %v1657 = vunpack.c.l.b16 %v1639
      %v1658 = vunpack.c.l.b16 %v1640
      %v1659 = vunpack.c.h.b16 %v1640
      %v1660 = vunpack.c.l.b16 %v1641
      %v1661 = vunpack.c.l.b16 %v1642
      %v1662 = vunpack.c.h.b16 %v1642
      %v1663 = vunpack.c.l.b16 %v1643
      %v1664 = vpack.c.b16 %v1655, %v1652
      %v1665 = vpack.c.b16 %v1656, %v1653
      %v1666 = vpack.c.b16 %v1657, %v1654
      %v1667 = vpack.c.b16 %v1661, %v1658
      %v1668 = vpack.c.b16 %v1662, %v1659
      %v1669 = vpack.c.b16 %v1663, %v1660
      %v1677 = vsel %vm366, %v1600, 0
      %v1680 = vsel %vm366, %v1601, 0
      %v1683 = vsel %vm366, %v1602, 0
      %v1686 = vsel %vm366, %v1603, 0
      %v1689 = vsel %vm366, %v1604, 0
      %v1692 = vsel %vm366, %v1605, 0
      %v1695 = vsel %vm366, %v1606, 0
      %v1698 = vsel %vm366, %v1607, 0
      %v1701 = vsel %vm366, %v1608, 0
      %v1704 = vsel %vm366, %v1609, 0
      %v1707 = vsel %vm366, %v1610, 0
      %v1710 = vsel %vm366, %v1611, 0
      %v1713 = vsel %vm366, %v1612, 0
      %v1716 = vsel %vm366, %v1613, 0
      %v1719 = vsel %vm366, %v1614, 0
      %v1722 = vsel %vm366, %v1615, 0
      %v1725 = vsel %vm366, %v1616, 0
      %v1728 = vsel %vm366, %v1617, 0
      %v1731 = vsel %vm366, %v1618, 0
      %v1734 = vsel %vm366, %v1619, 0
      %v1737 = vsel %vm366, %v1620, 0
      %v1740 = vsel %vm366, %v1621, 0
      %v1743 = vsel %vm366, %v1622, 0
      %v1746 = vsel %vm366, %v1623, 0
      %v1749 = vsel %vm366, %v1624, 0
      %v1752 = vsel %vm366, %v1625, 0
      %v1755 = vsel %vm366, %v1626, 0
      %v1758 = vsel %vm366, %v1627, 0
      %v1761 = vsel %vm366, %v1628, 0
      %v1764 = vsel %vm366, %v1629, 0
      %v1767 = vsel %vm366, %v1630, 0
      %v1770 = vsel %vm366, %v1631, 0
      %v1773 = vsel %vm366, %v1632, 0
      %v1776 = vsel %vm366, %v1633, 0
      %v1779 = vsel %vm366, %v1634, 0
      %v1782 = vsel %vm366, %v1635, 0
      %1784 = vmatprep.subr.bf16.mxu0 %v1665
      %1785 = vmatpush1.bf16.msra.mxu0 %v1664
      %1786 = vmatprep.subr.bf16.mxu0 %v1668
      %1787 = vmatpush1.bf16.msra.mxu0 %v1667
      %1788 = vmatprep.subr.bf16.mxu0 0
      %1789 = vmatpush1.bf16.msra.mxu0 0
      %1790 = vmatprep.subr.bf16.mxu0 0
      %1791 = vmatpush1.bf16.msra.mxu0 0
      %1792 = vmatprep.subr.bf16.mxu0 0
      %1793 = vmatpush1.bf16.msra.mxu0 0
      %1794 = vmatprep.subr.bf16.mxu0 0
      %1795 = vmatpush1.bf16.msra.mxu0 0
      %1796 = vmatprep.subr.bf16.mxu0 0
      %1797 = vmatpush1.bf16.msra.mxu0 0
      %1798 = vmatprep.subr.bf16.mxu0 0
      %1799 = vmatpush1.bf16.msra.mxu0 0
      %1800 = vmatprep.subr.bf16.mxu0 0
      %1801 = vmatpush1.bf16.msra.mxu0 0
      %1802 = vmatprep.subr.bf16.mxu0 0
      %1803 = vmatpush1.bf16.msra.mxu0 0
      %1804 = vmatprep.subr.bf16.mxu0 0
      %1805 = vmatpush1.bf16.msra.mxu0 0
      %1806 = vmatprep.subr.bf16.mxu0 0
      %1807 = vmatpush1.bf16.msra.mxu0 0
      %1808 = vmatprep.subr.bf16.mxu0 0
      %1809 = vmatpush1.bf16.msra.mxu0 0
      %1810 = vmatprep.subr.bf16.mxu0 0
      %1811 = vmatpush1.bf16.msra.mxu0 0
      %1812 = vmatprep.subr.bf16.mxu0 0
      %1813 = vmatpush1.bf16.msra.mxu0 0
      %1814 = vmatprep.subr.bf16.mxu0 0
      %1815 = vmatpush1.bf16.msra.mxu0 0
      %1816 = vmatprep.mubr.bf16.mxu0 0
      %1817 = vmatmul.mubr.bf16.gmra.mrb[0].mxu0 %v1677
      %v1818 = vpop.f32.mrb[0].mxu0
      %v1819 = vadd.f32 0.0, %v1818
      %v1820 = vpop.f32.mrb[0].mxu0
      %v1821 = vadd.f32 0.0, %v1820
      %v1822 = vpop.f32.mrb[0].mxu0
      %v1823 = vadd.f32 0.0, %v1822
      %v1824 = vpop.f32.mrb[0].mxu0
      %v1825 = vadd.f32 0.0, %v1824
      %1826 = vmatprep.mubr.bf16.mxu0 0
      %1827 = vmatmul.mubr.bf16.gmra.mrb[0].mxu0 %v1680
      %v1828 = vpop.f32.mrb[0].mxu0
      %v1829 = vadd.f32 0.0, %v1828
      %v1830 = vpop.f32.mrb[0].mxu0
      %v1831 = vadd.f32 0.0, %v1830
      %v1832 = vpop.f32.mrb[0].mxu0
      %v1833 = vpop.f32.mrb[0].mxu0
      %1834 = vmatprep.mubr.bf16.mxu0 0
      %1835 = vmatmul.mubr.bf16.gmra.mrb[0].mxu0 %v1683
      %v1836 = vpop.f32.mrb[0].mxu0
      %v1837 = vadd.f32 0.0, %v1836
      %v1838 = vpop.f32.mrb[0].mxu0
      %v1839 = vadd.f32 0.0, %v1838
      %v1840 = vpop.f32.mrb[0].mxu0
      %v1841 = vadd.f32 0.0, %v1840
      %v1842 = vpop.f32.mrb[0].mxu0
      %v1843 = vadd.f32 0.0, %v1842
      %1844 = vmatprep.mubr.bf16.mxu0 0
      %1845 = vmatmul.mubr.bf16.gmra.mrb[0].mxu0 %v1686
      %v1846 = vpop.f32.mrb[0].mxu0
      %v1847 = vadd.f32 0.0, %v1846
      %v1848 = vpop.f32.mrb[0].mxu0
      %v1849 = vadd.f32 0.0, %v1848
      %v1850 = vpop.f32.mrb[0].mxu0
      %v1851 = vpop.f32.mrb[0].mxu0
      %1852 = vmatprep.mubr.bf16.mxu0 0
      %1853 = vmatmul.mubr.bf16.gmra.mrb[0].mxu0 %v1689
      %v1854 = vpop.f32.mrb[0].mxu0
      %v1855 = vadd.f32 0.0, %v1854
      %v1856 = vpop.f32.mrb[0].mxu0
      %v1857 = vadd.f32 0.0, %v1856
      %v1858 = vpop.f32.mrb[0].mxu0
      %v1859 = vadd.f32 0.0, %v1858
      %v1860 = vpop.f32.mrb[0].mxu0
      %v1861 = vadd.f32 0.0, %v1860
      %1862 = vmatprep.mubr.bf16.mxu0 0
      %1863 = vmatmul.mubr.bf16.gmra.mrb[0].mxu0 %v1692
      %v1864 = vpop.f32.mrb[0].mxu0
      %v1865 = vadd.f32 0.0, %v1864
      %v1866 = vpop.f32.mrb[0].mxu0
      %v1867 = vadd.f32 0.0, %v1866
      %v1868 = vpop.f32.mrb[0].mxu0
      %v1869 = vpop.f32.mrb[0].mxu0
      %1870 = vmatprep.mubr.bf16.mxu0 0
      %1871 = vmatmul.mubr.bf16.gmra.mrb[0].mxu0 %v1695
      %v1872 = vpop.f32.mrb[0].mxu0
      %v1873 = vadd.f32 0.0, %v1872
      %v1874 = vpop.f32.mrb[0].mxu0
      %v1875 = vadd.f32 0.0, %v1874
      %v1876 = vpop.f32.mrb[0].mxu0
      %v1877 = vadd.f32 0.0, %v1876
      %v1878 = vpop.f32.mrb[0].mxu0
      %v1879 = vadd.f32 0.0, %v1878
      %1880 = vmatprep.mubr.bf16.mxu0 0
      %1881 = vmatmul.mubr.bf16.gmra.mrb[0].mxu0 %v1698
      %v1882 = vpop.f32.mrb[0].mxu0
      %v1883 = vadd.f32 0.0, %v1882
      %v1884 = vpop.f32.mrb[0].mxu0
      %v1885 = vadd.f32 0.0, %v1884
      %v1886 = vpop.f32.mrb[0].mxu0
      %v1887 = vpop.f32.mrb[0].mxu0
      %1888 = vmatprep.mubr.bf16.mxu0 0
      %1889 = vmatmul.mubr.bf16.gmra.mrb[0].mxu0 %v1701
      %v1890 = vpop.f32.mrb[0].mxu0
      %v1891 = vadd.f32 0.0, %v1890
      %v1892 = vpop.f32.mrb[0].mxu0
      %v1893 = vadd.f32 0.0, %v1892
      %v1894 = vpop.f32.mrb[0].mxu0
      %v1895 = vadd.f32 0.0, %v1894
      %v1896 = vpop.f32.mrb[0].mxu0
      %v1897 = vadd.f32 0.0, %v1896
      %1898 = vmatprep.mubr.bf16.mxu0 0
      %1899 = vmatmul.mubr.bf16.gmra.mrb[0].mxu0 %v1704
      %v1900 = vpop.f32.mrb[0].mxu0
      %v1901 = vadd.f32 0.0, %v1900
      %v1902 = vpop.f32.mrb[0].mxu0
      %v1903 = vadd.f32 0.0, %v1902
      %v1904 = vpop.f32.mrb[0].mxu0
      %v1905 = vpop.f32.mrb[0].mxu0
      %1906 = vmatprep.mubr.bf16.mxu0 0
      %1907 = vmatmul.mubr.bf16.gmra.mrb[0].mxu0 %v1707
      %v1908 = vpop.f32.mrb[0].mxu0
      %v1909 = vadd.f32 0.0, %v1908
      %v1910 = vpop.f32.mrb[0].mxu0
      %v1911 = vadd.f32 0.0, %v1910
      %v1912 = vpop.f32.mrb[0].mxu0
      %v1913 = vadd.f32 0.0, %v1912
      %v1914 = vpop.f32.mrb[0].mxu0
      %v1915 = vadd.f32 0.0, %v1914
      %1916 = vmatprep.mubr.bf16.mxu0 0
      %1917 = vmatmul.mubr.bf16.gmra.mrb[0].mxu0 %v1710
      %v1918 = vpop.f32.mrb[0].mxu0
      %v1919 = vadd.f32 0.0, %v1918
      %v1920 = vpop.f32.mrb[0].mxu0
      %v1921 = vadd.f32 0.0, %v1920
      %v1922 = vpop.f32.mrb[0].mxu0
      %v1923 = vpop.f32.mrb[0].mxu0
      %1924 = vmatprep.mubr.bf16.mxu0 0
      %1925 = vmatmul.mubr.bf16.gmra.mrb[0].mxu0 %v1713
      %v1926 = vpop.f32.mrb[0].mxu0
      %v1927 = vadd.f32 0.0, %v1926
      %v1928 = vpop.f32.mrb[0].mxu0
      %v1929 = vadd.f32 0.0, %v1928
      %v1930 = vpop.f32.mrb[0].mxu0
      %v1931 = vadd.f32 0.0, %v1930
      %v1932 = vpop.f32.mrb[0].mxu0
      %v1933 = vadd.f32 0.0, %v1932
      %1934 = vmatprep.mubr.bf16.mxu0 0
      %1935 = vmatmul.mubr.bf16.gmra.mrb[0].mxu0 %v1716
      %v1936 = vpop.f32.mrb[0].mxu0
      %v1937 = vadd.f32 0.0, %v1936
      %v1938 = vpop.f32.mrb[0].mxu0
      %v1939 = vadd.f32 0.0, %v1938
      %v1940 = vpop.f32.mrb[0].mxu0
      %v1941 = vpop.f32.mrb[0].mxu0
      %1942 = vmatprep.mubr.bf16.mxu0 0
      %1943 = vmatmul.mubr.bf16.gmra.mrb[0].mxu0 %v1719
      %v1944 = vpop.f32.mrb[0].mxu0
      %v1945 = vadd.f32 0.0, %v1944
      %v1946 = vpop.f32.mrb[0].mxu0
      %v1947 = vadd.f32 0.0, %v1946
      %v1948 = vpop.f32.mrb[0].mxu0
      %v1949 = vadd.f32 0.0, %v1948
      %v1950 = vpop.f32.mrb[0].mxu0
      %v1951 = vadd.f32 0.0, %v1950
      %1952 = vmatprep.mubr.bf16.mxu0 0
      %1953 = vmatmul.mubr.bf16.gmra.mrb[0].mxu0 %v1722
      %v1954 = vpop.f32.mrb[0].mxu0
      %v1955 = vadd.f32 0.0, %v1954
      %v1956 = vpop.f32.mrb[0].mxu0
      %v1957 = vadd.f32 0.0, %v1956
      %v1958 = vpop.f32.mrb[0].mxu0
      %v1959 = vpop.f32.mrb[0].mxu0
      %1960 = vmatprep.mubr.bf16.mxu0 0
      %1961 = vmatmul.mubr.bf16.gmra.mrb[0].mxu0 %v1725
      %v1962 = vpop.f32.mrb[0].mxu0
      %v1963 = vadd.f32 0.0, %v1962
      %v1964 = vpop.f32.mrb[0].mxu0
      %v1965 = vadd.f32 0.0, %v1964
      %v1966 = vpop.f32.mrb[0].mxu0
      %v1967 = vadd.f32 0.0, %v1966
      %v1968 = vpop.f32.mrb[0].mxu0
      %v1969 = vadd.f32 0.0, %v1968
      %1970 = vmatprep.mubr.bf16.mxu0 0
      %1971 = vmatmul.mubr.bf16.gmra.mrb[0].mxu0 %v1728
      %v1972 = vpop.f32.mrb[0].mxu0
      %v1973 = vadd.f32 0.0, %v1972
      %v1974 = vpop.f32.mrb[0].mxu0
      %v1975 = vadd.f32 0.0, %v1974
      %v1976 = vpop.f32.mrb[0].mxu0
      %v1977 = vpop.f32.mrb[0].mxu0
      %1978 = vmatprep.mubr.bf16.mxu0 0
      %1979 = vmatmul.mubr.bf16.gmra.mrb[0].mxu0 %v1731
      %v1980 = vpop.f32.mrb[0].mxu0
      %v1981 = vadd.f32 0.0, %v1980
      %v1982 = vpop.f32.mrb[0].mxu0
      %v1983 = vadd.f32 0.0, %v1982
      %v1984 = vpop.f32.mrb[0].mxu0
      %v1985 = vadd.f32 0.0, %v1984
      %v1986 = vpop.f32.mrb[0].mxu0
      %v1987 = vadd.f32 0.0, %v1986
      %1988 = vmatprep.mubr.bf16.mxu0 0
      %1989 = vmatmul.mubr.bf16.gmra.mrb[0].mxu0 %v1734
      %v1990 = vpop.f32.mrb[0].mxu0
      %v1991 = vadd.f32 0.0, %v1990
      %v1992 = vpop.f32.mrb[0].mxu0
      %v1993 = vadd.f32 0.0, %v1992
      %v1994 = vpop.f32.mrb[0].mxu0
      %v1995 = vpop.f32.mrb[0].mxu0
      %1996 = vmatprep.mubr.bf16.mxu0 0
      %1997 = vmatmul.mubr.bf16.gmra.mrb[0].mxu0 %v1737
      %v1998 = vpop.f32.mrb[0].mxu0
      %v1999 = vadd.f32 0.0, %v1998
      %v2000 = vpop.f32.mrb[0].mxu0
      %v2001 = vadd.f32 0.0, %v2000
      %v2002 = vpop.f32.mrb[0].mxu0
      %v2003 = vadd.f32 0.0, %v2002
      %v2004 = vpop.f32.mrb[0].mxu0
      %v2005 = vadd.f32 0.0, %v2004
      %2006 = vmatprep.mubr.bf16.mxu0 0
      %2007 = vmatmul.mubr.bf16.gmra.mrb[0].mxu0 %v1740
      %v2008 = vpop.f32.mrb[0].mxu0
      %v2009 = vadd.f32 0.0, %v2008
      %v2010 = vpop.f32.mrb[0].mxu0
      %v2011 = vadd.f32 0.0, %v2010
      %v2012 = vpop.f32.mrb[0].mxu0
      %v2013 = vpop.f32.mrb[0].mxu0
      %2014 = vmatprep.mubr.bf16.mxu0 0
      %2015 = vmatmul.mubr.bf16.gmra.mrb[0].mxu0 %v1743
      %v2016 = vpop.f32.mrb[0].mxu0
      %v2017 = vadd.f32 0.0, %v2016
      %v2018 = vpop.f32.mrb[0].mxu0
      %v2019 = vadd.f32 0.0, %v2018
      %v2020 = vpop.f32.mrb[0].mxu0
      %v2021 = vadd.f32 0.0, %v2020
      %v2022 = vpop.f32.mrb[0].mxu0
      %v2023 = vadd.f32 0.0, %v2022
      %2024 = vmatprep.mubr.bf16.mxu0 0
      %2025 = vmatmul.mubr.bf16.gmra.mrb[0].mxu0 %v1746
      %v2026 = vpop.f32.mrb[0].mxu0
      %v2027 = vadd.f32 0.0, %v2026
      %v2028 = vpop.f32.mrb[0].mxu0
      %v2029 = vadd.f32 0.0, %v2028
      %v2030 = vpop.f32.mrb[0].mxu0
      %v2031 = vpop.f32.mrb[0].mxu0
      %2032 = vmatprep.mubr.bf16.mxu0 0
      %2033 = vmatmul.mubr.bf16.gmra.mrb[0].mxu0 %v1749
      %v2034 = vpop.f32.mrb[0].mxu0
      %v2035 = vadd.f32 0.0, %v2034
      %v2036 = vpop.f32.mrb[0].mxu0
      %v2037 = vadd.f32 0.0, %v2036
      %v2038 = vpop.f32.mrb[0].mxu0
      %v2039 = vadd.f32 0.0, %v2038
      %v2040 = vpop.f32.mrb[0].mxu0
      %v2041 = vadd.f32 0.0, %v2040
      %2042 = vmatprep.mubr.bf16.mxu0 0
      %2043 = vmatmul.mubr.bf16.gmra.mrb[0].mxu0 %v1752
      %v2044 = vpop.f32.mrb[0].mxu0
      %v2045 = vadd.f32 0.0, %v2044
      %v2046 = vpop.f32.mrb[0].mxu0
      %v2047 = vadd.f32 0.0, %v2046
      %v2048 = vpop.f32.mrb[0].mxu0
      %v2049 = vpop.f32.mrb[0].mxu0
      %2050 = vmatprep.mubr.bf16.mxu0 0
      %2051 = vmatmul.mubr.bf16.gmra.mrb[0].mxu0 %v1755
      %v2052 = vpop.f32.mrb[0].mxu0
      %v2053 = vadd.f32 0.0, %v2052
      %v2054 = vpop.f32.mrb[0].mxu0
      %v2055 = vadd.f32 0.0, %v2054
      %v2056 = vpop.f32.mrb[0].mxu0
      %v2057 = vadd.f32 0.0, %v2056
      %v2058 = vpop.f32.mrb[0].mxu0
      %v2059 = vadd.f32 0.0, %v2058
      %2060 = vmatprep.mubr.bf16.mxu0 0
      %2061 = vmatmul.mubr.bf16.gmra.mrb[0].mxu0 %v1758
      %v2062 = vpop.f32.mrb[0].mxu0
      %v2063 = vadd.f32 0.0, %v2062
      %v2064 = vpop.f32.mrb[0].mxu0
      %v2065 = vadd.f32 0.0, %v2064
      %v2066 = vpop.f32.mrb[0].mxu0
      %v2067 = vpop.f32.mrb[0].mxu0
      %2068 = vmatprep.mubr.bf16.mxu0 0
      %2069 = vmatmul.mubr.bf16.gmra.mrb[0].mxu0 %v1761
      %v2070 = vpop.f32.mrb[0].mxu0
      %v2071 = vadd.f32 0.0, %v2070
      %v2072 = vpop.f32.mrb[0].mxu0
      %v2073 = vadd.f32 0.0, %v2072
      %v2074 = vpop.f32.mrb[0].mxu0
      %v2075 = vadd.f32 0.0, %v2074
      %v2076 = vpop.f32.mrb[0].mxu0
      %v2077 = vadd.f32 0.0, %v2076
      %2078 = vmatprep.mubr.bf16.mxu0 0
      %2079 = vmatmul.mubr.bf16.gmra.mrb[0].mxu0 %v1764
      %v2080 = vpop.f32.mrb[0].mxu0
      %v2081 = vadd.f32 0.0, %v2080
      %v2082 = vpop.f32.mrb[0].mxu0
      %v2083 = vadd.f32 0.0, %v2082
      %v2084 = vpop.f32.mrb[0].mxu0
      %v2085 = vpop.f32.mrb[0].mxu0
      %2086 = vmatprep.mubr.bf16.mxu0 0
      %2087 = vmatmul.mubr.bf16.gmra.mrb[0].mxu0 %v1767
      %v2088 = vpop.f32.mrb[0].mxu0
      %v2089 = vadd.f32 0.0, %v2088
      %v2090 = vpop.f32.mrb[0].mxu0
      %v2091 = vadd.f32 0.0, %v2090
      %v2092 = vpop.f32.mrb[0].mxu0
      %v2093 = vadd.f32 0.0, %v2092
      %v2094 = vpop.f32.mrb[0].mxu0
      %v2095 = vadd.f32 0.0, %v2094
      %2096 = vmatprep.mubr.bf16.mxu0 0
      %2097 = vmatmul.mubr.bf16.gmra.mrb[0].mxu0 %v1770
      %v2098 = vpop.f32.mrb[0].mxu0
      %v2099 = vadd.f32 0.0, %v2098
      %v2100 = vpop.f32.mrb[0].mxu0
      %v2101 = vadd.f32 0.0, %v2100
      %v2102 = vpop.f32.mrb[0].mxu0
      %v2103 = vpop.f32.mrb[0].mxu0
      %2104 = vmatprep.mubr.bf16.mxu0 0
      %2105 = vmatmul.mubr.bf16.gmra.mrb[0].mxu0 %v1773
      %v2106 = vpop.f32.mrb[0].mxu0
      %v2107 = vadd.f32 0.0, %v2106
      %v2108 = vpop.f32.mrb[0].mxu0
      %v2109 = vadd.f32 0.0, %v2108
      %v2110 = vpop.f32.mrb[0].mxu0
      %v2111 = vadd.f32 0.0, %v2110
      %v2112 = vpop.f32.mrb[0].mxu0
      %v2113 = vadd.f32 0.0, %v2112
      %2114 = vmatprep.mubr.bf16.mxu0 0
      %2115 = vmatmul.mubr.bf16.gmra.mrb[0].mxu0 %v1776
      %v2116 = vpop.f32.mrb[0].mxu0
      %v2117 = vpop.f32.mrb[0].mxu0
      %v2118 = vadd.f32 0.0, %v2117
      %v2119 = vpop.f32.mrb[0].mxu0
      %v2120 = vpop.f32.mrb[0].mxu0
      %2121 = vmatprep.mubr.bf16.mxu0 0
      %2122 = vmatmul.mubr.bf16.gmra.mrb[0].mxu0 %v1779
      %v2123 = vpop.f32.mrb[0].mxu0
      %v2124 = vadd.f32 0.0, %v2123
      %v2125 = vpop.f32.mrb[0].mxu0
      %v2126 = vadd.f32 0.0, %v2125
      %v2127 = vpop.f32.mrb[0].mxu0
      %v2128 = vadd.f32 0.0, %v2127
      %v2129 = vpop.f32.mrb[0].mxu0
      %v2130 = vadd.f32 0.0, %v2129
      %2131 = vmatprep.mubr.bf16.mxu0 0
      %2132 = vmatmul.mubr.bf16.gmra.mrb[0].mxu0 %v1782
      %v2133 = vpop.f32.mrb[0].mxu0
      %v2134 = vpop.f32.mrb[0].mxu0
      %v2135 = vadd.f32 0.0, %v2134
      %v2136 = vpop.f32.mrb[0].mxu0
      %v2137 = vpop.f32.mrb[0].mxu0
      %2138 = vdwg.mxu0
      %2139 = vmatprep.subr.bf16.mxu0 0
      %2140 = vmatpush1.bf16.msra.mxu0 %v1666
      %2141 = vmatprep.subr.bf16.mxu0 0
      %2142 = vmatpush1.bf16.msra.mxu0 %v1669
      %2143 = vmatprep.subr.bf16.mxu0 0
      %2144 = vmatpush1.bf16.msra.mxu0 0
      %2145 = vmatprep.subr.bf16.mxu0 0
      %2146 = vmatpush1.bf16.msra.mxu0 0
      %2147 = vmatprep.subr.bf16.mxu0 0
      %2148 = vmatpush1.bf16.msra.mxu0 0
      %2149 = vmatprep.subr.bf16.mxu0 0
      %2150 = vmatpush1.bf16.msra.mxu0 0
      %2151 = vmatprep.subr.bf16.mxu0 0
      %2152 = vmatpush1.bf16.msra.mxu0 0
      %2153 = vmatprep.subr.bf16.mxu0 0
      %2154 = vmatpush1.bf16.msra.mxu0 0
      %2155 = vmatprep.subr.bf16.mxu0 0
      %2156 = vmatpush1.bf16.msra.mxu0 0
      %2157 = vmatprep.subr.bf16.mxu0 0
      %2158 = vmatpush1.bf16.msra.mxu0 0
      %2159 = vmatprep.subr.bf16.mxu0 0
      %2160 = vmatpush1.bf16.msra.mxu0 0
      %2161 = vmatprep.subr.bf16.mxu0 0
      %2162 = vmatpush1.bf16.msra.mxu0 0
      %2163 = vmatprep.subr.bf16.mxu0 0
      %2164 = vmatpush1.bf16.msra.mxu0 0
      %2165 = vmatprep.subr.bf16.mxu0 0
      %2166 = vmatpush1.bf16.msra.mxu0 0
      %2167 = vmatprep.subr.bf16.mxu0 0
      %2168 = vmatpush1.bf16.msra.mxu0 0
      %2169 = vmatprep.subr.bf16.mxu0 0
      %2170 = vmatpush1.bf16.msra.mxu0 0
      %2171 = vmatprep.mubr.bf16.mxu0 0
      %2172 = vmatmul.mubr.bf16.gmra.mrb[0].mxu0 %v1677
      %v2173 = vpop.f32.mrb[0].mxu0
      %v2174 = vpop.f32.mrb[0].mxu0
      %v2175 = vpop.f32.mrb[0].mxu0
      %v2176 = vpop.f32.mrb[0].mxu0
      %2177 = vmatprep.mubr.bf16.mxu0 0
      %2178 = vmatmul.mubr.bf16.gmra.mrb[0].mxu0 %v1680
      %v2179 = vpop.f32.mrb[0].mxu0
      %v2180 = vpop.f32.mrb[0].mxu0
      %v2181 = vpop.f32.mrb[0].mxu0
      %v2182 = vpop.f32.mrb[0].mxu0
      %2183 = vmatprep.mubr.bf16.mxu0 0
      %2184 = vmatmul.mubr.bf16.gmra.mrb[0].mxu0 %v1683
      %v2185 = vpop.f32.mrb[0].mxu0
      %v2186 = vpop.f32.mrb[0].mxu0
      %v2187 = vpop.f32.mrb[0].mxu0
      %v2188 = vpop.f32.mrb[0].mxu0
      %2189 = vmatprep.mubr.bf16.mxu0 0
      %2190 = vmatmul.mubr.bf16.gmra.mrb[0].mxu0 %v1686
      %v2191 = vpop.f32.mrb[0].mxu0
      %v2192 = vpop.f32.mrb[0].mxu0
      %v2193 = vpop.f32.mrb[0].mxu0
      %v2194 = vpop.f32.mrb[0].mxu0
      %2195 = vmatprep.mubr.bf16.mxu0 0
      %2196 = vmatmul.mubr.bf16.gmra.mrb[0].mxu0 %v1689
      %v2197 = vpop.f32.mrb[0].mxu0
      %v2198 = vadd.f32 0.0, %v2197
      %v2199 = vpop.f32.mrb[0].mxu0
      %v2200 = vpop.f32.mrb[0].mxu0
      %v2201 = vadd.f32 0.0, %v2200
      %v2202 = vpop.f32.mrb[0].mxu0
      %2203 = vmatprep.mubr.bf16.mxu0 0
      %2204 = vmatmul.mubr.bf16.gmra.mrb[0].mxu0 %v1692
      %v2205 = vpop.f32.mrb[0].mxu0
      %v2206 = vadd.f32 0.0, %v2205
      %v2207 = vpop.f32.mrb[0].mxu0
      %v2208 = vpop.f32.mrb[0].mxu0
      %v2209 = vpop.f32.mrb[0].mxu0
      %2210 = vmatprep.mubr.bf16.mxu0 0
      %2211 = vmatmul.mubr.bf16.gmra.mrb[0].mxu0 %v1695
      %v2212 = vpop.f32.mrb[0].mxu0
      %v2213 = vadd.f32 0.0, %v2212
      %v2214 = vpop.f32.mrb[0].mxu0
      %v2215 = vpop.f32.mrb[0].mxu0
      %v2216 = vadd.f32 0.0, %v2215
      %v2217 = vpop.f32.mrb[0].mxu0
      %2218 = vmatprep.mubr.bf16.mxu0 0
      %2219 = vmatmul.mubr.bf16.gmra.mrb[0].mxu0 %v1698
      %v2220 = vpop.f32.mrb[0].mxu0
      %v2221 = vadd.f32 0.0, %v2220
      %v2222 = vpop.f32.mrb[0].mxu0
      %v2223 = vpop.f32.mrb[0].mxu0
      %v2224 = vpop.f32.mrb[0].mxu0
      %2225 = vmatprep.mubr.bf16.mxu0 0
      %2226 = vmatmul.mubr.bf16.gmra.mrb[0].mxu0 %v1701
      %v2227 = vpop.f32.mrb[0].mxu0
      %v2228 = vadd.f32 0.0, %v2227
      %v2229 = vpop.f32.mrb[0].mxu0
      %v2230 = vpop.f32.mrb[0].mxu0
      %v2231 = vadd.f32 0.0, %v2230
      %v2232 = vpop.f32.mrb[0].mxu0
      %2233 = vmatprep.mubr.bf16.mxu0 0
      %2234 = vmatmul.mubr.bf16.gmra.mrb[0].mxu0 %v1704
      %v2235 = vpop.f32.mrb[0].mxu0
      %v2236 = vadd.f32 0.0, %v2235
      %v2237 = vpop.f32.mrb[0].mxu0
      %v2238 = vpop.f32.mrb[0].mxu0
      %v2239 = vpop.f32.mrb[0].mxu0
      %2240 = vmatprep.mubr.bf16.mxu0 0
      %2241 = vmatmul.mubr.bf16.gmra.mrb[0].mxu0 %v1707
      %v2242 = vpop.f32.mrb[0].mxu0
      %v2243 = vadd.f32 0.0, %v2242
      %v2244 = vpop.f32.mrb[0].mxu0
      %v2245 = vpop.f32.mrb[0].mxu0
      %v2246 = vadd.f32 0.0, %v2245
      %v2247 = vpop.f32.mrb[0].mxu0
      %2248 = vmatprep.mubr.bf16.mxu0 0
      %2249 = vmatmul.mubr.bf16.gmra.mrb[0].mxu0 %v1710
      %v2250 = vpop.f32.mrb[0].mxu0
      %v2251 = vadd.f32 0.0, %v2250
      %v2252 = vpop.f32.mrb[0].mxu0
      %v2253 = vpop.f32.mrb[0].mxu0
      %v2254 = vpop.f32.mrb[0].mxu0
      %2255 = vmatprep.mubr.bf16.mxu0 0
      %2256 = vmatmul.mubr.bf16.gmra.mrb[0].mxu0 %v1713
      %v2257 = vpop.f32.mrb[0].mxu0
      %v2258 = vadd.f32 0.0, %v2257
      %v2259 = vpop.f32.mrb[0].mxu0
      %v2260 = vpop.f32.mrb[0].mxu0
      %v2261 = vadd.f32 0.0, %v2260
      %v2262 = vpop.f32.mrb[0].mxu0
      %2263 = vmatprep.mubr.bf16.mxu0 0
      %2264 = vmatmul.mubr.bf16.gmra.mrb[0].mxu0 %v1716
      %v2265 = vpop.f32.mrb[0].mxu0
      %v2266 = vadd.f32 0.0, %v2265
      %v2267 = vpop.f32.mrb[0].mxu0
      %v2268 = vpop.f32.mrb[0].mxu0
      %v2269 = vpop.f32.mrb[0].mxu0
      %2270 = vmatprep.mubr.bf16.mxu0 0
      %2271 = vmatmul.mubr.bf16.gmra.mrb[0].mxu0 %v1719
      %v2272 = vpop.f32.mrb[0].mxu0
      %v2273 = vadd.f32 0.0, %v2272
      %v2274 = vpop.f32.mrb[0].mxu0
      %v2275 = vpop.f32.mrb[0].mxu0
      %v2276 = vadd.f32 0.0, %v2275
      %v2277 = vpop.f32.mrb[0].mxu0
      %2278 = vmatprep.mubr.bf16.mxu0 0
      %2279 = vmatmul.mubr.bf16.gmra.mrb[0].mxu0 %v1722
      %v2280 = vpop.f32.mrb[0].mxu0
      %v2281 = vadd.f32 0.0, %v2280
      %v2282 = vpop.f32.mrb[0].mxu0
      %v2283 = vpop.f32.mrb[0].mxu0
      %v2284 = vpop.f32.mrb[0].mxu0
      %2285 = vmatprep.mubr.bf16.mxu0 0
      %2286 = vmatmul.mubr.bf16.gmra.mrb[0].mxu0 %v1725
      %v2287 = vpop.f32.mrb[0].mxu0
      %v2288 = vadd.f32 0.0, %v2287
      %v2289 = vpop.f32.mrb[0].mxu0
      %v2290 = vpop.f32.mrb[0].mxu0
      %v2291 = vadd.f32 0.0, %v2290
      %v2292 = vpop.f32.mrb[0].mxu0
      %2293 = vmatprep.mubr.bf16.mxu0 0
      %2294 = vmatmul.mubr.bf16.gmra.mrb[0].mxu0 %v1728
      %v2295 = vpop.f32.mrb[0].mxu0
      %v2296 = vadd.f32 0.0, %v2295
      %v2297 = vpop.f32.mrb[0].mxu0
      %v2298 = vpop.f32.mrb[0].mxu0
      %v2299 = vpop.f32.mrb[0].mxu0
      %2300 = vmatprep.mubr.bf16.mxu0 0
      %2301 = vmatmul.mubr.bf16.gmra.mrb[0].mxu0 %v1731
      %v2302 = vpop.f32.mrb[0].mxu0
      %v2303 = vadd.f32 0.0, %v2302
      %v2304 = vpop.f32.mrb[0].mxu0
      %v2305 = vpop.f32.mrb[0].mxu0
      %v2306 = vadd.f32 0.0, %v2305
      %v2307 = vpop.f32.mrb[0].mxu0
      %2308 = vmatprep.mubr.bf16.mxu0 0
      %2309 = vmatmul.mubr.bf16.gmra.mrb[0].mxu0 %v1734
      %v2310 = vpop.f32.mrb[0].mxu0
      %v2311 = vadd.f32 0.0, %v2310
      %v2312 = vpop.f32.mrb[0].mxu0
      %v2313 = vpop.f32.mrb[0].mxu0
      %v2314 = vpop.f32.mrb[0].mxu0
      %2315 = vmatprep.mubr.bf16.mxu0 0
      %2316 = vmatmul.mubr.bf16.gmra.mrb[0].mxu0 %v1737
      %v2317 = vpop.f32.mrb[0].mxu0
      %v2318 = vadd.f32 0.0, %v2317
      %v2319 = vpop.f32.mrb[0].mxu0
      %v2320 = vpop.f32.mrb[0].mxu0
      %v2321 = vadd.f32 0.0, %v2320
      %v2322 = vpop.f32.mrb[0].mxu0
      %2323 = vmatprep.mubr.bf16.mxu0 0
      %2324 = vmatmul.mubr.bf16.gmra.mrb[0].mxu0 %v1740
      %v2325 = vpop.f32.mrb[0].mxu0
      %v2326 = vadd.f32 0.0, %v2325
      %v2327 = vpop.f32.mrb[0].mxu0
      %v2328 = vpop.f32.mrb[0].mxu0
      %v2329 = vpop.f32.mrb[0].mxu0
      %2330 = vmatprep.mubr.bf16.mxu0 0
      %2331 = vmatmul.mubr.bf16.gmra.mrb[0].mxu0 %v1743
      %v2332 = vpop.f32.mrb[0].mxu0
      %v2333 = vadd.f32 0.0, %v2332
      %v2334 = vpop.f32.mrb[0].mxu0
      %v2335 = vpop.f32.mrb[0].mxu0
      %v2336 = vadd.f32 0.0, %v2335
      %v2337 = vpop.f32.mrb[0].mxu0
      %2338 = vmatprep.mubr.bf16.mxu0 0
      %2339 = vmatmul.mubr.bf16.gmra.mrb[0].mxu0 %v1746
      %v2340 = vpop.f32.mrb[0].mxu0
      %v2341 = vadd.f32 0.0, %v2340
      %v2342 = vpop.f32.mrb[0].mxu0
      %v2343 = vpop.f32.mrb[0].mxu0
      %v2344 = vpop.f32.mrb[0].mxu0
      %2345 = vmatprep.mubr.bf16.mxu0 0
      %2346 = vmatmul.mubr.bf16.gmra.mrb[0].mxu0 %v1749
      %v2347 = vpop.f32.mrb[0].mxu0
      %v2348 = vadd.f32 0.0, %v2347
      %v2349 = vpop.f32.mrb[0].mxu0
      %v2350 = vpop.f32.mrb[0].mxu0
      %v2351 = vadd.f32 0.0, %v2350
      %v2352 = vpop.f32.mrb[0].mxu0
      %2353 = vmatprep.mubr.bf16.mxu0 0
      %2354 = vmatmul.mubr.bf16.gmra.mrb[0].mxu0 %v1752
      %v2355 = vpop.f32.mrb[0].mxu0
      %v2356 = vadd.f32 0.0, %v2355
      %v2357 = vpop.f32.mrb[0].mxu0
      %v2358 = vpop.f32.mrb[0].mxu0
      %v2359 = vpop.f32.mrb[0].mxu0
      %2360 = vmatprep.mubr.bf16.mxu0 0
      %2361 = vmatmul.mubr.bf16.gmra.mrb[0].mxu0 %v1755
      %v2362 = vpop.f32.mrb[0].mxu0
      %v2363 = vadd.f32 0.0, %v2362
      %v2364 = vpop.f32.mrb[0].mxu0
      %v2365 = vpop.f32.mrb[0].mxu0
      %v2366 = vadd.f32 0.0, %v2365
      %v2367 = vpop.f32.mrb[0].mxu0
      %2368 = vmatprep.mubr.bf16.mxu0 0
      %2369 = vmatmul.mubr.bf16.gmra.mrb[0].mxu0 %v1758
      %v2370 = vpop.f32.mrb[0].mxu0
      %v2371 = vadd.f32 0.0, %v2370
      %v2372 = vpop.f32.mrb[0].mxu0
      %v2373 = vpop.f32.mrb[0].mxu0
      %v2374 = vpop.f32.mrb[0].mxu0
      %2375 = vmatprep.mubr.bf16.mxu0 0
      %2376 = vmatmul.mubr.bf16.gmra.mrb[0].mxu0 %v1761
      %v2377 = vpop.f32.mrb[0].mxu0
      %v2378 = vadd.f32 0.0, %v2377
      %v2379 = vpop.f32.mrb[0].mxu0
      %v2380 = vpop.f32.mrb[0].mxu0
      %v2381 = vadd.f32 0.0, %v2380
      %v2382 = vpop.f32.mrb[0].mxu0
      %2383 = vmatprep.mubr.bf16.mxu0 0
      %2384 = vmatmul.mubr.bf16.gmra.mrb[0].mxu0 %v1764
      %v2385 = vpop.f32.mrb[0].mxu0
      %v2386 = vadd.f32 0.0, %v2385
      %v2387 = vpop.f32.mrb[0].mxu0
      %v2388 = vpop.f32.mrb[0].mxu0
      %v2389 = vpop.f32.mrb[0].mxu0
      %2390 = vmatprep.mubr.bf16.mxu0 0
      %2391 = vmatmul.mubr.bf16.gmra.mrb[0].mxu0 %v1767
      %v2392 = vpop.f32.mrb[0].mxu0
      %v2393 = vadd.f32 0.0, %v2392
      %v2394 = vpop.f32.mrb[0].mxu0
      %v2395 = vpop.f32.mrb[0].mxu0
      %v2396 = vadd.f32 0.0, %v2395
      %v2397 = vpop.f32.mrb[0].mxu0
      %2398 = vmatprep.mubr.bf16.mxu0 0
      %2399 = vmatmul.mubr.bf16.gmra.mrb[0].mxu0 %v1770
      %v2400 = vpop.f32.mrb[0].mxu0
      %v2401 = vadd.f32 0.0, %v2400
      %v2402 = vpop.f32.mrb[0].mxu0
      %v2403 = vpop.f32.mrb[0].mxu0
      %v2404 = vpop.f32.mrb[0].mxu0
      %2405 = vmatprep.mubr.bf16.mxu0 0
      %2406 = vmatmul.mubr.bf16.gmra.mrb[0].mxu0 %v1773
      %v2407 = vpop.f32.mrb[0].mxu0
      %v2408 = vadd.f32 0.0, %v2407
      %v2409 = vpop.f32.mrb[0].mxu0
      %v2410 = vpop.f32.mrb[0].mxu0
      %v2411 = vadd.f32 0.0, %v2410
      %v2412 = vpop.f32.mrb[0].mxu0
      %2413 = vmatprep.mubr.bf16.mxu0 0
      %2414 = vmatmul.mubr.bf16.gmra.mrb[0].mxu0 %v1776
      %v2415 = vpop.f32.mrb[0].mxu0
      %v2416 = vadd.f32 0.0, %v2415
      %v2417 = vpop.f32.mrb[0].mxu0
      %v2418 = vpop.f32.mrb[0].mxu0
      %v2419 = vpop.f32.mrb[0].mxu0
      %2420 = vmatprep.mubr.bf16.mxu0 0
      %2421 = vmatmul.mubr.bf16.gmra.mrb[0].mxu0 %v1779
      %v2422 = vpop.f32.mrb[0].mxu0
      %v2423 = vadd.f32 0.0, %v2422
      %v2424 = vpop.f32.mrb[0].mxu0
      %v2425 = vpop.f32.mrb[0].mxu0
      %v2426 = vadd.f32 0.0, %v2425
      %v2427 = vpop.f32.mrb[0].mxu0
      %2428 = vmatprep.mubr.bf16.mxu0 0
      %2429 = vmatmul.mubr.bf16.gmra.mrb[0].mxu0 %v1782
      %v2430 = vpop.f32.mrb[0].mxu0
      %v2431 = vadd.f32 0.0, %v2430
      %v2432 = vpop.f32.mrb[0].mxu0
      %v2433 = vpop.f32.mrb[0].mxu0
      %v2434 = vpop.f32.mrb[0].mxu0
      %2435 = vdwg.mxu0
      %2468 = vrot.lane.b32.xlu0 %v1837, 96
      %v2469 = vpop.permute.xlu0 %2468
      %2470 = vrot.lane.b32.xlu0 %v1841, 96
      %v2471 = vpop.permute.xlu0 %2470
      %2472 = vrot.lane.b32.xlu0 %v1855, 96
      %v2473 = vpop.permute.xlu0 %2472
      %2474 = vrot.lane.b32.xlu0 %v1859, 96
      %v2475 = vpop.permute.xlu0 %2474
      %2476 = vrot.lane.b32.xlu0 %v1873, 96
      %v2477 = vpop.permute.xlu0 %2476
      %2478 = vrot.lane.b32.xlu0 %v1877, 96
      %v2479 = vpop.permute.xlu0 %2478
      %2480 = vrot.lane.b32.xlu0 %v1891, 96
      %v2481 = vpop.permute.xlu0 %2480
      %2482 = vrot.lane.b32.xlu0 %v1895, 96
      %v2483 = vpop.permute.xlu0 %2482
      %2484 = vrot.lane.b32.xlu0 %v1909, 96
      %v2485 = vpop.permute.xlu0 %2484
      %2486 = vrot.lane.b32.xlu0 %v1913, 96
      %v2487 = vpop.permute.xlu0 %2486
      %2488 = vrot.lane.b32.xlu0 %v1927, 96
      %v2489 = vpop.permute.xlu0 %2488
      %2490 = vrot.lane.b32.xlu0 %v1931, 96
      %v2491 = vpop.permute.xlu0 %2490
      %2492 = vrot.lane.b32.xlu0 %v1945, 96
      %v2493 = vpop.permute.xlu0 %2492
      %2494 = vrot.lane.b32.xlu0 %v1949, 96
      %v2495 = vpop.permute.xlu0 %2494
      %2496 = vrot.lane.b32.xlu0 %v1963, 96
      %v2497 = vpop.permute.xlu0 %2496
      %2498 = vrot.lane.b32.xlu0 %v1967, 96
      %v2499 = vpop.permute.xlu0 %2498
      %2500 = vrot.lane.b32.xlu0 %v1981, 96
      %v2501 = vpop.permute.xlu0 %2500
      %2502 = vrot.lane.b32.xlu0 %v1985, 96
      %v2503 = vpop.permute.xlu0 %2502
      %2504 = vrot.lane.b32.xlu0 %v1999, 96
      %v2505 = vpop.permute.xlu0 %2504
      %2506 = vrot.lane.b32.xlu0 %v2003, 96
      %v2507 = vpop.permute.xlu0 %2506
      %2508 = vrot.lane.b32.xlu0 %v2017, 96
      %v2509 = vpop.permute.xlu0 %2508
      %2510 = vrot.lane.b32.xlu0 %v2021, 96
      %v2511 = vpop.permute.xlu0 %2510
      %2512 = vrot.lane.b32.xlu0 %v2035, 96
      %v2513 = vpop.permute.xlu0 %2512
      %2514 = vrot.lane.b32.xlu0 %v2039, 96
      %v2515 = vpop.permute.xlu0 %2514
      %2516 = vrot.lane.b32.xlu0 %v2053, 96
      %v2517 = vpop.permute.xlu0 %2516
      %2518 = vrot.lane.b32.xlu0 %v2057, 96
      %v2519 = vpop.permute.xlu0 %2518
      %2520 = vrot.lane.b32.xlu0 %v2071, 96
      %v2521 = vpop.permute.xlu0 %2520
      %2522 = vrot.lane.b32.xlu0 %v2075, 96
      %v2523 = vpop.permute.xlu0 %2522
      %2524 = vrot.lane.b32.xlu0 %v2089, 96
      %v2525 = vpop.permute.xlu0 %2524
      %2526 = vrot.lane.b32.xlu0 %v2093, 96
      %v2527 = vpop.permute.xlu0 %2526
      %2528 = vrot.lane.b32.xlu0 %v2107, 96
      %v2529 = vpop.permute.xlu0 %2528
      %2530 = vrot.lane.b32.xlu0 %v2111, 96
      %v2531 = vpop.permute.xlu0 %2530
      %v2564 = vadd.f32 %v1819, %v2469
      %v2565 = vadd.f32 %v1823, %v2471
      %v2566 = vadd.f32 %v1837, %v2473
      %v2567 = vadd.f32 %v1841, %v2475
      %v2568 = vadd.f32 %v1855, %v2477
      %v2569 = vadd.f32 %v1859, %v2479
      %v2570 = vadd.f32 %v1873, %v2481
      %v2571 = vadd.f32 %v1877, %v2483
      %v2572 = vadd.f32 %v1891, %v2485
      %v2573 = vadd.f32 %v1895, %v2487
      %v2574 = vadd.f32 %v1909, %v2489
      %v2575 = vadd.f32 %v1913, %v2491
      %v2576 = vadd.f32 %v1927, %v2493
      %v2577 = vadd.f32 %v1931, %v2495
      %v2578 = vadd.f32 %v1945, %v2497
      %v2579 = vadd.f32 %v1949, %v2499
      %v2580 = vadd.f32 %v1963, %v2501
      %v2581 = vadd.f32 %v1967, %v2503
      %v2582 = vadd.f32 %v1981, %v2505
      %v2583 = vadd.f32 %v1985, %v2507
      %v2584 = vadd.f32 %v1999, %v2509
      %v2585 = vadd.f32 %v2003, %v2511
      %v2586 = vadd.f32 %v2017, %v2513
      %v2587 = vadd.f32 %v2021, %v2515
      %v2588 = vadd.f32 %v2035, %v2517
      %v2589 = vadd.f32 %v2039, %v2519
      %v2590 = vadd.f32 %v2053, %v2521
      %v2591 = vadd.f32 %v2057, %v2523
      %v2592 = vadd.f32 %v2071, %v2525
      %v2593 = vadd.f32 %v2075, %v2527
      %v2594 = vadd.f32 %v2089, %v2529
      %v2595 = vadd.f32 %v2093, %v2531
      %2598 = vrot.lane.b32.xlu0 %v1855, 64
      %v2599 = vpop.permute.xlu0 %2598
      %2600 = vrot.lane.b32.xlu0 %v1859, 64
      %v2601 = vpop.permute.xlu0 %2600
      %2602 = vrot.lane.b32.xlu0 %v1873, 64
      %v2603 = vpop.permute.xlu0 %2602
      %2604 = vrot.lane.b32.xlu0 %v1877, 64
      %v2605 = vpop.permute.xlu0 %2604
      %2606 = vrot.lane.b32.xlu0 %v1891, 64
      %v2607 = vpop.permute.xlu0 %2606
      %2608 = vrot.lane.b32.xlu0 %v1895, 64
      %v2609 = vpop.permute.xlu0 %2608
      %2610 = vrot.lane.b32.xlu0 %v1909, 64
      %v2611 = vpop.permute.xlu0 %2610
      %2612 = vrot.lane.b32.xlu0 %v1913, 64
      %v2613 = vpop.permute.xlu0 %2612
      %2614 = vrot.lane.b32.xlu0 %v1927, 64
      %v2615 = vpop.permute.xlu0 %2614
      %2616 = vrot.lane.b32.xlu0 %v1931, 64
      %v2617 = vpop.permute.xlu0 %2616
      %2618 = vrot.lane.b32.xlu0 %v1945, 64
      %v2619 = vpop.permute.xlu0 %2618
      %2620 = vrot.lane.b32.xlu0 %v1949, 64
      %v2621 = vpop.permute.xlu0 %2620
      %2622 = vrot.lane.b32.xlu0 %v1963, 64
      %v2623 = vpop.permute.xlu0 %2622
      %2624 = vrot.lane.b32.xlu0 %v1967, 64
      %v2625 = vpop.permute.xlu0 %2624
      %2626 = vrot.lane.b32.xlu0 %v1981, 64
      %v2627 = vpop.permute.xlu0 %2626
      %2628 = vrot.lane.b32.xlu0 %v1985, 64
      %v2629 = vpop.permute.xlu0 %2628
      %2630 = vrot.lane.b32.xlu0 %v1999, 64
      %v2631 = vpop.permute.xlu0 %2630
      %2632 = vrot.lane.b32.xlu0 %v2003, 64
      %v2633 = vpop.permute.xlu0 %2632
      %2634 = vrot.lane.b32.xlu0 %v2017, 64
      %v2635 = vpop.permute.xlu0 %2634
      %2636 = vrot.lane.b32.xlu0 %v2021, 64
      %v2637 = vpop.permute.xlu0 %2636
      %2638 = vrot.lane.b32.xlu0 %v2035, 64
      %v2639 = vpop.permute.xlu0 %2638
      %2640 = vrot.lane.b32.xlu0 %v2039, 64
      %v2641 = vpop.permute.xlu0 %2640
      %2642 = vrot.lane.b32.xlu0 %v2053, 64
      %v2643 = vpop.permute.xlu0 %2642
      %2644 = vrot.lane.b32.xlu0 %v2057, 64
      %v2645 = vpop.permute.xlu0 %2644
      %2646 = vrot.lane.b32.xlu0 %v2071, 64
      %v2647 = vpop.permute.xlu0 %2646
      %2648 = vrot.lane.b32.xlu0 %v2075, 64
      %v2649 = vpop.permute.xlu0 %2648
      %2650 = vrot.lane.b32.xlu0 %v2089, 64
      %v2651 = vpop.permute.xlu0 %2650
      %2652 = vrot.lane.b32.xlu0 %v2093, 64
      %v2653 = vpop.permute.xlu0 %2652
      %2654 = vrot.lane.b32.xlu0 %v2107, 64
      %v2655 = vpop.permute.xlu0 %2654
      %2656 = vrot.lane.b32.xlu0 %v2111, 64
      %v2657 = vpop.permute.xlu0 %2656
      %2658 = vrot.lane.b32.xlu0 %v2124, 64
      %v2659 = vpop.permute.xlu0 %2658
      %2660 = vrot.lane.b32.xlu0 %v2128, 64
      %v2661 = vpop.permute.xlu0 %2660
      %v2694 = vadd.f32 %v2564, %v2599
      %v2695 = vadd.f32 %v2565, %v2601
      %v2696 = vadd.f32 %v2566, %v2603
      %v2697 = vadd.f32 %v2567, %v2605
      %v2698 = vadd.f32 %v2568, %v2607
      %v2699 = vadd.f32 %v2569, %v2609
      %v2700 = vadd.f32 %v2570, %v2611
      %v2701 = vadd.f32 %v2571, %v2613
      %v2702 = vadd.f32 %v2572, %v2615
      %v2703 = vadd.f32 %v2573, %v2617
      %v2704 = vadd.f32 %v2574, %v2619
      %v2705 = vadd.f32 %v2575, %v2621
      %v2706 = vadd.f32 %v2576, %v2623
      %v2707 = vadd.f32 %v2577, %v2625
      %v2708 = vadd.f32 %v2578, %v2627
      %v2709 = vadd.f32 %v2579, %v2629
      %v2710 = vadd.f32 %v2580, %v2631
      %v2711 = vadd.f32 %v2581, %v2633
      %v2712 = vadd.f32 %v2582, %v2635
      %v2713 = vadd.f32 %v2583, %v2637
      %v2714 = vadd.f32 %v2584, %v2639
      %v2715 = vadd.f32 %v2585, %v2641
      %v2716 = vadd.f32 %v2586, %v2643
      %v2717 = vadd.f32 %v2587, %v2645
      %v2718 = vadd.f32 %v2588, %v2647
      %v2719 = vadd.f32 %v2589, %v2649
      %v2720 = vadd.f32 %v2590, %v2651
      %v2721 = vadd.f32 %v2591, %v2653
      %v2722 = vadd.f32 %v2592, %v2655
      %v2723 = vadd.f32 %v2593, %v2657
      %v2724 = vadd.f32 %v2594, %v2659
      %v2725 = vadd.f32 %v2595, %v2661
      %vm2744 = vcmask 1046528
      %v2745 = vrot.slane %v1819, 1
      %v2746 = vrot.slane %v1823, 1
      %v2747 = vsel %vm2744, %v2745, %v2746
      %v2748 = vrot.slane %v1829, 1
      %v2749 = vsel %vm2744, %v2746, %v2748
      %v2750 = vrot.slane %v1837, 1
      %v2751 = vrot.slane %v1841, 1
      %v2752 = vsel %vm2744, %v2750, %v2751
      %v2753 = vrot.slane %v1847, 1
      %v2754 = vsel %vm2744, %v2751, %v2753
      %v2755 = vrot.slane %v1855, 1
      %v2756 = vrot.slane %v1859, 1
      %v2757 = vsel %vm2744, %v2755, %v2756
      %v2758 = vrot.slane %v1865, 1
      %v2759 = vsel %vm2744, %v2756, %v2758
      %v2760 = vrot.slane %v1873, 1
      %v2761 = vrot.slane %v1877, 1
      %v2762 = vsel %vm2744, %v2760, %v2761
      %v2763 = vrot.slane %v1883, 1
      %v2764 = vsel %vm2744, %v2761, %v2763
      %v2765 = vrot.slane %v1891, 1
      %v2766 = vrot.slane %v1895, 1
      %v2767 = vsel %vm2744, %v2765, %v2766
      %v2768 = vrot.slane %v1901, 1
      %v2769 = vsel %vm2744, %v2766, %v2768
      %v2770 = vrot.slane %v1909, 1
      %v2771 = vrot.slane %v1913, 1
      %v2772 = vsel %vm2744, %v2770, %v2771
      %v2773 = vrot.slane %v1919, 1
      %v2774 = vsel %vm2744, %v2771, %v2773
      %v2775 = vrot.slane %v1927, 1
      %v2776 = vrot.slane %v1931, 1
      %v2777 = vsel %vm2744, %v2775, %v2776
      %v2778 = vrot.slane %v1937, 1
      %v2779 = vsel %vm2744, %v2776, %v2778
      %v2780 = vrot.slane %v1945, 1
      %v2781 = vrot.slane %v1949, 1
      %v2782 = vsel %vm2744, %v2780, %v2781
      %v2783 = vrot.slane %v1955, 1
      %v2784 = vsel %vm2744, %v2781, %v2783
      %v2785 = vrot.slane %v1963, 1
      %v2786 = vrot.slane %v1967, 1
      %v2787 = vsel %vm2744, %v2785, %v2786
      %v2788 = vrot.slane %v1973, 1
      %v2789 = vsel %vm2744, %v2786, %v2788
      %v2790 = vrot.slane %v1981, 1
      %v2791 = vrot.slane %v1985, 1
      %v2792 = vsel %vm2744, %v2790, %v2791
      %v2793 = vrot.slane %v1991, 1
      %v2794 = vsel %vm2744, %v2791, %v2793
      %v2795 = vrot.slane %v1999, 1
      %v2796 = vrot.slane %v2003, 1
      %v2797 = vsel %vm2744, %v2795, %v2796
      %v2798 = vrot.slane %v2009, 1
      %v2799 = vsel %vm2744, %v2796, %v2798
      %v2800 = vrot.slane %v2017, 1
      %v2801 = vrot.slane %v2021, 1
      %v2802 = vsel %vm2744, %v2800, %v2801
      %v2803 = vrot.slane %v2027, 1
      %v2804 = vsel %vm2744, %v2801, %v2803
      %v2805 = vrot.slane %v2035, 1
      %v2806 = vrot.slane %v2039, 1
      %v2807 = vsel %vm2744, %v2805, %v2806
      %v2808 = vrot.slane %v2045, 1
      %v2809 = vsel %vm2744, %v2806, %v2808
      %v2810 = vrot.slane %v2053, 1
      %v2811 = vrot.slane %v2057, 1
      %v2812 = vsel %vm2744, %v2810, %v2811
      %v2813 = vrot.slane %v2063, 1
      %v2814 = vsel %vm2744, %v2811, %v2813
      %v2815 = vrot.slane %v2071, 1
      %v2816 = vrot.slane %v2075, 1
      %v2817 = vsel %vm2744, %v2815, %v2816
      %v2818 = vrot.slane %v2081, 1
      %v2819 = vsel %vm2744, %v2816, %v2818
      %v2820 = vrot.slane %v2089, 1
      %v2821 = vrot.slane %v2093, 1
      %v2822 = vsel %vm2744, %v2820, %v2821
      %v2823 = vrot.slane %v2099, 1
      %v2824 = vsel %vm2744, %v2821, %v2823
      %2825 = vrot.lane.b32.xlu0 %v2747, 32
      %v2826 = vpop.permute.xlu0 %2825
      %2827 = vrot.lane.b32.xlu0 %v2749, 32
      %v2828 = vpop.permute.xlu0 %2827
      %2829 = vrot.lane.b32.xlu0 %v2752, 32
      %v2830 = vpop.permute.xlu0 %2829
      %2831 = vrot.lane.b32.xlu0 %v2754, 32
      %v2832 = vpop.permute.xlu0 %2831
      %2833 = vrot.lane.b32.xlu0 %v2757, 32
      %v2834 = vpop.permute.xlu0 %2833
      %2835 = vrot.lane.b32.xlu0 %v2759, 32
      %v2836 = vpop.permute.xlu0 %2835
      %2837 = vrot.lane.b32.xlu0 %v2762, 32
      %v2838 = vpop.permute.xlu0 %2837
      %2839 = vrot.lane.b32.xlu0 %v2764, 32
      %v2840 = vpop.permute.xlu0 %2839
      %2841 = vrot.lane.b32.xlu0 %v2767, 32
      %v2842 = vpop.permute.xlu0 %2841
      %2843 = vrot.lane.b32.xlu0 %v2769, 32
      %v2844 = vpop.permute.xlu0 %2843
      %2845 = vrot.lane.b32.xlu0 %v2772, 32
      %v2846 = vpop.permute.xlu0 %2845
      %2847 = vrot.lane.b32.xlu0 %v2774, 32
      %v2848 = vpop.permute.xlu0 %2847
      %2849 = vrot.lane.b32.xlu0 %v2777, 32
      %v2850 = vpop.permute.xlu0 %2849
      %2851 = vrot.lane.b32.xlu0 %v2779, 32
      %v2852 = vpop.permute.xlu0 %2851
      %2853 = vrot.lane.b32.xlu0 %v2782, 32
      %v2854 = vpop.permute.xlu0 %2853
      %2855 = vrot.lane.b32.xlu0 %v2784, 32
      %v2856 = vpop.permute.xlu0 %2855
      %2857 = vrot.lane.b32.xlu0 %v2787, 32
      %v2858 = vpop.permute.xlu0 %2857
      %2859 = vrot.lane.b32.xlu0 %v2789, 32
      %v2860 = vpop.permute.xlu0 %2859
      %2861 = vrot.lane.b32.xlu0 %v2792, 32
      %v2862 = vpop.permute.xlu0 %2861
      %2863 = vrot.lane.b32.xlu0 %v2794, 32
      %v2864 = vpop.permute.xlu0 %2863
      %2865 = vrot.lane.b32.xlu0 %v2797, 32
      %v2866 = vpop.permute.xlu0 %2865
      %2867 = vrot.lane.b32.xlu0 %v2799, 32
      %v2868 = vpop.permute.xlu0 %2867
      %2869 = vrot.lane.b32.xlu0 %v2802, 32
      %v2870 = vpop.permute.xlu0 %2869
      %2871 = vrot.lane.b32.xlu0 %v2804, 32
      %v2872 = vpop.permute.xlu0 %2871
      %2873 = vrot.lane.b32.xlu0 %v2807, 32
      %v2874 = vpop.permute.xlu0 %2873
      %2875 = vrot.lane.b32.xlu0 %v2809, 32
      %v2876 = vpop.permute.xlu0 %2875
      %2877 = vrot.lane.b32.xlu0 %v2812, 32
      %v2878 = vpop.permute.xlu0 %2877
      %2879 = vrot.lane.b32.xlu0 %v2814, 32
      %v2880 = vpop.permute.xlu0 %2879
      %2881 = vrot.lane.b32.xlu0 %v2817, 32
      %v2882 = vpop.permute.xlu0 %2881
      %2883 = vrot.lane.b32.xlu0 %v2819, 32
      %v2884 = vpop.permute.xlu0 %2883
      %2885 = vrot.lane.b32.xlu0 %v2822, 32
      %v2886 = vpop.permute.xlu0 %2885
      %2887 = vrot.lane.b32.xlu0 %v2824, 32
      %v2888 = vpop.permute.xlu0 %2887
      %v2921 = vadd.f32 %v2694, %v2826
      %v2922 = vadd.f32 %v2695, %v2828
      %v2923 = vadd.f32 %v2696, %v2830
      %v2924 = vadd.f32 %v2697, %v2832
      %v2925 = vadd.f32 %v2698, %v2834
      %v2926 = vadd.f32 %v2699, %v2836
      %v2927 = vadd.f32 %v2700, %v2838
      %v2928 = vadd.f32 %v2701, %v2840
      %v2929 = vadd.f32 %v2702, %v2842
      %v2930 = vadd.f32 %v2703, %v2844
      %v2931 = vadd.f32 %v2704, %v2846
      %v2932 = vadd.f32 %v2705, %v2848
      %v2933 = vadd.f32 %v2706, %v2850
      %v2934 = vadd.f32 %v2707, %v2852
      %v2935 = vadd.f32 %v2708, %v2854
      %v2936 = vadd.f32 %v2709, %v2856
      %v2937 = vadd.f32 %v2710, %v2858
      %v2938 = vadd.f32 %v2711, %v2860
      %v2939 = vadd.f32 %v2712, %v2862
      %v2940 = vadd.f32 %v2713, %v2864
      %v2941 = vadd.f32 %v2714, %v2866
      %v2942 = vadd.f32 %v2715, %v2868
      %v2943 = vadd.f32 %v2716, %v2870
      %v2944 = vadd.f32 %v2717, %v2872
      %v2945 = vadd.f32 %v2718, %v2874
      %v2946 = vadd.f32 %v2719, %v2876
      %v2947 = vadd.f32 %v2720, %v2878
      %v2948 = vadd.f32 %v2721, %v2880
      %v2949 = vadd.f32 %v2722, %v2882
      %v2950 = vadd.f32 %v2723, %v2884
      %v2951 = vadd.f32 %v2724, %v2886
      %v2952 = vadd.f32 %v2725, %v2888
      %v3001 = vrot.slane %v1839, 1
      %v3002 = vrot.slane %v1843, 1
      %v3003 = vsel %vm2744, %v3001, %v3002
      %v3004 = vrot.slane %v1849, 1
      %v3005 = vsel %vm2744, %v3002, %v3004
      %v3006 = vrot.slane %v1857, 1
      %v3007 = vrot.slane %v1861, 1
      %v3008 = vsel %vm2744, %v3006, %v3007
      %v3009 = vrot.slane %v1867, 1
      %v3010 = vsel %vm2744, %v3007, %v3009
      %v3011 = vrot.slane %v1875, 1
      %v3012 = vrot.slane %v1879, 1
      %v3013 = vsel %vm2744, %v3011, %v3012
      %v3014 = vrot.slane %v1885, 1
      %v3015 = vsel %vm2744, %v3012, %v3014
      %v3016 = vrot.slane %v1893, 1
      %v3017 = vrot.slane %v1897, 1
      %v3018 = vsel %vm2744, %v3016, %v3017
      %v3019 = vrot.slane %v1903, 1
      %v3020 = vsel %vm2744, %v3017, %v3019
      %v3021 = vrot.slane %v1911, 1
      %v3022 = vrot.slane %v1915, 1
      %v3023 = vsel %vm2744, %v3021, %v3022
      %v3024 = vrot.slane %v1921, 1
      %v3025 = vsel %vm2744, %v3022, %v3024
      %v3026 = vrot.slane %v1929, 1
      %v3027 = vrot.slane %v1933, 1
      %v3028 = vsel %vm2744, %v3026, %v3027
      %v3029 = vrot.slane %v1939, 1
      %v3030 = vsel %vm2744, %v3027, %v3029
      %v3031 = vrot.slane %v1947, 1
      %v3032 = vrot.slane %v1951, 1
      %v3033 = vsel %vm2744, %v3031, %v3032
      %v3034 = vrot.slane %v1957, 1
      %v3035 = vsel %vm2744, %v3032, %v3034
      %v3036 = vrot.slane %v1965, 1
      %v3037 = vrot.slane %v1969, 1
      %v3038 = vsel %vm2744, %v3036, %v3037
      %v3039 = vrot.slane %v1975, 1
      %v3040 = vsel %vm2744, %v3037, %v3039
      %v3041 = vrot.slane %v1983, 1
      %v3042 = vrot.slane %v1987, 1
      %v3043 = vsel %vm2744, %v3041, %v3042
      %v3044 = vrot.slane %v1993, 1
      %v3045 = vsel %vm2744, %v3042, %v3044
      %v3046 = vrot.slane %v2001, 1
      %v3047 = vrot.slane %v2005, 1
      %v3048 = vsel %vm2744, %v3046, %v3047
      %v3049 = vrot.slane %v2011, 1
      %v3050 = vsel %vm2744, %v3047, %v3049
      %v3051 = vrot.slane %v2019, 1
      %v3052 = vrot.slane %v2023, 1
      %v3053 = vsel %vm2744, %v3051, %v3052
      %v3054 = vrot.slane %v2029, 1
      %v3055 = vsel %vm2744, %v3052, %v3054
      %v3056 = vrot.slane %v2037, 1
      %v3057 = vrot.slane %v2041, 1
      %v3058 = vsel %vm2744, %v3056, %v3057
      %v3059 = vrot.slane %v2047, 1
      %v3060 = vsel %vm2744, %v3057, %v3059
      %v3061 = vrot.slane %v2055, 1
      %v3062 = vrot.slane %v2059, 1
      %v3063 = vsel %vm2744, %v3061, %v3062
      %v3064 = vrot.slane %v2065, 1
      %v3065 = vsel %vm2744, %v3062, %v3064
      %v3066 = vrot.slane %v2073, 1
      %v3067 = vrot.slane %v2077, 1
      %v3068 = vsel %vm2744, %v3066, %v3067
      %v3069 = vrot.slane %v2083, 1
      %v3070 = vsel %vm2744, %v3067, %v3069
      %v3071 = vrot.slane %v2091, 1
      %v3072 = vrot.slane %v2095, 1
      %v3073 = vsel %vm2744, %v3071, %v3072
      %v3074 = vrot.slane %v2101, 1
      %v3075 = vsel %vm2744, %v3072, %v3074
      %v3076 = vrot.slane %v2109, 1
      %v3077 = vrot.slane %v2113, 1
      %v3078 = vsel %vm2744, %v3076, %v3077
      %v3079 = vrot.slane %v2118, 1
      %v3080 = vsel %vm2744, %v3077, %v3079
      %v3113 = vadd.f32 %v2921, %v3003
      %v3114 = vadd.f32 %v2922, %v3005
      %v3115 = vadd.f32 %v2923, %v3008
      %v3116 = vadd.f32 %v2924, %v3010
      %v3117 = vadd.f32 %v2925, %v3013
      %v3118 = vadd.f32 %v2926, %v3015
      %v3119 = vadd.f32 %v2927, %v3018
      %v3120 = vadd.f32 %v2928, %v3020
      %v3121 = vadd.f32 %v2929, %v3023
      %v3122 = vadd.f32 %v2930, %v3025
      %v3123 = vadd.f32 %v2931, %v3028
      %v3124 = vadd.f32 %v2932, %v3030
      %v3125 = vadd.f32 %v2933, %v3033
      %v3126 = vadd.f32 %v2934, %v3035
      %v3127 = vadd.f32 %v2935, %v3038
      %v3128 = vadd.f32 %v2936, %v3040
      %v3129 = vadd.f32 %v2937, %v3043
      %v3130 = vadd.f32 %v2938, %v3045
      %v3131 = vadd.f32 %v2939, %v3048
      %v3132 = vadd.f32 %v2940, %v3050
      %v3133 = vadd.f32 %v2941, %v3053
      %v3134 = vadd.f32 %v2942, %v3055
      %v3135 = vadd.f32 %v2943, %v3058
      %v3136 = vadd.f32 %v2944, %v3060
      %v3137 = vadd.f32 %v2945, %v3063
      %v3138 = vadd.f32 %v2946, %v3065
      %v3139 = vadd.f32 %v2947, %v3068
      %v3140 = vadd.f32 %v2948, %v3070
      %v3141 = vadd.f32 %v2949, %v3073
      %v3142 = vadd.f32 %v2950, %v3075
      %v3143 = vadd.f32 %v2951, %v3078
      %v3144 = vadd.f32 %v2952, %v3080
      %v3148 = vrot.slane %v2126, 1
      %v3149 = vrot.slane %v2130, 1
      %v3150 = vsel %vm2744, %v3148, %v3149
      %v3151 = vrot.slane %v2135, 1
      %v3152 = vsel %vm2744, %v3149, %v3151
      %3153 = vrot.lane.b32.xlu0 %v3008, 96
      %v3154 = vpop.permute.xlu0 %3153
      %3155 = vrot.lane.b32.xlu0 %v3010, 96
      %v3156 = vpop.permute.xlu0 %3155
      %3157 = vrot.lane.b32.xlu0 %v3013, 96
      %v3158 = vpop.permute.xlu0 %3157
      %3159 = vrot.lane.b32.xlu0 %v3015, 96
      %v3160 = vpop.permute.xlu0 %3159
      %3161 = vrot.lane.b32.xlu0 %v3018, 96
      %v3162 = vpop.permute.xlu0 %3161
      %3163 = vrot.lane.b32.xlu0 %v3020, 96
      %v3164 = vpop.permute.xlu0 %3163
      %3165 = vrot.lane.b32.xlu0 %v3023, 96
      %v3166 = vpop.permute.xlu0 %3165
      %3167 = vrot.lane.b32.xlu0 %v3025, 96
      %v3168 = vpop.permute.xlu0 %3167
      %3169 = vrot.lane.b32.xlu0 %v3028, 96
      %v3170 = vpop.permute.xlu0 %3169
      %3171 = vrot.lane.b32.xlu0 %v3030, 96
      %v3172 = vpop.permute.xlu0 %3171
      %3173 = vrot.lane.b32.xlu0 %v3033, 96
      %v3174 = vpop.permute.xlu0 %3173
      %3175 = vrot.lane.b32.xlu0 %v3035, 96
      %v3176 = vpop.permute.xlu0 %3175
      %3177 = vrot.lane.b32.xlu0 %v3038, 96
      %v3178 = vpop.permute.xlu0 %3177
      %3179 = vrot.lane.b32.xlu0 %v3040, 96
      %v3180 = vpop.permute.xlu0 %3179
      %3181 = vrot.lane.b32.xlu0 %v3043, 96
      %v3182 = vpop.permute.xlu0 %3181
      %3183 = vrot.lane.b32.xlu0 %v3045, 96
      %v3184 = vpop.permute.xlu0 %3183
      %3185 = vrot.lane.b32.xlu0 %v3048, 96
      %v3186 = vpop.permute.xlu0 %3185
      %3187 = vrot.lane.b32.xlu0 %v3050, 96
      %v3188 = vpop.permute.xlu0 %3187
      %3189 = vrot.lane.b32.xlu0 %v3053, 96
      %v3190 = vpop.permute.xlu0 %3189
      %3191 = vrot.lane.b32.xlu0 %v3055, 96
      %v3192 = vpop.permute.xlu0 %3191
      %3193 = vrot.lane.b32.xlu0 %v3058, 96
      %v3194 = vpop.permute.xlu0 %3193
      %3195 = vrot.lane.b32.xlu0 %v3060, 96
      %v3196 = vpop.permute.xlu0 %3195
      %3197 = vrot.lane.b32.xlu0 %v3063, 96
      %v3198 = vpop.permute.xlu0 %3197
      %3199 = vrot.lane.b32.xlu0 %v3065, 96
      %v3200 = vpop.permute.xlu0 %3199
      %3201 = vrot.lane.b32.xlu0 %v3068, 96
      %v3202 = vpop.permute.xlu0 %3201
      %3203 = vrot.lane.b32.xlu0 %v3070, 96
      %v3204 = vpop.permute.xlu0 %3203
      %3205 = vrot.lane.b32.xlu0 %v3073, 96
      %v3206 = vpop.permute.xlu0 %3205
      %3207 = vrot.lane.b32.xlu0 %v3075, 96
      %v3208 = vpop.permute.xlu0 %3207
      %3209 = vrot.lane.b32.xlu0 %v3078, 96
      %v3210 = vpop.permute.xlu0 %3209
      %3211 = vrot.lane.b32.xlu0 %v3080, 96
      %v3212 = vpop.permute.xlu0 %3211
      %3213 = vrot.lane.b32.xlu0 %v3150, 96
      %v3214 = vpop.permute.xlu0 %3213
      %3215 = vrot.lane.b32.xlu0 %v3152, 96
      %v3216 = vpop.permute.xlu0 %3215
      %v3249 = vadd.f32 %v3113, %v3154
      %v3250 = vadd.f32 %v3114, %v3156
      %v3251 = vadd.f32 %v3115, %v3158
      %v3252 = vadd.f32 %v3116, %v3160
      %v3253 = vadd.f32 %v3117, %v3162
      %v3254 = vadd.f32 %v3118, %v3164
      %v3255 = vadd.f32 %v3119, %v3166
      %v3256 = vadd.f32 %v3120, %v3168
      %v3257 = vadd.f32 %v3121, %v3170
      %v3258 = vadd.f32 %v3122, %v3172
      %v3259 = vadd.f32 %v3123, %v3174
      %v3260 = vadd.f32 %v3124, %v3176
      %v3261 = vadd.f32 %v3125, %v3178
      %v3262 = vadd.f32 %v3126, %v3180
      %v3263 = vadd.f32 %v3127, %v3182
      %v3264 = vadd.f32 %v3128, %v3184
      %v3265 = vadd.f32 %v3129, %v3186
      %v3266 = vadd.f32 %v3130, %v3188
      %v3267 = vadd.f32 %v3131, %v3190
      %v3268 = vadd.f32 %v3132, %v3192
      %v3269 = vadd.f32 %v3133, %v3194
      %v3270 = vadd.f32 %v3134, %v3196
      %v3271 = vadd.f32 %v3135, %v3198
      %v3272 = vadd.f32 %v3136, %v3200
      %v3273 = vadd.f32 %v3137, %v3202
      %v3274 = vadd.f32 %v3138, %v3204
      %v3275 = vadd.f32 %v3139, %v3206
      %v3276 = vadd.f32 %v3140, %v3208
      %v3277 = vadd.f32 %v3141, %v3210
      %v3278 = vadd.f32 %v3142, %v3212
      %v3279 = vadd.f32 %v3143, %v3214
      %v3280 = vadd.f32 %v3144, %v3216
      %vm3284 = vcmask 1045504
      %v3285 = vrot.slane %v1821, 2
      %v3286 = vrot.slane %v1825, 2
      %v3287 = vsel %vm3284, %v3285, %v3286
      %v3288 = vrot.slane %v1831, 2
      %v3289 = vsel %vm3284, %v3286, %v3288
      %v3290 = vrot.slane %v1839, 2
      %v3291 = vrot.slane %v1843, 2
      %v3292 = vsel %vm3284, %v3290, %v3291
      %v3293 = vrot.slane %v1849, 2
      %v3294 = vsel %vm3284, %v3291, %v3293
      %v3295 = vrot.slane %v1857, 2
      %v3296 = vrot.slane %v1861, 2
      %v3297 = vsel %vm3284, %v3295, %v3296
      %v3298 = vrot.slane %v1867, 2
      %v3299 = vsel %vm3284, %v3296, %v3298
      %v3300 = vrot.slane %v1875, 2
      %v3301 = vrot.slane %v1879, 2
      %v3302 = vsel %vm3284, %v3300, %v3301
      %v3303 = vrot.slane %v1885, 2
      %v3304 = vsel %vm3284, %v3301, %v3303
      %v3305 = vrot.slane %v1893, 2
      %v3306 = vrot.slane %v1897, 2
      %v3307 = vsel %vm3284, %v3305, %v3306
      %v3308 = vrot.slane %v1903, 2
      %v3309 = vsel %vm3284, %v3306, %v3308
      %v3310 = vrot.slane %v1911, 2
      %v3311 = vrot.slane %v1915, 2
      %v3312 = vsel %vm3284, %v3310, %v3311
      %v3313 = vrot.slane %v1921, 2
      %v3314 = vsel %vm3284, %v3311, %v3313
      %v3315 = vrot.slane %v1929, 2
      %v3316 = vrot.slane %v1933, 2
      %v3317 = vsel %vm3284, %v3315, %v3316
      %v3318 = vrot.slane %v1939, 2
      %v3319 = vsel %vm3284, %v3316, %v3318
      %v3320 = vrot.slane %v1947, 2
      %v3321 = vrot.slane %v1951, 2
      %v3322 = vsel %vm3284, %v3320, %v3321
      %v3323 = vrot.slane %v1957, 2
      %v3324 = vsel %vm3284, %v3321, %v3323
      %v3325 = vrot.slane %v1965, 2
      %v3326 = vrot.slane %v1969, 2
      %v3327 = vsel %vm3284, %v3325, %v3326
      %v3328 = vrot.slane %v1975, 2
      %v3329 = vsel %vm3284, %v3326, %v3328
      %v3330 = vrot.slane %v1983, 2
      %v3331 = vrot.slane %v1987, 2
      %v3332 = vsel %vm3284, %v3330, %v3331
      %v3333 = vrot.slane %v1993, 2
      %v3334 = vsel %vm3284, %v3331, %v3333
      %v3335 = vrot.slane %v2001, 2
      %v3336 = vrot.slane %v2005, 2
      %v3337 = vsel %vm3284, %v3335, %v3336
      %v3338 = vrot.slane %v2011, 2
      %v3339 = vsel %vm3284, %v3336, %v3338
      %v3340 = vrot.slane %v2019, 2
      %v3341 = vrot.slane %v2023, 2
      %v3342 = vsel %vm3284, %v3340, %v3341
      %v3343 = vrot.slane %v2029, 2
      %v3344 = vsel %vm3284, %v3341, %v3343
      %v3345 = vrot.slane %v2037, 2
      %v3346 = vrot.slane %v2041, 2
      %v3347 = vsel %vm3284, %v3345, %v3346
      %v3348 = vrot.slane %v2047, 2
      %v3349 = vsel %vm3284, %v3346, %v3348
      %v3350 = vrot.slane %v2055, 2
      %v3351 = vrot.slane %v2059, 2
      %v3352 = vsel %vm3284, %v3350, %v3351
      %v3353 = vrot.slane %v2065, 2
      %v3354 = vsel %vm3284, %v3351, %v3353
      %v3355 = vrot.slane %v2073, 2
      %v3356 = vrot.slane %v2077, 2
      %v3357 = vsel %vm3284, %v3355, %v3356
      %v3358 = vrot.slane %v2083, 2
      %v3359 = vsel %vm3284, %v3356, %v3358
      %v3360 = vrot.slane %v2091, 2
      %v3361 = vrot.slane %v2095, 2
      %v3362 = vsel %vm3284, %v3360, %v3361
      %v3363 = vrot.slane %v2101, 2
      %v3364 = vsel %vm3284, %v3361, %v3363
      %3365 = vrot.lane.b32.xlu0 %v3287, 64
      %v3366 = vpop.permute.xlu0 %3365
      %3367 = vrot.lane.b32.xlu0 %v3289, 64
      %v3368 = vpop.permute.xlu0 %3367
      %3369 = vrot.lane.b32.xlu0 %v3292, 64
      %v3370 = vpop.permute.xlu0 %3369
      %3371 = vrot.lane.b32.xlu0 %v3294, 64
      %v3372 = vpop.permute.xlu0 %3371
      %3373 = vrot.lane.b32.xlu0 %v3297, 64
      %v3374 = vpop.permute.xlu0 %3373
      %3375 = vrot.lane.b32.xlu0 %v3299, 64
      %v3376 = vpop.permute.xlu0 %3375
      %3377 = vrot.lane.b32.xlu0 %v3302, 64
      %v3378 = vpop.permute.xlu0 %3377
      %3379 = vrot.lane.b32.xlu0 %v3304, 64
      %v3380 = vpop.permute.xlu0 %3379
      %3381 = vrot.lane.b32.xlu0 %v3307, 64
      %v3382 = vpop.permute.xlu0 %3381
      %3383 = vrot.lane.b32.xlu0 %v3309, 64
      %v3384 = vpop.permute.xlu0 %3383
      %3385 = vrot.lane.b32.xlu0 %v3312, 64
      %v3386 = vpop.permute.xlu0 %3385
      %3387 = vrot.lane.b32.xlu0 %v3314, 64
      %v3388 = vpop.permute.xlu0 %3387
      %3389 = vrot.lane.b32.xlu0 %v3317, 64
      %v3390 = vpop.permute.xlu0 %3389
      %3391 = vrot.lane.b32.xlu0 %v3319, 64
      %v3392 = vpop.permute.xlu0 %3391
      %3393 = vrot.lane.b32.xlu0 %v3322, 64
      %v3394 = vpop.permute.xlu0 %3393
      %3395 = vrot.lane.b32.xlu0 %v3324, 64
      %v3396 = vpop.permute.xlu0 %3395
      %3397 = vrot.lane.b32.xlu0 %v3327, 64
      %v3398 = vpop.permute.xlu0 %3397
      %3399 = vrot.lane.b32.xlu0 %v3329, 64
      %v3400 = vpop.permute.xlu0 %3399
      %3401 = vrot.lane.b32.xlu0 %v3332, 64
      %v3402 = vpop.permute.xlu0 %3401
      %3403 = vrot.lane.b32.xlu0 %v3334, 64
      %v3404 = vpop.permute.xlu0 %3403
      %3405 = vrot.lane.b32.xlu0 %v3337, 64
      %v3406 = vpop.permute.xlu0 %3405
      %3407 = vrot.lane.b32.xlu0 %v3339, 64
      %v3408 = vpop.permute.xlu0 %3407
      %3409 = vrot.lane.b32.xlu0 %v3342, 64
      %v3410 = vpop.permute.xlu0 %3409
      %3411 = vrot.lane.b32.xlu0 %v3344, 64
      %v3412 = vpop.permute.xlu0 %3411
      %3413 = vrot.lane.b32.xlu0 %v3347, 64
      %v3414 = vpop.permute.xlu0 %3413
      %3415 = vrot.lane.b32.xlu0 %v3349, 64
      %v3416 = vpop.permute.xlu0 %3415
      %3417 = vrot.lane.b32.xlu0 %v3352, 64
      %v3418 = vpop.permute.xlu0 %3417
      %3419 = vrot.lane.b32.xlu0 %v3354, 64
      %v3420 = vpop.permute.xlu0 %3419
      %3421 = vrot.lane.b32.xlu0 %v3357, 64
      %v3422 = vpop.permute.xlu0 %3421
      %3423 = vrot.lane.b32.xlu0 %v3359, 64
      %v3424 = vpop.permute.xlu0 %3423
      %3425 = vrot.lane.b32.xlu0 %v3362, 64
      %v3426 = vpop.permute.xlu0 %3425
      %3427 = vrot.lane.b32.xlu0 %v3364, 64
      %v3428 = vpop.permute.xlu0 %3427
      %v3461 = vadd.f32 %v3249, %v3366
      %v3462 = vadd.f32 %v3250, %v3368
      %v3463 = vadd.f32 %v3251, %v3370
      %v3464 = vadd.f32 %v3252, %v3372
      %v3465 = vadd.f32 %v3253, %v3374
      %v3466 = vadd.f32 %v3254, %v3376
      %v3467 = vadd.f32 %v3255, %v3378
      %v3468 = vadd.f32 %v3256, %v3380
      %v3469 = vadd.f32 %v3257, %v3382
      %v3470 = vadd.f32 %v3258, %v3384
      %v3471 = vadd.f32 %v3259, %v3386
      %v3472 = vadd.f32 %v3260, %v3388
      %v3473 = vadd.f32 %v3261, %v3390
      %v3474 = vadd.f32 %v3262, %v3392
      %v3475 = vadd.f32 %v3263, %v3394
      %v3476 = vadd.f32 %v3264, %v3396
      %v3477 = vadd.f32 %v3265, %v3398
      %v3478 = vadd.f32 %v3266, %v3400
      %v3479 = vadd.f32 %v3267, %v3402
      %v3480 = vadd.f32 %v3268, %v3404
      %v3481 = vadd.f32 %v3269, %v3406
      %v3482 = vadd.f32 %v3270, %v3408
      %v3483 = vadd.f32 %v3271, %v3410
      %v3484 = vadd.f32 %v3272, %v3412
      %v3485 = vadd.f32 %v3273, %v3414
      %v3486 = vadd.f32 %v3274, %v3416
      %v3487 = vadd.f32 %v3275, %v3418
      %v3488 = vadd.f32 %v3276, %v3420
      %v3489 = vadd.f32 %v3277, %v3422
      %v3490 = vadd.f32 %v3278, %v3424
      %v3491 = vadd.f32 %v3279, %v3426
      %v3492 = vadd.f32 %v3280, %v3428
      %v3493 = vrot.slane %v2109, 2
      %v3494 = vrot.slane %v2113, 2
      %v3495 = vsel %vm3284, %v3493, %v3494
      %v3496 = vrot.slane %v2118, 2
      %v3497 = vsel %vm3284, %v3494, %v3496
      %3498 = vrot.lane.b32.xlu0 %v3292, 32
      %v3499 = vpop.permute.xlu0 %3498
      %3500 = vrot.lane.b32.xlu0 %v3294, 32
      %v3501 = vpop.permute.xlu0 %3500
      %3502 = vrot.lane.b32.xlu0 %v3297, 32
      %v3503 = vpop.permute.xlu0 %3502
      %3504 = vrot.lane.b32.xlu0 %v3299, 32
      %v3505 = vpop.permute.xlu0 %3504
      %3506 = vrot.lane.b32.xlu0 %v3302, 32
      %v3507 = vpop.permute.xlu0 %3506
      %3508 = vrot.lane.b32.xlu0 %v3304, 32
      %v3509 = vpop.permute.xlu0 %3508
      %3510 = vrot.lane.b32.xlu0 %v3307, 32
      %v3511 = vpop.permute.xlu0 %3510
      %3512 = vrot.lane.b32.xlu0 %v3309, 32
      %v3513 = vpop.permute.xlu0 %3512
      %3514 = vrot.lane.b32.xlu0 %v3312, 32
      %v3515 = vpop.permute.xlu0 %3514
      %3516 = vrot.lane.b32.xlu0 %v3314, 32
      %v3517 = vpop.permute.xlu0 %3516
      %3518 = vrot.lane.b32.xlu0 %v3317, 32
      %v3519 = vpop.permute.xlu0 %3518
      %3520 = vrot.lane.b32.xlu0 %v3319, 32
      %v3521 = vpop.permute.xlu0 %3520
      %3522 = vrot.lane.b32.xlu0 %v3322, 32
      %v3523 = vpop.permute.xlu0 %3522
      %3524 = vrot.lane.b32.xlu0 %v3324, 32
      %v3525 = vpop.permute.xlu0 %3524
      %3526 = vrot.lane.b32.xlu0 %v3327, 32
      %v3527 = vpop.permute.xlu0 %3526
      %3528 = vrot.lane.b32.xlu0 %v3329, 32
      %v3529 = vpop.permute.xlu0 %3528
      %3530 = vrot.lane.b32.xlu0 %v3332, 32
      %v3531 = vpop.permute.xlu0 %3530
      %3532 = vrot.lane.b32.xlu0 %v3334, 32
      %v3533 = vpop.permute.xlu0 %3532
      %3534 = vrot.lane.b32.xlu0 %v3337, 32
      %v3535 = vpop.permute.xlu0 %3534
      %3536 = vrot.lane.b32.xlu0 %v3339, 32
      %v3537 = vpop.permute.xlu0 %3536
      %3538 = vrot.lane.b32.xlu0 %v3342, 32
      %v3539 = vpop.permute.xlu0 %3538
      %3540 = vrot.lane.b32.xlu0 %v3344, 32
      %v3541 = vpop.permute.xlu0 %3540
      %3542 = vrot.lane.b32.xlu0 %v3347, 32
      %v3543 = vpop.permute.xlu0 %3542
      %3544 = vrot.lane.b32.xlu0 %v3349, 32
      %v3545 = vpop.permute.xlu0 %3544
      %3546 = vrot.lane.b32.xlu0 %v3352, 32
      %v3547 = vpop.permute.xlu0 %3546
      %3548 = vrot.lane.b32.xlu0 %v3354, 32
      %v3549 = vpop.permute.xlu0 %3548
      %3550 = vrot.lane.b32.xlu0 %v3357, 32
      %v3551 = vpop.permute.xlu0 %3550
      %3552 = vrot.lane.b32.xlu0 %v3359, 32
      %v3553 = vpop.permute.xlu0 %3552
      %3554 = vrot.lane.b32.xlu0 %v3362, 32
      %v3555 = vpop.permute.xlu0 %3554
      %3556 = vrot.lane.b32.xlu0 %v3364, 32
      %v3557 = vpop.permute.xlu0 %3556
      %3558 = vrot.lane.b32.xlu0 %v3495, 32
      %v3559 = vpop.permute.xlu0 %3558
      %3560 = vrot.lane.b32.xlu0 %v3497, 32
      %v3561 = vpop.permute.xlu0 %3560
      %v3594 = vadd.f32 %v3461, %v3499
      %v3595 = vadd.f32 %v3462, %v3501
      %v3596 = vadd.f32 %v3463, %v3503
      %v3597 = vadd.f32 %v3464, %v3505
      %v3598 = vadd.f32 %v3465, %v3507
      %v3599 = vadd.f32 %v3466, %v3509
      %v3600 = vadd.f32 %v3467, %v3511
      %v3601 = vadd.f32 %v3468, %v3513
      %v3602 = vadd.f32 %v3469, %v3515
      %v3603 = vadd.f32 %v3470, %v3517
      %v3604 = vadd.f32 %v3471, %v3519
      %v3605 = vadd.f32 %v3472, %v3521
      %v3606 = vadd.f32 %v3473, %v3523
      %v3607 = vadd.f32 %v3474, %v3525
      %v3608 = vadd.f32 %v3475, %v3527
      %v3609 = vadd.f32 %v3476, %v3529
      %v3610 = vadd.f32 %v3477, %v3531
      %v3611 = vadd.f32 %v3478, %v3533
      %v3612 = vadd.f32 %v3479, %v3535
      %v3613 = vadd.f32 %v3480, %v3537
      %v3614 = vadd.f32 %v3481, %v3539
      %v3615 = vadd.f32 %v3482, %v3541
      %v3616 = vadd.f32 %v3483, %v3543
      %v3617 = vadd.f32 %v3484, %v3545
      %v3618 = vadd.f32 %v3485, %v3547
      %v3619 = vadd.f32 %v3486, %v3549
      %v3620 = vadd.f32 %v3487, %v3551
      %v3621 = vadd.f32 %v3488, %v3553
      %v3622 = vadd.f32 %v3489, %v3555
      %v3623 = vadd.f32 %v3490, %v3557
      %v3624 = vadd.f32 %v3491, %v3559
      %v3625 = vadd.f32 %v3492, %v3561
      %v3674 = vrot.slane %v2198, 2
      %v3675 = vrot.slane %v2201, 2
      %v3676 = vsel %vm3284, %v3674, %v3675
      %v3677 = vrot.slane %v2206, 2
      %v3678 = vsel %vm3284, %v3675, %v3677
      %v3679 = vrot.slane %v2213, 2
      %v3680 = vrot.slane %v2216, 2
      %v3681 = vsel %vm3284, %v3679, %v3680
      %v3682 = vrot.slane %v2221, 2
      %v3683 = vsel %vm3284, %v3680, %v3682
      %v3684 = vrot.slane %v2228, 2
      %v3685 = vrot.slane %v2231, 2
      %v3686 = vsel %vm3284, %v3684, %v3685
      %v3687 = vrot.slane %v2236, 2
      %v3688 = vsel %vm3284, %v3685, %v3687
      %v3689 = vrot.slane %v2243, 2
      %v3690 = vrot.slane %v2246, 2
      %v3691 = vsel %vm3284, %v3689, %v3690
      %v3692 = vrot.slane %v2251, 2
      %v3693 = vsel %vm3284, %v3690, %v3692
      %v3694 = vrot.slane %v2258, 2
      %v3695 = vrot.slane %v2261, 2
      %v3696 = vsel %vm3284, %v3694, %v3695
      %v3697 = vrot.slane %v2266, 2
      %v3698 = vsel %vm3284, %v3695, %v3697
      %v3699 = vrot.slane %v2273, 2
      %v3700 = vrot.slane %v2276, 2
      %v3701 = vsel %vm3284, %v3699, %v3700
      %v3702 = vrot.slane %v2281, 2
      %v3703 = vsel %vm3284, %v3700, %v3702
      %v3704 = vrot.slane %v2288, 2
      %v3705 = vrot.slane %v2291, 2
      %v3706 = vsel %vm3284, %v3704, %v3705
      %v3707 = vrot.slane %v2296, 2
      %v3708 = vsel %vm3284, %v3705, %v3707
      %v3709 = vrot.slane %v2303, 2
      %v3710 = vrot.slane %v2306, 2
      %v3711 = vsel %vm3284, %v3709, %v3710
      %v3712 = vrot.slane %v2311, 2
      %v3713 = vsel %vm3284, %v3710, %v3712
      %v3714 = vrot.slane %v2318, 2
      %v3715 = vrot.slane %v2321, 2
      %v3716 = vsel %vm3284, %v3714, %v3715
      %v3717 = vrot.slane %v2326, 2
      %v3718 = vsel %vm3284, %v3715, %v3717
      %v3719 = vrot.slane %v2333, 2
      %v3720 = vrot.slane %v2336, 2
      %v3721 = vsel %vm3284, %v3719, %v3720
      %v3722 = vrot.slane %v2341, 2
      %v3723 = vsel %vm3284, %v3720, %v3722
      %v3724 = vrot.slane %v2348, 2
      %v3725 = vrot.slane %v2351, 2
      %v3726 = vsel %vm3284, %v3724, %v3725
      %v3727 = vrot.slane %v2356, 2
      %v3728 = vsel %vm3284, %v3725, %v3727
      %v3729 = vrot.slane %v2363, 2
      %v3730 = vrot.slane %v2366, 2
      %v3731 = vsel %vm3284, %v3729, %v3730
      %v3732 = vrot.slane %v2371, 2
      %v3733 = vsel %vm3284, %v3730, %v3732
      %v3734 = vrot.slane %v2378, 2
      %v3735 = vrot.slane %v2381, 2
      %v3736 = vsel %vm3284, %v3734, %v3735
      %v3737 = vrot.slane %v2386, 2
      %v3738 = vsel %vm3284, %v3735, %v3737
      %v3739 = vrot.slane %v2393, 2
      %v3740 = vrot.slane %v2396, 2
      %v3741 = vsel %vm3284, %v3739, %v3740
      %v3742 = vrot.slane %v2401, 2
      %v3743 = vsel %vm3284, %v3740, %v3742
      %v3744 = vrot.slane %v2408, 2
      %v3745 = vrot.slane %v2411, 2
      %v3746 = vsel %vm3284, %v3744, %v3745
      %v3747 = vrot.slane %v2416, 2
      %v3748 = vsel %vm3284, %v3745, %v3747
      %v3749 = vrot.slane %v2423, 2
      %v3750 = vrot.slane %v2426, 2
      %v3751 = vsel %vm3284, %v3749, %v3750
      %v3752 = vrot.slane %v2431, 2
      %v3753 = vsel %vm3284, %v3750, %v3752
      %v3786 = vadd.f32 %v3594, %v3676
      %v3787 = vadd.f32 %v3595, %v3678
      %v3788 = vadd.f32 %v3596, %v3681
      %v3789 = vadd.f32 %v3597, %v3683
      %v3790 = vadd.f32 %v3598, %v3686
      %v3791 = vadd.f32 %v3599, %v3688
      %v3792 = vadd.f32 %v3600, %v3691
      %v3793 = vadd.f32 %v3601, %v3693
      %v3794 = vadd.f32 %v3602, %v3696
      %v3795 = vadd.f32 %v3603, %v3698
      %v3796 = vadd.f32 %v3604, %v3701
      %v3797 = vadd.f32 %v3605, %v3703
      %v3798 = vadd.f32 %v3606, %v3706
      %v3799 = vadd.f32 %v3607, %v3708
      %v3800 = vadd.f32 %v3608, %v3711
      %v3801 = vadd.f32 %v3609, %v3713
      %v3802 = vadd.f32 %v3610, %v3716
      %v3803 = vadd.f32 %v3611, %v3718
      %v3804 = vadd.f32 %v3612, %v3721
      %v3805 = vadd.f32 %v3613, %v3723
      %v3806 = vadd.f32 %v3614, %v3726
      %v3807 = vadd.f32 %v3615, %v3728
      %v3808 = vadd.f32 %v3616, %v3731
      %v3809 = vadd.f32 %v3617, %v3733
      %v3810 = vadd.f32 %v3618, %v3736
      %v3811 = vadd.f32 %v3619, %v3738
      %v3812 = vadd.f32 %v3620, %v3741
      %v3813 = vadd.f32 %v3621, %v3743
      %v3814 = vadd.f32 %v3622, %v3746
      %v3815 = vadd.f32 %v3623, %v3748
      %v3816 = vadd.f32 %v3624, %v3751
      %v3817 = vadd.f32 %v3625, %v3753
      %v3818 = vld [vmem:[%s4] sm:$0x1]
      %v3820 = vlaneseq
      %v3821 = vshrl.u32 %v3820, 7
      %v3822 = vsub.s32 0, %v3821
      %v3823 = vrot.slane %v3818, %v3822
      %v3825 = vadd.f32 %v3786, %v3823
      %v3826 = vadd.f32 %v3787, %v3823
      %v3827 = vadd.f32 %v3788, %v3823
      %v3828 = vadd.f32 %v3789, %v3823
      %v3829 = vadd.f32 %v3790, %v3823
      %v3830 = vadd.f32 %v3791, %v3823
      %v3831 = vadd.f32 %v3792, %v3823
      %v3832 = vadd.f32 %v3793, %v3823
      %v3833 = vadd.f32 %v3794, %v3823
      %v3834 = vadd.f32 %v3795, %v3823
      %v3835 = vadd.f32 %v3796, %v3823
      %v3836 = vadd.f32 %v3797, %v3823
      %v3837 = vadd.f32 %v3798, %v3823
      %v3838 = vadd.f32 %v3799, %v3823
      %v3839 = vadd.f32 %v3800, %v3823
      %v3840 = vadd.f32 %v3801, %v3823
      %v3841 = vadd.f32 %v3802, %v3823
      %v3842 = vadd.f32 %v3803, %v3823
      %v3843 = vadd.f32 %v3804, %v3823
      %v3844 = vadd.f32 %v3805, %v3823
      %v3845 = vadd.f32 %v3806, %v3823
      %v3846 = vadd.f32 %v3807, %v3823
      %v3847 = vadd.f32 %v3808, %v3823
      %v3848 = vadd.f32 %v3809, %v3823
      %v3849 = vadd.f32 %v3810, %v3823
      %v3850 = vadd.f32 %v3811, %v3823
      %v3851 = vadd.f32 %v3812, %v3823
      %v3852 = vadd.f32 %v3813, %v3823
      %v3853 = vadd.f32 %v3814, %v3823
      %v3854 = vadd.f32 %v3815, %v3823
      %v3855 = vadd.f32 %v3816, %v3823
      %v3856 = vadd.f32 %v3817, %v3823
      %v3857 = vsel %vm366, %v3825, 0.0
      %v3858 = vsel %vm366, %v3826, 0.0
      %v3859 = vadd.f32 %v3857, %v3858
      %v3860 = vrot.slane %v3859, 4
      %v3861 = vadd.f32 %v3859, %v3860
      %v3862 = vrot.slane %v3861, 2
      %v3863 = vadd.f32 %v3861, %v3862
      %v3864 = vrot.slane %v3863, 1
      %v3865 = vadd.f32 %v3863, %v3864
      %v3866 = vsel %vm366, %v3827, 0.0
      %v3867 = vsel %vm366, %v3828, 0.0
      %v3868 = vadd.f32 %v3866, %v3867
      %v3869 = vrot.slane %v3868, 4
      %v3870 = vadd.f32 %v3868, %v3869
      %v3871 = vrot.slane %v3870, 2
      %v3872 = vadd.f32 %v3870, %v3871
      %v3873 = vrot.slane %v3872, 1
      %v3874 = vadd.f32 %v3872, %v3873
      %v3875 = vsel %vm366, %v3829, 0.0
      %v3876 = vsel %vm366, %v3830, 0.0
      %v3877 = vadd.f32 %v3875, %v3876
      %v3878 = vrot.slane %v3877, 4
      %v3879 = vadd.f32 %v3877, %v3878
      %v3880 = vrot.slane %v3879, 2
      %v3881 = vadd.f32 %v3879, %v3880
      %v3882 = vrot.slane %v3881, 1
      %v3883 = vadd.f32 %v3881, %v3882
      %v3884 = vsel %vm366, %v3831, 0.0
      %v3885 = vsel %vm366, %v3832, 0.0
      %v3886 = vadd.f32 %v3884, %v3885
      %v3887 = vrot.slane %v3886, 4
      %v3888 = vadd.f32 %v3886, %v3887
      %v3889 = vrot.slane %v3888, 2
      %v3890 = vadd.f32 %v3888, %v3889
      %v3891 = vrot.slane %v3890, 1
      %v3892 = vadd.f32 %v3890, %v3891
      %v3893 = vsel %vm366, %v3833, 0.0
      %v3894 = vsel %vm366, %v3834, 0.0
      %v3895 = vadd.f32 %v3893, %v3894
      %v3896 = vrot.slane %v3895, 4
      %v3897 = vadd.f32 %v3895, %v3896
      %v3898 = vrot.slane %v3897, 2
      %v3899 = vadd.f32 %v3897, %v3898
      %v3900 = vrot.slane %v3899, 1
      %v3901 = vadd.f32 %v3899, %v3900
      %v3902 = vsel %vm366, %v3835, 0.0
      %v3903 = vsel %vm366, %v3836, 0.0
      %v3904 = vadd.f32 %v3902, %v3903
      %v3905 = vrot.slane %v3904, 4
      %v3906 = vadd.f32 %v3904, %v3905
      %v3907 = vrot.slane %v3906, 2
      %v3908 = vadd.f32 %v3906, %v3907
      %v3909 = vrot.slane %v3908, 1
      %v3910 = vadd.f32 %v3908, %v3909
      %v3911 = vsel %vm366, %v3837, 0.0
      %v3912 = vsel %vm366, %v3838, 0.0
      %v3913 = vadd.f32 %v3911, %v3912
      %v3914 = vrot.slane %v3913, 4
      %v3915 = vadd.f32 %v3913, %v3914
      %v3916 = vrot.slane %v3915, 2
      %v3917 = vadd.f32 %v3915, %v3916
      %v3918 = vrot.slane %v3917, 1
      %v3919 = vadd.f32 %v3917, %v3918
      %v3920 = vsel %vm366, %v3839, 0.0
      %v3921 = vsel %vm366, %v3840, 0.0
      %v3922 = vadd.f32 %v3920, %v3921
      %v3923 = vrot.slane %v3922, 4
      %v3924 = vadd.f32 %v3922, %v3923
      %v3925 = vrot.slane %v3924, 2
      %v3926 = vadd.f32 %v3924, %v3925
      %v3927 = vrot.slane %v3926, 1
      %v3928 = vadd.f32 %v3926, %v3927
      %v3929 = vsel %vm366, %v3841, 0.0
      %v3930 = vsel %vm366, %v3842, 0.0
      %v3931 = vadd.f32 %v3929, %v3930
      %v3932 = vrot.slane %v3931, 4
      %v3933 = vadd.f32 %v3931, %v3932
      %v3934 = vrot.slane %v3933, 2
      %v3935 = vadd.f32 %v3933, %v3934
      %v3936 = vrot.slane %v3935, 1
      %v3937 = vadd.f32 %v3935, %v3936
      %v3938 = vsel %vm366, %v3843, 0.0
      %v3939 = vsel %vm366, %v3844, 0.0
      %v3940 = vadd.f32 %v3938, %v3939
      %v3941 = vrot.slane %v3940, 4
      %v3942 = vadd.f32 %v3940, %v3941
      %v3943 = vrot.slane %v3942, 2
      %v3944 = vadd.f32 %v3942, %v3943
      %v3945 = vrot.slane %v3944, 1
      %v3946 = vadd.f32 %v3944, %v3945
      %v3947 = vsel %vm366, %v3845, 0.0
      %v3948 = vsel %vm366, %v3846, 0.0
      %v3949 = vadd.f32 %v3947, %v3948
      %v3950 = vrot.slane %v3949, 4
      %v3951 = vadd.f32 %v3949, %v3950
      %v3952 = vrot.slane %v3951, 2
      %v3953 = vadd.f32 %v3951, %v3952
      %v3954 = vrot.slane %v3953, 1
      %v3955 = vadd.f32 %v3953, %v3954
      %v3956 = vsel %vm366, %v3847, 0.0
      %v3957 = vsel %vm366, %v3848, 0.0
      %v3958 = vadd.f32 %v3956, %v3957
      %v3959 = vrot.slane %v3958, 4
      %v3960 = vadd.f32 %v3958, %v3959
      %v3961 = vrot.slane %v3960, 2
      %v3962 = vadd.f32 %v3960, %v3961
      %v3963 = vrot.slane %v3962, 1
      %v3964 = vadd.f32 %v3962, %v3963
      %v3965 = vsel %vm366, %v3849, 0.0
      %v3966 = vsel %vm366, %v3850, 0.0
      %v3967 = vadd.f32 %v3965, %v3966
      %v3968 = vrot.slane %v3967, 4
      %v3969 = vadd.f32 %v3967, %v3968
      %v3970 = vrot.slane %v3969, 2
      %v3971 = vadd.f32 %v3969, %v3970
      %v3972 = vrot.slane %v3971, 1
      %v3973 = vadd.f32 %v3971, %v3972
      %v3974 = vsel %vm366, %v3851, 0.0
      %v3975 = vsel %vm366, %v3852, 0.0
      %v3976 = vadd.f32 %v3974, %v3975
      %v3977 = vrot.slane %v3976, 4
      %v3978 = vadd.f32 %v3976, %v3977
      %v3979 = vrot.slane %v3978, 2
      %v3980 = vadd.f32 %v3978, %v3979
      %v3981 = vrot.slane %v3980, 1
      %v3982 = vadd.f32 %v3980, %v3981
      %v3983 = vsel %vm366, %v3853, 0.0
      %v3984 = vsel %vm366, %v3854, 0.0
      %v3985 = vadd.f32 %v3983, %v3984
      %v3986 = vrot.slane %v3985, 4
      %v3987 = vadd.f32 %v3985, %v3986
      %v3988 = vrot.slane %v3987, 2
      %v3989 = vadd.f32 %v3987, %v3988
      %v3990 = vrot.slane %v3989, 1
      %v3991 = vadd.f32 %v3989, %v3990
      %v3992 = vsel %vm366, %v3855, 0.0
      %v3993 = vsel %vm366, %v3856, 0.0
      %v3994 = vadd.f32 %v3992, %v3993
      %v3995 = vrot.slane %v3994, 4
      %v3996 = vadd.f32 %v3994, %v3995
      %v3997 = vrot.slane %v3996, 2
      %v3998 = vadd.f32 %v3996, %v3997
      %v3999 = vrot.slane %v3998, 1
      %v4000 = vadd.f32 %v3998, %v3999
      %v4001 = vmul.f32 %v3825, %v3825
      %v4002 = vmul.f32 %v3826, %v3826
      %v4003 = vmul.f32 %v3827, %v3827
      %v4004 = vmul.f32 %v3828, %v3828
      %v4005 = vmul.f32 %v3829, %v3829
      %v4006 = vmul.f32 %v3830, %v3830
      %v4007 = vmul.f32 %v3831, %v3831
      %v4008 = vmul.f32 %v3832, %v3832
      %v4009 = vmul.f32 %v3833, %v3833
      %v4010 = vmul.f32 %v3834, %v3834
      %v4011 = vmul.f32 %v3835, %v3835
      %v4012 = vmul.f32 %v3836, %v3836
      %v4013 = vmul.f32 %v3837, %v3837
      %v4014 = vmul.f32 %v3838, %v3838
      %v4015 = vmul.f32 %v3839, %v3839
      %v4016 = vmul.f32 %v3840, %v3840
      %v4017 = vmul.f32 %v3841, %v3841
      %v4018 = vmul.f32 %v3842, %v3842
      %v4019 = vmul.f32 %v3843, %v3843
      %v4020 = vmul.f32 %v3844, %v3844
      %v4021 = vmul.f32 %v3845, %v3845
      %v4022 = vmul.f32 %v3846, %v3846
      %v4023 = vmul.f32 %v3847, %v3847
      %v4024 = vmul.f32 %v3848, %v3848
      %v4025 = vmul.f32 %v3849, %v3849
      %v4026 = vmul.f32 %v3850, %v3850
      %v4027 = vmul.f32 %v3851, %v3851
      %v4028 = vmul.f32 %v3852, %v3852
      %v4029 = vmul.f32 %v3853, %v3853
      %v4030 = vmul.f32 %v3854, %v3854
      %v4031 = vmul.f32 %v3855, %v3855
      %v4032 = vmul.f32 %v3856, %v3856
      %v4033 = vsel %vm366, %v4001, 0.0
      %v4034 = vsel %vm366, %v4002, 0.0
      %v4035 = vadd.f32 %v4033, %v4034
      %v4036 = vrot.slane %v4035, 4
      %v4037 = vadd.f32 %v4035, %v4036
      %v4038 = vrot.slane %v4037, 2
      %v4039 = vadd.f32 %v4037, %v4038
      %v4040 = vrot.slane %v4039, 1
      %v4041 = vadd.f32 %v4039, %v4040
      %v4042 = vsel %vm366, %v4003, 0.0
      %v4043 = vsel %vm366, %v4004, 0.0
      %v4044 = vadd.f32 %v4042, %v4043
      %v4045 = vrot.slane %v4044, 4
      %v4046 = vadd.f32 %v4044, %v4045
      %v4047 = vrot.slane %v4046, 2
      %v4048 = vadd.f32 %v4046, %v4047
      %v4049 = vrot.slane %v4048, 1
      %v4050 = vadd.f32 %v4048, %v4049
      %v4051 = vsel %vm366, %v4005, 0.0
      %v4052 = vsel %vm366, %v4006, 0.0
      %v4053 = vadd.f32 %v4051, %v4052
      %v4054 = vrot.slane %v4053, 4
      %v4055 = vadd.f32 %v4053, %v4054
      %v4056 = vrot.slane %v4055, 2
      %v4057 = vadd.f32 %v4055, %v4056
      %v4058 = vrot.slane %v4057, 1
      %v4059 = vadd.f32 %v4057, %v4058
      %v4060 = vsel %vm366, %v4007, 0.0
      %v4061 = vsel %vm366, %v4008, 0.0
      %v4062 = vadd.f32 %v4060, %v4061
      %v4063 = vrot.slane %v4062, 4
      %v4064 = vadd.f32 %v4062, %v4063
      %v4065 = vrot.slane %v4064, 2
      %v4066 = vadd.f32 %v4064, %v4065
      %v4067 = vrot.slane %v4066, 1
      %v4068 = vadd.f32 %v4066, %v4067
      %v4069 = vsel %vm366, %v4009, 0.0
      %v4070 = vsel %vm366, %v4010, 0.0
      %v4071 = vadd.f32 %v4069, %v4070
      %v4072 = vrot.slane %v4071, 4
      %v4073 = vadd.f32 %v4071, %v4072
      %v4074 = vrot.slane %v4073, 2
      %v4075 = vadd.f32 %v4073, %v4074
      %v4076 = vrot.slane %v4075, 1
      %v4077 = vadd.f32 %v4075, %v4076
      %v4078 = vsel %vm366, %v4011, 0.0
      %v4079 = vsel %vm366, %v4012, 0.0
      %v4080 = vadd.f32 %v4078, %v4079
      %v4081 = vrot.slane %v4080, 4
      %v4082 = vadd.f32 %v4080, %v4081
      %v4083 = vrot.slane %v4082, 2
      %v4084 = vadd.f32 %v4082, %v4083
      %v4085 = vrot.slane %v4084, 1
      %v4086 = vadd.f32 %v4084, %v4085
      %v4087 = vsel %vm366, %v4013, 0.0
      %v4088 = vsel %vm366, %v4014, 0.0
      %v4089 = vadd.f32 %v4087, %v4088
      %v4090 = vrot.slane %v4089, 4
      %v4091 = vadd.f32 %v4089, %v4090
      %v4092 = vrot.slane %v4091, 2
      %v4093 = vadd.f32 %v4091, %v4092
      %v4094 = vrot.slane %v4093, 1
      %v4095 = vadd.f32 %v4093, %v4094
      %v4096 = vsel %vm366, %v4015, 0.0
      %v4097 = vsel %vm366, %v4016, 0.0
      %v4098 = vadd.f32 %v4096, %v4097
      %v4099 = vrot.slane %v4098, 4
      %v4100 = vadd.f32 %v4098, %v4099
      %v4101 = vrot.slane %v4100, 2
      %v4102 = vadd.f32 %v4100, %v4101
      %v4103 = vrot.slane %v4102, 1
      %v4104 = vadd.f32 %v4102, %v4103
      %v4105 = vsel %vm366, %v4017, 0.0
      %v4106 = vsel %vm366, %v4018, 0.0
      %v4107 = vadd.f32 %v4105, %v4106
      %v4108 = vrot.slane %v4107, 4
      %v4109 = vadd.f32 %v4107, %v4108
      %v4110 = vrot.slane %v4109, 2
      %v4111 = vadd.f32 %v4109, %v4110
      %v4112 = vrot.slane %v4111, 1
      %v4113 = vadd.f32 %v4111, %v4112
      %v4114 = vsel %vm366, %v4019, 0.0
      %v4115 = vsel %vm366, %v4020, 0.0
      %v4116 = vadd.f32 %v4114, %v4115
      %v4117 = vrot.slane %v4116, 4
      %v4118 = vadd.f32 %v4116, %v4117
      %v4119 = vrot.slane %v4118, 2
      %v4120 = vadd.f32 %v4118, %v4119
      %v4121 = vrot.slane %v4120, 1
      %v4122 = vadd.f32 %v4120, %v4121
      %v4123 = vsel %vm366, %v4021, 0.0
      %v4124 = vsel %vm366, %v4022, 0.0
      %v4125 = vadd.f32 %v4123, %v4124
      %v4126 = vrot.slane %v4125, 4
      %v4127 = vadd.f32 %v4125, %v4126
      %v4128 = vrot.slane %v4127, 2
      %v4129 = vadd.f32 %v4127, %v4128
      %v4130 = vrot.slane %v4129, 1
      %v4131 = vadd.f32 %v4129, %v4130
      %v4132 = vsel %vm366, %v4023, 0.0
      %v4133 = vsel %vm366, %v4024, 0.0
      %v4134 = vadd.f32 %v4132, %v4133
      %v4135 = vrot.slane %v4134, 4
      %v4136 = vadd.f32 %v4134, %v4135
      %v4137 = vrot.slane %v4136, 2
      %v4138 = vadd.f32 %v4136, %v4137
      %v4139 = vrot.slane %v4138, 1
      %v4140 = vadd.f32 %v4138, %v4139
      %v4141 = vsel %vm366, %v4025, 0.0
      %v4142 = vsel %vm366, %v4026, 0.0
      %v4143 = vadd.f32 %v4141, %v4142
      %v4144 = vrot.slane %v4143, 4
      %v4145 = vadd.f32 %v4143, %v4144
      %v4146 = vrot.slane %v4145, 2
      %v4147 = vadd.f32 %v4145, %v4146
      %v4148 = vrot.slane %v4147, 1
      %v4149 = vadd.f32 %v4147, %v4148
      %v4150 = vsel %vm366, %v4027, 0.0
      %v4151 = vsel %vm366, %v4028, 0.0
      %v4152 = vadd.f32 %v4150, %v4151
      %v4153 = vrot.slane %v4152, 4
      %v4154 = vadd.f32 %v4152, %v4153
      %v4155 = vrot.slane %v4154, 2
      %v4156 = vadd.f32 %v4154, %v4155
      %v4157 = vrot.slane %v4156, 1
      %v4158 = vadd.f32 %v4156, %v4157
      %v4159 = vsel %vm366, %v4029, 0.0
      %v4160 = vsel %vm366, %v4030, 0.0
      %v4161 = vadd.f32 %v4159, %v4160
      %v4162 = vrot.slane %v4161, 4
      %v4163 = vadd.f32 %v4161, %v4162
      %v4164 = vrot.slane %v4163, 2
      %v4165 = vadd.f32 %v4163, %v4164
      %v4166 = vrot.slane %v4165, 1
      %v4167 = vadd.f32 %v4165, %v4166
      %v4168 = vsel %vm366, %v4031, 0.0
      %v4169 = vsel %vm366, %v4032, 0.0
      %v4170 = vadd.f32 %v4168, %v4169
      %v4171 = vrot.slane %v4170, 4
      %v4172 = vadd.f32 %v4170, %v4171
      %v4173 = vrot.slane %v4172, 2
      %v4174 = vadd.f32 %v4172, %v4173
      %v4175 = vrot.slane %v4174, 1
      %v4176 = vadd.f32 %v4174, %v4175
      %v4177 = vmul.f32 %v3865, 0.0625
      %v4178 = vmul.f32 %v3874, 0.0625
      %v4179 = vmul.f32 %v3883, 0.0625
      %v4180 = vmul.f32 %v3892, 0.0625
      %v4181 = vmul.f32 %v3901, 0.0625
      %v4182 = vmul.f32 %v3910, 0.0625
      %v4183 = vmul.f32 %v3919, 0.0625
      %v4184 = vmul.f32 %v3928, 0.0625
      %v4185 = vmul.f32 %v3937, 0.0625
      %v4186 = vmul.f32 %v3946, 0.0625
      %v4187 = vmul.f32 %v3955, 0.0625
      %v4188 = vmul.f32 %v3964, 0.0625
      %v4189 = vmul.f32 %v3973, 0.0625
      %v4190 = vmul.f32 %v3982, 0.0625
      %v4191 = vmul.f32 %v3991, 0.0625
      %v4192 = vmul.f32 %v4000, 0.0625
      %v4193 = vmul.f32 %v4041, 0.0625
      %v4194 = vmul.f32 %v4050, 0.0625
      %v4195 = vmul.f32 %v4059, 0.0625
      %v4196 = vmul.f32 %v4068, 0.0625
      %v4197 = vmul.f32 %v4077, 0.0625
      %v4198 = vmul.f32 %v4086, 0.0625
      %v4199 = vmul.f32 %v4095, 0.0625
      %v4200 = vmul.f32 %v4104, 0.0625
      %v4201 = vmul.f32 %v4113, 0.0625
      %v4202 = vmul.f32 %v4122, 0.0625
      %v4203 = vmul.f32 %v4131, 0.0625
      %v4204 = vmul.f32 %v4140, 0.0625
      %v4205 = vmul.f32 %v4149, 0.0625
      %v4206 = vmul.f32 %v4158, 0.0625
      %v4207 = vmul.f32 %v4167, 0.0625
      %v4208 = vmul.f32 %v4176, 0.0625
      %v4209 = vmul.f32 %v4177, %v4177
      %v4210 = vmul.f32 %v4178, %v4178
      %v4211 = vmul.f32 %v4179, %v4179
      %v4212 = vmul.f32 %v4180, %v4180
      %v4213 = vmul.f32 %v4181, %v4181
      %v4214 = vmul.f32 %v4182, %v4182
      %v4215 = vmul.f32 %v4183, %v4183
      %v4216 = vmul.f32 %v4184, %v4184
      %v4217 = vmul.f32 %v4185, %v4185
      %v4218 = vmul.f32 %v4186, %v4186
      %v4219 = vmul.f32 %v4187, %v4187
      %v4220 = vmul.f32 %v4188, %v4188
      %v4221 = vmul.f32 %v4189, %v4189
      %v4222 = vmul.f32 %v4190, %v4190
      %v4223 = vmul.f32 %v4191, %v4191
      %v4224 = vmul.f32 %v4192, %v4192
      %v4225 = vsub.f32 %v4193, %v4209
      %v4226 = vsub.f32 %v4194, %v4210
      %v4227 = vsub.f32 %v4195, %v4211
      %v4228 = vsub.f32 %v4196, %v4212
      %v4229 = vsub.f32 %v4197, %v4213
      %v4230 = vsub.f32 %v4198, %v4214
      %v4231 = vsub.f32 %v4199, %v4215
      %v4232 = vsub.f32 %v4200, %v4216
      %v4233 = vsub.f32 %v4201, %v4217
      %v4234 = vsub.f32 %v4202, %v4218
      %v4235 = vsub.f32 %v4203, %v4219
      %v4236 = vsub.f32 %v4204, %v4220
      %v4237 = vsub.f32 %v4205, %v4221
      %v4238 = vsub.f32 %v4206, %v4222
      %v4239 = vsub.f32 %v4207, %v4223
      %v4240 = vsub.f32 %v4208, %v4224
      %v4241 = vsub.f32 %v3825, %v4177
      %v4242 = vsub.f32 %v3826, %v4177
      %v4243 = vsub.f32 %v3827, %v4178
      %v4244 = vsub.f32 %v3828, %v4178
      %v4245 = vsub.f32 %v3829, %v4179
      %v4246 = vsub.f32 %v3830, %v4179
      %v4247 = vsub.f32 %v3831, %v4180
      %v4248 = vsub.f32 %v3832, %v4180
      %v4249 = vsub.f32 %v3833, %v4181
      %v4250 = vsub.f32 %v3834, %v4181
      %v4251 = vsub.f32 %v3835, %v4182
      %v4252 = vsub.f32 %v3836, %v4182
      %v4253 = vsub.f32 %v3837, %v4183
      %v4254 = vsub.f32 %v3838, %v4183
      %v4255 = vsub.f32 %v3839, %v4184
      %v4256 = vsub.f32 %v3840, %v4184
      %v4257 = vsub.f32 %v3841, %v4185
      %v4258 = vsub.f32 %v3842, %v4185
      %v4259 = vsub.f32 %v3843, %v4186
      %v4260 = vsub.f32 %v3844, %v4186
      %v4261 = vsub.f32 %v3845, %v4187
      %v4262 = vsub.f32 %v3846, %v4187
      %v4263 = vsub.f32 %v3847, %v4188
      %v4264 = vsub.f32 %v3848, %v4188
      %v4265 = vsub.f32 %v3849, %v4189
      %v4266 = vsub.f32 %v3850, %v4189
      %v4267 = vsub.f32 %v3851, %v4190
      %v4268 = vsub.f32 %v3852, %v4190
      %v4269 = vsub.f32 %v3853, %v4191
      %v4270 = vsub.f32 %v3854, %v4191
      %v4271 = vsub.f32 %v3855, %v4192
      %v4272 = vsub.f32 %v3856, %v4192
      %v4273 = vadd.f32 %v4225, 1e-05
      %v4274 = vadd.f32 %v4226, 1e-05
      %v4275 = vadd.f32 %v4227, 1e-05
      %v4276 = vadd.f32 %v4228, 1e-05
      %v4277 = vadd.f32 %v4229, 1e-05
      %v4278 = vadd.f32 %v4230, 1e-05
      %v4279 = vadd.f32 %v4231, 1e-05
      %v4280 = vadd.f32 %v4232, 1e-05
      %v4281 = vadd.f32 %v4233, 1e-05
      %v4282 = vadd.f32 %v4234, 1e-05
      %v4283 = vadd.f32 %v4235, 1e-05
      %v4284 = vadd.f32 %v4236, 1e-05
      %v4285 = vadd.f32 %v4237, 1e-05
      %v4286 = vadd.f32 %v4238, 1e-05
      %v4287 = vadd.f32 %v4239, 1e-05
      %v4288 = vadd.f32 %v4240, 1e-05
      %v4289 = vrsqrt.pop %v4273
      %v4290 = vrsqrt.pop %v4274
      %v4291 = vrsqrt.pop %v4275
      %v4292 = vrsqrt.pop %v4276
      %v4293 = vrsqrt.pop %v4277
      %v4294 = vrsqrt.pop %v4278
      %v4295 = vrsqrt.pop %v4279
      %v4296 = vrsqrt.pop %v4280
      %v4297 = vrsqrt.pop %v4281
      %v4298 = vrsqrt.pop %v4282
      %v4299 = vrsqrt.pop %v4283
      %v4300 = vrsqrt.pop %v4284
      %v4301 = vrsqrt.pop %v4285
      %v4302 = vrsqrt.pop %v4286
      %v4303 = vrsqrt.pop %v4287
      %v4304 = vrsqrt.pop %v4288
      %v4305 = vmul.f32 %v4241, %v4289
      %v4306 = vmul.f32 %v4242, %v4289
      %v4307 = vmul.f32 %v4243, %v4290
      %v4308 = vmul.f32 %v4244, %v4290
      %v4309 = vmul.f32 %v4245, %v4291
      %v4310 = vmul.f32 %v4246, %v4291
      %v4311 = vmul.f32 %v4247, %v4292
      %v4312 = vmul.f32 %v4248, %v4292
      %v4313 = vmul.f32 %v4249, %v4293
      %v4314 = vmul.f32 %v4250, %v4293
      %v4315 = vmul.f32 %v4251, %v4294
      %v4316 = vmul.f32 %v4252, %v4294
      %v4317 = vmul.f32 %v4253, %v4295
      %v4318 = vmul.f32 %v4254, %v4295
      %v4319 = vmul.f32 %v4255, %v4296
      %v4320 = vmul.f32 %v4256, %v4296
      %v4321 = vmul.f32 %v4257, %v4297
      %v4322 = vmul.f32 %v4258, %v4297
      %v4323 = vmul.f32 %v4259, %v4298
      %v4324 = vmul.f32 %v4260, %v4298
      %v4325 = vmul.f32 %v4261, %v4299
      %v4326 = vmul.f32 %v4262, %v4299
      %v4327 = vmul.f32 %v4263, %v4300
      %v4328 = vmul.f32 %v4264, %v4300
      %v4329 = vmul.f32 %v4265, %v4301
      %v4330 = vmul.f32 %v4266, %v4301
      %v4331 = vmul.f32 %v4267, %v4302
      %v4332 = vmul.f32 %v4268, %v4302
      %v4333 = vmul.f32 %v4269, %v4303
      %v4334 = vmul.f32 %v4270, %v4303
      %v4335 = vmul.f32 %v4271, %v4304
      %v4336 = vmul.f32 %v4272, %v4304
      %v4337 = vld [vmem:[%s5] sm:$0xff]
      %v4338 = vld [vmem:[%s5 + $0x8] sm:$0xff]
      %4340 = vset.pattern.permute.xlu0 0
      %4341 = vperm.xlu0 %4340, %v4337
      %v4342 = vpop.permute.xlu0 %4341
      %4345 = vset.pattern.permute.xlu0 0
      %4346 = vperm.xlu0 %4345, %v4338
      %v4347 = vpop.permute.xlu0 %4346
      %v4349 = vmul.f32 %v4305, %v4342
      %v4350 = vmul.f32 %v4306, %v4347
      %v4351 = vmul.f32 %v4307, %v4342
      %v4352 = vmul.f32 %v4308, %v4347
      %v4353 = vmul.f32 %v4309, %v4342
      %v4354 = vmul.f32 %v4310, %v4347
      %v4355 = vmul.f32 %v4311, %v4342
      %v4356 = vmul.f32 %v4312, %v4347
      %v4357 = vmul.f32 %v4313, %v4342
      %v4358 = vmul.f32 %v4314, %v4347
      %v4359 = vmul.f32 %v4315, %v4342
      %v4360 = vmul.f32 %v4316, %v4347
      %v4361 = vmul.f32 %v4317, %v4342
      %v4362 = vmul.f32 %v4318, %v4347
      %v4363 = vmul.f32 %v4319, %v4342
      %v4364 = vmul.f32 %v4320, %v4347
      %v4365 = vmul.f32 %v4321, %v4342
      %v4366 = vmul.f32 %v4322, %v4347
      %v4367 = vmul.f32 %v4323, %v4342
      %v4368 = vmul.f32 %v4324, %v4347
      %v4369 = vmul.f32 %v4325, %v4342
      %v4370 = vmul.f32 %v4326, %v4347
      %v4371 = vmul.f32 %v4327, %v4342
      %v4372 = vmul.f32 %v4328, %v4347
      %v4373 = vmul.f32 %v4329, %v4342
      %v4374 = vmul.f32 %v4330, %v4347
      %v4375 = vmul.f32 %v4331, %v4342
      %v4376 = vmul.f32 %v4332, %v4347
      %v4377 = vmul.f32 %v4333, %v4342
      %v4378 = vmul.f32 %v4334, %v4347
      %v4379 = vmul.f32 %v4335, %v4342
      %v4380 = vmul.f32 %v4336, %v4347
      %v4381 = vld [vmem:[%s6] sm:$0xff]
      %v4382 = vld [vmem:[%s6 + $0x8] sm:$0xff]
      %4384 = vset.pattern.permute.xlu0 0
      %4385 = vperm.xlu0 %4384, %v4381
      %v4386 = vpop.permute.xlu0 %4385
      %4389 = vset.pattern.permute.xlu0 0
      %4390 = vperm.xlu0 %4389, %v4382
      %v4391 = vpop.permute.xlu0 %4390
      %v4393 = vadd.f32 %v4349, %v4386
      %v4394 = vadd.f32 %v4350, %v4391
      %v4395 = vadd.f32 %v4351, %v4386
      %v4396 = vadd.f32 %v4352, %v4391
      %v4397 = vadd.f32 %v4353, %v4386
      %v4398 = vadd.f32 %v4354, %v4391
      %v4399 = vadd.f32 %v4355, %v4386
      %v4400 = vadd.f32 %v4356, %v4391
      %v4401 = vadd.f32 %v4357, %v4386
      %v4402 = vadd.f32 %v4358, %v4391
      %v4403 = vadd.f32 %v4359, %v4386
      %v4404 = vadd.f32 %v4360, %v4391
      %v4405 = vadd.f32 %v4361, %v4386
      %v4406 = vadd.f32 %v4362, %v4391
      %v4407 = vadd.f32 %v4363, %v4386
      %v4408 = vadd.f32 %v4364, %v4391
      %v4409 = vadd.f32 %v4365, %v4386
      %v4410 = vadd.f32 %v4366, %v4391
      %v4411 = vadd.f32 %v4367, %v4386
      %v4412 = vadd.f32 %v4368, %v4391
      %v4413 = vadd.f32 %v4369, %v4386
      %v4414 = vadd.f32 %v4370, %v4391
      %v4415 = vadd.f32 %v4371, %v4386
      %v4416 = vadd.f32 %v4372, %v4391
      %v4417 = vadd.f32 %v4373, %v4386
      %v4418 = vadd.f32 %v4374, %v4391
      %v4419 = vadd.f32 %v4375, %v4386
      %v4420 = vadd.f32 %v4376, %v4391
      %v4421 = vadd.f32 %v4377, %v4386
      %v4422 = vadd.f32 %v4378, %v4391
      %v4423 = vadd.f32 %v4379, %v4386
      %v4424 = vadd.f32 %v4380, %v4391
      %v4425 = vmul.f32 %v4393, 0.5
      %v4426 = vmul.f32 %v4394, 0.5
      %v4427 = vmul.f32 %v4395, 0.5
      %v4428 = vmul.f32 %v4396, 0.5
      %v4429 = vmul.f32 %v4397, 0.5
      %v4430 = vmul.f32 %v4398, 0.5
      %v4431 = vmul.f32 %v4399, 0.5
      %v4432 = vmul.f32 %v4400, 0.5
      %v4433 = vmul.f32 %v4401, 0.5
      %v4434 = vmul.f32 %v4402, 0.5
      %v4435 = vmul.f32 %v4403, 0.5
      %v4436 = vmul.f32 %v4404, 0.5
      %v4437 = vmul.f32 %v4405, 0.5
      %v4438 = vmul.f32 %v4406, 0.5
      %v4439 = vmul.f32 %v4407, 0.5
      %v4440 = vmul.f32 %v4408, 0.5
      %v4441 = vmul.f32 %v4409, 0.5
      %v4442 = vmul.f32 %v4410, 0.5
      %v4443 = vmul.f32 %v4411, 0.5
      %v4444 = vmul.f32 %v4412, 0.5
      %v4445 = vmul.f32 %v4413, 0.5
      %v4446 = vmul.f32 %v4414, 0.5
      %v4447 = vmul.f32 %v4415, 0.5
      %v4448 = vmul.f32 %v4416, 0.5
      %v4449 = vmul.f32 %v4417, 0.5
      %v4450 = vmul.f32 %v4418, 0.5
      %v4451 = vmul.f32 %v4419, 0.5
      %v4452 = vmul.f32 %v4420, 0.5
      %v4453 = vmul.f32 %v4421, 0.5
      %v4454 = vmul.f32 %v4422, 0.5
      %v4455 = vmul.f32 %v4423, 0.5
      %v4456 = vmul.f32 %v4424, 0.5
      %v4457 = vmul.f32 %v4393, 0.044715
      %v4458 = vmul.f32 %v4394, 0.044715
      %v4459 = vmul.f32 %v4395, 0.044715
      %v4460 = vmul.f32 %v4396, 0.044715
      %v4461 = vmul.f32 %v4397, 0.044715
      %v4462 = vmul.f32 %v4398, 0.044715
      %v4463 = vmul.f32 %v4399, 0.044715
      %v4464 = vmul.f32 %v4400, 0.044715
      %v4465 = vmul.f32 %v4401, 0.044715
      %v4466 = vmul.f32 %v4402, 0.044715
      %v4467 = vmul.f32 %v4403, 0.044715
      %v4468 = vmul.f32 %v4404, 0.044715
      %v4469 = vmul.f32 %v4405, 0.044715
      %v4470 = vmul.f32 %v4406, 0.044715
      %v4471 = vmul.f32 %v4407, 0.044715
      %v4472 = vmul.f32 %v4408, 0.044715
      %v4473 = vmul.f32 %v4409, 0.044715
      %v4474 = vmul.f32 %v4410, 0.044715
      %v4475 = vmul.f32 %v4411, 0.044715
      %v4476 = vmul.f32 %v4412, 0.044715
      %v4477 = vmul.f32 %v4413, 0.044715
      %v4478 = vmul.f32 %v4414, 0.044715
      %v4479 = vmul.f32 %v4415, 0.044715
      %v4480 = vmul.f32 %v4416, 0.044715
      %v4481 = vmul.f32 %v4417, 0.044715
      %v4482 = vmul.f32 %v4418, 0.044715
      %v4483 = vmul.f32 %v4419, 0.044715
      %v4484 = vmul.f32 %v4420, 0.044715
      %v4485 = vmul.f32 %v4421, 0.044715
      %v4486 = vmul.f32 %v4422, 0.044715
      %v4487 = vmul.f32 %v4423, 0.044715
      %v4488 = vmul.f32 %v4424, 0.044715
      %v4489 = vmul.f32 %v4457, %v4393
      %v4490 = vmul.f32 %v4458, %v4394
      %v4491 = vmul.f32 %v4459, %v4395
      %v4492 = vmul.f32 %v4460, %v4396
      %v4493 = vmul.f32 %v4461, %v4397
      %v4494 = vmul.f32 %v4462, %v4398
      %v4495 = vmul.f32 %v4463, %v4399
      %v4496 = vmul.f32 %v4464, %v4400
      %v4497 = vmul.f32 %v4465, %v4401
      %v4498 = vmul.f32 %v4466, %v4402
      %v4499 = vmul.f32 %v4467, %v4403
      %v4500 = vmul.f32 %v4468, %v4404
      %v4501 = vmul.f32 %v4469, %v4405
      %v4502 = vmul.f32 %v4470, %v4406
      %v4503 = vmul.f32 %v4471, %v4407
      %v4504 = vmul.f32 %v4472, %v4408
      %v4505 = vmul.f32 %v4473, %v4409
      %v4506 = vmul.f32 %v4474, %v4410
      %v4507 = vmul.f32 %v4475, %v4411
      %v4508 = vmul.f32 %v4476, %v4412
      %v4509 = vmul.f32 %v4477, %v4413
      %v4510 = vmul.f32 %v4478, %v4414
      %v4511 = vmul.f32 %v4479, %v4415
      %v4512 = vmul.f32 %v4480, %v4416
      %v4513 = vmul.f32 %v4481, %v4417
      %v4514 = vmul.f32 %v4482, %v4418
      %v4515 = vmul.f32 %v4483, %v4419
      %v4516 = vmul.f32 %v4484, %v4420
      %v4517 = vmul.f32 %v4485, %v4421
      %v4518 = vmul.f32 %v4486, %v4422
      %v4519 = vmul.f32 %v4487, %v4423
      %v4520 = vmul.f32 %v4488, %v4424
      %v4521 = vmul.f32 %v4489, %v4393
      %v4522 = vmul.f32 %v4490, %v4394
      %v4523 = vmul.f32 %v4491, %v4395
      %v4524 = vmul.f32 %v4492, %v4396
      %v4525 = vmul.f32 %v4493, %v4397
      %v4526 = vmul.f32 %v4494, %v4398
      %v4527 = vmul.f32 %v4495, %v4399
      %v4528 = vmul.f32 %v4496, %v4400
      %v4529 = vmul.f32 %v4497, %v4401
      %v4530 = vmul.f32 %v4498, %v4402
      %v4531 = vmul.f32 %v4499, %v4403
      %v4532 = vmul.f32 %v4500, %v4404
      %v4533 = vmul.f32 %v4501, %v4405
      %v4534 = vmul.f32 %v4502, %v4406
      %v4535 = vmul.f32 %v4503, %v4407
      %v4536 = vmul.f32 %v4504, %v4408
      %v4537 = vmul.f32 %v4505, %v4409
      %v4538 = vmul.f32 %v4506, %v4410
      %v4539 = vmul.f32 %v4507, %v4411
      %v4540 = vmul.f32 %v4508, %v4412
      %v4541 = vmul.f32 %v4509, %v4413
      %v4542 = vmul.f32 %v4510, %v4414
      %v4543 = vmul.f32 %v4511, %v4415
      %v4544 = vmul.f32 %v4512, %v4416
      %v4545 = vmul.f32 %v4513, %v4417
      %v4546 = vmul.f32 %v4514, %v4418
      %v4547 = vmul.f32 %v4515, %v4419
      %v4548 = vmul.f32 %v4516, %v4420
      %v4549 = vmul.f32 %v4517, %v4421
      %v4550 = vmul.f32 %v4518, %v4422
      %v4551 = vmul.f32 %v4519, %v4423
      %v4552 = vmul.f32 %v4520, %v4424
      %v4553 = vadd.f32 %v4393, %v4521
      %v4554 = vadd.f32 %v4394, %v4522
      %v4555 = vadd.f32 %v4395, %v4523
      %v4556 = vadd.f32 %v4396, %v4524
      %v4557 = vadd.f32 %v4397, %v4525
      %v4558 = vadd.f32 %v4398, %v4526
      %v4559 = vadd.f32 %v4399, %v4527
      %v4560 = vadd.f32 %v4400, %v4528
      %v4561 = vadd.f32 %v4401, %v4529
      %v4562 = vadd.f32 %v4402, %v4530
      %v4563 = vadd.f32 %v4403, %v4531
      %v4564 = vadd.f32 %v4404, %v4532
      %v4565 = vadd.f32 %v4405, %v4533
      %v4566 = vadd.f32 %v4406, %v4534
      %v4567 = vadd.f32 %v4407, %v4535
      %v4568 = vadd.f32 %v4408, %v4536
      %v4569 = vadd.f32 %v4409, %v4537
      %v4570 = vadd.f32 %v4410, %v4538
      %v4571 = vadd.f32 %v4411, %v4539
      %v4572 = vadd.f32 %v4412, %v4540
      %v4573 = vadd.f32 %v4413, %v4541
      %v4574 = vadd.f32 %v4414, %v4542
      %v4575 = vadd.f32 %v4415, %v4543
      %v4576 = vadd.f32 %v4416, %v4544
      %v4577 = vadd.f32 %v4417, %v4545
      %v4578 = vadd.f32 %v4418, %v4546
      %v4579 = vadd.f32 %v4419, %v4547
      %v4580 = vadd.f32 %v4420, %v4548
      %v4581 = vadd.f32 %v4421, %v4549
      %v4582 = vadd.f32 %v4422, %v4550
      %v4583 = vadd.f32 %v4423, %v4551
      %v4584 = vadd.f32 %v4424, %v4552
      %v4585 = vmul.f32 %v4553, 0.7978846
      %v4586 = vmul.f32 %v4554, 0.7978846
      %v4587 = vmul.f32 %v4555, 0.7978846
      %v4588 = vmul.f32 %v4556, 0.7978846
      %v4589 = vmul.f32 %v4557, 0.7978846
      %v4590 = vmul.f32 %v4558, 0.7978846
      %v4591 = vmul.f32 %v4559, 0.7978846
      %v4592 = vmul.f32 %v4560, 0.7978846
      %v4593 = vmul.f32 %v4561, 0.7978846
      %v4594 = vmul.f32 %v4562, 0.7978846
      %v4595 = vmul.f32 %v4563, 0.7978846
      %v4596 = vmul.f32 %v4564, 0.7978846
      %v4597 = vmul.f32 %v4565, 0.7978846
      %v4598 = vmul.f32 %v4566, 0.7978846
      %v4599 = vmul.f32 %v4567, 0.7978846
      %v4600 = vmul.f32 %v4568, 0.7978846
      %v4601 = vmul.f32 %v4569, 0.7978846
      %v4602 = vmul.f32 %v4570, 0.7978846
      %v4603 = vmul.f32 %v4571, 0.7978846
      %v4604 = vmul.f32 %v4572, 0.7978846
      %v4605 = vmul.f32 %v4573, 0.7978846
      %v4606 = vmul.f32 %v4574, 0.7978846
      %v4607 = vmul.f32 %v4575, 0.7978846
      %v4608 = vmul.f32 %v4576, 0.7978846
      %v4609 = vmul.f32 %v4577, 0.7978846
      %v4610 = vmul.f32 %v4578, 0.7978846
      %v4611 = vmul.f32 %v4579, 0.7978846
      %v4612 = vmul.f32 %v4580, 0.7978846
      %v4613 = vmul.f32 %v4581, 0.7978846
      %v4614 = vmul.f32 %v4582, 0.7978846
      %v4615 = vmul.f32 %v4583, 0.7978846
      %v4616 = vmul.f32 %v4584, 0.7978846
      %v4617 = vtanh.pop %v4585
      %v4618 = vtanh.pop %v4586
      %v4619 = vtanh.pop %v4587
      %v4620 = vtanh.pop %v4588
      %v4621 = vtanh.pop %v4589
      %v4622 = vtanh.pop %v4590
      %v4623 = vtanh.pop %v4591
      %v4624 = vtanh.pop %v4592
      %v4625 = vtanh.pop %v4593
      %v4626 = vtanh.pop %v4594
      %v4627 = vtanh.pop %v4595
      %v4628 = vtanh.pop %v4596
      %v4629 = vtanh.pop %v4597
      %v4630 = vtanh.pop %v4598
      %v4631 = vtanh.pop %v4599
      %v4632 = vtanh.pop %v4600
      %v4633 = vtanh.pop %v4601
      %v4634 = vtanh.pop %v4602
      %v4635 = vtanh.pop %v4603
      %v4636 = vtanh.pop %v4604
      %v4637 = vtanh.pop %v4605
      %v4638 = vtanh.pop %v4606
      %v4639 = vtanh.pop %v4607
      %v4640 = vtanh.pop %v4608
      %v4641 = vtanh.pop %v4609
      %v4642 = vtanh.pop %v4610
      %v4643 = vtanh.pop %v4611
      %v4644 = vtanh.pop %v4612
      %v4645 = vtanh.pop %v4613
      %v4646 = vtanh.pop %v4614
      %v4647 = vtanh.pop %v4615
      %v4648 = vtanh.pop %v4616
      %v4649 = vadd.f32 %v4617, 1.0
      %v4650 = vadd.f32 %v4618, 1.0
      %v4651 = vadd.f32 %v4619, 1.0
      %v4652 = vadd.f32 %v4620, 1.0
      %v4653 = vadd.f32 %v4621, 1.0
      %v4654 = vadd.f32 %v4622, 1.0
      %v4655 = vadd.f32 %v4623, 1.0
      %v4656 = vadd.f32 %v4624, 1.0
      %v4657 = vadd.f32 %v4625, 1.0
      %v4658 = vadd.f32 %v4626, 1.0
      %v4659 = vadd.f32 %v4627, 1.0
      %v4660 = vadd.f32 %v4628, 1.0
      %v4661 = vadd.f32 %v4629, 1.0
      %v4662 = vadd.f32 %v4630, 1.0
      %v4663 = vadd.f32 %v4631, 1.0
      %v4664 = vadd.f32 %v4632, 1.0
      %v4665 = vadd.f32 %v4633, 1.0
      %v4666 = vadd.f32 %v4634, 1.0
      %v4667 = vadd.f32 %v4635, 1.0
      %v4668 = vadd.f32 %v4636, 1.0
      %v4669 = vadd.f32 %v4637, 1.0
      %v4670 = vadd.f32 %v4638, 1.0
      %v4671 = vadd.f32 %v4639, 1.0
      %v4672 = vadd.f32 %v4640, 1.0
      %v4673 = vadd.f32 %v4641, 1.0
      %v4674 = vadd.f32 %v4642, 1.0
      %v4675 = vadd.f32 %v4643, 1.0
      %v4676 = vadd.f32 %v4644, 1.0
      %v4677 = vadd.f32 %v4645, 1.0
      %v4678 = vadd.f32 %v4646, 1.0
      %v4679 = vadd.f32 %v4647, 1.0
      %v4680 = vadd.f32 %v4648, 1.0
      %v4681 = vmul.f32 %v4425, %v4649
      %v4682 = vmul.f32 %v4426, %v4650
      %v4683 = vmul.f32 %v4427, %v4651
      %v4684 = vmul.f32 %v4428, %v4652
      %v4685 = vmul.f32 %v4429, %v4653
      %v4686 = vmul.f32 %v4430, %v4654
      %v4687 = vmul.f32 %v4431, %v4655
      %v4688 = vmul.f32 %v4432, %v4656
      %v4689 = vmul.f32 %v4433, %v4657
      %v4690 = vmul.f32 %v4434, %v4658
      %v4691 = vmul.f32 %v4435, %v4659
      %v4692 = vmul.f32 %v4436, %v4660
      %v4693 = vmul.f32 %v4437, %v4661
      %v4694 = vmul.f32 %v4438, %v4662
      %v4695 = vmul.f32 %v4439, %v4663
      %v4696 = vmul.f32 %v4440, %v4664
      %v4697 = vmul.f32 %v4441, %v4665
      %v4698 = vmul.f32 %v4442, %v4666
      %v4699 = vmul.f32 %v4443, %v4667
      %v4700 = vmul.f32 %v4444, %v4668
      %v4701 = vmul.f32 %v4445, %v4669
      %v4702 = vmul.f32 %v4446, %v4670
      %v4703 = vmul.f32 %v4447, %v4671
      %v4704 = vmul.f32 %v4448, %v4672
      %v4705 = vmul.f32 %v4449, %v4673
      %v4706 = vmul.f32 %v4450, %v4674
      %v4707 = vmul.f32 %v4451, %v4675
      %v4708 = vmul.f32 %v4452, %v4676
      %v4709 = vmul.f32 %v4453, %v4677
      %v4710 = vmul.f32 %v4454, %v4678
      %v4711 = vmul.f32 %v4455, %v4679
      %v4712 = vmul.f32 %v4456, %v4680
      %v4713 = vpack.c.bf16 %v4682, %v4681
      %v4714 = vpack.c.bf16 %v4684, %v4683
      %v4715 = vpack.c.bf16 %v4686, %v4685
      %v4716 = vpack.c.bf16 %v4688, %v4687
      %v4717 = vpack.c.bf16 %v4690, %v4689
      %v4718 = vpack.c.bf16 %v4692, %v4691
      %v4719 = vpack.c.bf16 %v4694, %v4693
      %v4720 = vpack.c.bf16 %v4696, %v4695
      %v4721 = vpack.c.bf16 %v4698, %v4697
      %v4722 = vpack.c.bf16 %v4700, %v4699
      %v4723 = vpack.c.bf16 %v4702, %v4701
      %v4724 = vpack.c.bf16 %v4704, %v4703
      %v4725 = vpack.c.bf16 %v4706, %v4705
      %v4726 = vpack.c.bf16 %v4708, %v4707
      %v4727 = vpack.c.bf16 %v4710, %v4709
      %v4728 = vpack.c.bf16 %v4712, %v4711
      %v4730 = vshrl.u32 %v4713, 16
      %v4732 = vrot.slane %v4730, 7
      %v4733 = vshll.u32 %v4713, 16
      %v4735 = vor.u32 %v4732, %v4733
      %v4737 = vshrl.u32 %v4714, 16
      %v4739 = vrot.slane %v4737, 7
      %v4740 = vshll.u32 %v4714, 16
      %v4742 = vor.u32 %v4739, %v4740
      %v4744 = vshrl.u32 %v4715, 16
      %v4746 = vrot.slane %v4744, 7
      %v4747 = vshll.u32 %v4715, 16
      %v4749 = vor.u32 %v4746, %v4747
      %v4751 = vshrl.u32 %v4716, 16
      %v4753 = vrot.slane %v4751, 7
      %v4754 = vshll.u32 %v4716, 16
      %v4756 = vor.u32 %v4753, %v4754
      %v4758 = vshrl.u32 %v4717, 16
      %v4760 = vrot.slane %v4758, 7
      %v4761 = vshll.u32 %v4717, 16
      %v4763 = vor.u32 %v4760, %v4761
      %v4765 = vshrl.u32 %v4718, 16
      %v4767 = vrot.slane %v4765, 7
      %v4768 = vshll.u32 %v4718, 16
      %v4770 = vor.u32 %v4767, %v4768
      %v4772 = vshrl.u32 %v4719, 16
      %v4774 = vrot.slane %v4772, 7
      %v4775 = vshll.u32 %v4719, 16
      %v4777 = vor.u32 %v4774, %v4775
      %v4779 = vshrl.u32 %v4720, 16
      %v4781 = vrot.slane %v4779, 7
      %v4782 = vshll.u32 %v4720, 16
      %v4784 = vor.u32 %v4781, %v4782
      %v4786 = vshrl.u32 %v4721, 16
      %v4788 = vrot.slane %v4786, 7
      %v4789 = vshll.u32 %v4721, 16
      %v4791 = vor.u32 %v4788, %v4789
      %v4793 = vshrl.u32 %v4722, 16
      %v4795 = vrot.slane %v4793, 7
      %v4796 = vshll.u32 %v4722, 16
      %v4798 = vor.u32 %v4795, %v4796
      %v4800 = vshrl.u32 %v4723, 16
      %v4802 = vrot.slane %v4800, 7
      %v4803 = vshll.u32 %v4723, 16
      %v4805 = vor.u32 %v4802, %v4803
      %v4807 = vshrl.u32 %v4724, 16
      %v4809 = vrot.slane %v4807, 7
      %v4810 = vshll.u32 %v4724, 16
      %v4812 = vor.u32 %v4809, %v4810
      %v4814 = vshrl.u32 %v4725, 16
      %v4816 = vrot.slane %v4814, 7
      %v4817 = vshll.u32 %v4725, 16
      %v4819 = vor.u32 %v4816, %v4817
      %v4821 = vshrl.u32 %v4726, 16
      %v4823 = vrot.slane %v4821, 7
      %v4824 = vshll.u32 %v4726, 16
      %v4826 = vor.u32 %v4823, %v4824
      %v4828 = vshrl.u32 %v4727, 16
      %v4830 = vrot.slane %v4828, 7
      %v4831 = vshll.u32 %v4727, 16
      %v4833 = vor.u32 %v4830, %v4831
      %v4835 = vshrl.u32 %v4728, 16
      %v4837 = vrot.slane %v4835, 7
      %v4838 = vshll.u32 %v4728, 16
      %v4840 = vor.u32 %v4837, %v4838
      %v4873 = vld [vmem:[%s1501] sm:$0xff]
      %v4874 = vsel %vm1503, %v4735, %v4873
      %4875 = vst [vmem:[%s1501] sm:$0xff] %v4874
      %v4876 = vld [vmem:[%s1501 + $0x8] sm:$0x1]
      %v4877 = vsel %vm374, %v4732, %v4876
      %4878 = vst [vmem:[%s1501 + $0x8] sm:$0x1] %v4877
      %v4879 = vld [vmem:[%s1501 + $0x10] sm:$0xff]
      %v4880 = vsel %vm1503, %v4742, %v4879
      %4881 = vst [vmem:[%s1501 + $0x10] sm:$0xff] %v4880
      %v4882 = vld [vmem:[%s1501 + $0x18] sm:$0x1]
      %v4883 = vsel %vm374, %v4739, %v4882
      %4884 = vst [vmem:[%s1501 + $0x18] sm:$0x1] %v4883
      %v4885 = vld [vmem:[%s1501 + $0x20] sm:$0xff]
      %v4886 = vsel %vm1503, %v4749, %v4885
      %4887 = vst [vmem:[%s1501 + $0x20] sm:$0xff] %v4886
      %v4888 = vld [vmem:[%s1501 + $0x28] sm:$0x1]
      %v4889 = vsel %vm374, %v4746, %v4888
      %4890 = vst [vmem:[%s1501 + $0x28] sm:$0x1] %v4889
      %v4891 = vld [vmem:[%s1501 + $0x30] sm:$0xff]
      %v4892 = vsel %vm1503, %v4756, %v4891
      %4893 = vst [vmem:[%s1501 + $0x30] sm:$0xff] %v4892
      %v4894 = vld [vmem:[%s1501 + $0x38] sm:$0x1]
      %v4895 = vsel %vm374, %v4753, %v4894
      %4896 = vst [vmem:[%s1501 + $0x38] sm:$0x1] %v4895
      %v4897 = vld [vmem:[%s1501 + $0x40] sm:$0xff]
      %v4898 = vsel %vm1503, %v4763, %v4897
      %4899 = vst [vmem:[%s1501 + $0x40] sm:$0xff] %v4898
      %v4900 = vld [vmem:[%s1501 + $0x48] sm:$0x1]
      %v4901 = vsel %vm374, %v4760, %v4900
      %4902 = vst [vmem:[%s1501 + $0x48] sm:$0x1] %v4901
      %v4903 = vld [vmem:[%s1501 + $0x50] sm:$0xff]
      %v4904 = vsel %vm1503, %v4770, %v4903
      %4905 = vst [vmem:[%s1501 + $0x50] sm:$0xff] %v4904
      %v4906 = vld [vmem:[%s1501 + $0x58] sm:$0x1]
      %v4907 = vsel %vm374, %v4767, %v4906
      %4908 = vst [vmem:[%s1501 + $0x58] sm:$0x1] %v4907
      %v4909 = vld [vmem:[%s1501 + $0x60] sm:$0xff]
      %v4910 = vsel %vm1503, %v4777, %v4909
      %4911 = vst [vmem:[%s1501 + $0x60] sm:$0xff] %v4910
      %v4912 = vld [vmem:[%s1501 + $0x68] sm:$0x1]
      %v4913 = vsel %vm374, %v4774, %v4912
      %4914 = vst [vmem:[%s1501 + $0x68] sm:$0x1] %v4913
      %v4915 = vld [vmem:[%s1501 + $0x70] sm:$0xff]
      %v4916 = vsel %vm1503, %v4784, %v4915
      %4917 = vst [vmem:[%s1501 + $0x70] sm:$0xff] %v4916
      %v4918 = vld [vmem:[%s1501 + $0x78] sm:$0x1]
      %v4919 = vsel %vm374, %v4781, %v4918
      %4920 = vst [vmem:[%s1501 + $0x78] sm:$0x1] %v4919
      %v4921 = vld [vmem:[%s1501 + $0x80] sm:$0xff]
      %v4922 = vsel %vm1503, %v4791, %v4921
      %4923 = vst [vmem:[%s1501 + $0x80] sm:$0xff] %v4922
      %v4924 = vld [vmem:[%s1501 + $0x88] sm:$0x1]
      %v4925 = vsel %vm374, %v4788, %v4924
      %4926 = vst [vmem:[%s1501 + $0x88] sm:$0x1] %v4925
      %v4927 = vld [vmem:[%s1501 + $0x90] sm:$0xff]
      %v4928 = vsel %vm1503, %v4798, %v4927
      %4929 = vst [vmem:[%s1501 + $0x90] sm:$0xff] %v4928
      %v4930 = vld [vmem:[%s1501 + $0x98] sm:$0x1]
      %v4931 = vsel %vm374, %v4795, %v4930
      %4932 = vst [vmem:[%s1501 + $0x98] sm:$0x1] %v4931
      %v4933 = vld [vmem:[%s1501 + $0xa0] sm:$0xff]
      %v4934 = vsel %vm1503, %v4805, %v4933
      %4935 = vst [vmem:[%s1501 + $0xa0] sm:$0xff] %v4934
      %v4936 = vld [vmem:[%s1501 + $0xa8] sm:$0x1]
      %v4937 = vsel %vm374, %v4802, %v4936
      %4938 = vst [vmem:[%s1501 + $0xa8] sm:$0x1] %v4937
      %v4939 = vld [vmem:[%s1501 + $0xb0] sm:$0xff]
      %v4940 = vsel %vm1503, %v4812, %v4939
      %4941 = vst [vmem:[%s1501 + $0xb0] sm:$0xff] %v4940
      %v4942 = vld [vmem:[%s1501 + $0xb8] sm:$0x1]
      %v4943 = vsel %vm374, %v4809, %v4942
      %4944 = vst [vmem:[%s1501 + $0xb8] sm:$0x1] %v4943
      %v4945 = vld [vmem:[%s1501 + $0xc0] sm:$0xff]
      %v4946 = vsel %vm1503, %v4819, %v4945
      %4947 = vst [vmem:[%s1501 + $0xc0] sm:$0xff] %v4946
      %v4948 = vld [vmem:[%s1501 + $0xc8] sm:$0x1]
      %v4949 = vsel %vm374, %v4816, %v4948
      %4950 = vst [vmem:[%s1501 + $0xc8] sm:$0x1] %v4949
      %v4951 = vld [vmem:[%s1501 + $0xd0] sm:$0xff]
      %v4952 = vsel %vm1503, %v4826, %v4951
      %4953 = vst [vmem:[%s1501 + $0xd0] sm:$0xff] %v4952
      %v4954 = vld [vmem:[%s1501 + $0xd8] sm:$0x1]
      %v4955 = vsel %vm374, %v4823, %v4954
      %4956 = vst [vmem:[%s1501 + $0xd8] sm:$0x1] %v4955
      %v4957 = vld [vmem:[%s1501 + $0xe0] sm:$0xff]
      %v4958 = vsel %vm1503, %v4833, %v4957
      %4959 = vst [vmem:[%s1501 + $0xe0] sm:$0xff] %v4958
      %v4960 = vld [vmem:[%s1501 + $0xe8] sm:$0x1]
      %v4961 = vsel %vm374, %v4830, %v4960
      %4962 = vst [vmem:[%s1501 + $0xe8] sm:$0x1] %v4961
      %v4963 = vld [vmem:[%s1501 + $0xf0] sm:$0xff]
      %v4964 = vsel %vm1503, %v4840, %v4963
      %4965 = vst [vmem:[%s1501 + $0xf0] sm:$0xff] %v4964
      %v4966 = vld [vmem:[%s1501 + $0xf8] sm:$0x1]
      %v4967 = vsel %vm374, %v4837, %v4966
      %4968 = vst [vmem:[%s1501 + $0xf8] sm:$0x1] %v4967
      %v4969 = vld [vmem:[#allocation2] sm:$0xff]
      %v4970 = vld [vmem:[#allocation2 + $0x8] sm:$0xff]
      %v4971 = vld [vmem:[#allocation2 + $0x10] sm:$0xff]
      %v4972 = vld [vmem:[#allocation2 + $0x18] sm:$0xff]
      %v4973 = vld [vmem:[#allocation2 + $0x20] sm:$0xff]
      %v4974 = vld [vmem:[#allocation2 + $0x28] sm:$0xff]
      %v4975 = vld [vmem:[#allocation2 + $0x30] sm:$0xff]
      %v4976 = vld [vmem:[#allocation2 + $0x38] sm:$0xff]
      %v4977 = vld [vmem:[#allocation2 + $0x40] sm:$0xff]
      %v4978 = vld [vmem:[#allocation2 + $0x48] sm:$0xff]
      %v4979 = vld [vmem:[#allocation2 + $0x50] sm:$0xff]
      %v4980 = vld [vmem:[#allocation2 + $0x58] sm:$0xff]
      %v4981 = vld [vmem:[#allocation2 + $0x60] sm:$0xff]
      %v4982 = vld [vmem:[#allocation2 + $0x68] sm:$0xff]
      %v4983 = vld [vmem:[#allocation2 + $0x70] sm:$0xff]
      %v4984 = vld [vmem:[#allocation2 + $0x78] sm:$0xff]
      %v4985 = vld [vmem:[#allocation2 + $0x80] sm:$0xff]
      %v4986 = vld [vmem:[#allocation2 + $0x88] sm:$0xff]
      %v4987 = vld [vmem:[#allocation2 + $0x90] sm:$0xff]
      %v4988 = vld [vmem:[#allocation2 + $0x98] sm:$0xff]
      %v4989 = vld [vmem:[#allocation2 + $0xa0] sm:$0xff]
      %v4990 = vld [vmem:[#allocation2 + $0xa8] sm:$0xff]
      %v4991 = vld [vmem:[#allocation2 + $0xb0] sm:$0xff]
      %v4992 = vld [vmem:[#allocation2 + $0xb8] sm:$0xff]
      %v4993 = vld [vmem:[#allocation2 + $0xc0] sm:$0xff]
      %v4994 = vld [vmem:[#allocation2 + $0xc8] sm:$0xff]
      %v4995 = vld [vmem:[#allocation2 + $0xd0] sm:$0xff]
      %v4996 = vld [vmem:[#allocation2 + $0xd8] sm:$0xff]
      %v4997 = vld [vmem:[#allocation2 + $0xe0] sm:$0xff]
      %v4998 = vld [vmem:[#allocation2 + $0xe8] sm:$0xff]
      %v4999 = vld [vmem:[#allocation2 + $0xf0] sm:$0xff]
      %v5000 = vld [vmem:[#allocation2 + $0xf8] sm:$0xff]
      %v5001 = vld [vmem:[#allocation2 + $0x100] sm:$0xff]
      %v5002 = vld [vmem:[#allocation2 + $0x108] sm:$0xff]
      %v5003 = vld [vmem:[#allocation2 + $0x110] sm:$0xff]
      %v5004 = vld [vmem:[#allocation2 + $0x118] sm:$0xff]
      %v5005 = vld [vmem:[%s7] sm:$0xff]
      %v5006 = vld [vmem:[%s7 + $0x8] sm:$0xf]
      %v5007 = vld [vmem:[%s7 + $0xc] sm:$0xff]
      %v5008 = vld [vmem:[%s7 + $0x14] sm:$0xf]
      %v5009 = vld [vmem:[%s7 + $0x18] sm:$0xff]
      %v5010 = vld [vmem:[%s7 + $0x20] sm:$0xf]
      %v5011 = vld [vmem:[%s7 + $0x24] sm:$0xff]
      %v5012 = vld [vmem:[%s7 + $0x2c] sm:$0xf]
      %v5021 = vunpack.c.l.b16 %v5005
      %v5022 = vunpack.c.h.b16 %v5005
      %v5023 = vunpack.c.l.b16 %v5006
      %v5024 = vunpack.c.l.b16 %v5007
      %v5025 = vunpack.c.h.b16 %v5007
      %v5026 = vunpack.c.l.b16 %v5008
      %v5027 = vunpack.c.l.b16 %v5009
      %v5028 = vunpack.c.h.b16 %v5009
      %v5029 = vunpack.c.l.b16 %v5010
      %v5030 = vunpack.c.l.b16 %v5011
      %v5031 = vunpack.c.h.b16 %v5011
      %v5032 = vunpack.c.l.b16 %v5012
      %v5033 = vpack.c.b16 %v5024, %v5021
      %v5034 = vpack.c.b16 %v5025, %v5022
      %v5035 = vpack.c.b16 %v5026, %v5023
      %v5036 = vpack.c.b16 %v5030, %v5027
      %v5037 = vpack.c.b16 %v5031, %v5028
      %v5038 = vpack.c.b16 %v5032, %v5029
      %v5046 = vsel %vm366, %v4969, 0
      %v5049 = vsel %vm366, %v4970, 0
      %v5052 = vsel %vm366, %v4971, 0
      %v5055 = vsel %vm366, %v4972, 0
      %v5058 = vsel %vm366, %v4973, 0
      %v5061 = vsel %vm366, %v4974, 0
      %v5064 = vsel %vm366, %v4975, 0
      %v5067 = vsel %vm366, %v4976, 0
      %v5070 = vsel %vm366, %v4977, 0
      %v5073 = vsel %vm366, %v4978, 0
      %v5076 = vsel %vm366, %v4979, 0
      %v5079 = vsel %vm366, %v4980, 0
      %v5082 = vsel %vm366, %v4981, 0
      %v5085 = vsel %vm366, %v4982, 0
      %v5088 = vsel %vm366, %v4983, 0
      %v5091 = vsel %vm366, %v4984, 0
      %v5094 = vsel %vm366, %v4985, 0
      %v5097 = vsel %vm366, %v4986, 0
      %v5100 = vsel %vm366, %v4987, 0
      %v5103 = vsel %vm366, %v4988, 0
      %v5106 = vsel %vm366, %v4989, 0
      %v5109 = vsel %vm366, %v4990, 0
      %v5112 = vsel %vm366, %v4991, 0
      %v5115 = vsel %vm366, %v4992, 0
      %v5118 = vsel %vm366, %v4993, 0
      %v5121 = vsel %vm366, %v4994, 0
      %v5124 = vsel %vm366, %v4995, 0
      %v5127 = vsel %vm366, %v4996, 0
      %v5130 = vsel %vm366, %v4997, 0
      %v5133 = vsel %vm366, %v4998, 0
      %v5136 = vsel %vm366, %v4999, 0
      %v5139 = vsel %vm366, %v5000, 0
      %v5142 = vsel %vm366, %v5001, 0
      %v5145 = vsel %vm366, %v5002, 0
      %v5148 = vsel %vm366, %v5003, 0
      %v5151 = vsel %vm366, %v5004, 0
      %5153 = vmatprep.subr.bf16.mxu0 %v5034
      %5154 = vmatpush1.bf16.msra.mxu0 %v5033
      %5155 = vmatprep.subr.bf16.mxu0 %v5037
      %5156 = vmatpush1.bf16.msra.mxu0 %v5036
      %5157 = vmatprep.subr.bf16.mxu0 0
      %5158 = vmatpush1.bf16.msra.mxu0 0
      %5159 = vmatprep.subr.bf16.mxu0 0
      %5160 = vmatpush1.bf16.msra.mxu0 0
      %5161 = vmatprep.subr.bf16.mxu0 0
      %5162 = vmatpush1.bf16.msra.mxu0 0
      %5163 = vmatprep.subr.bf16.mxu0 0
      %5164 = vmatpush1.bf16.msra.mxu0 0
      %5165 = vmatprep.subr.bf16.mxu0 0
      %5166 = vmatpush1.bf16.msra.mxu0 0
      %5167 = vmatprep.subr.bf16.mxu0 0
      %5168 = vmatpush1.bf16.msra.mxu0 0
      %5169 = vmatprep.subr.bf16.mxu0 0
      %5170 = vmatpush1.bf16.msra.mxu0 0
      %5171 = vmatprep.subr.bf16.mxu0 0
      %5172 = vmatpush1.bf16.msra.mxu0 0
      %5173 = vmatprep.subr.bf16.mxu0 0
      %5174 = vmatpush1.bf16.msra.mxu0 0
      %5175 = vmatprep.subr.bf16.mxu0 0
      %5176 = vmatpush1.bf16.msra.mxu0 0
      %5177 = vmatprep.subr.bf16.mxu0 0
      %5178 = vmatpush1.bf16.msra.mxu0 0
      %5179 = vmatprep.subr.bf16.mxu0 0
      %5180 = vmatpush1.bf16.msra.mxu0 0
      %5181 = vmatprep.subr.bf16.mxu0 0
      %5182 = vmatpush1.bf16.msra.mxu0 0
      %5183 = vmatprep.subr.bf16.mxu0 0
      %5184 = vmatpush1.bf16.msra.mxu0 0
      %5185 = vmatprep.mubr.bf16.mxu0 0
      %5186 = vmatmul.mubr.bf16.gmra.mrb[0].mxu0 %v5046
      %v5187 = vpop.f32.mrb[0].mxu0
      %v5188 = vadd.f32 0.0, %v5187
      %v5189 = vpop.f32.mrb[0].mxu0
      %v5190 = vadd.f32 0.0, %v5189
      %v5191 = vpop.f32.mrb[0].mxu0
      %v5192 = vadd.f32 0.0, %v5191
      %v5193 = vpop.f32.mrb[0].mxu0
      %v5194 = vadd.f32 0.0, %v5193
      %5195 = vmatprep.mubr.bf16.mxu0 0
      %5196 = vmatmul.mubr.bf16.gmra.mrb[0].mxu0 %v5049
      %v5197 = vpop.f32.mrb[0].mxu0
      %v5198 = vadd.f32 0.0, %v5197
      %v5199 = vpop.f32.mrb[0].mxu0
      %v5200 = vadd.f32 0.0, %v5199
      %v5201 = vpop.f32.mrb[0].mxu0
      %v5202 = vpop.f32.mrb[0].mxu0
      %5203 = vmatprep.mubr.bf16.mxu0 0
      %5204 = vmatmul.mubr.bf16.gmra.mrb[0].mxu0 %v5052
      %v5205 = vpop.f32.mrb[0].mxu0
      %v5206 = vadd.f32 0.0, %v5205
      %v5207 = vpop.f32.mrb[0].mxu0
      %v5208 = vadd.f32 0.0, %v5207
      %v5209 = vpop.f32.mrb[0].mxu0
      %v5210 = vadd.f32 0.0, %v5209
      %v5211 = vpop.f32.mrb[0].mxu0
      %v5212 = vadd.f32 0.0, %v5211
      %5213 = vmatprep.mubr.bf16.mxu0 0
      %5214 = vmatmul.mubr.bf16.gmra.mrb[0].mxu0 %v5055
      %v5215 = vpop.f32.mrb[0].mxu0
      %v5216 = vadd.f32 0.0, %v5215
      %v5217 = vpop.f32.mrb[0].mxu0
      %v5218 = vadd.f32 0.0, %v5217
      %v5219 = vpop.f32.mrb[0].mxu0
      %v5220 = vpop.f32.mrb[0].mxu0
      %5221 = vmatprep.mubr.bf16.mxu0 0
      %5222 = vmatmul.mubr.bf16.gmra.mrb[0].mxu0 %v5058
      %v5223 = vpop.f32.mrb[0].mxu0
      %v5224 = vadd.f32 0.0, %v5223
      %v5225 = vpop.f32.mrb[0].mxu0
      %v5226 = vadd.f32 0.0, %v5225
      %v5227 = vpop.f32.mrb[0].mxu0
      %v5228 = vadd.f32 0.0, %v5227
      %v5229 = vpop.f32.mrb[0].mxu0
      %v5230 = vadd.f32 0.0, %v5229
      %5231 = vmatprep.mubr.bf16.mxu0 0
      %5232 = vmatmul.mubr.bf16.gmra.mrb[0].mxu0 %v5061
      %v5233 = vpop.f32.mrb[0].mxu0
      %v5234 = vadd.f32 0.0, %v5233
      %v5235 = vpop.f32.mrb[0].mxu0
      %v5236 = vadd.f32 0.0, %v5235
      %v5237 = vpop.f32.mrb[0].mxu0
      %v5238 = vpop.f32.mrb[0].mxu0
      %5239 = vmatprep.mubr.bf16.mxu0 0
      %5240 = vmatmul.mubr.bf16.gmra.mrb[0].mxu0 %v5064
      %v5241 = vpop.f32.mrb[0].mxu0
      %v5242 = vadd.f32 0.0, %v5241
      %v5243 = vpop.f32.mrb[0].mxu0
      %v5244 = vadd.f32 0.0, %v5243
      %v5245 = vpop.f32.mrb[0].mxu0
      %v5246 = vadd.f32 0.0, %v5245
      %v5247 = vpop.f32.mrb[0].mxu0
      %v5248 = vadd.f32 0.0, %v5247
      %5249 = vmatprep.mubr.bf16.mxu0 0
      %5250 = vmatmul.mubr.bf16.gmra.mrb[0].mxu0 %v5067
      %v5251 = vpop.f32.mrb[0].mxu0
      %v5252 = vadd.f32 0.0, %v5251
      %v5253 = vpop.f32.mrb[0].mxu0
      %v5254 = vadd.f32 0.0, %v5253
      %v5255 = vpop.f32.mrb[0].mxu0
      %v5256 = vpop.f32.mrb[0].mxu0
      %5257 = vmatprep.mubr.bf16.mxu0 0
      %5258 = vmatmul.mubr.bf16.gmra.mrb[0].mxu0 %v5070
      %v5259 = vpop.f32.mrb[0].mxu0
      %v5260 = vadd.f32 0.0, %v5259
      %v5261 = vpop.f32.mrb[0].mxu0
      %v5262 = vadd.f32 0.0, %v5261
      %v5263 = vpop.f32.mrb[0].mxu0
      %v5264 = vadd.f32 0.0, %v5263
      %v5265 = vpop.f32.mrb[0].mxu0
      %v5266 = vadd.f32 0.0, %v5265
      %5267 = vmatprep.mubr.bf16.mxu0 0
      %5268 = vmatmul.mubr.bf16.gmra.mrb[0].mxu0 %v5073
      %v5269 = vpop.f32.mrb[0].mxu0
      %v5270 = vadd.f32 0.0, %v5269
      %v5271 = vpop.f32.mrb[0].mxu0
      %v5272 = vadd.f32 0.0, %v5271
      %v5273 = vpop.f32.mrb[0].mxu0
      %v5274 = vpop.f32.mrb[0].mxu0
      %5275 = vmatprep.mubr.bf16.mxu0 0
      %5276 = vmatmul.mubr.bf16.gmra.mrb[0].mxu0 %v5076
      %v5277 = vpop.f32.mrb[0].mxu0
      %v5278 = vadd.f32 0.0, %v5277
      %v5279 = vpop.f32.mrb[0].mxu0
      %v5280 = vadd.f32 0.0, %v5279
      %v5281 = vpop.f32.mrb[0].mxu0
      %v5282 = vadd.f32 0.0, %v5281
      %v5283 = vpop.f32.mrb[0].mxu0
      %v5284 = vadd.f32 0.0, %v5283
      %5285 = vmatprep.mubr.bf16.mxu0 0
      %5286 = vmatmul.mubr.bf16.gmra.mrb[0].mxu0 %v5079
      %v5287 = vpop.f32.mrb[0].mxu0
      %v5288 = vadd.f32 0.0, %v5287
      %v5289 = vpop.f32.mrb[0].mxu0
      %v5290 = vadd.f32 0.0, %v5289
      %v5291 = vpop.f32.mrb[0].mxu0
      %v5292 = vpop.f32.mrb[0].mxu0
      %5293 = vmatprep.mubr.bf16.mxu0 0
      %5294 = vmatmul.mubr.bf16.gmra.mrb[0].mxu0 %v5082
      %v5295 = vpop.f32.mrb[0].mxu0
      %v5296 = vadd.f32 0.0, %v5295
      %v5297 = vpop.f32.mrb[0].mxu0
      %v5298 = vadd.f32 0.0, %v5297
      %v5299 = vpop.f32.mrb[0].mxu0
      %v5300 = vadd.f32 0.0, %v5299
      %v5301 = vpop.f32.mrb[0].mxu0
      %v5302 = vadd.f32 0.0, %v5301
      %5303 = vmatprep.mubr.bf16.mxu0 0
      %5304 = vmatmul.mubr.bf16.gmra.mrb[0].mxu0 %v5085
      %v5305 = vpop.f32.mrb[0].mxu0
      %v5306 = vadd.f32 0.0, %v5305
      %v5307 = vpop.f32.mrb[0].mxu0
      %v5308 = vadd.f32 0.0, %v5307
      %v5309 = vpop.f32.mrb[0].mxu0
      %v5310 = vpop.f32.mrb[0].mxu0
      %5311 = vmatprep.mubr.bf16.mxu0 0
      %5312 = vmatmul.mubr.bf16.gmra.mrb[0].mxu0 %v5088
      %v5313 = vpop.f32.mrb[0].mxu0
      %v5314 = vadd.f32 0.0, %v5313
      %v5315 = vpop.f32.mrb[0].mxu0
      %v5316 = vadd.f32 0.0, %v5315
      %v5317 = vpop.f32.mrb[0].mxu0
      %v5318 = vadd.f32 0.0, %v5317
      %v5319 = vpop.f32.mrb[0].mxu0
      %v5320 = vadd.f32 0.0, %v5319
      %5321 = vmatprep.mubr.bf16.mxu0 0
      %5322 = vmatmul.mubr.bf16.gmra.mrb[0].mxu0 %v5091
      %v5323 = vpop.f32.mrb[0].mxu0
      %v5324 = vadd.f32 0.0, %v5323
      %v5325 = vpop.f32.mrb[0].mxu0
      %v5326 = vadd.f32 0.0, %v5325
      %v5327 = vpop.f32.mrb[0].mxu0
      %v5328 = vpop.f32.mrb[0].mxu0
      %5329 = vmatprep.mubr.bf16.mxu0 0
      %5330 = vmatmul.mubr.bf16.gmra.mrb[0].mxu0 %v5094
      %v5331 = vpop.f32.mrb[0].mxu0
      %v5332 = vadd.f32 0.0, %v5331
      %v5333 = vpop.f32.mrb[0].mxu0
      %v5334 = vadd.f32 0.0, %v5333
      %v5335 = vpop.f32.mrb[0].mxu0
      %v5336 = vadd.f32 0.0, %v5335
      %v5337 = vpop.f32.mrb[0].mxu0
      %v5338 = vadd.f32 0.0, %v5337
      %5339 = vmatprep.mubr.bf16.mxu0 0
      %5340 = vmatmul.mubr.bf16.gmra.mrb[0].mxu0 %v5097
      %v5341 = vpop.f32.mrb[0].mxu0
      %v5342 = vadd.f32 0.0, %v5341
      %v5343 = vpop.f32.mrb[0].mxu0
      %v5344 = vadd.f32 0.0, %v5343
      %v5345 = vpop.f32.mrb[0].mxu0
      %v5346 = vpop.f32.mrb[0].mxu0
      %5347 = vmatprep.mubr.bf16.mxu0 0
      %5348 = vmatmul.mubr.bf16.gmra.mrb[0].mxu0 %v5100
      %v5349 = vpop.f32.mrb[0].mxu0
      %v5350 = vadd.f32 0.0, %v5349
      %v5351 = vpop.f32.mrb[0].mxu0
      %v5352 = vadd.f32 0.0, %v5351
      %v5353 = vpop.f32.mrb[0].mxu0
      %v5354 = vadd.f32 0.0, %v5353
      %v5355 = vpop.f32.mrb[0].mxu0
      %v5356 = vadd.f32 0.0, %v5355
      %5357 = vmatprep.mubr.bf16.mxu0 0
      %5358 = vmatmul.mubr.bf16.gmra.mrb[0].mxu0 %v5103
      %v5359 = vpop.f32.mrb[0].mxu0
      %v5360 = vadd.f32 0.0, %v5359
      %v5361 = vpop.f32.mrb[0].mxu0
      %v5362 = vadd.f32 0.0, %v5361
      %v5363 = vpop.f32.mrb[0].mxu0
      %v5364 = vpop.f32.mrb[0].mxu0
      %5365 = vmatprep.mubr.bf16.mxu0 0
      %5366 = vmatmul.mubr.bf16.gmra.mrb[0].mxu0 %v5106
      %v5367 = vpop.f32.mrb[0].mxu0
      %v5368 = vadd.f32 0.0, %v5367
      %v5369 = vpop.f32.mrb[0].mxu0
      %v5370 = vadd.f32 0.0, %v5369
      %v5371 = vpop.f32.mrb[0].mxu0
      %v5372 = vadd.f32 0.0, %v5371
      %v5373 = vpop.f32.mrb[0].mxu0
      %v5374 = vadd.f32 0.0, %v5373
      %5375 = vmatprep.mubr.bf16.mxu0 0
      %5376 = vmatmul.mubr.bf16.gmra.mrb[0].mxu0 %v5109
      %v5377 = vpop.f32.mrb[0].mxu0
      %v5378 = vadd.f32 0.0, %v5377
      %v5379 = vpop.f32.mrb[0].mxu0
      %v5380 = vadd.f32 0.0, %v5379
      %v5381 = vpop.f32.mrb[0].mxu0
      %v5382 = vpop.f32.mrb[0].mxu0
      %5383 = vmatprep.mubr.bf16.mxu0 0
      %5384 = vmatmul.mubr.bf16.gmra.mrb[0].mxu0 %v5112
      %v5385 = vpop.f32.mrb[0].mxu0
      %v5386 = vadd.f32 0.0, %v5385
      %v5387 = vpop.f32.mrb[0].mxu0
      %v5388 = vadd.f32 0.0, %v5387
      %v5389 = vpop.f32.mrb[0].mxu0
      %v5390 = vadd.f32 0.0, %v5389
      %v5391 = vpop.f32.mrb[0].mxu0
      %v5392 = vadd.f32 0.0, %v5391
      %5393 = vmatprep.mubr.bf16.mxu0 0
      %5394 = vmatmul.mubr.bf16.gmra.mrb[0].mxu0 %v5115
      %v5395 = vpop.f32.mrb[0].mxu0
      %v5396 = vadd.f32 0.0, %v5395
      %v5397 = vpop.f32.mrb[0].mxu0
      %v5398 = vadd.f32 0.0, %v5397
      %v5399 = vpop.f32.mrb[0].mxu0
      %v5400 = vpop.f32.mrb[0].mxu0
      %5401 = vmatprep.mubr.bf16.mxu0 0
      %5402 = vmatmul.mubr.bf16.gmra.mrb[0].mxu0 %v5118
      %v5403 = vpop.f32.mrb[0].mxu0
      %v5404 = vadd.f32 0.0, %v5403
      %v5405 = vpop.f32.mrb[0].mxu0
      %v5406 = vadd.f32 0.0, %v5405
      %v5407 = vpop.f32.mrb[0].mxu0
      %v5408 = vadd.f32 0.0, %v5407
      %v5409 = vpop.f32.mrb[0].mxu0
      %v5410 = vadd.f32 0.0, %v5409
      %5411 = vmatprep.mubr.bf16.mxu0 0
      %5412 = vmatmul.mubr.bf16.gmra.mrb[0].mxu0 %v5121
      %v5413 = vpop.f32.mrb[0].mxu0
      %v5414 = vadd.f32 0.0, %v5413
      %v5415 = vpop.f32.mrb[0].mxu0
      %v5416 = vadd.f32 0.0, %v5415
      %v5417 = vpop.f32.mrb[0].mxu0
      %v5418 = vpop.f32.mrb[0].mxu0
      %5419 = vmatprep.mubr.bf16.mxu0 0
      %5420 = vmatmul.mubr.bf16.gmra.mrb[0].mxu0 %v5124
      %v5421 = vpop.f32.mrb[0].mxu0
      %v5422 = vadd.f32 0.0, %v5421
      %v5423 = vpop.f32.mrb[0].mxu0
      %v5424 = vadd.f32 0.0, %v5423
      %v5425 = vpop.f32.mrb[0].mxu0
      %v5426 = vadd.f32 0.0, %v5425
      %v5427 = vpop.f32.mrb[0].mxu0
      %v5428 = vadd.f32 0.0, %v5427
      %5429 = vmatprep.mubr.bf16.mxu0 0
      %5430 = vmatmul.mubr.bf16.gmra.mrb[0].mxu0 %v5127
      %v5431 = vpop.f32.mrb[0].mxu0
      %v5432 = vadd.f32 0.0, %v5431
      %v5433 = vpop.f32.mrb[0].mxu0
      %v5434 = vadd.f32 0.0, %v5433
      %v5435 = vpop.f32.mrb[0].mxu0
      %v5436 = vpop.f32.mrb[0].mxu0
      %5437 = vmatprep.mubr.bf16.mxu0 0
      %5438 = vmatmul.mubr.bf16.gmra.mrb[0].mxu0 %v5130
      %v5439 = vpop.f32.mrb[0].mxu0
      %v5440 = vadd.f32 0.0, %v5439
      %v5441 = vpop.f32.mrb[0].mxu0
      %v5442 = vadd.f32 0.0, %v5441
      %v5443 = vpop.f32.mrb[0].mxu0
      %v5444 = vadd.f32 0.0, %v5443
      %v5445 = vpop.f32.mrb[0].mxu0
      %v5446 = vadd.f32 0.0, %v5445
      %5447 = vmatprep.mubr.bf16.mxu0 0
      %5448 = vmatmul.mubr.bf16.gmra.mrb[0].mxu0 %v5133
      %v5449 = vpop.f32.mrb[0].mxu0
      %v5450 = vadd.f32 0.0, %v5449
      %v5451 = vpop.f32.mrb[0].mxu0
      %v5452 = vadd.f32 0.0, %v5451
      %v5453 = vpop.f32.mrb[0].mxu0
      %v5454 = vpop.f32.mrb[0].mxu0
      %5455 = vmatprep.mubr.bf16.mxu0 0
      %5456 = vmatmul.mubr.bf16.gmra.mrb[0].mxu0 %v5136
      %v5457 = vpop.f32.mrb[0].mxu0
      %v5458 = vadd.f32 0.0, %v5457
      %v5459 = vpop.f32.mrb[0].mxu0
      %v5460 = vadd.f32 0.0, %v5459
      %v5461 = vpop.f32.mrb[0].mxu0
      %v5462 = vadd.f32 0.0, %v5461
      %v5463 = vpop.f32.mrb[0].mxu0
      %v5464 = vadd.f32 0.0, %v5463
      %5465 = vmatprep.mubr.bf16.mxu0 0
      %5466 = vmatmul.mubr.bf16.gmra.mrb[0].mxu0 %v5139
      %v5467 = vpop.f32.mrb[0].mxu0
      %v5468 = vadd.f32 0.0, %v5467
      %v5469 = vpop.f32.mrb[0].mxu0
      %v5470 = vadd.f32 0.0, %v5469
      %v5471 = vpop.f32.mrb[0].mxu0
      %v5472 = vpop.f32.mrb[0].mxu0
      %5473 = vmatprep.mubr.bf16.mxu0 0
      %5474 = vmatmul.mubr.bf16.gmra.mrb[0].mxu0 %v5142
      %v5475 = vpop.f32.mrb[0].mxu0
      %v5476 = vadd.f32 0.0, %v5475
      %v5477 = vpop.f32.mrb[0].mxu0
      %v5478 = vadd.f32 0.0, %v5477
      %v5479 = vpop.f32.mrb[0].mxu0
      %v5480 = vadd.f32 0.0, %v5479
      %v5481 = vpop.f32.mrb[0].mxu0
      %v5482 = vadd.f32 0.0, %v5481
      %5483 = vmatprep.mubr.bf16.mxu0 0
      %5484 = vmatmul.mubr.bf16.gmra.mrb[0].mxu0 %v5145
      %v5485 = vpop.f32.mrb[0].mxu0
      %v5486 = vpop.f32.mrb[0].mxu0
      %v5487 = vadd.f32 0.0, %v5486
      %v5488 = vpop.f32.mrb[0].mxu0
      %v5489 = vpop.f32.mrb[0].mxu0
      %5490 = vmatprep.mubr.bf16.mxu0 0
      %5491 = vmatmul.mubr.bf16.gmra.mrb[0].mxu0 %v5148
      %v5492 = vpop.f32.mrb[0].mxu0
      %v5493 = vadd.f32 0.0, %v5492
      %v5494 = vpop.f32.mrb[0].mxu0
      %v5495 = vadd.f32 0.0, %v5494
      %v5496 = vpop.f32.mrb[0].mxu0
      %v5497 = vadd.f32 0.0, %v5496
      %v5498 = vpop.f32.mrb[0].mxu0
      %v5499 = vadd.f32 0.0, %v5498
      %5500 = vmatprep.mubr.bf16.mxu0 0
      %5501 = vmatmul.mubr.bf16.gmra.mrb[0].mxu0 %v5151
      %v5502 = vpop.f32.mrb[0].mxu0
      %v5503 = vpop.f32.mrb[0].mxu0
      %v5504 = vadd.f32 0.0, %v5503
      %v5505 = vpop.f32.mrb[0].mxu0
      %v5506 = vpop.f32.mrb[0].mxu0
      %5507 = vdwg.mxu0
      %5508 = vmatprep.subr.bf16.mxu0 0
      %5509 = vmatpush1.bf16.msra.mxu0 %v5035
      %5510 = vmatprep.subr.bf16.mxu0 0
      %5511 = vmatpush1.bf16.msra.mxu0 %v5038
      %5512 = vmatprep.subr.bf16.mxu0 0
      %5513 = vmatpush1.bf16.msra.mxu0 0
      %5514 = vmatprep.subr.bf16.mxu0 0
      %5515 = vmatpush1.bf16.msra.mxu0 0
      %5516 = vmatprep.subr.bf16.mxu0 0
      %5517 = vmatpush1.bf16.msra.mxu0 0
      %5518 = vmatprep.subr.bf16.mxu0 0
      %5519 = vmatpush1.bf16.msra.mxu0 0
      %5520 = vmatprep.subr.bf16.mxu0 0
      %5521 = vmatpush1.bf16.msra.mxu0 0
      %5522 = vmatprep.subr.bf16.mxu0 0
      %5523 = vmatpush1.bf16.msra.mxu0 0
      %5524 = vmatprep.subr.bf16.mxu0 0
      %5525 = vmatpush1.bf16.msra.mxu0 0
      %5526 = vmatprep.subr.bf16.mxu0 0
      %5527 = vmatpush1.bf16.msra.mxu0 0
      %5528 = vmatprep.subr.bf16.mxu0 0
      %5529 = vmatpush1.bf16.msra.mxu0 0
      %5530 = vmatprep.subr.bf16.mxu0 0
      %5531 = vmatpush1.bf16.msra.mxu0 0
      %5532 = vmatprep.subr.bf16.mxu0 0
      %5533 = vmatpush1.bf16.msra.mxu0 0
      %5534 = vmatprep.subr.bf16.mxu0 0
      %5535 = vmatpush1.bf16.msra.mxu0 0
      %5536 = vmatprep.subr.bf16.mxu0 0
      %5537 = vmatpush1.bf16.msra.mxu0 0
      %5538 = vmatprep.subr.bf16.mxu0 0
      %5539 = vmatpush1.bf16.msra.mxu0 0
      %5540 = vmatprep.mubr.bf16.mxu0 0
      %5541 = vmatmul.mubr.bf16.gmra.mrb[0].mxu0 %v5046
      %v5542 = vpop.f32.mrb[0].mxu0
      %v5543 = vpop.f32.mrb[0].mxu0
      %v5544 = vpop.f32.mrb[0].mxu0
      %v5545 = vpop.f32.mrb[0].mxu0
      %5546 = vmatprep.mubr.bf16.mxu0 0
      %5547 = vmatmul.mubr.bf16.gmra.mrb[0].mxu0 %v5049
      %v5548 = vpop.f32.mrb[0].mxu0
      %v5549 = vpop.f32.mrb[0].mxu0
      %v5550 = vpop.f32.mrb[0].mxu0
      %v5551 = vpop.f32.mrb[0].mxu0
      %5552 = vmatprep.mubr.bf16.mxu0 0
      %5553 = vmatmul.mubr.bf16.gmra.mrb[0].mxu0 %v5052
      %v5554 = vpop.f32.mrb[0].mxu0
      %v5555 = vpop.f32.mrb[0].mxu0
      %v5556 = vpop.f32.mrb[0].mxu0
      %v5557 = vpop.f32.mrb[0].mxu0
      %5558 = vmatprep.mubr.bf16.mxu0 0
      %5559 = vmatmul.mubr.bf16.gmra.mrb[0].mxu0 %v5055
      %v5560 = vpop.f32.mrb[0].mxu0
      %v5561 = vpop.f32.mrb[0].mxu0
      %v5562 = vpop.f32.mrb[0].mxu0
      %v5563 = vpop.f32.mrb[0].mxu0
      %5564 = vmatprep.mubr.bf16.mxu0 0
      %5565 = vmatmul.mubr.bf16.gmra.mrb[0].mxu0 %v5058
      %v5566 = vpop.f32.mrb[0].mxu0
      %v5567 = vadd.f32 0.0, %v5566
      %v5568 = vpop.f32.mrb[0].mxu0
      %v5569 = vpop.f32.mrb[0].mxu0
      %v5570 = vadd.f32 0.0, %v5569
      %v5571 = vpop.f32.mrb[0].mxu0
      %5572 = vmatprep.mubr.bf16.mxu0 0
      %5573 = vmatmul.mubr.bf16.gmra.mrb[0].mxu0 %v5061
      %v5574 = vpop.f32.mrb[0].mxu0
      %v5575 = vadd.f32 0.0, %v5574
      %v5576 = vpop.f32.mrb[0].mxu0
      %v5577 = vpop.f32.mrb[0].mxu0
      %v5578 = vpop.f32.mrb[0].mxu0
      %5579 = vmatprep.mubr.bf16.mxu0 0
      %5580 = vmatmul.mubr.bf16.gmra.mrb[0].mxu0 %v5064
      %v5581 = vpop.f32.mrb[0].mxu0
      %v5582 = vadd.f32 0.0, %v5581
      %v5583 = vpop.f32.mrb[0].mxu0
      %v5584 = vpop.f32.mrb[0].mxu0
      %v5585 = vadd.f32 0.0, %v5584
      %v5586 = vpop.f32.mrb[0].mxu0
      %5587 = vmatprep.mubr.bf16.mxu0 0
      %5588 = vmatmul.mubr.bf16.gmra.mrb[0].mxu0 %v5067
      %v5589 = vpop.f32.mrb[0].mxu0
      %v5590 = vadd.f32 0.0, %v5589
      %v5591 = vpop.f32.mrb[0].mxu0
      %v5592 = vpop.f32.mrb[0].mxu0
      %v5593 = vpop.f32.mrb[0].mxu0
      %5594 = vmatprep.mubr.bf16.mxu0 0
      %5595 = vmatmul.mubr.bf16.gmra.mrb[0].mxu0 %v5070
      %v5596 = vpop.f32.mrb[0].mxu0
      %v5597 = vadd.f32 0.0, %v5596
      %v5598 = vpop.f32.mrb[0].mxu0
      %v5599 = vpop.f32.mrb[0].mxu0
      %v5600 = vadd.f32 0.0, %v5599
      %v5601 = vpop.f32.mrb[0].mxu0
      %5602 = vmatprep.mubr.bf16.mxu0 0
      %5603 = vmatmul.mubr.bf16.gmra.mrb[0].mxu0 %v5073
      %v5604 = vpop.f32.mrb[0].mxu0
      %v5605 = vadd.f32 0.0, %v5604
      %v5606 = vpop.f32.mrb[0].mxu0
      %v5607 = vpop.f32.mrb[0].mxu0
      %v5608 = vpop.f32.mrb[0].mxu0
      %5609 = vmatprep.mubr.bf16.mxu0 0
      %5610 = vmatmul.mubr.bf16.gmra.mrb[0].mxu0 %v5076
      %v5611 = vpop.f32.mrb[0].mxu0
      %v5612 = vadd.f32 0.0, %v5611
      %v5613 = vpop.f32.mrb[0].mxu0
      %v5614 = vpop.f32.mrb[0].mxu0
      %v5615 = vadd.f32 0.0, %v5614
      %v5616 = vpop.f32.mrb[0].mxu0
      %5617 = vmatprep.mubr.bf16.mxu0 0
      %5618 = vmatmul.mubr.bf16.gmra.mrb[0].mxu0 %v5079
      %v5619 = vpop.f32.mrb[0].mxu0
      %v5620 = vadd.f32 0.0, %v5619
      %v5621 = vpop.f32.mrb[0].mxu0
      %v5622 = vpop.f32.mrb[0].mxu0
      %v5623 = vpop.f32.mrb[0].mxu0
      %5624 = vmatprep.mubr.bf16.mxu0 0
      %5625 = vmatmul.mubr.bf16.gmra.mrb[0].mxu0 %v5082
      %v5626 = vpop.f32.mrb[0].mxu0
      %v5627 = vadd.f32 0.0, %v5626
      %v5628 = vpop.f32.mrb[0].mxu0
      %v5629 = vpop.f32.mrb[0].mxu0
      %v5630 = vadd.f32 0.0, %v5629
      %v5631 = vpop.f32.mrb[0].mxu0
      %5632 = vmatprep.mubr.bf16.mxu0 0
      %5633 = vmatmul.mubr.bf16.gmra.mrb[0].mxu0 %v5085
      %v5634 = vpop.f32.mrb[0].mxu0
      %v5635 = vadd.f32 0.0, %v5634
      %v5636 = vpop.f32.mrb[0].mxu0
      %v5637 = vpop.f32.mrb[0].mxu0
      %v5638 = vpop.f32.mrb[0].mxu0
      %5639 = vmatprep.mubr.bf16.mxu0 0
      %5640 = vmatmul.mubr.bf16.gmra.mrb[0].mxu0 %v5088
      %v5641 = vpop.f32.mrb[0].mxu0
      %v5642 = vadd.f32 0.0, %v5641
      %v5643 = vpop.f32.mrb[0].mxu0
      %v5644 = vpop.f32.mrb[0].mxu0
      %v5645 = vadd.f32 0.0, %v5644
      %v5646 = vpop.f32.mrb[0].mxu0
      %5647 = vmatprep.mubr.bf16.mxu0 0
      %5648 = vmatmul.mubr.bf16.gmra.mrb[0].mxu0 %v5091
      %v5649 = vpop.f32.mrb[0].mxu0
      %v5650 = vadd.f32 0.0, %v5649
      %v5651 = vpop.f32.mrb[0].mxu0
      %v5652 = vpop.f32.mrb[0].mxu0
      %v5653 = vpop.f32.mrb[0].mxu0
      %5654 = vmatprep.mubr.bf16.mxu0 0
      %5655 = vmatmul.mubr.bf16.gmra.mrb[0].mxu0 %v5094
      %v5656 = vpop.f32.mrb[0].mxu0
      %v5657 = vadd.f32 0.0, %v5656
      %v5658 = vpop.f32.mrb[0].mxu0
      %v5659 = vpop.f32.mrb[0].mxu0
      %v5660 = vadd.f32 0.0, %v5659
      %v5661 = vpop.f32.mrb[0].mxu0
      %5662 = vmatprep.mubr.bf16.mxu0 0
      %5663 = vmatmul.mubr.bf16.gmra.mrb[0].mxu0 %v5097
      %v5664 = vpop.f32.mrb[0].mxu0
      %v5665 = vadd.f32 0.0, %v5664
      %v5666 = vpop.f32.mrb[0].mxu0
      %v5667 = vpop.f32.mrb[0].mxu0
      %v5668 = vpop.f32.mrb[0].mxu0
      %5669 = vmatprep.mubr.bf16.mxu0 0
      %5670 = vmatmul.mubr.bf16.gmra.mrb[0].mxu0 %v5100
      %v5671 = vpop.f32.mrb[0].mxu0
      %v5672 = vadd.f32 0.0, %v5671
      %v5673 = vpop.f32.mrb[0].mxu0
      %v5674 = vpop.f32.mrb[0].mxu0
      %v5675 = vadd.f32 0.0, %v5674
      %v5676 = vpop.f32.mrb[0].mxu0
      %5677 = vmatprep.mubr.bf16.mxu0 0
      %5678 = vmatmul.mubr.bf16.gmra.mrb[0].mxu0 %v5103
      %v5679 = vpop.f32.mrb[0].mxu0
      %v5680 = vadd.f32 0.0, %v5679
      %v5681 = vpop.f32.mrb[0].mxu0
      %v5682 = vpop.f32.mrb[0].mxu0
      %v5683 = vpop.f32.mrb[0].mxu0
      %5684 = vmatprep.mubr.bf16.mxu0 0
      %5685 = vmatmul.mubr.bf16.gmra.mrb[0].mxu0 %v5106
      %v5686 = vpop.f32.mrb[0].mxu0
      %v5687 = vadd.f32 0.0, %v5686
      %v5688 = vpop.f32.mrb[0].mxu0
      %v5689 = vpop.f32.mrb[0].mxu0
      %v5690 = vadd.f32 0.0, %v5689
      %v5691 = vpop.f32.mrb[0].mxu0
      %5692 = vmatprep.mubr.bf16.mxu0 0
      %5693 = vmatmul.mubr.bf16.gmra.mrb[0].mxu0 %v5109
      %v5694 = vpop.f32.mrb[0].mxu0
      %v5695 = vadd.f32 0.0, %v5694
      %v5696 = vpop.f32.mrb[0].mxu0
      %v5697 = vpop.f32.mrb[0].mxu0
      %v5698 = vpop.f32.mrb[0].mxu0
      %5699 = vmatprep.mubr.bf16.mxu0 0
      %5700 = vmatmul.mubr.bf16.gmra.mrb[0].mxu0 %v5112
      %v5701 = vpop.f32.mrb[0].mxu0
      %v5702 = vadd.f32 0.0, %v5701
      %v5703 = vpop.f32.mrb[0].mxu0
      %v5704 = vpop.f32.mrb[0].mxu0
      %v5705 = vadd.f32 0.0, %v5704
      %v5706 = vpop.f32.mrb[0].mxu0
      %5707 = vmatprep.mubr.bf16.mxu0 0
      %5708 = vmatmul.mubr.bf16.gmra.mrb[0].mxu0 %v5115
      %v5709 = vpop.f32.mrb[0].mxu0
      %v5710 = vadd.f32 0.0, %v5709
      %v5711 = vpop.f32.mrb[0].mxu0
      %v5712 = vpop.f32.mrb[0].mxu0
      %v5713 = vpop.f32.mrb[0].mxu0
      %5714 = vmatprep.mubr.bf16.mxu0 0
      %5715 = vmatmul.mubr.bf16.gmra.mrb[0].mxu0 %v5118
      %v5716 = vpop.f32.mrb[0].mxu0
      %v5717 = vadd.f32 0.0, %v5716
      %v5718 = vpop.f32.mrb[0].mxu0
      %v5719 = vpop.f32.mrb[0].mxu0
      %v5720 = vadd.f32 0.0, %v5719
      %v5721 = vpop.f32.mrb[0].mxu0
      %5722 = vmatprep.mubr.bf16.mxu0 0
      %5723 = vmatmul.mubr.bf16.gmra.mrb[0].mxu0 %v5121
      %v5724 = vpop.f32.mrb[0].mxu0
      %v5725 = vadd.f32 0.0, %v5724
      %v5726 = vpop.f32.mrb[0].mxu0
      %v5727 = vpop.f32.mrb[0].mxu0
      %v5728 = vpop.f32.mrb[0].mxu0
      %5729 = vmatprep.mubr.bf16.mxu0 0
      %5730 = vmatmul.mubr.bf16.gmra.mrb[0].mxu0 %v5124
      %v5731 = vpop.f32.mrb[0].mxu0
      %v5732 = vadd.f32 0.0, %v5731
      %v5733 = vpop.f32.mrb[0].mxu0
      %v5734 = vpop.f32.mrb[0].mxu0
      %v5735 = vadd.f32 0.0, %v5734
      %v5736 = vpop.f32.mrb[0].mxu0
      %5737 = vmatprep.mubr.bf16.mxu0 0
      %5738 = vmatmul.mubr.bf16.gmra.mrb[0].mxu0 %v5127
      %v5739 = vpop.f32.mrb[0].mxu0
      %v5740 = vadd.f32 0.0, %v5739
      %v5741 = vpop.f32.mrb[0].mxu0
      %v5742 = vpop.f32.mrb[0].mxu0
      %v5743 = vpop.f32.mrb[0].mxu0
      %5744 = vmatprep.mubr.bf16.mxu0 0
      %5745 = vmatmul.mubr.bf16.gmra.mrb[0].mxu0 %v5130
      %v5746 = vpop.f32.mrb[0].mxu0
      %v5747 = vadd.f32 0.0, %v5746
      %v5748 = vpop.f32.mrb[0].mxu0
      %v5749 = vpop.f32.mrb[0].mxu0
      %v5750 = vadd.f32 0.0, %v5749
      %v5751 = vpop.f32.mrb[0].mxu0
      %5752 = vmatprep.mubr.bf16.mxu0 0
      %5753 = vmatmul.mubr.bf16.gmra.mrb[0].mxu0 %v5133
      %v5754 = vpop.f32.mrb[0].mxu0
      %v5755 = vadd.f32 0.0, %v5754
      %v5756 = vpop.f32.mrb[0].mxu0
      %v5757 = vpop.f32.mrb[0].mxu0
      %v5758 = vpop.f32.mrb[0].mxu0
      %5759 = vmatprep.mubr.bf16.mxu0 0
      %5760 = vmatmul.mubr.bf16.gmra.mrb[0].mxu0 %v5136
      %v5761 = vpop.f32.mrb[0].mxu0
      %v5762 = vadd.f32 0.0, %v5761
      %v5763 = vpop.f32.mrb[0].mxu0
      %v5764 = vpop.f32.mrb[0].mxu0
      %v5765 = vadd.f32 0.0, %v5764
      %v5766 = vpop.f32.mrb[0].mxu0
      %5767 = vmatprep.mubr.bf16.mxu0 0
      %5768 = vmatmul.mubr.bf16.gmra.mrb[0].mxu0 %v5139
      %v5769 = vpop.f32.mrb[0].mxu0
      %v5770 = vadd.f32 0.0, %v5769
      %v5771 = vpop.f32.mrb[0].mxu0
      %v5772 = vpop.f32.mrb[0].mxu0
      %v5773 = vpop.f32.mrb[0].mxu0
      %5774 = vmatprep.mubr.bf16.mxu0 0
      %5775 = vmatmul.mubr.bf16.gmra.mrb[0].mxu0 %v5142
      %v5776 = vpop.f32.mrb[0].mxu0
      %v5777 = vadd.f32 0.0, %v5776
      %v5778 = vpop.f32.mrb[0].mxu0
      %v5779 = vpop.f32.mrb[0].mxu0
      %v5780 = vadd.f32 0.0, %v5779
      %v5781 = vpop.f32.mrb[0].mxu0
      %5782 = vmatprep.mubr.bf16.mxu0 0
      %5783 = vmatmul.mubr.bf16.gmra.mrb[0].mxu0 %v5145
      %v5784 = vpop.f32.mrb[0].mxu0
      %v5785 = vadd.f32 0.0, %v5784
      %v5786 = vpop.f32.mrb[0].mxu0
      %v5787 = vpop.f32.mrb[0].mxu0
      %v5788 = vpop.f32.mrb[0].mxu0
      %5789 = vmatprep.mubr.bf16.mxu0 0
      %5790 = vmatmul.mubr.bf16.gmra.mrb[0].mxu0 %v5148
      %v5791 = vpop.f32.mrb[0].mxu0
      %v5792 = vadd.f32 0.0, %v5791
      %v5793 = vpop.f32.mrb[0].mxu0
      %v5794 = vpop.f32.mrb[0].mxu0
      %v5795 = vadd.f32 0.0, %v5794
      %v5796 = vpop.f32.mrb[0].mxu0
      %5797 = vmatprep.mubr.bf16.mxu0 0
      %5798 = vmatmul.mubr.bf16.gmra.mrb[0].mxu0 %v5151
      %v5799 = vpop.f32.mrb[0].mxu0
      %v5800 = vadd.f32 0.0, %v5799
      %v5801 = vpop.f32.mrb[0].mxu0
      %v5802 = vpop.f32.mrb[0].mxu0
      %v5803 = vpop.f32.mrb[0].mxu0
      %5804 = vdwg.mxu0
      %5837 = vrot.lane.b32.xlu0 %v5206, 96
      %v5838 = vpop.permute.xlu0 %5837
      %5839 = vrot.lane.b32.xlu0 %v5210, 96
      %v5840 = vpop.permute.xlu0 %5839
      %5841 = vrot.lane.b32.xlu0 %v5224, 96
      %v5842 = vpop.permute.xlu0 %5841
      %5843 = vrot.lane.b32.xlu0 %v5228, 96
      %v5844 = vpop.permute.xlu0 %5843
      %5845 = vrot.lane.b32.xlu0 %v5242, 96
      %v5846 = vpop.permute.xlu0 %5845
      %5847 = vrot.lane.b32.xlu0 %v5246, 96
      %v5848 = vpop.permute.xlu0 %5847
      %5849 = vrot.lane.b32.xlu0 %v5260, 96
      %v5850 = vpop.permute.xlu0 %5849
      %5851 = vrot.lane.b32.xlu0 %v5264, 96
      %v5852 = vpop.permute.xlu0 %5851
      %5853 = vrot.lane.b32.xlu0 %v5278, 96
      %v5854 = vpop.permute.xlu0 %5853
      %5855 = vrot.lane.b32.xlu0 %v5282, 96
      %v5856 = vpop.permute.xlu0 %5855
      %5857 = vrot.lane.b32.xlu0 %v5296, 96
      %v5858 = vpop.permute.xlu0 %5857
      %5859 = vrot.lane.b32.xlu0 %v5300, 96
      %v5860 = vpop.permute.xlu0 %5859
      %5861 = vrot.lane.b32.xlu0 %v5314, 96
      %v5862 = vpop.permute.xlu0 %5861
      %5863 = vrot.lane.b32.xlu0 %v5318, 96
      %v5864 = vpop.permute.xlu0 %5863
      %5865 = vrot.lane.b32.xlu0 %v5332, 96
      %v5866 = vpop.permute.xlu0 %5865
      %5867 = vrot.lane.b32.xlu0 %v5336, 96
      %v5868 = vpop.permute.xlu0 %5867
      %5869 = vrot.lane.b32.xlu0 %v5350, 96
      %v5870 = vpop.permute.xlu0 %5869
      %5871 = vrot.lane.b32.xlu0 %v5354, 96
      %v5872 = vpop.permute.xlu0 %5871
      %5873 = vrot.lane.b32.xlu0 %v5368, 96
      %v5874 = vpop.permute.xlu0 %5873
      %5875 = vrot.lane.b32.xlu0 %v5372, 96
      %v5876 = vpop.permute.xlu0 %5875
      %5877 = vrot.lane.b32.xlu0 %v5386, 96
      %v5878 = vpop.permute.xlu0 %5877
      %5879 = vrot.lane.b32.xlu0 %v5390, 96
      %v5880 = vpop.permute.xlu0 %5879
      %5881 = vrot.lane.b32.xlu0 %v5404, 96
      %v5882 = vpop.permute.xlu0 %5881
      %5883 = vrot.lane.b32.xlu0 %v5408, 96
      %v5884 = vpop.permute.xlu0 %5883
      %5885 = vrot.lane.b32.xlu0 %v5422, 96
      %v5886 = vpop.permute.xlu0 %5885
      %5887 = vrot.lane.b32.xlu0 %v5426, 96
      %v5888 = vpop.permute.xlu0 %5887
      %5889 = vrot.lane.b32.xlu0 %v5440, 96
      %v5890 = vpop.permute.xlu0 %5889
      %5891 = vrot.lane.b32.xlu0 %v5444, 96
      %v5892 = vpop.permute.xlu0 %5891
      %5893 = vrot.lane.b32.xlu0 %v5458, 96
      %v5894 = vpop.permute.xlu0 %5893
      %5895 = vrot.lane.b32.xlu0 %v5462, 96
      %v5896 = vpop.permute.xlu0 %5895
      %5897 = vrot.lane.b32.xlu0 %v5476, 96
      %v5898 = vpop.permute.xlu0 %5897
      %5899 = vrot.lane.b32.xlu0 %v5480, 96
      %v5900 = vpop.permute.xlu0 %5899
      %v5933 = vadd.f32 %v5188, %v5838
      %v5934 = vadd.f32 %v5192, %v5840
      %v5935 = vadd.f32 %v5206, %v5842
      %v5936 = vadd.f32 %v5210, %v5844
      %v5937 = vadd.f32 %v5224, %v5846
      %v5938 = vadd.f32 %v5228, %v5848
      %v5939 = vadd.f32 %v5242, %v5850
      %v5940 = vadd.f32 %v5246, %v5852
      %v5941 = vadd.f32 %v5260, %v5854
      %v5942 = vadd.f32 %v5264, %v5856
      %v5943 = vadd.f32 %v5278, %v5858
      %v5944 = vadd.f32 %v5282, %v5860
      %v5945 = vadd.f32 %v5296, %v5862
      %v5946 = vadd.f32 %v5300, %v5864
      %v5947 = vadd.f32 %v5314, %v5866
      %v5948 = vadd.f32 %v5318, %v5868
      %v5949 = vadd.f32 %v5332, %v5870
      %v5950 = vadd.f32 %v5336, %v5872
      %v5951 = vadd.f32 %v5350, %v5874
      %v5952 = vadd.f32 %v5354, %v5876
      %v5953 = vadd.f32 %v5368, %v5878
      %v5954 = vadd.f32 %v5372, %v5880
      %v5955 = vadd.f32 %v5386, %v5882
      %v5956 = vadd.f32 %v5390, %v5884
      %v5957 = vadd.f32 %v5404, %v5886
      %v5958 = vadd.f32 %v5408, %v5888
      %v5959 = vadd.f32 %v5422, %v5890
      %v5960 = vadd.f32 %v5426, %v5892
      %v5961 = vadd.f32 %v5440, %v5894
      %v5962 = vadd.f32 %v5444, %v5896
      %v5963 = vadd.f32 %v5458, %v5898
      %v5964 = vadd.f32 %v5462, %v5900
      %5967 = vrot.lane.b32.xlu0 %v5224, 64
      %v5968 = vpop.permute.xlu0 %5967
      %5969 = vrot.lane.b32.xlu0 %v5228, 64
      %v5970 = vpop.permute.xlu0 %5969
      %5971 = vrot.lane.b32.xlu0 %v5242, 64
      %v5972 = vpop.permute.xlu0 %5971
      %5973 = vrot.lane.b32.xlu0 %v5246, 64
      %v5974 = vpop.permute.xlu0 %5973
      %5975 = vrot.lane.b32.xlu0 %v5260, 64
      %v5976 = vpop.permute.xlu0 %5975
      %5977 = vrot.lane.b32.xlu0 %v5264, 64
      %v5978 = vpop.permute.xlu0 %5977
      %5979 = vrot.lane.b32.xlu0 %v5278, 64
      %v5980 = vpop.permute.xlu0 %5979
      %5981 = vrot.lane.b32.xlu0 %v5282, 64
      %v5982 = vpop.permute.xlu0 %5981
      %5983 = vrot.lane.b32.xlu0 %v5296, 64
      %v5984 = vpop.permute.xlu0 %5983
      %5985 = vrot.lane.b32.xlu0 %v5300, 64
      %v5986 = vpop.permute.xlu0 %5985
      %5987 = vrot.lane.b32.xlu0 %v5314, 64
      %v5988 = vpop.permute.xlu0 %5987
      %5989 = vrot.lane.b32.xlu0 %v5318, 64
      %v5990 = vpop.permute.xlu0 %5989
      %5991 = vrot.lane.b32.xlu0 %v5332, 64
      %v5992 = vpop.permute.xlu0 %5991
      %5993 = vrot.lane.b32.xlu0 %v5336, 64
      %v5994 = vpop.permute.xlu0 %5993
      %5995 = vrot.lane.b32.xlu0 %v5350, 64
      %v5996 = vpop.permute.xlu0 %5995
      %5997 = vrot.lane.b32.xlu0 %v5354, 64
      %v5998 = vpop.permute.xlu0 %5997
      %5999 = vrot.lane.b32.xlu0 %v5368, 64
      %v6000 = vpop.permute.xlu0 %5999
      %6001 = vrot.lane.b32.xlu0 %v5372, 64
      %v6002 = vpop.permute.xlu0 %6001
      %6003 = vrot.lane.b32.xlu0 %v5386, 64
      %v6004 = vpop.permute.xlu0 %6003
      %6005 = vrot.lane.b32.xlu0 %v5390, 64
      %v6006 = vpop.permute.xlu0 %6005
      %6007 = vrot.lane.b32.xlu0 %v5404, 64
      %v6008 = vpop.permute.xlu0 %6007
      %6009 = vrot.lane.b32.xlu0 %v5408, 64
      %v6010 = vpop.permute.xlu0 %6009
      %6011 = vrot.lane.b32.xlu0 %v5422, 64
      %v6012 = vpop.permute.xlu0 %6011
      %6013 = vrot.lane.b32.xlu0 %v5426, 64
      %v6014 = vpop.permute.xlu0 %6013
      %6015 = vrot.lane.b32.xlu0 %v5440, 64
      %v6016 = vpop.permute.xlu0 %6015
      %6017 = vrot.lane.b32.xlu0 %v5444, 64
      %v6018 = vpop.permute.xlu0 %6017
      %6019 = vrot.lane.b32.xlu0 %v5458, 64
      %v6020 = vpop.permute.xlu0 %6019
      %6021 = vrot.lane.b32.xlu0 %v5462, 64
      %v6022 = vpop.permute.xlu0 %6021
      %6023 = vrot.lane.b32.xlu0 %v5476, 64
      %v6024 = vpop.permute.xlu0 %6023
      %6025 = vrot.lane.b32.xlu0 %v5480, 64
      %v6026 = vpop.permute.xlu0 %6025
      %6027 = vrot.lane.b32.xlu0 %v5493, 64
      %v6028 = vpop.permute.xlu0 %6027
      %6029 = vrot.lane.b32.xlu0 %v5497, 64
      %v6030 = vpop.permute.xlu0 %6029
      %v6063 = vadd.f32 %v5933, %v5968
      %v6064 = vadd.f32 %v5934, %v5970
      %v6065 = vadd.f32 %v5935, %v5972
      %v6066 = vadd.f32 %v5936, %v5974
      %v6067 = vadd.f32 %v5937, %v5976
      %v6068 = vadd.f32 %v5938, %v5978
      %v6069 = vadd.f32 %v5939, %v5980
      %v6070 = vadd.f32 %v5940, %v5982
      %v6071 = vadd.f32 %v5941, %v5984
      %v6072 = vadd.f32 %v5942, %v5986
      %v6073 = vadd.f32 %v5943, %v5988
      %v6074 = vadd.f32 %v5944, %v5990
      %v6075 = vadd.f32 %v5945, %v5992
      %v6076 = vadd.f32 %v5946, %v5994
      %v6077 = vadd.f32 %v5947, %v5996
      %v6078 = vadd.f32 %v5948, %v5998
      %v6079 = vadd.f32 %v5949, %v6000
      %v6080 = vadd.f32 %v5950, %v6002
      %v6081 = vadd.f32 %v5951, %v6004
      %v6082 = vadd.f32 %v5952, %v6006
      %v6083 = vadd.f32 %v5953, %v6008
      %v6084 = vadd.f32 %v5954, %v6010
      %v6085 = vadd.f32 %v5955, %v6012
      %v6086 = vadd.f32 %v5956, %v6014
      %v6087 = vadd.f32 %v5957, %v6016
      %v6088 = vadd.f32 %v5958, %v6018
      %v6089 = vadd.f32 %v5959, %v6020
      %v6090 = vadd.f32 %v5960, %v6022
      %v6091 = vadd.f32 %v5961, %v6024
      %v6092 = vadd.f32 %v5962, %v6026
      %v6093 = vadd.f32 %v5963, %v6028
      %v6094 = vadd.f32 %v5964, %v6030
      %v6113 = vrot.slane %v5188, 1
      %v6114 = vrot.slane %v5192, 1
      %v6115 = vsel %vm2744, %v6113, %v6114
      %v6116 = vrot.slane %v5198, 1
      %v6117 = vsel %vm2744, %v6114, %v6116
      %v6118 = vrot.slane %v5206, 1
      %v6119 = vrot.slane %v5210, 1
      %v6120 = vsel %vm2744, %v6118, %v6119
      %v6121 = vrot.slane %v5216, 1
      %v6122 = vsel %vm2744, %v6119, %v6121
      %v6123 = vrot.slane %v5224, 1
      %v6124 = vrot.slane %v5228, 1
      %v6125 = vsel %vm2744, %v6123, %v6124
      %v6126 = vrot.slane %v5234, 1
      %v6127 = vsel %vm2744, %v6124, %v6126
      %v6128 = vrot.slane %v5242, 1
      %v6129 = vrot.slane %v5246, 1
      %v6130 = vsel %vm2744, %v6128, %v6129
      %v6131 = vrot.slane %v5252, 1
      %v6132 = vsel %vm2744, %v6129, %v6131
      %v6133 = vrot.slane %v5260, 1
      %v6134 = vrot.slane %v5264, 1
      %v6135 = vsel %vm2744, %v6133, %v6134
      %v6136 = vrot.slane %v5270, 1
      %v6137 = vsel %vm2744, %v6134, %v6136
      %v6138 = vrot.slane %v5278, 1
      %v6139 = vrot.slane %v5282, 1
      %v6140 = vsel %vm2744, %v6138, %v6139
      %v6141 = vrot.slane %v5288, 1
      %v6142 = vsel %vm2744, %v6139, %v6141
      %v6143 = vrot.slane %v5296, 1
      %v6144 = vrot.slane %v5300, 1
      %v6145 = vsel %vm2744, %v6143, %v6144
      %v6146 = vrot.slane %v5306, 1
      %v6147 = vsel %vm2744, %v6144, %v6146
      %v6148 = vrot.slane %v5314, 1
      %v6149 = vrot.slane %v5318, 1
      %v6150 = vsel %vm2744, %v6148, %v6149
      %v6151 = vrot.slane %v5324, 1
      %v6152 = vsel %vm2744, %v6149, %v6151
      %v6153 = vrot.slane %v5332, 1
      %v6154 = vrot.slane %v5336, 1
      %v6155 = vsel %vm2744, %v6153, %v6154
      %v6156 = vrot.slane %v5342, 1
      %v6157 = vsel %vm2744, %v6154, %v6156
      %v6158 = vrot.slane %v5350, 1
      %v6159 = vrot.slane %v5354, 1
      %v6160 = vsel %vm2744, %v6158, %v6159
      %v6161 = vrot.slane %v5360, 1
      %v6162 = vsel %vm2744, %v6159, %v6161
      %v6163 = vrot.slane %v5368, 1
      %v6164 = vrot.slane %v5372, 1
      %v6165 = vsel %vm2744, %v6163, %v6164
      %v6166 = vrot.slane %v5378, 1
      %v6167 = vsel %vm2744, %v6164, %v6166
      %v6168 = vrot.slane %v5386, 1
      %v6169 = vrot.slane %v5390, 1
      %v6170 = vsel %vm2744, %v6168, %v6169
      %v6171 = vrot.slane %v5396, 1
      %v6172 = vsel %vm2744, %v6169, %v6171
      %v6173 = vrot.slane %v5404, 1
      %v6174 = vrot.slane %v5408, 1
      %v6175 = vsel %vm2744, %v6173, %v6174
      %v6176 = vrot.slane %v5414, 1
      %v6177 = vsel %vm2744, %v6174, %v6176
      %v6178 = vrot.slane %v5422, 1
      %v6179 = vrot.slane %v5426, 1
      %v6180 = vsel %vm2744, %v6178, %v6179
      %v6181 = vrot.slane %v5432, 1
      %v6182 = vsel %vm2744, %v6179, %v6181
      %v6183 = vrot.slane %v5440, 1
      %v6184 = vrot.slane %v5444, 1
      %v6185 = vsel %vm2744, %v6183, %v6184
      %v6186 = vrot.slane %v5450, 1
      %v6187 = vsel %vm2744, %v6184, %v6186
      %v6188 = vrot.slane %v5458, 1
      %v6189 = vrot.slane %v5462, 1
      %v6190 = vsel %vm2744, %v6188, %v6189
      %v6191 = vrot.slane %v5468, 1
      %v6192 = vsel %vm2744, %v6189, %v6191
      %6193 = vrot.lane.b32.xlu0 %v6115, 32
      %v6194 = vpop.permute.xlu0 %6193
      %6195 = vrot.lane.b32.xlu0 %v6117, 32
      %v6196 = vpop.permute.xlu0 %6195
      %6197 = vrot.lane.b32.xlu0 %v6120, 32
      %v6198 = vpop.permute.xlu0 %6197
      %6199 = vrot.lane.b32.xlu0 %v6122, 32
      %v6200 = vpop.permute.xlu0 %6199
      %6201 = vrot.lane.b32.xlu0 %v6125, 32
      %v6202 = vpop.permute.xlu0 %6201
      %6203 = vrot.lane.b32.xlu0 %v6127, 32
      %v6204 = vpop.permute.xlu0 %6203
      %6205 = vrot.lane.b32.xlu0 %v6130, 32
      %v6206 = vpop.permute.xlu0 %6205
      %6207 = vrot.lane.b32.xlu0 %v6132, 32
      %v6208 = vpop.permute.xlu0 %6207
      %6209 = vrot.lane.b32.xlu0 %v6135, 32
      %v6210 = vpop.permute.xlu0 %6209
      %6211 = vrot.lane.b32.xlu0 %v6137, 32
      %v6212 = vpop.permute.xlu0 %6211
      %6213 = vrot.lane.b32.xlu0 %v6140, 32
      %v6214 = vpop.permute.xlu0 %6213
      %6215 = vrot.lane.b32.xlu0 %v6142, 32
      %v6216 = vpop.permute.xlu0 %6215
      %6217 = vrot.lane.b32.xlu0 %v6145, 32
      %v6218 = vpop.permute.xlu0 %6217
      %6219 = vrot.lane.b32.xlu0 %v6147, 32
      %v6220 = vpop.permute.xlu0 %6219
      %6221 = vrot.lane.b32.xlu0 %v6150, 32
      %v6222 = vpop.permute.xlu0 %6221
      %6223 = vrot.lane.b32.xlu0 %v6152, 32
      %v6224 = vpop.permute.xlu0 %6223
      %6225 = vrot.lane.b32.xlu0 %v6155, 32
      %v6226 = vpop.permute.xlu0 %6225
      %6227 = vrot.lane.b32.xlu0 %v6157, 32
      %v6228 = vpop.permute.xlu0 %6227
      %6229 = vrot.lane.b32.xlu0 %v6160, 32
      %v6230 = vpop.permute.xlu0 %6229
      %6231 = vrot.lane.b32.xlu0 %v6162, 32
      %v6232 = vpop.permute.xlu0 %6231
      %6233 = vrot.lane.b32.xlu0 %v6165, 32
      %v6234 = vpop.permute.xlu0 %6233
      %6235 = vrot.lane.b32.xlu0 %v6167, 32
      %v6236 = vpop.permute.xlu0 %6235
      %6237 = vrot.lane.b32.xlu0 %v6170, 32
      %v6238 = vpop.permute.xlu0 %6237
      %6239 = vrot.lane.b32.xlu0 %v6172, 32
      %v6240 = vpop.permute.xlu0 %6239
      %6241 = vrot.lane.b32.xlu0 %v6175, 32
      %v6242 = vpop.permute.xlu0 %6241
      %6243 = vrot.lane.b32.xlu0 %v6177, 32
      %v6244 = vpop.permute.xlu0 %6243
      %6245 = vrot.lane.b32.xlu0 %v6180, 32
      %v6246 = vpop.permute.xlu0 %6245
      %6247 = vrot.lane.b32.xlu0 %v6182, 32
      %v6248 = vpop.permute.xlu0 %6247
      %6249 = vrot.lane.b32.xlu0 %v6185, 32
      %v6250 = vpop.permute.xlu0 %6249
      %6251 = vrot.lane.b32.xlu0 %v6187, 32
      %v6252 = vpop.permute.xlu0 %6251
      %6253 = vrot.lane.b32.xlu0 %v6190, 32
      %v6254 = vpop.permute.xlu0 %6253
      %6255 = vrot.lane.b32.xlu0 %v6192, 32
      %v6256 = vpop.permute.xlu0 %6255
      %v6289 = vadd.f32 %v6063, %v6194
      %v6290 = vadd.f32 %v6064, %v6196
      %v6291 = vadd.f32 %v6065, %v6198
      %v6292 = vadd.f32 %v6066, %v6200
      %v6293 = vadd.f32 %v6067, %v6202
      %v6294 = vadd.f32 %v6068, %v6204
      %v6295 = vadd.f32 %v6069, %v6206
      %v6296 = vadd.f32 %v6070, %v6208
      %v6297 = vadd.f32 %v6071, %v6210
      %v6298 = vadd.f32 %v6072, %v6212
      %v6299 = vadd.f32 %v6073, %v6214
      %v6300 = vadd.f32 %v6074, %v6216
      %v6301 = vadd.f32 %v6075, %v6218
      %v6302 = vadd.f32 %v6076, %v6220
      %v6303 = vadd.f32 %v6077, %v6222
      %v6304 = vadd.f32 %v6078, %v6224
      %v6305 = vadd.f32 %v6079, %v6226
      %v6306 = vadd.f32 %v6080, %v6228
      %v6307 = vadd.f32 %v6081, %v6230
      %v6308 = vadd.f32 %v6082, %v6232
      %v6309 = vadd.f32 %v6083, %v6234
      %v6310 = vadd.f32 %v6084, %v6236
      %v6311 = vadd.f32 %v6085, %v6238
      %v6312 = vadd.f32 %v6086, %v6240
      %v6313 = vadd.f32 %v6087, %v6242
      %v6314 = vadd.f32 %v6088, %v6244
      %v6315 = vadd.f32 %v6089, %v6246
      %v6316 = vadd.f32 %v6090, %v6248
      %v6317 = vadd.f32 %v6091, %v6250
      %v6318 = vadd.f32 %v6092, %v6252
      %v6319 = vadd.f32 %v6093, %v6254
      %v6320 = vadd.f32 %v6094, %v6256
      %v6369 = vrot.slane %v5208, 1
      %v6370 = vrot.slane %v5212, 1
      %v6371 = vsel %vm2744, %v6369, %v6370
      %v6372 = vrot.slane %v5218, 1
      %v6373 = vsel %vm2744, %v6370, %v6372
      %v6374 = vrot.slane %v5226, 1
      %v6375 = vrot.slane %v5230, 1
      %v6376 = vsel %vm2744, %v6374, %v6375
      %v6377 = vrot.slane %v5236, 1
      %v6378 = vsel %vm2744, %v6375, %v6377
      %v6379 = vrot.slane %v5244, 1
      %v6380 = vrot.slane %v5248, 1
      %v6381 = vsel %vm2744, %v6379, %v6380
      %v6382 = vrot.slane %v5254, 1
      %v6383 = vsel %vm2744, %v6380, %v6382
      %v6384 = vrot.slane %v5262, 1
      %v6385 = vrot.slane %v5266, 1
      %v6386 = vsel %vm2744, %v6384, %v6385
      %v6387 = vrot.slane %v5272, 1
      %v6388 = vsel %vm2744, %v6385, %v6387
      %v6389 = vrot.slane %v5280, 1
      %v6390 = vrot.slane %v5284, 1
      %v6391 = vsel %vm2744, %v6389, %v6390
      %v6392 = vrot.slane %v5290, 1
      %v6393 = vsel %vm2744, %v6390, %v6392
      %v6394 = vrot.slane %v5298, 1
      %v6395 = vrot.slane %v5302, 1
      %v6396 = vsel %vm2744, %v6394, %v6395
      %v6397 = vrot.slane %v5308, 1
      %v6398 = vsel %vm2744, %v6395, %v6397
      %v6399 = vrot.slane %v5316, 1
      %v6400 = vrot.slane %v5320, 1
      %v6401 = vsel %vm2744, %v6399, %v6400
      %v6402 = vrot.slane %v5326, 1
      %v6403 = vsel %vm2744, %v6400, %v6402
      %v6404 = vrot.slane %v5334, 1
      %v6405 = vrot.slane %v5338, 1
      %v6406 = vsel %vm2744, %v6404, %v6405
      %v6407 = vrot.slane %v5344, 1
      %v6408 = vsel %vm2744, %v6405, %v6407
      %v6409 = vrot.slane %v5352, 1
      %v6410 = vrot.slane %v5356, 1
      %v6411 = vsel %vm2744, %v6409, %v6410
      %v6412 = vrot.slane %v5362, 1
      %v6413 = vsel %vm2744, %v6410, %v6412
      %v6414 = vrot.slane %v5370, 1
      %v6415 = vrot.slane %v5374, 1
      %v6416 = vsel %vm2744, %v6414, %v6415
      %v6417 = vrot.slane %v5380, 1
      %v6418 = vsel %vm2744, %v6415, %v6417
      %v6419 = vrot.slane %v5388, 1
      %v6420 = vrot.slane %v5392, 1
      %v6421 = vsel %vm2744, %v6419, %v6420
      %v6422 = vrot.slane %v5398, 1
      %v6423 = vsel %vm2744, %v6420, %v6422
      %v6424 = vrot.slane %v5406, 1
      %v6425 = vrot.slane %v5410, 1
      %v6426 = vsel %vm2744, %v6424, %v6425
      %v6427 = vrot.slane %v5416, 1
      %v6428 = vsel %vm2744, %v6425, %v6427
      %v6429 = vrot.slane %v5424, 1
      %v6430 = vrot.slane %v5428, 1
      %v6431 = vsel %vm2744, %v6429, %v6430
      %v6432 = vrot.slane %v5434, 1
      %v6433 = vsel %vm2744, %v6430, %v6432
      %v6434 = vrot.slane %v5442, 1
      %v6435 = vrot.slane %v5446, 1
      %v6436 = vsel %vm2744, %v6434, %v6435
      %v6437 = vrot.slane %v5452, 1
      %v6438 = vsel %vm2744, %v6435, %v6437
      %v6439 = vrot.slane %v5460, 1
      %v6440 = vrot.slane %v5464, 1
      %v6441 = vsel %vm2744, %v6439, %v6440
      %v6442 = vrot.slane %v5470, 1
      %v6443 = vsel %vm2744, %v6440, %v6442
      %v6444 = vrot.slane %v5478, 1
      %v6445 = vrot.slane %v5482, 1
      %v6446 = vsel %vm2744, %v6444, %v6445
      %v6447 = vrot.slane %v5487, 1
      %v6448 = vsel %vm2744, %v6445, %v6447
      %v6481 = vadd.f32 %v6289, %v6371
      %v6482 = vadd.f32 %v6290, %v6373
      %v6483 = vadd.f32 %v6291, %v6376
      %v6484 = vadd.f32 %v6292, %v6378
      %v6485 = vadd.f32 %v6293, %v6381
      %v6486 = vadd.f32 %v6294, %v6383
      %v6487 = vadd.f32 %v6295, %v6386
      %v6488 = vadd.f32 %v6296, %v6388
      %v6489 = vadd.f32 %v6297, %v6391
      %v6490 = vadd.f32 %v6298, %v6393
      %v6491 = vadd.f32 %v6299, %v6396
      %v6492 = vadd.f32 %v6300, %v6398
      %v6493 = vadd.f32 %v6301, %v6401
      %v6494 = vadd.f32 %v6302, %v6403
      %v6495 = vadd.f32 %v6303, %v6406
      %v6496 = vadd.f32 %v6304, %v6408
      %v6497 = vadd.f32 %v6305, %v6411
      %v6498 = vadd.f32 %v6306, %v6413
      %v6499 = vadd.f32 %v6307, %v6416
      %v6500 = vadd.f32 %v6308, %v6418
      %v6501 = vadd.f32 %v6309, %v6421
      %v6502 = vadd.f32 %v6310, %v6423
      %v6503 = vadd.f32 %v6311, %v6426
      %v6504 = vadd.f32 %v6312, %v6428
      %v6505 = vadd.f32 %v6313, %v6431
      %v6506 = vadd.f32 %v6314, %v6433
      %v6507 = vadd.f32 %v6315, %v6436
      %v6508 = vadd.f32 %v6316, %v6438
      %v6509 = vadd.f32 %v6317, %v6441
      %v6510 = vadd.f32 %v6318, %v6443
      %v6511 = vadd.f32 %v6319, %v6446
      %v6512 = vadd.f32 %v6320, %v6448
      %v6516 = vrot.slane %v5495, 1
      %v6517 = vrot.slane %v5499, 1
      %v6518 = vsel %vm2744, %v6516, %v6517
      %v6519 = vrot.slane %v5504, 1
      %v6520 = vsel %vm2744, %v6517, %v6519
      %6521 = vrot.lane.b32.xlu0 %v6376, 96
      %v6522 = vpop.permute.xlu0 %6521
      %6523 = vrot.lane.b32.xlu0 %v6378, 96
      %v6524 = vpop.permute.xlu0 %6523
      %6525 = vrot.lane.b32.xlu0 %v6381, 96
      %v6526 = vpop.permute.xlu0 %6525
      %6527 = vrot.lane.b32.xlu0 %v6383, 96
      %v6528 = vpop.permute.xlu0 %6527
      %6529 = vrot.lane.b32.xlu0 %v6386, 96
      %v6530 = vpop.permute.xlu0 %6529
      %6531 = vrot.lane.b32.xlu0 %v6388, 96
      %v6532 = vpop.permute.xlu0 %6531
      %6533 = vrot.lane.b32.xlu0 %v6391, 96
      %v6534 = vpop.permute.xlu0 %6533
      %6535 = vrot.lane.b32.xlu0 %v6393, 96
      %v6536 = vpop.permute.xlu0 %6535
      %6537 = vrot.lane.b32.xlu0 %v6396, 96
      %v6538 = vpop.permute.xlu0 %6537
      %6539 = vrot.lane.b32.xlu0 %v6398, 96
      %v6540 = vpop.permute.xlu0 %6539
      %6541 = vrot.lane.b32.xlu0 %v6401, 96
      %v6542 = vpop.permute.xlu0 %6541
      %6543 = vrot.lane.b32.xlu0 %v6403, 96
      %v6544 = vpop.permute.xlu0 %6543
      %6545 = vrot.lane.b32.xlu0 %v6406, 96
      %v6546 = vpop.permute.xlu0 %6545
      %6547 = vrot.lane.b32.xlu0 %v6408, 96
      %v6548 = vpop.permute.xlu0 %6547
      %6549 = vrot.lane.b32.xlu0 %v6411, 96
      %v6550 = vpop.permute.xlu0 %6549
      %6551 = vrot.lane.b32.xlu0 %v6413, 96
      %v6552 = vpop.permute.xlu0 %6551
      %6553 = vrot.lane.b32.xlu0 %v6416, 96
      %v6554 = vpop.permute.xlu0 %6553
      %6555 = vrot.lane.b32.xlu0 %v6418, 96
      %v6556 = vpop.permute.xlu0 %6555
      %6557 = vrot.lane.b32.xlu0 %v6421, 96
      %v6558 = vpop.permute.xlu0 %6557
      %6559 = vrot.lane.b32.xlu0 %v6423, 96
      %v6560 = vpop.permute.xlu0 %6559
      %6561 = vrot.lane.b32.xlu0 %v6426, 96
      %v6562 = vpop.permute.xlu0 %6561
      %6563 = vrot.lane.b32.xlu0 %v6428, 96
      %v6564 = vpop.permute.xlu0 %6563
      %6565 = vrot.lane.b32.xlu0 %v6431, 96
      %v6566 = vpop.permute.xlu0 %6565
      %6567 = vrot.lane.b32.xlu0 %v6433, 96
      %v6568 = vpop.permute.xlu0 %6567
      %6569 = vrot.lane.b32.xlu0 %v6436, 96
      %v6570 = vpop.permute.xlu0 %6569
      %6571 = vrot.lane.b32.xlu0 %v6438, 96
      %v6572 = vpop.permute.xlu0 %6571
      %6573 = vrot.lane.b32.xlu0 %v6441, 96
      %v6574 = vpop.permute.xlu0 %6573
      %6575 = vrot.lane.b32.xlu0 %v6443, 96
      %v6576 = vpop.permute.xlu0 %6575
      %6577 = vrot.lane.b32.xlu0 %v6446, 96
      %v6578 = vpop.permute.xlu0 %6577
      %6579 = vrot.lane.b32.xlu0 %v6448, 96
      %v6580 = vpop.permute.xlu0 %6579
      %6581 = vrot.lane.b32.xlu0 %v6518, 96
      %v6582 = vpop.permute.xlu0 %6581
      %6583 = vrot.lane.b32.xlu0 %v6520, 96
      %v6584 = vpop.permute.xlu0 %6583
      %v6617 = vadd.f32 %v6481, %v6522
      %v6618 = vadd.f32 %v6482, %v6524
      %v6619 = vadd.f32 %v6483, %v6526
      %v6620 = vadd.f32 %v6484, %v6528
      %v6621 = vadd.f32 %v6485, %v6530
      %v6622 = vadd.f32 %v6486, %v6532
      %v6623 = vadd.f32 %v6487, %v6534
      %v6624 = vadd.f32 %v6488, %v6536
      %v6625 = vadd.f32 %v6489, %v6538
      %v6626 = vadd.f32 %v6490, %v6540
      %v6627 = vadd.f32 %v6491, %v6542
      %v6628 = vadd.f32 %v6492, %v6544
      %v6629 = vadd.f32 %v6493, %v6546
      %v6630 = vadd.f32 %v6494, %v6548
      %v6631 = vadd.f32 %v6495, %v6550
      %v6632 = vadd.f32 %v6496, %v6552
      %v6633 = vadd.f32 %v6497, %v6554
      %v6634 = vadd.f32 %v6498, %v6556
      %v6635 = vadd.f32 %v6499, %v6558
      %v6636 = vadd.f32 %v6500, %v6560
      %v6637 = vadd.f32 %v6501, %v6562
      %v6638 = vadd.f32 %v6502, %v6564
      %v6639 = vadd.f32 %v6503, %v6566
      %v6640 = vadd.f32 %v6504, %v6568
      %v6641 = vadd.f32 %v6505, %v6570
      %v6642 = vadd.f32 %v6506, %v6572
      %v6643 = vadd.f32 %v6507, %v6574
      %v6644 = vadd.f32 %v6508, %v6576
      %v6645 = vadd.f32 %v6509, %v6578
      %v6646 = vadd.f32 %v6510, %v6580
      %v6647 = vadd.f32 %v6511, %v6582
      %v6648 = vadd.f32 %v6512, %v6584
      %v6652 = vrot.slane %v5190, 2
      %v6653 = vrot.slane %v5194, 2
      %v6654 = vsel %vm3284, %v6652, %v6653
      %v6655 = vrot.slane %v5200, 2
      %v6656 = vsel %vm3284, %v6653, %v6655
      %v6657 = vrot.slane %v5208, 2
      %v6658 = vrot.slane %v5212, 2
      %v6659 = vsel %vm3284, %v6657, %v6658
      %v6660 = vrot.slane %v5218, 2
      %v6661 = vsel %vm3284, %v6658, %v6660
      %v6662 = vrot.slane %v5226, 2
      %v6663 = vrot.slane %v5230, 2
      %v6664 = vsel %vm3284, %v6662, %v6663
      %v6665 = vrot.slane %v5236, 2
      %v6666 = vsel %vm3284, %v6663, %v6665
      %v6667 = vrot.slane %v5244, 2
      %v6668 = vrot.slane %v5248, 2
      %v6669 = vsel %vm3284, %v6667, %v6668
      %v6670 = vrot.slane %v5254, 2
      %v6671 = vsel %vm3284, %v6668, %v6670
      %v6672 = vrot.slane %v5262, 2
      %v6673 = vrot.slane %v5266, 2
      %v6674 = vsel %vm3284, %v6672, %v6673
      %v6675 = vrot.slane %v5272, 2
      %v6676 = vsel %vm3284, %v6673, %v6675
      %v6677 = vrot.slane %v5280, 2
      %v6678 = vrot.slane %v5284, 2
      %v6679 = vsel %vm3284, %v6677, %v6678
      %v6680 = vrot.slane %v5290, 2
      %v6681 = vsel %vm3284, %v6678, %v6680
      %v6682 = vrot.slane %v5298, 2
      %v6683 = vrot.slane %v5302, 2
      %v6684 = vsel %vm3284, %v6682, %v6683
      %v6685 = vrot.slane %v5308, 2
      %v6686 = vsel %vm3284, %v6683, %v6685
      %v6687 = vrot.slane %v5316, 2
      %v6688 = vrot.slane %v5320, 2
      %v6689 = vsel %vm3284, %v6687, %v6688
      %v6690 = vrot.slane %v5326, 2
      %v6691 = vsel %vm3284, %v6688, %v6690
      %v6692 = vrot.slane %v5334, 2
      %v6693 = vrot.slane %v5338, 2
      %v6694 = vsel %vm3284, %v6692, %v6693
      %v6695 = vrot.slane %v5344, 2
      %v6696 = vsel %vm3284, %v6693, %v6695
      %v6697 = vrot.slane %v5352, 2
      %v6698 = vrot.slane %v5356, 2
      %v6699 = vsel %vm3284, %v6697, %v6698
      %v6700 = vrot.slane %v5362, 2
      %v6701 = vsel %vm3284, %v6698, %v6700
      %v6702 = vrot.slane %v5370, 2
      %v6703 = vrot.slane %v5374, 2
      %v6704 = vsel %vm3284, %v6702, %v6703
      %v6705 = vrot.slane %v5380, 2
      %v6706 = vsel %vm3284, %v6703, %v6705
      %v6707 = vrot.slane %v5388, 2
      %v6708 = vrot.slane %v5392, 2
      %v6709 = vsel %vm3284, %v6707, %v6708
      %v6710 = vrot.slane %v5398, 2
      %v6711 = vsel %vm3284, %v6708, %v6710
      %v6712 = vrot.slane %v5406, 2
      %v6713 = vrot.slane %v5410, 2
      %v6714 = vsel %vm3284, %v6712, %v6713
      %v6715 = vrot.slane %v5416, 2
      %v6716 = vsel %vm3284, %v6713, %v6715
      %v6717 = vrot.slane %v5424, 2
      %v6718 = vrot.slane %v5428, 2
      %v6719 = vsel %vm3284, %v6717, %v6718
      %v6720 = vrot.slane %v5434, 2
      %v6721 = vsel %vm3284, %v6718, %v6720
      %v6722 = vrot.slane %v5442, 2
      %v6723 = vrot.slane %v5446, 2
      %v6724 = vsel %vm3284, %v6722, %v6723
      %v6725 = vrot.slane %v5452, 2
      %v6726 = vsel %vm3284, %v6723, %v6725
      %v6727 = vrot.slane %v5460, 2
      %v6728 = vrot.slane %v5464, 2
      %v6729 = vsel %vm3284, %v6727, %v6728
      %v6730 = vrot.slane %v5470, 2
      %v6731 = vsel %vm3284, %v6728, %v6730
      %6732 = vrot.lane.b32.xlu0 %v6654, 64
      %v6733 = vpop.permute.xlu0 %6732
      %6734 = vrot.lane.b32.xlu0 %v6656, 64
      %v6735 = vpop.permute.xlu0 %6734
      %6736 = vrot.lane.b32.xlu0 %v6659, 64
      %v6737 = vpop.permute.xlu0 %6736
      %6738 = vrot.lane.b32.xlu0 %v6661, 64
      %v6739 = vpop.permute.xlu0 %6738
      %6740 = vrot.lane.b32.xlu0 %v6664, 64
      %v6741 = vpop.permute.xlu0 %6740
      %6742 = vrot.lane.b32.xlu0 %v6666, 64
      %v6743 = vpop.permute.xlu0 %6742
      %6744 = vrot.lane.b32.xlu0 %v6669, 64
      %v6745 = vpop.permute.xlu0 %6744
      %6746 = vrot.lane.b32.xlu0 %v6671, 64
      %v6747 = vpop.permute.xlu0 %6746
      %6748 = vrot.lane.b32.xlu0 %v6674, 64
      %v6749 = vpop.permute.xlu0 %6748
      %6750 = vrot.lane.b32.xlu0 %v6676, 64
      %v6751 = vpop.permute.xlu0 %6750
      %6752 = vrot.lane.b32.xlu0 %v6679, 64
      %v6753 = vpop.permute.xlu0 %6752
      %6754 = vrot.lane.b32.xlu0 %v6681, 64
      %v6755 = vpop.permute.xlu0 %6754
      %6756 = vrot.lane.b32.xlu0 %v6684, 64
      %v6757 = vpop.permute.xlu0 %6756
      %6758 = vrot.lane.b32.xlu0 %v6686, 64
      %v6759 = vpop.permute.xlu0 %6758
      %6760 = vrot.lane.b32.xlu0 %v6689, 64
      %v6761 = vpop.permute.xlu0 %6760
      %6762 = vrot.lane.b32.xlu0 %v6691, 64
      %v6763 = vpop.permute.xlu0 %6762
      %6764 = vrot.lane.b32.xlu0 %v6694, 64
      %v6765 = vpop.permute.xlu0 %6764
      %6766 = vrot.lane.b32.xlu0 %v6696, 64
      %v6767 = vpop.permute.xlu0 %6766
      %6768 = vrot.lane.b32.xlu0 %v6699, 64
      %v6769 = vpop.permute.xlu0 %6768
      %6770 = vrot.lane.b32.xlu0 %v6701, 64
      %v6771 = vpop.permute.xlu0 %6770
      %6772 = vrot.lane.b32.xlu0 %v6704, 64
      %v6773 = vpop.permute.xlu0 %6772
      %6774 = vrot.lane.b32.xlu0 %v6706, 64
      %v6775 = vpop.permute.xlu0 %6774
      %6776 = vrot.lane.b32.xlu0 %v6709, 64
      %v6777 = vpop.permute.xlu0 %6776
      %6778 = vrot.lane.b32.xlu0 %v6711, 64
      %v6779 = vpop.permute.xlu0 %6778
      %6780 = vrot.lane.b32.xlu0 %v6714, 64
      %v6781 = vpop.permute.xlu0 %6780
      %6782 = vrot.lane.b32.xlu0 %v6716, 64
      %v6783 = vpop.permute.xlu0 %6782
      %6784 = vrot.lane.b32.xlu0 %v6719, 64
      %v6785 = vpop.permute.xlu0 %6784
      %6786 = vrot.lane.b32.xlu0 %v6721, 64
      %v6787 = vpop.permute.xlu0 %6786
      %6788 = vrot.lane.b32.xlu0 %v6724, 64
      %v6789 = vpop.permute.xlu0 %6788
      %6790 = vrot.lane.b32.xlu0 %v6726, 64
      %v6791 = vpop.permute.xlu0 %6790
      %6792 = vrot.lane.b32.xlu0 %v6729, 64
      %v6793 = vpop.permute.xlu0 %6792
      %6794 = vrot.lane.b32.xlu0 %v6731, 64
      %v6795 = vpop.permute.xlu0 %6794
      %v6828 = vadd.f32 %v6617, %v6733
      %v6829 = vadd.f32 %v6618, %v6735
      %v6830 = vadd.f32 %v6619, %v6737
      %v6831 = vadd.f32 %v6620, %v6739
      %v6832 = vadd.f32 %v6621, %v6741
      %v6833 = vadd.f32 %v6622, %v6743
      %v6834 = vadd.f32 %v6623, %v6745
      %v6835 = vadd.f32 %v6624, %v6747
      %v6836 = vadd.f32 %v6625, %v6749
      %v6837 = vadd.f32 %v6626, %v6751
      %v6838 = vadd.f32 %v6627, %v6753
      %v6839 = vadd.f32 %v6628, %v6755
      %v6840 = vadd.f32 %v6629, %v6757
      %v6841 = vadd.f32 %v6630, %v6759
      %v6842 = vadd.f32 %v6631, %v6761
      %v6843 = vadd.f32 %v6632, %v6763
      %v6844 = vadd.f32 %v6633, %v6765
      %v6845 = vadd.f32 %v6634, %v6767
      %v6846 = vadd.f32 %v6635, %v6769
      %v6847 = vadd.f32 %v6636, %v6771
      %v6848 = vadd.f32 %v6637, %v6773
      %v6849 = vadd.f32 %v6638, %v6775
      %v6850 = vadd.f32 %v6639, %v6777
      %v6851 = vadd.f32 %v6640, %v6779
      %v6852 = vadd.f32 %v6641, %v6781
      %v6853 = vadd.f32 %v6642, %v6783
      %v6854 = vadd.f32 %v6643, %v6785
      %v6855 = vadd.f32 %v6644, %v6787
      %v6856 = vadd.f32 %v6645, %v6789
      %v6857 = vadd.f32 %v6646, %v6791
      %v6858 = vadd.f32 %v6647, %v6793
      %v6859 = vadd.f32 %v6648, %v6795
      %v6860 = vrot.slane %v5478, 2
      %v6861 = vrot.slane %v5482, 2
      %v6862 = vsel %vm3284, %v6860, %v6861
      %v6863 = vrot.slane %v5487, 2
      %v6864 = vsel %vm3284, %v6861, %v6863
      %6865 = vrot.lane.b32.xlu0 %v6659, 32
      %v6866 = vpop.permute.xlu0 %6865
      %6867 = vrot.lane.b32.xlu0 %v6661, 32
      %v6868 = vpop.permute.xlu0 %6867
      %6869 = vrot.lane.b32.xlu0 %v6664, 32
      %v6870 = vpop.permute.xlu0 %6869
      %6871 = vrot.lane.b32.xlu0 %v6666, 32
      %v6872 = vpop.permute.xlu0 %6871
      %6873 = vrot.lane.b32.xlu0 %v6669, 32
      %v6874 = vpop.permute.xlu0 %6873
      %6875 = vrot.lane.b32.xlu0 %v6671, 32
      %v6876 = vpop.permute.xlu0 %6875
      %6877 = vrot.lane.b32.xlu0 %v6674, 32
      %v6878 = vpop.permute.xlu0 %6877
      %6879 = vrot.lane.b32.xlu0 %v6676, 32
      %v6880 = vpop.permute.xlu0 %6879
      %6881 = vrot.lane.b32.xlu0 %v6679, 32
      %v6882 = vpop.permute.xlu0 %6881
      %6883 = vrot.lane.b32.xlu0 %v6681, 32
      %v6884 = vpop.permute.xlu0 %6883
      %6885 = vrot.lane.b32.xlu0 %v6684, 32
      %v6886 = vpop.permute.xlu0 %6885
      %6887 = vrot.lane.b32.xlu0 %v6686, 32
      %v6888 = vpop.permute.xlu0 %6887
      %6889 = vrot.lane.b32.xlu0 %v6689, 32
      %v6890 = vpop.permute.xlu0 %6889
      %6891 = vrot.lane.b32.xlu0 %v6691, 32
      %v6892 = vpop.permute.xlu0 %6891
      %6893 = vrot.lane.b32.xlu0 %v6694, 32
      %v6894 = vpop.permute.xlu0 %6893
      %6895 = vrot.lane.b32.xlu0 %v6696, 32
      %v6896 = vpop.permute.xlu0 %6895
      %6897 = vrot.lane.b32.xlu0 %v6699, 32
      %v6898 = vpop.permute.xlu0 %6897
      %6899 = vrot.lane.b32.xlu0 %v6701, 32
      %v6900 = vpop.permute.xlu0 %6899
      %6901 = vrot.lane.b32.xlu0 %v6704, 32
      %v6902 = vpop.permute.xlu0 %6901
      %6903 = vrot.lane.b32.xlu0 %v6706, 32
      %v6904 = vpop.permute.xlu0 %6903
      %6905 = vrot.lane.b32.xlu0 %v6709, 32
      %v6906 = vpop.permute.xlu0 %6905
      %6907 = vrot.lane.b32.xlu0 %v6711, 32
      %v6908 = vpop.permute.xlu0 %6907
      %6909 = vrot.lane.b32.xlu0 %v6714, 32
      %v6910 = vpop.permute.xlu0 %6909
      %6911 = vrot.lane.b32.xlu0 %v6716, 32
      %v6912 = vpop.permute.xlu0 %6911
      %6913 = vrot.lane.b32.xlu0 %v6719, 32
      %v6914 = vpop.permute.xlu0 %6913
      %6915 = vrot.lane.b32.xlu0 %v6721, 32
      %v6916 = vpop.permute.xlu0 %6915
      %6917 = vrot.lane.b32.xlu0 %v6724, 32
      %v6918 = vpop.permute.xlu0 %6917
      %6919 = vrot.lane.b32.xlu0 %v6726, 32
      %v6920 = vpop.permute.xlu0 %6919
      %6921 = vrot.lane.b32.xlu0 %v6729, 32
      %v6922 = vpop.permute.xlu0 %6921
      %6923 = vrot.lane.b32.xlu0 %v6731, 32
      %v6924 = vpop.permute.xlu0 %6923
      %6925 = vrot.lane.b32.xlu0 %v6862, 32
      %v6926 = vpop.permute.xlu0 %6925
      %6927 = vrot.lane.b32.xlu0 %v6864, 32
      %v6928 = vpop.permute.xlu0 %6927
      %v6961 = vadd.f32 %v6828, %v6866
      %v6962 = vadd.f32 %v6829, %v6868
      %v6963 = vadd.f32 %v6830, %v6870
      %v6964 = vadd.f32 %v6831, %v6872
      %v6965 = vadd.f32 %v6832, %v6874
      %v6966 = vadd.f32 %v6833, %v6876
      %v6967 = vadd.f32 %v6834, %v6878
      %v6968 = vadd.f32 %v6835, %v6880
      %v6969 = vadd.f32 %v6836, %v6882
      %v6970 = vadd.f32 %v6837, %v6884
      %v6971 = vadd.f32 %v6838, %v6886
      %v6972 = vadd.f32 %v6839, %v6888
      %v6973 = vadd.f32 %v6840, %v6890
      %v6974 = vadd.f32 %v6841, %v6892
      %v6975 = vadd.f32 %v6842, %v6894
      %v6976 = vadd.f32 %v6843, %v6896
      %v6977 = vadd.f32 %v6844, %v6898
      %v6978 = vadd.f32 %v6845, %v6900
      %v6979 = vadd.f32 %v6846, %v6902
      %v6980 = vadd.f32 %v6847, %v6904
      %v6981 = vadd.f32 %v6848, %v6906
      %v6982 = vadd.f32 %v6849, %v6908
      %v6983 = vadd.f32 %v6850, %v6910
      %v6984 = vadd.f32 %v6851, %v6912
      %v6985 = vadd.f32 %v6852, %v6914
      %v6986 = vadd.f32 %v6853, %v6916
      %v6987 = vadd.f32 %v6854, %v6918
      %v6988 = vadd.f32 %v6855, %v6920
      %v6989 = vadd.f32 %v6856, %v6922
      %v6990 = vadd.f32 %v6857, %v6924
      %v6991 = vadd.f32 %v6858, %v6926
      %v6992 = vadd.f32 %v6859, %v6928
      %v7041 = vrot.slane %v5567, 2
      %v7042 = vrot.slane %v5570, 2
      %v7043 = vsel %vm3284, %v7041, %v7042
      %v7044 = vrot.slane %v5575, 2
      %v7045 = vsel %vm3284, %v7042, %v7044
      %v7046 = vrot.slane %v5582, 2
      %v7047 = vrot.slane %v5585, 2
      %v7048 = vsel %vm3284, %v7046, %v7047
      %v7049 = vrot.slane %v5590, 2
      %v7050 = vsel %vm3284, %v7047, %v7049
      %v7051 = vrot.slane %v5597, 2
      %v7052 = vrot.slane %v5600, 2
      %v7053 = vsel %vm3284, %v7051, %v7052
      %v7054 = vrot.slane %v5605, 2
      %v7055 = vsel %vm3284, %v7052, %v7054
      %v7056 = vrot.slane %v5612, 2
      %v7057 = vrot.slane %v5615, 2
      %v7058 = vsel %vm3284, %v7056, %v7057
      %v7059 = vrot.slane %v5620, 2
      %v7060 = vsel %vm3284, %v7057, %v7059
      %v7061 = vrot.slane %v5627, 2
      %v7062 = vrot.slane %v5630, 2
      %v7063 = vsel %vm3284, %v7061, %v7062
      %v7064 = vrot.slane %v5635, 2
      %v7065 = vsel %vm3284, %v7062, %v7064
      %v7066 = vrot.slane %v5642, 2
      %v7067 = vrot.slane %v5645, 2
      %v7068 = vsel %vm3284, %v7066, %v7067
      %v7069 = vrot.slane %v5650, 2
      %v7070 = vsel %vm3284, %v7067, %v7069
      %v7071 = vrot.slane %v5657, 2
      %v7072 = vrot.slane %v5660, 2
      %v7073 = vsel %vm3284, %v7071, %v7072
      %v7074 = vrot.slane %v5665, 2
      %v7075 = vsel %vm3284, %v7072, %v7074
      %v7076 = vrot.slane %v5672, 2
      %v7077 = vrot.slane %v5675, 2
      %v7078 = vsel %vm3284, %v7076, %v7077
      %v7079 = vrot.slane %v5680, 2
      %v7080 = vsel %vm3284, %v7077, %v7079
      %v7081 = vrot.slane %v5687, 2
      %v7082 = vrot.slane %v5690, 2
      %v7083 = vsel %vm3284, %v7081, %v7082
      %v7084 = vrot.slane %v5695, 2
      %v7085 = vsel %vm3284, %v7082, %v7084
      %v7086 = vrot.slane %v5702, 2
      %v7087 = vrot.slane %v5705, 2
      %v7088 = vsel %vm3284, %v7086, %v7087
      %v7089 = vrot.slane %v5710, 2
      %v7090 = vsel %vm3284, %v7087, %v7089
      %v7091 = vrot.slane %v5717, 2
      %v7092 = vrot.slane %v5720, 2
      %v7093 = vsel %vm3284, %v7091, %v7092
      %v7094 = vrot.slane %v5725, 2
      %v7095 = vsel %vm3284, %v7092, %v7094
      %v7096 = vrot.slane %v5732, 2
      %v7097 = vrot.slane %v5735, 2
      %v7098 = vsel %vm3284, %v7096, %v7097
      %v7099 = vrot.slane %v5740, 2
      %v7100 = vsel %vm3284, %v7097, %v7099
      %v7101 = vrot.slane %v5747, 2
      %v7102 = vrot.slane %v5750, 2
      %v7103 = vsel %vm3284, %v7101, %v7102
      %v7104 = vrot.slane %v5755, 2
      %v7105 = vsel %vm3284, %v7102, %v7104
      %v7106 = vrot.slane %v5762, 2
      %v7107 = vrot.slane %v5765, 2
      %v7108 = vsel %vm3284, %v7106, %v7107
      %v7109 = vrot.slane %v5770, 2
      %v7110 = vsel %vm3284, %v7107, %v7109
      %v7111 = vrot.slane %v5777, 2
      %v7112 = vrot.slane %v5780, 2
      %v7113 = vsel %vm3284, %v7111, %v7112
      %v7114 = vrot.slane %v5785, 2
      %v7115 = vsel %vm3284, %v7112, %v7114
      %v7116 = vrot.slane %v5792, 2
      %v7117 = vrot.slane %v5795, 2
      %v7118 = vsel %vm3284, %v7116, %v7117
      %v7119 = vrot.slane %v5800, 2
      %v7120 = vsel %vm3284, %v7117, %v7119
      %v7153 = vadd.f32 %v6961, %v7043
      %v7154 = vadd.f32 %v6962, %v7045
      %v7155 = vadd.f32 %v6963, %v7048
      %v7156 = vadd.f32 %v6964, %v7050
      %v7157 = vadd.f32 %v6965, %v7053
      %v7158 = vadd.f32 %v6966, %v7055
      %v7159 = vadd.f32 %v6967, %v7058
      %v7160 = vadd.f32 %v6968, %v7060
      %v7161 = vadd.f32 %v6969, %v7063
      %v7162 = vadd.f32 %v6970, %v7065
      %v7163 = vadd.f32 %v6971, %v7068
      %v7164 = vadd.f32 %v6972, %v7070
      %v7165 = vadd.f32 %v6973, %v7073
      %v7166 = vadd.f32 %v6974, %v7075
      %v7167 = vadd.f32 %v6975, %v7078
      %v7168 = vadd.f32 %v6976, %v7080
      %v7169 = vadd.f32 %v6977, %v7083
      %v7170 = vadd.f32 %v6978, %v7085
      %v7171 = vadd.f32 %v6979, %v7088
      %v7172 = vadd.f32 %v6980, %v7090
      %v7173 = vadd.f32 %v6981, %v7093
      %v7174 = vadd.f32 %v6982, %v7095
      %v7175 = vadd.f32 %v6983, %v7098
      %v7176 = vadd.f32 %v6984, %v7100
      %v7177 = vadd.f32 %v6985, %v7103
      %v7178 = vadd.f32 %v6986, %v7105
      %v7179 = vadd.f32 %v6987, %v7108
      %v7180 = vadd.f32 %v6988, %v7110
      %v7181 = vadd.f32 %v6989, %v7113
      %v7182 = vadd.f32 %v6990, %v7115
      %v7183 = vadd.f32 %v6991, %v7118
      %v7184 = vadd.f32 %v6992, %v7120
      %v7185 = vld [vmem:[%s8] sm:$0x1]
      %v7187 = vlaneseq
      %v7188 = vshrl.u32 %v7187, 7
      %v7189 = vsub.s32 0, %v7188
      %v7190 = vrot.slane %v7185, %v7189
      %v7192 = vadd.f32 %v7153, %v7190
      %v7193 = vadd.f32 %v7154, %v7190
      %v7194 = vadd.f32 %v7155, %v7190
      %v7195 = vadd.f32 %v7156, %v7190
      %v7196 = vadd.f32 %v7157, %v7190
      %v7197 = vadd.f32 %v7158, %v7190
      %v7198 = vadd.f32 %v7159, %v7190
      %v7199 = vadd.f32 %v7160, %v7190
      %v7200 = vadd.f32 %v7161, %v7190
      %v7201 = vadd.f32 %v7162, %v7190
      %v7202 = vadd.f32 %v7163, %v7190
      %v7203 = vadd.f32 %v7164, %v7190
      %v7204 = vadd.f32 %v7165, %v7190
      %v7205 = vadd.f32 %v7166, %v7190
      %v7206 = vadd.f32 %v7167, %v7190
      %v7207 = vadd.f32 %v7168, %v7190
      %v7208 = vadd.f32 %v7169, %v7190
      %v7209 = vadd.f32 %v7170, %v7190
      %v7210 = vadd.f32 %v7171, %v7190
      %v7211 = vadd.f32 %v7172, %v7190
      %v7212 = vadd.f32 %v7173, %v7190
      %v7213 = vadd.f32 %v7174, %v7190
      %v7214 = vadd.f32 %v7175, %v7190
      %v7215 = vadd.f32 %v7176, %v7190
      %v7216 = vadd.f32 %v7177, %v7190
      %v7217 = vadd.f32 %v7178, %v7190
      %v7218 = vadd.f32 %v7179, %v7190
      %v7219 = vadd.f32 %v7180, %v7190
      %v7220 = vadd.f32 %v7181, %v7190
      %v7221 = vadd.f32 %v7182, %v7190
      %v7222 = vadd.f32 %v7183, %v7190
      %v7223 = vadd.f32 %v7184, %v7190
      %v7224 = vadd.f32 %v7192, %v334
      %v7225 = vadd.f32 %v7193, %v335
      %v7226 = vadd.f32 %v7194, %v336
      %v7227 = vadd.f32 %v7195, %v337
      %v7228 = vadd.f32 %v7196, %v338
      %v7229 = vadd.f32 %v7197, %v339
      %v7230 = vadd.f32 %v7198, %v340
      %v7231 = vadd.f32 %v7199, %v341
      %v7232 = vadd.f32 %v7200, %v342
      %v7233 = vadd.f32 %v7201, %v343
      %v7234 = vadd.f32 %v7202, %v344
      %v7235 = vadd.f32 %v7203, %v345
      %v7236 = vadd.f32 %v7204, %v346
      %v7237 = vadd.f32 %v7205, %v347
      %v7238 = vadd.f32 %v7206, %v348
      %v7239 = vadd.f32 %v7207, %v349
      %v7240 = vadd.f32 %v7208, %v350
      %v7241 = vadd.f32 %v7209, %v351
      %v7242 = vadd.f32 %v7210, %v352
      %v7243 = vadd.f32 %v7211, %v353
      %v7244 = vadd.f32 %v7212, %v354
      %v7245 = vadd.f32 %v7213, %v355
      %v7246 = vadd.f32 %v7214, %v356
      %v7247 = vadd.f32 %v7215, %v357
      %v7248 = vadd.f32 %v7216, %v358
      %v7249 = vadd.f32 %v7217, %v359
      %v7250 = vadd.f32 %v7218, %v360
      %v7251 = vadd.f32 %v7219, %v361
      %v7252 = vadd.f32 %v7220, %v362
      %v7253 = vadd.f32 %v7221, %v363
      %v7254 = vadd.f32 %v7222, %v364
      %v7255 = vadd.f32 %v7223, %v365
      %7256 = vst.msk [vmem:[%s332] sm:$0xff] %vm366, %v7224
      %7257 = vst.msk [vmem:[%s332 + $0x8] sm:$0xff] %vm366, %v7225
      %7258 = vst.msk [vmem:[%s332 + $0x10] sm:$0xff] %vm366, %v7226
      %7259 = vst.msk [vmem:[%s332 + $0x18] sm:$0xff] %vm366, %v7227
      %7260 = vst.msk [vmem:[%s332 + $0x20] sm:$0xff] %vm366, %v7228
      %7261 = vst.msk [vmem:[%s332 + $0x28] sm:$0xff] %vm366, %v7229
      %7262 = vst.msk [vmem:[%s332 + $0x30] sm:$0xff] %vm366, %v7230
      %7263 = vst.msk [vmem:[%s332 + $0x38] sm:$0xff] %vm366, %v7231
      %7264 = vst.msk [vmem:[%s332 + $0x40] sm:$0xff] %vm366, %v7232
      %7265 = vst.msk [vmem:[%s332 + $0x48] sm:$0xff] %vm366, %v7233
      %7266 = vst.msk [vmem:[%s332 + $0x50] sm:$0xff] %vm366, %v7234
      %7267 = vst.msk [vmem:[%s332 + $0x58] sm:$0xff] %vm366, %v7235
      %7268 = vst.msk [vmem:[%s332 + $0x60] sm:$0xff] %vm366, %v7236
      %7269 = vst.msk [vmem:[%s332 + $0x68] sm:$0xff] %vm366, %v7237
      %7270 = vst.msk [vmem:[%s332 + $0x70] sm:$0xff] %vm366, %v7238
      %7271 = vst.msk [vmem:[%s332 + $0x78] sm:$0xff] %vm366, %v7239
      %7272 = vst.msk [vmem:[%s332 + $0x80] sm:$0xff] %vm366, %v7240
      %7273 = vst.msk [vmem:[%s332 + $0x88] sm:$0xff] %vm366, %v7241
      %7274 = vst.msk [vmem:[%s332 + $0x90] sm:$0xff] %vm366, %v7242
      %7275 = vst.msk [vmem:[%s332 + $0x98] sm:$0xff] %vm366, %v7243
      %7276 = vst.msk [vmem:[%s332 + $0xa0] sm:$0xff] %vm366, %v7244
      %7277 = vst.msk [vmem:[%s332 + $0xa8] sm:$0xff] %vm366, %v7245
      %7278 = vst.msk [vmem:[%s332 + $0xb0] sm:$0xff] %vm366, %v7246
      %7279 = vst.msk [vmem:[%s332 + $0xb8] sm:$0xff] %vm366, %v7247
      %7280 = vst.msk [vmem:[%s332 + $0xc0] sm:$0xff] %vm366, %v7248
      %7281 = vst.msk [vmem:[%s332 + $0xc8] sm:$0xff] %vm366, %v7249
      %7282 = vst.msk [vmem:[%s332 + $0xd0] sm:$0xff] %vm366, %v7250
      %7283 = vst.msk [vmem:[%s332 + $0xd8] sm:$0xff] %vm366, %v7251
      %7284 = vst.msk [vmem:[%s332 + $0xe0] sm:$0xff] %vm366, %v7252
      %7285 = vst.msk [vmem:[%s332 + $0xe8] sm:$0xff] %vm366, %v7253
      %7286 = vst.msk [vmem:[%s332 + $0xf0] sm:$0xff] %vm366, %v7254
      %7287 = vst.msk [vmem:[%s332 + $0xf8] sm:$0xff] %vm366, %v7255
      %p7288 = scmp.lt.s32.totalorder %s20, 1
      %s7289 = scalar_select %p7288, %s20, 1
      %s7290 = smul.addr %s7289, 32
      %s7291 = smul.addr %s7290, 8
      %s7292 = scalar_lea.vmem %s9, %s7291
      // Predicated region
      $region57: #{residual_cnn_forward.1} parent=55 // pred_check
        %p7293 = pneg %p232
      $region58: #{residual_cnn_forward.1} parent=55 // pred_check_branch
        %7295 = sbr.rel (%p7293) target = $region60
      $region59: #{residual_cnn_forward.1} parent=55 // pred_region
        _
      $region60: #{residual_cnn_forward.1} parent=55 // pred_fallthru
        _
    $region56: #{residual_cnn_forward.1} parent=5 // pred_fallthru
      _
    %p7296 = scmp.le.s32.totalorder 2, %s15
    // Predicated region
    $region61: #{residual_cnn_forward.1} parent=5 // pred_check
      %p7297 = pneg %p7296
    $region62: #{residual_cnn_forward.1} parent=5 // pred_check_branch
      %7299 = sbr.rel (%p7297) target = $region64
    $region63: #{residual_cnn_forward.1} parent=5 // pred_region
      %s7300 = ssub.s32 %s15, 2
      // Predicated region
      $region65: #{residual_cnn_forward.1} parent=63 // pred_check
        %p7301 = pneg %p238
      $region66: #{residual_cnn_forward.1} parent=63 // pred_check_branch
        %7303 = sbr.rel (%p7301) target = $region68
      $region67: #{residual_cnn_forward.1} parent=63 // pred_region
        %p7304 = scmp.lt.s32.totalorder %s21, 1
        %s7305 = scalar_select %p7304, %s21, 1
        %s7306 = smul.addr %s7305, 32
        %s7307 = smul.addr %s7306, 8
        %s7308 = scalar_lea.vmem %s9, %s7307
      $region68: #{residual_cnn_forward.1} parent=63 // pred_fallthru
        _
    $region64: #{residual_cnn_forward.1} parent=5 // pred_fallthru
      _
  $region6: #{residual_cnn_forward.1} parent=0 // loop_footer
    %s19 = sadd.s32 1, %s15
  $region7: #{residual_cnn_forward.1} parent=0 // loop_footer_branch
    %14 = sbr.rel target = $region3
  $region8: #{residual_cnn_forward.1} parent=0 // loop_exit
    _

</llo_original>
